<compile_context>
chip_gen: v5e
topology: v5e:2x2
jax: 0.10.0
libtpu: 0.0.40
codegen_flags: <defaults>
</compile_context>

<pallas_src>
import functools

import jax
import jax.numpy as jnp
from jax.experimental import pallas as pl


def _round_up(x, m):
    return ((x + m - 1) // m) * m


# ----------------------------------------------------------------------------
# Fused forward kernel
# ----------------------------------------------------------------------------
def _s2vt_kernel(feat_ref, cap_ref,
                 f2h_w_ref, f2h_b_ref,
                 enc_w_ref, enc_b_ref,
                 dec_w_ref, dec_b_ref,
                 h2v_w_ref, h2v_b_ref,
                 out_ref,
                 *, frame_len, cap_len, b_pad, h_pad, vocab):
    BP, HP = b_pad, h_pad
    T = frame_len + cap_len - 1

    # --- stage 1: feature -> hidden for all frames in one MXU matmul --------
    # feat_ref: (frame_len*BP, F_pad) time-major; result rows [t*BP:(t+1)*BP]
    # are the encoder input at time t.
    feat_h = (jnp.dot(feat_ref[...], f2h_w_ref[...],
                      preferred_element_type=jnp.float32)
              + f2h_b_ref[...])                                   # (L*BP, HP)

    enc_w = enc_w_ref[...]          # (2*HP, 4*HP)  = [W_ih ; W_hh]
    enc_b = enc_b_ref[...]          # (1, 4*HP)
    dec_w = dec_w_ref[...]          # (3*HP, 4*HP)  = [W_ih_cap ; W_ih_enc ; W_hh]
    dec_b = dec_b_ref[...]          # (1, 4*HP)

    def cell(stacked, w, b, c):
        # Single fused gate matmul; gate order (i, f, g, o), each gate is a
        # full 128-lane block so the slices below are free vreg views.
        gates = jnp.dot(stacked, w, preferred_element_type=jnp.float32) + b
        i_g = jax.nn.sigmoid(gates[:, 0 * HP:1 * HP])
        f_g = jax.nn.sigmoid(gates[:, 1 * HP:2 * HP])
        g_g = jnp.tanh(gates[:, 2 * HP:3 * HP])
        o_g = jax.nn.sigmoid(gates[:, 3 * HP:4 * HP])
        c_new = f_g * c + i_g * g_g
        h_new = o_g * jnp.tanh(c_new)
        return h_new, c_new

    zeros = jnp.zeros((BP, HP), jnp.float32)
    h_e = c_e = h_d = c_d = zeros
    dec_hs = []

    # --- stage 2: fully-unrolled encoder+decoder recurrence ------------------
    # Encoder step t feeds decoder step t directly (no HBM materialization).
    for t in range(T):
        x_e = feat_h[t * BP:(t + 1) * BP, :] if t < frame_len else zeros
        h_e, c_e = cell(jnp.concatenate([x_e, h_e], axis=1), enc_w, enc_b, c_e)

        if t >= frame_len:
            k = t - frame_len
            x_c = cap_ref[k * BP:(k + 1) * BP, :]
        else:
            x_c = zeros
        h_d, c_d = cell(jnp.concatenate([x_c, h_e, h_d], axis=1),
                        dec_w, dec_b, c_d)

        if t >= frame_len:
            dec_hs.append(h_d)

    dec_h = jnp.concatenate(dec_hs, axis=0)          # ((cap_len-1)*BP, HP)

    # --- stage 3: hidden -> vocab + log_softmax (lane-dense output) ---------
    logits = (jnp.dot(dec_h, h2v_w_ref[...],
                      preferred_element_type=jnp.float32)
              + h2v_b_ref[...])                       # ((cap_len-1)*BP, V_pad)
    col = jax.lax.broadcasted_iota(jnp.int32, logits.shape, 1)
    logits = jnp.where(col < vocab, logits, -1e30)    # mask padded vocab lanes
    m = jnp.max(logits, axis=-1, keepdims=True)
    lse = m + jnp.log(jnp.sum(jnp.exp(logits - m), axis=-1, keepdims=True))
    out_ref[...] = logits - lse


# ----------------------------------------------------------------------------
# Padding / relayout helpers (XLA-side, cheap, traced under jit)
# ----------------------------------------------------------------------------
def _pad2(x, rows, cols):
    return jnp.pad(x, ((0, rows - x.shape[0]), (0, cols - x.shape[1])))


def _pad_gate_cols(w, H, HP):
    # (in, 4H) -> (in, 4*HP): each torch gate (i,f,g,o) gets its own HP-wide,
    # zero-padded lane block so in-kernel gate slices are 128-lane aligned.
    parts = [jnp.pad(w[:, g * H:(g + 1) * H], ((0, 0), (0, HP - H)))
             for g in range(4)]
    return jnp.concatenate(parts, axis=1)


def _pad_gate_bias(b, H, HP):
    parts = [jnp.pad(b[g * H:(g + 1) * H], (0, HP - H)) for g in range(4)]
    return jnp.concatenate(parts).reshape(1, 4 * HP)


# ----------------------------------------------------------------------------
# Parameters (gate order i,f,g,o; combined bias = bias_ih + bias_hh)
# ----------------------------------------------------------------------------
def init_params(key, vocab_size, frame_dim, hidden_dim):
    ks = jax.random.split(key, 11)
    s = 0.1

    def rnd(k, shape):
        return s * jax.random.normal(k, shape, dtype=jnp.float32)

    H = hidden_dim
    return {
        "f2h_w": rnd(ks[0], (frame_dim, H)),
        "f2h_b": rnd(ks[1], (H,)),
        "h2v_w": rnd(ks[2], (H, vocab_size)),
        "h2v_b": rnd(ks[3], (vocab_size,)),
        "enc_wih": rnd(ks[4], (H, 4 * H)),
        "enc_whh": rnd(ks[5], (H, 4 * H)),
        "enc_b": rnd(ks[6], (4 * H,)),
        "dec_wih": rnd(ks[7], (2 * H, 4 * H)),
        "dec_whh": rnd(ks[8], (H, 4 * H)),
        "dec_b": rnd(ks[9], (4 * H,)),     # fixed: no longer shares enc_b key
        "emb": rnd(ks[10], (vocab_size, H)),
    }


# ----------------------------------------------------------------------------
# Forward (single fused pallas_call)
# ----------------------------------------------------------------------------
@functools.partial(
    jax.jit, static_argnames=("frame_dim", "hidden_dim", "frame_len", "cap_len"))
def s2vt_forward(params, features, captions, *, frame_dim, hidden_dim,
                 frame_len, cap_len):
    """features: (B, frame_len, frame_dim) f32; captions: (B, cap_len) int32.
    Returns (B*(cap_len-1), vocab) log-probabilities (eval-mode dropout)."""
    B = features.shape[0]
    H = hidden_dim
    V = params["h2v_w"].shape[1]

    BP = max(8, _round_up(B, 8))        # sublane-aligned batch
    HP = _round_up(H, 128)              # lane-aligned hidden
    FP = _round_up(frame_dim, 128)
    VP = _round_up(V, 128)

    # ---- weights: pad + relayout so gates are 128-lane blocks --------------
    f2h_w = _pad2(params["f2h_w"], FP, HP)
    f2h_b = jnp.pad(params["f2h_b"], (0, HP - H)).reshape(1, HP)

    enc_w = jnp.concatenate(
        [_pad2(_pad_gate_cols(params["enc_wih"], H, HP), HP, 4 * HP),
         _pad2(_pad_gate_cols(params["enc_whh"], H, HP), HP, 4 * HP)], axis=0)
    enc_b = _pad_gate_bias(params["enc_b"], H, HP)

    dec_w = jnp.concatenate(
        [_pad2(_pad_gate_cols(params["dec_wih"][:H], H, HP), HP, 4 * HP),   # cap
         _pad2(_pad_gate_cols(params["dec_wih"][H:], H, HP), HP, 4 * HP),   # enc
         _pad2(_pad_gate_cols(params["dec_whh"], H, HP), HP, 4 * HP)], axis=0)
    dec_b = _pad_gate_bias(params["dec_b"], H, HP)

    h2v_w = _pad2(params["h2v_w"], HP, VP)
    h2v_b = jnp.pad(params["h2v_b"], (0, VP - V)).reshape(1, VP)

    # ---- activations: time-major, padded, flattened to 2D ------------------
    feat_tm = jnp.transpose(features, (1, 0, 2))                   # (L, B, F)
    feat_tm = jnp.pad(feat_tm, ((0, 0), (0, BP - B), (0, FP - frame_dim)))
    feat_tm = feat_tm.reshape(frame_len * BP, FP)

    cap_emb = jnp.take(params["emb"], captions[:, :cap_len - 1], axis=0)  # (B,C-1,H)
    cap_tm = jnp.transpose(cap_emb, (1, 0, 2))                     # (C-1, B, H)
    cap_tm = jnp.pad(cap_tm, ((0, 0), (0, BP - B), (0, HP - H)))
    cap_tm = cap_tm.reshape((cap_len - 1) * BP, HP)

    kernel = functools.partial(
        _s2vt_kernel, frame_len=frame_len, cap_len=cap_len,
        b_pad=BP, h_pad=HP, vocab=V)

    out_pad = pl.pallas_call(
        kernel,
        out_shape=jax.ShapeDtypeStruct(((cap_len - 1) * BP, VP), jnp.float32),
        in_specs=[
            pl.BlockSpec(feat_tm.shape, lambda: (0, 0)),
            pl.BlockSpec(cap_tm.shape, lambda: (0, 0)),
            pl.BlockSpec(f2h_w.shape, lambda: (0, 0)),
            pl.BlockSpec(f2h_b.shape, lambda: (0, 0)),
            pl.BlockSpec(enc_w.shape, lambda: (0, 0)),
            pl.BlockSpec(enc_b.shape, lambda: (0, 0)),
            pl.BlockSpec(dec_w.shape, lambda: (0, 0)),
            pl.BlockSpec(dec_b.shape, lambda: (0, 0)),
            pl.BlockSpec(h2v_w.shape, lambda: (0, 0)),
            pl.BlockSpec(h2v_b.shape, lambda: (0, 0)),
        ],
        out_specs=pl.BlockSpec(((cap_len - 1) * BP, VP), lambda: (0, 0)),
    )(feat_tm, cap_tm, f2h_w, f2h_b, enc_w, enc_b, dec_w, dec_b, h2v_w, h2v_b)

    # rows are (caption_step, batch) ordered; torch flattens as (batch, step).
    out = out_pad.reshape(cap_len - 1, BP, VP)[:, :B, :V]
    out = jnp.transpose(out, (1, 0, 2)).reshape(B * (cap_len - 1), V)
    return out


# ----------------------------------------------------------------------------
# Pure-JAX reference (for correctness check only)
# ----------------------------------------------------------------------------
def _lstm_ref(x_btd, w_ih, w_hh, b, H):
    B = x_btd.shape[0]

    def cell(carry, x):
        h, c = carry
        g = x @ w_ih + h @ w_hh + b
        i = jax.nn.sigmoid(g[:, 0 * H:1 * H])
        f = jax.nn.sigmoid(g[:, 1 * H:2 * H])
        gg = jnp.tanh(g[:, 2 * H:3 * H])
        o = jax.nn.sigmoid(g[:, 3 * H:4 * H])
        c = f * c + i * gg
        h = o * jnp.tanh(c)
        return (h, c), h

    init = (jnp.zeros((B, H), jnp.float32), jnp.zeros((B, H), jnp.float32))
    _, hs = jax.lax.scan(cell, init, jnp.transpose(x_btd, (1, 0, 2)))
    return jnp.transpose(hs, (1, 0, 2))


def s2vt_reference(params, features, captions, *, frame_dim, hidden_dim,
                   frame_len, cap_len):
    B = features.shape[0]
    H = hidden_dim
    feat_h = features.reshape(-1, frame_dim) @ params["f2h_w"] + params["f2h_b"]
    feat_h = feat_h.reshape(B, frame_len, H)
    enc_in = jnp.concatenate(
        [feat_h, jnp.zeros((B, cap_len - 1, H), jnp.float32)], axis=1)
    enc_out = _lstm_ref(enc_in, params["enc_wih"], params["enc_whh"],
                        params["enc_b"], H)
    cap_emb = jnp.take(params["emb"], captions[:, :cap_len - 1], axis=0)
    cap_pad = jnp.concatenate(
        [jnp.zeros((B, frame_len, H), jnp.float32), cap_emb], axis=1)
    dec_in = jnp.concatenate([cap_pad, enc_out], axis=2)
    dec_out = _lstm_ref(dec_in, params["dec_wih"], params["dec_whh"],
                        params["dec_b"], H)
    dec_tail = dec_out[:, frame_len:, :].reshape(-1, H)
    logits = dec_tail @ params["h2v_w"] + params["h2v_b"]
    return jax.nn.log_softmax(logits, axis=-1)


# ----------------------------------------------------------------------------
if __name__ == "__main__":
    VOCAB = 48
    BATCH = 2
    FRAME_DIM = 64
    HIDDEN = 32
    FRAME_LEN = 8
    CAP_LEN = 6

    key = jax.random.PRNGKey(0)
    k_par, k_feat, k_cap = jax.random.split(key, 3)

    params = init_params(k_par, VOCAB, FRAME_DIM, HIDDEN)
    features = jax.random.normal(
        k_feat, (BATCH, FRAME_LEN, FRAME_DIM), dtype=jnp.float32)
    captions = jax.random.randint(
        k_cap, (BATCH, CAP_LEN), 0, VOCAB, dtype=jnp.int32)

    out = s2vt_forward(
        params, features, captions,
        frame_dim=FRAME_DIM, hidden_dim=HIDDEN,
        frame_len=FRAME_LEN, cap_len=CAP_LEN)
    out = jax.block_until_ready(out)

    assert out.shape == (BATCH * (CAP_LEN - 1), VOCAB), out.shape
    # log_softmax rows should sum (in prob space) to ~1
    assert jnp.allclose(jnp.exp(out).sum(axis=1), 1.0, atol=1e-4)

    # cross-check against a pure-JAX reference of the same math
    ref = s2vt_reference(
        params, features, captions,
        frame_dim=FRAME_DIM, hidden_dim=HIDDEN,
        frame_len=FRAME_LEN, cap_len=CAP_LEN)
    max_err = float(jnp.max(jnp.abs(out - ref)))
    assert max_err < 1e-4, f"mismatch vs reference: {max_err}"

    print("KERNEL_OK")
</pallas_src>

<mosaic_0001>
module attributes {stable_mosaic.version = 11 : i64} {
  func.func @_s2vt_kernel(%arg0: memref<64x128xf32, #tpu.memory_space<vmem>>, %arg1: memref<40x128xf32, #tpu.memory_space<vmem>>, %arg2: memref<128x128xf32, #tpu.memory_space<vmem>>, %arg3: memref<1x128xf32, #tpu.memory_space<vmem>>, %arg4: memref<256x512xf32, #tpu.memory_space<vmem>>, %arg5: memref<1x512xf32, #tpu.memory_space<vmem>>, %arg6: memref<384x512xf32, #tpu.memory_space<vmem>>, %arg7: memref<1x512xf32, #tpu.memory_space<vmem>>, %arg8: memref<128x128xf32, #tpu.memory_space<vmem>>, %arg9: memref<1x128xf32, #tpu.memory_space<vmem>>, %arg10: memref<40x128xf32, #tpu.memory_space<vmem>>) attributes {dimension_semantics = [], scalar_prefetch = 0 : i64, scratch_operands = 0 : i64, tpu.core_type = #tpu.core_type<tc>} {
    %c0 = arith.constant 0 : index
    %c0_0 = arith.constant 0 : index
    %0 = vector.load %arg0[%c0, %c0_0] : memref<64x128xf32, #tpu.memory_space<vmem>>, vector<64x128xf32>
    %c0_1 = arith.constant 0 : index
    %c0_2 = arith.constant 0 : index
    %1 = vector.load %arg2[%c0_1, %c0_2] : memref<128x128xf32, #tpu.memory_space<vmem>>, vector<128x128xf32>
    %cst = arith.constant dense<0.000000e+00> : vector<64x128xf32>
    %2 = tpu.matmul %0, %1, %cst {dimension_numbers = #tpu.dot_dimension_numbers<[1], [0], [0], [1], [0, 0, 1, 1], [], []>} : vector<64x128xf32>, vector<128x128xf32>, vector<64x128xf32> -> vector<64x128xf32>
    %c0_3 = arith.constant 0 : index
    %c0_4 = arith.constant 0 : index
    %3 = vector.load %arg3[%c0_3, %c0_4] : memref<1x128xf32, #tpu.memory_space<vmem>>, vector<1x128xf32>
    %4 = vector.broadcast %3 : vector<1x128xf32> to vector<64x128xf32>
    %5 = arith.addf %2, %4 : vector<64x128xf32>
    %c0_5 = arith.constant 0 : index
    %c0_6 = arith.constant 0 : index
    %6 = vector.load %arg4[%c0_5, %c0_6] : memref<256x512xf32, #tpu.memory_space<vmem>>, vector<256x512xf32>
    %c0_7 = arith.constant 0 : index
    %c0_8 = arith.constant 0 : index
    %7 = vector.load %arg5[%c0_7, %c0_8] : memref<1x512xf32, #tpu.memory_space<vmem>>, vector<1x512xf32>
    %c0_9 = arith.constant 0 : index
    %c0_10 = arith.constant 0 : index
    %8 = vector.load %arg6[%c0_9, %c0_10] : memref<384x512xf32, #tpu.memory_space<vmem>>, vector<384x512xf32>
    %c0_11 = arith.constant 0 : index
    %c0_12 = arith.constant 0 : index
    %9 = vector.load %arg7[%c0_11, %c0_12] : memref<1x512xf32, #tpu.memory_space<vmem>>, vector<1x512xf32>
    %cst_13 = arith.constant 0.000000e+00 : f32
    %10 = vector.broadcast %cst_13 : f32 to vector<8x128xf32>
    %11 = vector.extract_strided_slice %5 {offsets = [0, 0], sizes = [8, 128], strides = [1, 1]} : vector<64x128xf32> to vector<8x128xf32>
    %12 = tpu.concatenate %11, %10 in 1 : vector<8x128xf32>, vector<8x128xf32> -> vector<8x256xf32>
    %cst_14 = arith.constant dense<0.000000e+00> : vector<8x512xf32>
    %13 = tpu.matmul %12, %6, %cst_14 {dimension_numbers = #tpu.dot_dimension_numbers<[1], [0], [0], [1], [0, 0, 1, 1], [], []>} : vector<8x256xf32>, vector<256x512xf32>, vector<8x512xf32> -> vector<8x512xf32>
    %14 = vector.broadcast %7 : vector<1x512xf32> to vector<8x512xf32>
    %15 = arith.addf %13, %14 : vector<8x512xf32>
    %16 = vector.extract_strided_slice %15 {offsets = [0, 0], sizes = [8, 128], strides = [1, 1]} : vector<8x512xf32> to vector<8x128xf32>
    %17 = arith.negf %16 : vector<8x128xf32>
    %18 = math.exp %17 : vector<8x128xf32>
    %cst_15 = arith.constant 1.000000e+00 : f32
    %19 = vector.broadcast %cst_15 : f32 to vector<8x128xf32>
    %20 = arith.addf %19, %18 : vector<8x128xf32>
    %21 = arith.divf %19, %20 : vector<8x128xf32>
    %22 = vector.extract_strided_slice %15 {offsets = [0, 128], sizes = [8, 128], strides = [1, 1]} : vector<8x512xf32> to vector<8x128xf32>
    %23 = arith.negf %22 : vector<8x128xf32>
    %24 = math.exp %23 : vector<8x128xf32>
    %cst_16 = arith.constant 1.000000e+00 : f32
    %25 = vector.broadcast %cst_16 : f32 to vector<8x128xf32>
    %26 = arith.addf %25, %24 : vector<8x128xf32>
    %27 = arith.divf %25, %26 : vector<8x128xf32>
    %28 = vector.extract_strided_slice %15 {offsets = [0, 256], sizes = [8, 128], strides = [1, 1]} : vector<8x512xf32> to vector<8x128xf32>
    %29 = math.tanh %28 : vector<8x128xf32>
    %30 = vector.extract_strided_slice %15 {offsets = [0, 384], sizes = [8, 128], strides = [1, 1]} : vector<8x512xf32> to vector<8x128xf32>
    %31 = arith.negf %30 : vector<8x128xf32>
    %32 = math.exp %31 : vector<8x128xf32>
    %cst_17 = arith.constant 1.000000e+00 : f32
    %33 = vector.broadcast %cst_17 : f32 to vector<8x128xf32>
    %34 = arith.addf %33, %32 : vector<8x128xf32>
    %35 = arith.divf %33, %34 : vector<8x128xf32>
    %36 = arith.mulf %27, %10 : vector<8x128xf32>
    %37 = arith.mulf %21, %29 : vector<8x128xf32>
    %38 = arith.addf %36, %37 : vector<8x128xf32>
    %39 = math.tanh %38 : vector<8x128xf32>
    %40 = arith.mulf %35, %39 : vector<8x128xf32>
    %41 = tpu.concatenate %10, %40, %10 in 1 : vector<8x128xf32>, vector<8x128xf32>, vector<8x128xf32> -> vector<8x384xf32>
    %cst_18 = arith.constant dense<0.000000e+00> : vector<8x512xf32>
    %42 = tpu.matmul %41, %8, %cst_18 {dimension_numbers = #tpu.dot_dimension_numbers<[1], [0], [0], [1], [0, 0, 1, 1], [], []>} : vector<8x384xf32>, vector<384x512xf32>, vector<8x512xf32> -> vector<8x512xf32>
    %43 = vector.broadcast %9 : vector<1x512xf32> to vector<8x512xf32>
    %44 = arith.addf %42, %43 : vector<8x512xf32>
    %45 = vector.extract_strided_slice %44 {offsets = [0, 0], sizes = [8, 128], strides = [1, 1]} : vector<8x512xf32> to vector<8x128xf32>
    %46 = arith.negf %45 : vector<8x128xf32>
    %47 = math.exp %46 : vector<8x128xf32>
    %cst_19 = arith.constant 1.000000e+00 : f32
    %48 = vector.broadcast %cst_19 : f32 to vector<8x128xf32>
    %49 = arith.addf %48, %47 : vector<8x128xf32>
    %50 = arith.divf %48, %49 : vector<8x128xf32>
    %51 = vector.extract_strided_slice %44 {offsets = [0, 128], sizes = [8, 128], strides = [1, 1]} : vector<8x512xf32> to vector<8x128xf32>
    %52 = arith.negf %51 : vector<8x128xf32>
    %53 = math.exp %52 : vector<8x128xf32>
    %cst_20 = arith.constant 1.000000e+00 : f32
    %54 = vector.broadcast %cst_20 : f32 to vector<8x128xf32>
    %55 = arith.addf %54, %53 : vector<8x128xf32>
    %56 = arith.divf %54, %55 : vector<8x128xf32>
    %57 = vector.extract_strided_slice %44 {offsets = [0, 256], sizes = [8, 128], strides = [1, 1]} : vector<8x512xf32> to vector<8x128xf32>
    %58 = math.tanh %57 : vector<8x128xf32>
    %59 = vector.extract_strided_slice %44 {offsets = [0, 384], sizes = [8, 128], strides = [1, 1]} : vector<8x512xf32> to vector<8x128xf32>
    %60 = arith.negf %59 : vector<8x128xf32>
    %61 = math.exp %60 : vector<8x128xf32>
    %cst_21 = arith.constant 1.000000e+00 : f32
    %62 = vector.broadcast %cst_21 : f32 to vector<8x128xf32>
    %63 = arith.addf %62, %61 : vector<8x128xf32>
    %64 = arith.divf %62, %63 : vector<8x128xf32>
    %65 = arith.mulf %56, %10 : vector<8x128xf32>
    %66 = arith.mulf %50, %58 : vector<8x128xf32>
    %67 = arith.addf %65, %66 : vector<8x128xf32>
    %68 = math.tanh %67 : vector<8x128xf32>
    %69 = arith.mulf %64, %68 : vector<8x128xf32>
    %70 = vector.extract_strided_slice %5 {offsets = [8, 0], sizes = [8, 128], strides = [1, 1]} : vector<64x128xf32> to vector<8x128xf32>
    %71 = tpu.concatenate %70, %40 in 1 : vector<8x128xf32>, vector<8x128xf32> -> vector<8x256xf32>
    %cst_22 = arith.constant dense<0.000000e+00> : vector<8x512xf32>
    %72 = tpu.matmul %71, %6, %cst_22 {dimension_numbers = #tpu.dot_dimension_numbers<[1], [0], [0], [1], [0, 0, 1, 1], [], []>} : vector<8x256xf32>, vector<256x512xf32>, vector<8x512xf32> -> vector<8x512xf32>
    %73 = vector.broadcast %7 : vector<1x512xf32> to vector<8x512xf32>
    %74 = arith.addf %72, %73 : vector<8x512xf32>
    %75 = vector.extract_strided_slice %74 {offsets = [0, 0], sizes = [8, 128], strides = [1, 1]} : vector<8x512xf32> to vector<8x128xf32>
    %76 = arith.negf %75 : vector<8x128xf32>
    %77 = math.exp %76 : vector<8x128xf32>
    %cst_23 = arith.constant 1.000000e+00 : f32
    %78 = vector.broadcast %cst_23 : f32 to vector<8x128xf32>
    %79 = arith.addf %78, %77 : vector<8x128xf32>
    %80 = arith.divf %78, %79 : vector<8x128xf32>
    %81 = vector.extract_strided_slice %74 {offsets = [0, 128], sizes = [8, 128], strides = [1, 1]} : vector<8x512xf32> to vector<8x128xf32>
    %82 = arith.negf %81 : vector<8x128xf32>
    %83 = math.exp %82 : vector<8x128xf32>
    %cst_24 = arith.constant 1.000000e+00 : f32
    %84 = vector.broadcast %cst_24 : f32 to vector<8x128xf32>
    %85 = arith.addf %84, %83 : vector<8x128xf32>
    %86 = arith.divf %84, %85 : vector<8x128xf32>
    %87 = vector.extract_strided_slice %74 {offsets = [0, 256], sizes = [8, 128], strides = [1, 1]} : vector<8x512xf32> to vector<8x128xf32>
    %88 = math.tanh %87 : vector<8x128xf32>
    %89 = vector.extract_strided_slice %74 {offsets = [0, 384], sizes = [8, 128], strides = [1, 1]} : vector<8x512xf32> to vector<8x128xf32>
    %90 = arith.negf %89 : vector<8x128xf32>
    %91 = math.exp %90 : vector<8x128xf32>
    %cst_25 = arith.constant 1.000000e+00 : f32
    %92 = vector.broadcast %cst_25 : f32 to vector<8x128xf32>
    %93 = arith.addf %92, %91 : vector<8x128xf32>
    %94 = arith.divf %92, %93 : vector<8x128xf32>
    %95 = arith.mulf %86, %38 : vector<8x128xf32>
    %96 = arith.mulf %80, %88 : vector<8x128xf32>
    %97 = arith.addf %95, %96 : vector<8x128xf32>
    %98 = math.tanh %97 : vector<8x128xf32>
    %99 = arith.mulf %94, %98 : vector<8x128xf32>
    %100 = tpu.concatenate %10, %99, %69 in 1 : vector<8x128xf32>, vector<8x128xf32>, vector<8x128xf32> -> vector<8x384xf32>
    %cst_26 = arith.constant dense<0.000000e+00> : vector<8x512xf32>
    %101 = tpu.matmul %100, %8, %cst_26 {dimension_numbers = #tpu.dot_dimension_numbers<[1], [0], [0], [1], [0, 0, 1, 1], [], []>} : vector<8x384xf32>, vector<384x512xf32>, vector<8x512xf32> -> vector<8x512xf32>
    %102 = vector.broadcast %9 : vector<1x512xf32> to vector<8x512xf32>
    %103 = arith.addf %101, %102 : vector<8x512xf32>
    %104 = vector.extract_strided_slice %103 {offsets = [0, 0], sizes = [8, 128], strides = [1, 1]} : vector<8x512xf32> to vector<8x128xf32>
    %105 = arith.negf %104 : vector<8x128xf32>
    %106 = math.exp %105 : vector<8x128xf32>
    %cst_27 = arith.constant 1.000000e+00 : f32
    %107 = vector.broadcast %cst_27 : f32 to vector<8x128xf32>
    %108 = arith.addf %107, %106 : vector<8x128xf32>
    %109 = arith.divf %107, %108 : vector<8x128xf32>
    %110 = vector.extract_strided_slice %103 {offsets = [0, 128], sizes = [8, 128], strides = [1, 1]} : vector<8x512xf32> to vector<8x128xf32>
    %111 = arith.negf %110 : vector<8x128xf32>
    %112 = math.exp %111 : vector<8x128xf32>
    %cst_28 = arith.constant 1.000000e+00 : f32
    %113 = vector.broadcast %cst_28 : f32 to vector<8x128xf32>
    %114 = arith.addf %113, %112 : vector<8x128xf32>
    %115 = arith.divf %113, %114 : vector<8x128xf32>
    %116 = vector.extract_strided_slice %103 {offsets = [0, 256], sizes = [8, 128], strides = [1, 1]} : vector<8x512xf32> to vector<8x128xf32>
    %117 = math.tanh %116 : vector<8x128xf32>
    %118 = vector.extract_strided_slice %103 {offsets = [0, 384], sizes = [8, 128], strides = [1, 1]} : vector<8x512xf32> to vector<8x128xf32>
    %119 = arith.negf %118 : vector<8x128xf32>
    %120 = math.exp %119 : vector<8x128xf32>
    %cst_29 = arith.constant 1.000000e+00 : f32
    %121 = vector.broadcast %cst_29 : f32 to vector<8x128xf32>
    %122 = arith.addf %121, %120 : vector<8x128xf32>
    %123 = arith.divf %121, %122 : vector<8x128xf32>
    %124 = arith.mulf %115, %67 : vector<8x128xf32>
    %125 = arith.mulf %109, %117 : vector<8x128xf32>
    %126 = arith.addf %124, %125 : vector<8x128xf32>
    %127 = math.tanh %126 : vector<8x128xf32>
    %128 = arith.mulf %123, %127 : vector<8x128xf32>
    %129 = vector.extract_strided_slice %5 {offsets = [16, 0], sizes = [8, 128], strides = [1, 1]} : vector<64x128xf32> to vector<8x128xf32>
    %130 = tpu.concatenate %129, %99 in 1 : vector<8x128xf32>, vector<8x128xf32> -> vector<8x256xf32>
    %cst_30 = arith.constant dense<0.000000e+00> : vector<8x512xf32>
    %131 = tpu.matmul %130, %6, %cst_30 {dimension_numbers = #tpu.dot_dimension_numbers<[1], [0], [0], [1], [0, 0, 1, 1], [], []>} : vector<8x256xf32>, vector<256x512xf32>, vector<8x512xf32> -> vector<8x512xf32>
    %132 = vector.broadcast %7 : vector<1x512xf32> to vector<8x512xf32>
    %133 = arith.addf %131, %132 : vector<8x512xf32>
    %134 = vector.extract_strided_slice %133 {offsets = [0, 0], sizes = [8, 128], strides = [1, 1]} : vector<8x512xf32> to vector<8x128xf32>
    %135 = arith.negf %134 : vector<8x128xf32>
    %136 = math.exp %135 : vector<8x128xf32>
    %cst_31 = arith.constant 1.000000e+00 : f32
    %137 = vector.broadcast %cst_31 : f32 to vector<8x128xf32>
    %138 = arith.addf %137, %136 : vector<8x128xf32>
    %139 = arith.divf %137, %138 : vector<8x128xf32>
    %140 = vector.extract_strided_slice %133 {offsets = [0, 128], sizes = [8, 128], strides = [1, 1]} : vector<8x512xf32> to vector<8x128xf32>
    %141 = arith.negf %140 : vector<8x128xf32>
    %142 = math.exp %141 : vector<8x128xf32>
    %cst_32 = arith.constant 1.000000e+00 : f32
    %143 = vector.broadcast %cst_32 : f32 to vector<8x128xf32>
    %144 = arith.addf %143, %142 : vector<8x128xf32>
    %145 = arith.divf %143, %144 : vector<8x128xf32>
    %146 = vector.extract_strided_slice %133 {offsets = [0, 256], sizes = [8, 128], strides = [1, 1]} : vector<8x512xf32> to vector<8x128xf32>
    %147 = math.tanh %146 : vector<8x128xf32>
    %148 = vector.extract_strided_slice %133 {offsets = [0, 384], sizes = [8, 128], strides = [1, 1]} : vector<8x512xf32> to vector<8x128xf32>
    %149 = arith.negf %148 : vector<8x128xf32>
    %150 = math.exp %149 : vector<8x128xf32>
    %cst_33 = arith.constant 1.000000e+00 : f32
    %151 = vector.broadcast %cst_33 : f32 to vector<8x128xf32>
    %152 = arith.addf %151, %150 : vector<8x128xf32>
    %153 = arith.divf %151, %152 : vector<8x128xf32>
    %154 = arith.mulf %145, %97 : vector<8x128xf32>
    %155 = arith.mulf %139, %147 : vector<8x128xf32>
    %156 = arith.addf %154, %155 : vector<8x128xf32>
    %157 = math.tanh %156 : vector<8x128xf32>
    %158 = arith.mulf %153, %157 : vector<8x128xf32>
    %159 = tpu.concatenate %10, %158, %128 in 1 : vector<8x128xf32>, vector<8x128xf32>, vector<8x128xf32> -> vector<8x384xf32>
    %cst_34 = arith.constant dense<0.000000e+00> : vector<8x512xf32>
    %160 = tpu.matmul %159, %8, %cst_34 {dimension_numbers = #tpu.dot_dimension_numbers<[1], [0], [0], [1], [0, 0, 1, 1], [], []>} : vector<8x384xf32>, vector<384x512xf32>, vector<8x512xf32> -> vector<8x512xf32>
    %161 = vector.broadcast %9 : vector<1x512xf32> to vector<8x512xf32>
    %162 = arith.addf %160, %161 : vector<8x512xf32>
    %163 = vector.extract_strided_slice %162 {offsets = [0, 0], sizes = [8, 128], strides = [1, 1]} : vector<8x512xf32> to vector<8x128xf32>
    %164 = arith.negf %163 : vector<8x128xf32>
    %165 = math.exp %164 : vector<8x128xf32>
    %cst_35 = arith.constant 1.000000e+00 : f32
    %166 = vector.broadcast %cst_35 : f32 to vector<8x128xf32>
    %167 = arith.addf %166, %165 : vector<8x128xf32>
    %168 = arith.divf %166, %167 : vector<8x128xf32>
    %169 = vector.extract_strided_slice %162 {offsets = [0, 128], sizes = [8, 128], strides = [1, 1]} : vector<8x512xf32> to vector<8x128xf32>
    %170 = arith.negf %169 : vector<8x128xf32>
    %171 = math.exp %170 : vector<8x128xf32>
    %cst_36 = arith.constant 1.000000e+00 : f32
    %172 = vector.broadcast %cst_36 : f32 to vector<8x128xf32>
    %173 = arith.addf %172, %171 : vector<8x128xf32>
    %174 = arith.divf %172, %173 : vector<8x128xf32>
    %175 = vector.extract_strided_slice %162 {offsets = [0, 256], sizes = [8, 128], strides = [1, 1]} : vector<8x512xf32> to vector<8x128xf32>
    %176 = math.tanh %175 : vector<8x128xf32>
    %177 = vector.extract_strided_slice %162 {offsets = [0, 384], sizes = [8, 128], strides = [1, 1]} : vector<8x512xf32> to vector<8x128xf32>
    %178 = arith.negf %177 : vector<8x128xf32>
    %179 = math.exp %178 : vector<8x128xf32>
    %cst_37 = arith.constant 1.000000e+00 : f32
    %180 = vector.broadcast %cst_37 : f32 to vector<8x128xf32>
    %181 = arith.addf %180, %179 : vector<8x128xf32>
    %182 = arith.divf %180, %181 : vector<8x128xf32>
    %183 = arith.mulf %174, %126 : vector<8x128xf32>
    %184 = arith.mulf %168, %176 : vector<8x128xf32>
    %185 = arith.addf %183, %184 : vector<8x128xf32>
    %186 = math.tanh %185 : vector<8x128xf32>
    %187 = arith.mulf %182, %186 : vector<8x128xf32>
    %188 = vector.extract_strided_slice %5 {offsets = [24, 0], sizes = [8, 128], strides = [1, 1]} : vector<64x128xf32> to vector<8x128xf32>
    %189 = tpu.concatenate %188, %158 in 1 : vector<8x128xf32>, vector<8x128xf32> -> vector<8x256xf32>
    %cst_38 = arith.constant dense<0.000000e+00> : vector<8x512xf32>
    %190 = tpu.matmul %189, %6, %cst_38 {dimension_numbers = #tpu.dot_dimension_numbers<[1], [0], [0], [1], [0, 0, 1, 1], [], []>} : vector<8x256xf32>, vector<256x512xf32>, vector<8x512xf32> -> vector<8x512xf32>
    %191 = vector.broadcast %7 : vector<1x512xf32> to vector<8x512xf32>
    %192 = arith.addf %190, %191 : vector<8x512xf32>
    %193 = vector.extract_strided_slice %192 {offsets = [0, 0], sizes = [8, 128], strides = [1, 1]} : vector<8x512xf32> to vector<8x128xf32>
    %194 = arith.negf %193 : vector<8x128xf32>
    %195 = math.exp %194 : vector<8x128xf32>
    %cst_39 = arith.constant 1.000000e+00 : f32
    %196 = vector.broadcast %cst_39 : f32 to vector<8x128xf32>
    %197 = arith.addf %196, %195 : vector<8x128xf32>
    %198 = arith.divf %196, %197 : vector<8x128xf32>
    %199 = vector.extract_strided_slice %192 {offsets = [0, 128], sizes = [8, 128], strides = [1, 1]} : vector<8x512xf32> to vector<8x128xf32>
    %200 = arith.negf %199 : vector<8x128xf32>
    %201 = math.exp %200 : vector<8x128xf32>
    %cst_40 = arith.constant 1.000000e+00 : f32
    %202 = vector.broadcast %cst_40 : f32 to vector<8x128xf32>
    %203 = arith.addf %202, %201 : vector<8x128xf32>
    %204 = arith.divf %202, %203 : vector<8x128xf32>
    %205 = vector.extract_strided_slice %192 {offsets = [0, 256], sizes = [8, 128], strides = [1, 1]} : vector<8x512xf32> to vector<8x128xf32>
    %206 = math.tanh %205 : vector<8x128xf32>
    %207 = vector.extract_strided_slice %192 {offsets = [0, 384], sizes = [8, 128], strides = [1, 1]} : vector<8x512xf32> to vector<8x128xf32>
    %208 = arith.negf %207 : vector<8x128xf32>
    %209 = math.exp %208 : vector<8x128xf32>
    %cst_41 = arith.constant 1.000000e+00 : f32
    %210 = vector.broadcast %cst_41 : f32 to vector<8x128xf32>
    %211 = arith.addf %210, %209 : vector<8x128xf32>
    %212 = arith.divf %210, %211 : vector<8x128xf32>
    %213 = arith.mulf %204, %156 : vector<8x128xf32>
    %214 = arith.mulf %198, %206 : vector<8x128xf32>
    %215 = arith.addf %213, %214 : vector<8x128xf32>
    %216 = math.tanh %215 : vector<8x128xf32>
    %217 = arith.mulf %212, %216 : vector<8x128xf32>
    %218 = tpu.concatenate %10, %217, %187 in 1 : vector<8x128xf32>, vector<8x128xf32>, vector<8x128xf32> -> vector<8x384xf32>
    %cst_42 = arith.constant dense<0.000000e+00> : vector<8x512xf32>
    %219 = tpu.matmul %218, %8, %cst_42 {dimension_numbers = #tpu.dot_dimension_numbers<[1], [0], [0], [1], [0, 0, 1, 1], [], []>} : vector<8x384xf32>, vector<384x512xf32>, vector<8x512xf32> -> vector<8x512xf32>
    %220 = vector.broadcast %9 : vector<1x512xf32> to vector<8x512xf32>
    %221 = arith.addf %219, %220 : vector<8x512xf32>
    %222 = vector.extract_strided_slice %221 {offsets = [0, 0], sizes = [8, 128], strides = [1, 1]} : vector<8x512xf32> to vector<8x128xf32>
    %223 = arith.negf %222 : vector<8x128xf32>
    %224 = math.exp %223 : vector<8x128xf32>
    %cst_43 = arith.constant 1.000000e+00 : f32
    %225 = vector.broadcast %cst_43 : f32 to vector<8x128xf32>
    %226 = arith.addf %225, %224 : vector<8x128xf32>
    %227 = arith.divf %225, %226 : vector<8x128xf32>
    %228 = vector.extract_strided_slice %221 {offsets = [0, 128], sizes = [8, 128], strides = [1, 1]} : vector<8x512xf32> to vector<8x128xf32>
    %229 = arith.negf %228 : vector<8x128xf32>
    %230 = math.exp %229 : vector<8x128xf32>
    %cst_44 = arith.constant 1.000000e+00 : f32
    %231 = vector.broadcast %cst_44 : f32 to vector<8x128xf32>
    %232 = arith.addf %231, %230 : vector<8x128xf32>
    %233 = arith.divf %231, %232 : vector<8x128xf32>
    %234 = vector.extract_strided_slice %221 {offsets = [0, 256], sizes = [8, 128], strides = [1, 1]} : vector<8x512xf32> to vector<8x128xf32>
    %235 = math.tanh %234 : vector<8x128xf32>
    %236 = vector.extract_strided_slice %221 {offsets = [0, 384], sizes = [8, 128], strides = [1, 1]} : vector<8x512xf32> to vector<8x128xf32>
    %237 = arith.negf %236 : vector<8x128xf32>
    %238 = math.exp %237 : vector<8x128xf32>
    %cst_45 = arith.constant 1.000000e+00 : f32
    %239 = vector.broadcast %cst_45 : f32 to vector<8x128xf32>
    %240 = arith.addf %239, %238 : vector<8x128xf32>
    %241 = arith.divf %239, %240 : vector<8x128xf32>
    %242 = arith.mulf %233, %185 : vector<8x128xf32>
    %243 = arith.mulf %227, %235 : vector<8x128xf32>
    %244 = arith.addf %242, %243 : vector<8x128xf32>
    %245 = math.tanh %244 : vector<8x128xf32>
    %246 = arith.mulf %241, %245 : vector<8x128xf32>
    %247 = vector.extract_strided_slice %5 {offsets = [32, 0], sizes = [8, 128], strides = [1, 1]} : vector<64x128xf32> to vector<8x128xf32>
    %248 = tpu.concatenate %247, %217 in 1 : vector<8x128xf32>, vector<8x128xf32> -> vector<8x256xf32>
    %cst_46 = arith.constant dense<0.000000e+00> : vector<8x512xf32>
    %249 = tpu.matmul %248, %6, %cst_46 {dimension_numbers = #tpu.dot_dimension_numbers<[1], [0], [0], [1], [0, 0, 1, 1], [], []>} : vector<8x256xf32>, vector<256x512xf32>, vector<8x512xf32> -> vector<8x512xf32>
    %250 = vector.broadcast %7 : vector<1x512xf32> to vector<8x512xf32>
    %251 = arith.addf %249, %250 : vector<8x512xf32>
    %252 = vector.extract_strided_slice %251 {offsets = [0, 0], sizes = [8, 128], strides = [1, 1]} : vector<8x512xf32> to vector<8x128xf32>
    %253 = arith.negf %252 : vector<8x128xf32>
    %254 = math.exp %253 : vector<8x128xf32>
    %cst_47 = arith.constant 1.000000e+00 : f32
    %255 = vector.broadcast %cst_47 : f32 to vector<8x128xf32>
    %256 = arith.addf %255, %254 : vector<8x128xf32>
    %257 = arith.divf %255, %256 : vector<8x128xf32>
    %258 = vector.extract_strided_slice %251 {offsets = [0, 128], sizes = [8, 128], strides = [1, 1]} : vector<8x512xf32> to vector<8x128xf32>
    %259 = arith.negf %258 : vector<8x128xf32>
    %260 = math.exp %259 : vector<8x128xf32>
    %cst_48 = arith.constant 1.000000e+00 : f32
    %261 = vector.broadcast %cst_48 : f32 to vector<8x128xf32>
    %262 = arith.addf %261, %260 : vector<8x128xf32>
    %263 = arith.divf %261, %262 : vector<8x128xf32>
    %264 = vector.extract_strided_slice %251 {offsets = [0, 256], sizes = [8, 128], strides = [1, 1]} : vector<8x512xf32> to vector<8x128xf32>
    %265 = math.tanh %264 : vector<8x128xf32>
    %266 = vector.extract_strided_slice %251 {offsets = [0, 384], sizes = [8, 128], strides = [1, 1]} : vector<8x512xf32> to vector<8x128xf32>
    %267 = arith.negf %266 : vector<8x128xf32>
    %268 = math.exp %267 : vector<8x128xf32>
    %cst_49 = arith.constant 1.000000e+00 : f32
    %269 = vector.broadcast %cst_49 : f32 to vector<8x128xf32>
    %270 = arith.addf %269, %268 : vector<8x128xf32>
    %271 = arith.divf %269, %270 : vector<8x128xf32>
    %272 = arith.mulf %263, %215 : vector<8x128xf32>
    %273 = arith.mulf %257, %265 : vector<8x128xf32>
    %274 = arith.addf %272, %273 : vector<8x128xf32>
    %275 = math.tanh %274 : vector<8x128xf32>
    %276 = arith.mulf %271, %275 : vector<8x128xf32>
    %277 = tpu.concatenate %10, %276, %246 in 1 : vector<8x128xf32>, vector<8x128xf32>, vector<8x128xf32> -> vector<8x384xf32>
    %cst_50 = arith.constant dense<0.000000e+00> : vector<8x512xf32>
    %278 = tpu.matmul %277, %8, %cst_50 {dimension_numbers = #tpu.dot_dimension_numbers<[1], [0], [0], [1], [0, 0, 1, 1], [], []>} : vector<8x384xf32>, vector<384x512xf32>, vector<8x512xf32> -> vector<8x512xf32>
    %279 = vector.broadcast %9 : vector<1x512xf32> to vector<8x512xf32>
    %280 = arith.addf %278, %279 : vector<8x512xf32>
    %281 = vector.extract_strided_slice %280 {offsets = [0, 0], sizes = [8, 128], strides = [1, 1]} : vector<8x512xf32> to vector<8x128xf32>
    %282 = arith.negf %281 : vector<8x128xf32>
    %283 = math.exp %282 : vector<8x128xf32>
    %cst_51 = arith.constant 1.000000e+00 : f32
    %284 = vector.broadcast %cst_51 : f32 to vector<8x128xf32>
    %285 = arith.addf %284, %283 : vector<8x128xf32>
    %286 = arith.divf %284, %285 : vector<8x128xf32>
    %287 = vector.extract_strided_slice %280 {offsets = [0, 128], sizes = [8, 128], strides = [1, 1]} : vector<8x512xf32> to vector<8x128xf32>
    %288 = arith.negf %287 : vector<8x128xf32>
    %289 = math.exp %288 : vector<8x128xf32>
    %cst_52 = arith.constant 1.000000e+00 : f32
    %290 = vector.broadcast %cst_52 : f32 to vector<8x128xf32>
    %291 = arith.addf %290, %289 : vector<8x128xf32>
    %292 = arith.divf %290, %291 : vector<8x128xf32>
    %293 = vector.extract_strided_slice %280 {offsets = [0, 256], sizes = [8, 128], strides = [1, 1]} : vector<8x512xf32> to vector<8x128xf32>
    %294 = math.tanh %293 : vector<8x128xf32>
    %295 = vector.extract_strided_slice %280 {offsets = [0, 384], sizes = [8, 128], strides = [1, 1]} : vector<8x512xf32> to vector<8x128xf32>
    %296 = arith.negf %295 : vector<8x128xf32>
    %297 = math.exp %296 : vector<8x128xf32>
    %cst_53 = arith.constant 1.000000e+00 : f32
    %298 = vector.broadcast %cst_53 : f32 to vector<8x128xf32>
    %299 = arith.addf %298, %297 : vector<8x128xf32>
    %300 = arith.divf %298, %299 : vector<8x128xf32>
    %301 = arith.mulf %292, %244 : vector<8x128xf32>
    %302 = arith.mulf %286, %294 : vector<8x128xf32>
    %303 = arith.addf %301, %302 : vector<8x128xf32>
    %304 = math.tanh %303 : vector<8x128xf32>
    %305 = arith.mulf %300, %304 : vector<8x128xf32>
    %306 = vector.extract_strided_slice %5 {offsets = [40, 0], sizes = [8, 128], strides = [1, 1]} : vector<64x128xf32> to vector<8x128xf32>
    %307 = tpu.concatenate %306, %276 in 1 : vector<8x128xf32>, vector<8x128xf32> -> vector<8x256xf32>
    %cst_54 = arith.constant dense<0.000000e+00> : vector<8x512xf32>
    %308 = tpu.matmul %307, %6, %cst_54 {dimension_numbers = #tpu.dot_dimension_numbers<[1], [0], [0], [1], [0, 0, 1, 1], [], []>} : vector<8x256xf32>, vector<256x512xf32>, vector<8x512xf32> -> vector<8x512xf32>
    %309 = vector.broadcast %7 : vector<1x512xf32> to vector<8x512xf32>
    %310 = arith.addf %308, %309 : vector<8x512xf32>
    %311 = vector.extract_strided_slice %310 {offsets = [0, 0], sizes = [8, 128], strides = [1, 1]} : vector<8x512xf32> to vector<8x128xf32>
    %312 = arith.negf %311 : vector<8x128xf32>
    %313 = math.exp %312 : vector<8x128xf32>
    %cst_55 = arith.constant 1.000000e+00 : f32
    %314 = vector.broadcast %cst_55 : f32 to vector<8x128xf32>
    %315 = arith.addf %314, %313 : vector<8x128xf32>
    %316 = arith.divf %314, %315 : vector<8x128xf32>
    %317 = vector.extract_strided_slice %310 {offsets = [0, 128], sizes = [8, 128], strides = [1, 1]} : vector<8x512xf32> to vector<8x128xf32>
    %318 = arith.negf %317 : vector<8x128xf32>
    %319 = math.exp %318 : vector<8x128xf32>
    %cst_56 = arith.constant 1.000000e+00 : f32
    %320 = vector.broadcast %cst_56 : f32 to vector<8x128xf32>
    %321 = arith.addf %320, %319 : vector<8x128xf32>
    %322 = arith.divf %320, %321 : vector<8x128xf32>
    %323 = vector.extract_strided_slice %310 {offsets = [0, 256], sizes = [8, 128], strides = [1, 1]} : vector<8x512xf32> to vector<8x128xf32>
    %324 = math.tanh %323 : vector<8x128xf32>
    %325 = vector.extract_strided_slice %310 {offsets = [0, 384], sizes = [8, 128], strides = [1, 1]} : vector<8x512xf32> to vector<8x128xf32>
    %326 = arith.negf %325 : vector<8x128xf32>
    %327 = math.exp %326 : vector<8x128xf32>
    %cst_57 = arith.constant 1.000000e+00 : f32
    %328 = vector.broadcast %cst_57 : f32 to vector<8x128xf32>
    %329 = arith.addf %328, %327 : vector<8x128xf32>
    %330 = arith.divf %328, %329 : vector<8x128xf32>
    %331 = arith.mulf %322, %274 : vector<8x128xf32>
    %332 = arith.mulf %316, %324 : vector<8x128xf32>
    %333 = arith.addf %331, %332 : vector<8x128xf32>
    %334 = math.tanh %333 : vector<8x128xf32>
    %335 = arith.mulf %330, %334 : vector<8x128xf32>
    %336 = tpu.concatenate %10, %335, %305 in 1 : vector<8x128xf32>, vector<8x128xf32>, vector<8x128xf32> -> vector<8x384xf32>
    %cst_58 = arith.constant dense<0.000000e+00> : vector<8x512xf32>
    %337 = tpu.matmul %336, %8, %cst_58 {dimension_numbers = #tpu.dot_dimension_numbers<[1], [0], [0], [1], [0, 0, 1, 1], [], []>} : vector<8x384xf32>, vector<384x512xf32>, vector<8x512xf32> -> vector<8x512xf32>
    %338 = vector.broadcast %9 : vector<1x512xf32> to vector<8x512xf32>
    %339 = arith.addf %337, %338 : vector<8x512xf32>
    %340 = vector.extract_strided_slice %339 {offsets = [0, 0], sizes = [8, 128], strides = [1, 1]} : vector<8x512xf32> to vector<8x128xf32>
    %341 = arith.negf %340 : vector<8x128xf32>
    %342 = math.exp %341 : vector<8x128xf32>
    %cst_59 = arith.constant 1.000000e+00 : f32
    %343 = vector.broadcast %cst_59 : f32 to vector<8x128xf32>
    %344 = arith.addf %343, %342 : vector<8x128xf32>
    %345 = arith.divf %343, %344 : vector<8x128xf32>
    %346 = vector.extract_strided_slice %339 {offsets = [0, 128], sizes = [8, 128], strides = [1, 1]} : vector<8x512xf32> to vector<8x128xf32>
    %347 = arith.negf %346 : vector<8x128xf32>
    %348 = math.exp %347 : vector<8x128xf32>
    %cst_60 = arith.constant 1.000000e+00 : f32
    %349 = vector.broadcast %cst_60 : f32 to vector<8x128xf32>
    %350 = arith.addf %349, %348 : vector<8x128xf32>
    %351 = arith.divf %349, %350 : vector<8x128xf32>
    %352 = vector.extract_strided_slice %339 {offsets = [0, 256], sizes = [8, 128], strides = [1, 1]} : vector<8x512xf32> to vector<8x128xf32>
    %353 = math.tanh %352 : vector<8x128xf32>
    %354 = vector.extract_strided_slice %339 {offsets = [0, 384], sizes = [8, 128], strides = [1, 1]} : vector<8x512xf32> to vector<8x128xf32>
    %355 = arith.negf %354 : vector<8x128xf32>
    %356 = math.exp %355 : vector<8x128xf32>
    %cst_61 = arith.constant 1.000000e+00 : f32
    %357 = vector.broadcast %cst_61 : f32 to vector<8x128xf32>
    %358 = arith.addf %357, %356 : vector<8x128xf32>
    %359 = arith.divf %357, %358 : vector<8x128xf32>
    %360 = arith.mulf %351, %303 : vector<8x128xf32>
    %361 = arith.mulf %345, %353 : vector<8x128xf32>
    %362 = arith.addf %360, %361 : vector<8x128xf32>
    %363 = math.tanh %362 : vector<8x128xf32>
    %364 = arith.mulf %359, %363 : vector<8x128xf32>
    %365 = vector.extract_strided_slice %5 {offsets = [48, 0], sizes = [8, 128], strides = [1, 1]} : vector<64x128xf32> to vector<8x128xf32>
    %366 = tpu.concatenate %365, %335 in 1 : vector<8x128xf32>, vector<8x128xf32> -> vector<8x256xf32>
    %cst_62 = arith.constant dense<0.000000e+00> : vector<8x512xf32>
    %367 = tpu.matmul %366, %6, %cst_62 {dimension_numbers = #tpu.dot_dimension_numbers<[1], [0], [0], [1], [0, 0, 1, 1], [], []>} : vector<8x256xf32>, vector<256x512xf32>, vector<8x512xf32> -> vector<8x512xf32>
    %368 = vector.broadcast %7 : vector<1x512xf32> to vector<8x512xf32>
    %369 = arith.addf %367, %368 : vector<8x512xf32>
    %370 = vector.extract_strided_slice %369 {offsets = [0, 0], sizes = [8, 128], strides = [1, 1]} : vector<8x512xf32> to vector<8x128xf32>
    %371 = arith.negf %370 : vector<8x128xf32>
    %372 = math.exp %371 : vector<8x128xf32>
    %cst_63 = arith.constant 1.000000e+00 : f32
    %373 = vector.broadcast %cst_63 : f32 to vector<8x128xf32>
    %374 = arith.addf %373, %372 : vector<8x128xf32>
    %375 = arith.divf %373, %374 : vector<8x128xf32>
    %376 = vector.extract_strided_slice %369 {offsets = [0, 128], sizes = [8, 128], strides = [1, 1]} : vector<8x512xf32> to vector<8x128xf32>
    %377 = arith.negf %376 : vector<8x128xf32>
    %378 = math.exp %377 : vector<8x128xf32>
    %cst_64 = arith.constant 1.000000e+00 : f32
    %379 = vector.broadcast %cst_64 : f32 to vector<8x128xf32>
    %380 = arith.addf %379, %378 : vector<8x128xf32>
    %381 = arith.divf %379, %380 : vector<8x128xf32>
    %382 = vector.extract_strided_slice %369 {offsets = [0, 256], sizes = [8, 128], strides = [1, 1]} : vector<8x512xf32> to vector<8x128xf32>
    %383 = math.tanh %382 : vector<8x128xf32>
    %384 = vector.extract_strided_slice %369 {offsets = [0, 384], sizes = [8, 128], strides = [1, 1]} : vector<8x512xf32> to vector<8x128xf32>
    %385 = arith.negf %384 : vector<8x128xf32>
    %386 = math.exp %385 : vector<8x128xf32>
    %cst_65 = arith.constant 1.000000e+00 : f32
    %387 = vector.broadcast %cst_65 : f32 to vector<8x128xf32>
    %388 = arith.addf %387, %386 : vector<8x128xf32>
    %389 = arith.divf %387, %388 : vector<8x128xf32>
    %390 = arith.mulf %381, %333 : vector<8x128xf32>
    %391 = arith.mulf %375, %383 : vector<8x128xf32>
    %392 = arith.addf %390, %391 : vector<8x128xf32>
    %393 = math.tanh %392 : vector<8x128xf32>
    %394 = arith.mulf %389, %393 : vector<8x128xf32>
    %395 = tpu.concatenate %10, %394, %364 in 1 : vector<8x128xf32>, vector<8x128xf32>, vector<8x128xf32> -> vector<8x384xf32>
    %cst_66 = arith.constant dense<0.000000e+00> : vector<8x512xf32>
    %396 = tpu.matmul %395, %8, %cst_66 {dimension_numbers = #tpu.dot_dimension_numbers<[1], [0], [0], [1], [0, 0, 1, 1], [], []>} : vector<8x384xf32>, vector<384x512xf32>, vector<8x512xf32> -> vector<8x512xf32>
    %397 = vector.broadcast %9 : vector<1x512xf32> to vector<8x512xf32>
    %398 = arith.addf %396, %397 : vector<8x512xf32>
    %399 = vector.extract_strided_slice %398 {offsets = [0, 0], sizes = [8, 128], strides = [1, 1]} : vector<8x512xf32> to vector<8x128xf32>
    %400 = arith.negf %399 : vector<8x128xf32>
    %401 = math.exp %400 : vector<8x128xf32>
    %cst_67 = arith.constant 1.000000e+00 : f32
    %402 = vector.broadcast %cst_67 : f32 to vector<8x128xf32>
    %403 = arith.addf %402, %401 : vector<8x128xf32>
    %404 = arith.divf %402, %403 : vector<8x128xf32>
    %405 = vector.extract_strided_slice %398 {offsets = [0, 128], sizes = [8, 128], strides = [1, 1]} : vector<8x512xf32> to vector<8x128xf32>
    %406 = arith.negf %405 : vector<8x128xf32>
    %407 = math.exp %406 : vector<8x128xf32>
    %cst_68 = arith.constant 1.000000e+00 : f32
    %408 = vector.broadcast %cst_68 : f32 to vector<8x128xf32>
    %409 = arith.addf %408, %407 : vector<8x128xf32>
    %410 = arith.divf %408, %409 : vector<8x128xf32>
    %411 = vector.extract_strided_slice %398 {offsets = [0, 256], sizes = [8, 128], strides = [1, 1]} : vector<8x512xf32> to vector<8x128xf32>
    %412 = math.tanh %411 : vector<8x128xf32>
    %413 = vector.extract_strided_slice %398 {offsets = [0, 384], sizes = [8, 128], strides = [1, 1]} : vector<8x512xf32> to vector<8x128xf32>
    %414 = arith.negf %413 : vector<8x128xf32>
    %415 = math.exp %414 : vector<8x128xf32>
    %cst_69 = arith.constant 1.000000e+00 : f32
    %416 = vector.broadcast %cst_69 : f32 to vector<8x128xf32>
    %417 = arith.addf %416, %415 : vector<8x128xf32>
    %418 = arith.divf %416, %417 : vector<8x128xf32>
    %419 = arith.mulf %410, %362 : vector<8x128xf32>
    %420 = arith.mulf %404, %412 : vector<8x128xf32>
    %421 = arith.addf %419, %420 : vector<8x128xf32>
    %422 = math.tanh %421 : vector<8x128xf32>
    %423 = arith.mulf %418, %422 : vector<8x128xf32>
    %424 = vector.extract_strided_slice %5 {offsets = [56, 0], sizes = [8, 128], strides = [1, 1]} : vector<64x128xf32> to vector<8x128xf32>
    %425 = tpu.concatenate %424, %394 in 1 : vector<8x128xf32>, vector<8x128xf32> -> vector<8x256xf32>
    %cst_70 = arith.constant dense<0.000000e+00> : vector<8x512xf32>
    %426 = tpu.matmul %425, %6, %cst_70 {dimension_numbers = #tpu.dot_dimension_numbers<[1], [0], [0], [1], [0, 0, 1, 1], [], []>} : vector<8x256xf32>, vector<256x512xf32>, vector<8x512xf32> -> vector<8x512xf32>
    %427 = vector.broadcast %7 : vector<1x512xf32> to vector<8x512xf32>
    %428 = arith.addf %426, %427 : vector<8x512xf32>
    %429 = vector.extract_strided_slice %428 {offsets = [0, 0], sizes = [8, 128], strides = [1, 1]} : vector<8x512xf32> to vector<8x128xf32>
    %430 = arith.negf %429 : vector<8x128xf32>
    %431 = math.exp %430 : vector<8x128xf32>
    %cst_71 = arith.constant 1.000000e+00 : f32
    %432 = vector.broadcast %cst_71 : f32 to vector<8x128xf32>
    %433 = arith.addf %432, %431 : vector<8x128xf32>
    %434 = arith.divf %432, %433 : vector<8x128xf32>
    %435 = vector.extract_strided_slice %428 {offsets = [0, 128], sizes = [8, 128], strides = [1, 1]} : vector<8x512xf32> to vector<8x128xf32>
    %436 = arith.negf %435 : vector<8x128xf32>
    %437 = math.exp %436 : vector<8x128xf32>
    %cst_72 = arith.constant 1.000000e+00 : f32
    %438 = vector.broadcast %cst_72 : f32 to vector<8x128xf32>
    %439 = arith.addf %438, %437 : vector<8x128xf32>
    %440 = arith.divf %438, %439 : vector<8x128xf32>
    %441 = vector.extract_strided_slice %428 {offsets = [0, 256], sizes = [8, 128], strides = [1, 1]} : vector<8x512xf32> to vector<8x128xf32>
    %442 = math.tanh %441 : vector<8x128xf32>
    %443 = vector.extract_strided_slice %428 {offsets = [0, 384], sizes = [8, 128], strides = [1, 1]} : vector<8x512xf32> to vector<8x128xf32>
    %444 = arith.negf %443 : vector<8x128xf32>
    %445 = math.exp %444 : vector<8x128xf32>
    %cst_73 = arith.constant 1.000000e+00 : f32
    %446 = vector.broadcast %cst_73 : f32 to vector<8x128xf32>
    %447 = arith.addf %446, %445 : vector<8x128xf32>
    %448 = arith.divf %446, %447 : vector<8x128xf32>
    %449 = arith.mulf %440, %392 : vector<8x128xf32>
    %450 = arith.mulf %434, %442 : vector<8x128xf32>
    %451 = arith.addf %449, %450 : vector<8x128xf32>
    %452 = math.tanh %451 : vector<8x128xf32>
    %453 = arith.mulf %448, %452 : vector<8x128xf32>
    %454 = tpu.concatenate %10, %453, %423 in 1 : vector<8x128xf32>, vector<8x128xf32>, vector<8x128xf32> -> vector<8x384xf32>
    %cst_74 = arith.constant dense<0.000000e+00> : vector<8x512xf32>
    %455 = tpu.matmul %454, %8, %cst_74 {dimension_numbers = #tpu.dot_dimension_numbers<[1], [0], [0], [1], [0, 0, 1, 1], [], []>} : vector<8x384xf32>, vector<384x512xf32>, vector<8x512xf32> -> vector<8x512xf32>
    %456 = vector.broadcast %9 : vector<1x512xf32> to vector<8x512xf32>
    %457 = arith.addf %455, %456 : vector<8x512xf32>
    %458 = vector.extract_strided_slice %457 {offsets = [0, 0], sizes = [8, 128], strides = [1, 1]} : vector<8x512xf32> to vector<8x128xf32>
    %459 = arith.negf %458 : vector<8x128xf32>
    %460 = math.exp %459 : vector<8x128xf32>
    %cst_75 = arith.constant 1.000000e+00 : f32
    %461 = vector.broadcast %cst_75 : f32 to vector<8x128xf32>
    %462 = arith.addf %461, %460 : vector<8x128xf32>
    %463 = arith.divf %461, %462 : vector<8x128xf32>
    %464 = vector.extract_strided_slice %457 {offsets = [0, 128], sizes = [8, 128], strides = [1, 1]} : vector<8x512xf32> to vector<8x128xf32>
    %465 = arith.negf %464 : vector<8x128xf32>
    %466 = math.exp %465 : vector<8x128xf32>
    %cst_76 = arith.constant 1.000000e+00 : f32
    %467 = vector.broadcast %cst_76 : f32 to vector<8x128xf32>
    %468 = arith.addf %467, %466 : vector<8x128xf32>
    %469 = arith.divf %467, %468 : vector<8x128xf32>
    %470 = vector.extract_strided_slice %457 {offsets = [0, 256], sizes = [8, 128], strides = [1, 1]} : vector<8x512xf32> to vector<8x128xf32>
    %471 = math.tanh %470 : vector<8x128xf32>
    %472 = vector.extract_strided_slice %457 {offsets = [0, 384], sizes = [8, 128], strides = [1, 1]} : vector<8x512xf32> to vector<8x128xf32>
    %473 = arith.negf %472 : vector<8x128xf32>
    %474 = math.exp %473 : vector<8x128xf32>
    %cst_77 = arith.constant 1.000000e+00 : f32
    %475 = vector.broadcast %cst_77 : f32 to vector<8x128xf32>
    %476 = arith.addf %475, %474 : vector<8x128xf32>
    %477 = arith.divf %475, %476 : vector<8x128xf32>
    %478 = arith.mulf %469, %421 : vector<8x128xf32>
    %479 = arith.mulf %463, %471 : vector<8x128xf32>
    %480 = arith.addf %478, %479 : vector<8x128xf32>
    %481 = math.tanh %480 : vector<8x128xf32>
    %482 = arith.mulf %477, %481 : vector<8x128xf32>
    %483 = tpu.concatenate %10, %453 in 1 : vector<8x128xf32>, vector<8x128xf32> -> vector<8x256xf32>
    %cst_78 = arith.constant dense<0.000000e+00> : vector<8x512xf32>
    %484 = tpu.matmul %483, %6, %cst_78 {dimension_numbers = #tpu.dot_dimension_numbers<[1], [0], [0], [1], [0, 0, 1, 1], [], []>} : vector<8x256xf32>, vector<256x512xf32>, vector<8x512xf32> -> vector<8x512xf32>
    %485 = vector.broadcast %7 : vector<1x512xf32> to vector<8x512xf32>
    %486 = arith.addf %484, %485 : vector<8x512xf32>
    %487 = vector.extract_strided_slice %486 {offsets = [0, 0], sizes = [8, 128], strides = [1, 1]} : vector<8x512xf32> to vector<8x128xf32>
    %488 = arith.negf %487 : vector<8x128xf32>
    %489 = math.exp %488 : vector<8x128xf32>
    %cst_79 = arith.constant 1.000000e+00 : f32
    %490 = vector.broadcast %cst_79 : f32 to vector<8x128xf32>
    %491 = arith.addf %490, %489 : vector<8x128xf32>
    %492 = arith.divf %490, %491 : vector<8x128xf32>
    %493 = vector.extract_strided_slice %486 {offsets = [0, 128], sizes = [8, 128], strides = [1, 1]} : vector<8x512xf32> to vector<8x128xf32>
    %494 = arith.negf %493 : vector<8x128xf32>
    %495 = math.exp %494 : vector<8x128xf32>
    %cst_80 = arith.constant 1.000000e+00 : f32
    %496 = vector.broadcast %cst_80 : f32 to vector<8x128xf32>
    %497 = arith.addf %496, %495 : vector<8x128xf32>
    %498 = arith.divf %496, %497 : vector<8x128xf32>
    %499 = vector.extract_strided_slice %486 {offsets = [0, 256], sizes = [8, 128], strides = [1, 1]} : vector<8x512xf32> to vector<8x128xf32>
    %500 = math.tanh %499 : vector<8x128xf32>
    %501 = vector.extract_strided_slice %486 {offsets = [0, 384], sizes = [8, 128], strides = [1, 1]} : vector<8x512xf32> to vector<8x128xf32>
    %502 = arith.negf %501 : vector<8x128xf32>
    %503 = math.exp %502 : vector<8x128xf32>
    %cst_81 = arith.constant 1.000000e+00 : f32
    %504 = vector.broadcast %cst_81 : f32 to vector<8x128xf32>
    %505 = arith.addf %504, %503 : vector<8x128xf32>
    %506 = arith.divf %504, %505 : vector<8x128xf32>
    %507 = arith.mulf %498, %451 : vector<8x128xf32>
    %508 = arith.mulf %492, %500 : vector<8x128xf32>
    %509 = arith.addf %507, %508 : vector<8x128xf32>
    %510 = math.tanh %509 : vector<8x128xf32>
    %511 = arith.mulf %506, %510 : vector<8x128xf32>
    %c0_82 = arith.constant 0 : index
    %c0_83 = arith.constant 0 : index
    %512 = vector.load %arg1[%c0_82, %c0_83] : memref<40x128xf32, #tpu.memory_space<vmem>>, vector<8x128xf32>
    %513 = tpu.concatenate %512, %511, %482 in 1 : vector<8x128xf32>, vector<8x128xf32>, vector<8x128xf32> -> vector<8x384xf32>
    %cst_84 = arith.constant dense<0.000000e+00> : vector<8x512xf32>
    %514 = tpu.matmul %513, %8, %cst_84 {dimension_numbers = #tpu.dot_dimension_numbers<[1], [0], [0], [1], [0, 0, 1, 1], [], []>} : vector<8x384xf32>, vector<384x512xf32>, vector<8x512xf32> -> vector<8x512xf32>
    %515 = vector.broadcast %9 : vector<1x512xf32> to vector<8x512xf32>
    %516 = arith.addf %514, %515 : vector<8x512xf32>
    %517 = vector.extract_strided_slice %516 {offsets = [0, 0], sizes = [8, 128], strides = [1, 1]} : vector<8x512xf32> to vector<8x128xf32>
    %518 = arith.negf %517 : vector<8x128xf32>
    %519 = math.exp %518 : vector<8x128xf32>
    %cst_85 = arith.constant 1.000000e+00 : f32
    %520 = vector.broadcast %cst_85 : f32 to vector<8x128xf32>
    %521 = arith.addf %520, %519 : vector<8x128xf32>
    %522 = arith.divf %520, %521 : vector<8x128xf32>
    %523 = vector.extract_strided_slice %516 {offsets = [0, 128], sizes = [8, 128], strides = [1, 1]} : vector<8x512xf32> to vector<8x128xf32>
    %524 = arith.negf %523 : vector<8x128xf32>
    %525 = math.exp %524 : vector<8x128xf32>
    %cst_86 = arith.constant 1.000000e+00 : f32
    %526 = vector.broadcast %cst_86 : f32 to vector<8x128xf32>
    %527 = arith.addf %526, %525 : vector<8x128xf32>
    %528 = arith.divf %526, %527 : vector<8x128xf32>
    %529 = vector.extract_strided_slice %516 {offsets = [0, 256], sizes = [8, 128], strides = [1, 1]} : vector<8x512xf32> to vector<8x128xf32>
    %530 = math.tanh %529 : vector<8x128xf32>
    %531 = vector.extract_strided_slice %516 {offsets = [0, 384], sizes = [8, 128], strides = [1, 1]} : vector<8x512xf32> to vector<8x128xf32>
    %532 = arith.negf %531 : vector<8x128xf32>
    %533 = math.exp %532 : vector<8x128xf32>
    %cst_87 = arith.constant 1.000000e+00 : f32
    %534 = vector.broadcast %cst_87 : f32 to vector<8x128xf32>
    %535 = arith.addf %534, %533 : vector<8x128xf32>
    %536 = arith.divf %534, %535 : vector<8x128xf32>
    %537 = arith.mulf %528, %480 : vector<8x128xf32>
    %538 = arith.mulf %522, %530 : vector<8x128xf32>
    %539 = arith.addf %537, %538 : vector<8x128xf32>
    %540 = math.tanh %539 : vector<8x128xf32>
    %541 = arith.mulf %536, %540 : vector<8x128xf32>
    %542 = tpu.concatenate %10, %511 in 1 : vector<8x128xf32>, vector<8x128xf32> -> vector<8x256xf32>
    %cst_88 = arith.constant dense<0.000000e+00> : vector<8x512xf32>
    %543 = tpu.matmul %542, %6, %cst_88 {dimension_numbers = #tpu.dot_dimension_numbers<[1], [0], [0], [1], [0, 0, 1, 1], [], []>} : vector<8x256xf32>, vector<256x512xf32>, vector<8x512xf32> -> vector<8x512xf32>
    %544 = vector.broadcast %7 : vector<1x512xf32> to vector<8x512xf32>
    %545 = arith.addf %543, %544 : vector<8x512xf32>
    %546 = vector.extract_strided_slice %545 {offsets = [0, 0], sizes = [8, 128], strides = [1, 1]} : vector<8x512xf32> to vector<8x128xf32>
    %547 = arith.negf %546 : vector<8x128xf32>
    %548 = math.exp %547 : vector<8x128xf32>
    %cst_89 = arith.constant 1.000000e+00 : f32
    %549 = vector.broadcast %cst_89 : f32 to vector<8x128xf32>
    %550 = arith.addf %549, %548 : vector<8x128xf32>
    %551 = arith.divf %549, %550 : vector<8x128xf32>
    %552 = vector.extract_strided_slice %545 {offsets = [0, 128], sizes = [8, 128], strides = [1, 1]} : vector<8x512xf32> to vector<8x128xf32>
    %553 = arith.negf %552 : vector<8x128xf32>
    %554 = math.exp %553 : vector<8x128xf32>
    %cst_90 = arith.constant 1.000000e+00 : f32
    %555 = vector.broadcast %cst_90 : f32 to vector<8x128xf32>
    %556 = arith.addf %555, %554 : vector<8x128xf32>
    %557 = arith.divf %555, %556 : vector<8x128xf32>
    %558 = vector.extract_strided_slice %545 {offsets = [0, 256], sizes = [8, 128], strides = [1, 1]} : vector<8x512xf32> to vector<8x128xf32>
    %559 = math.tanh %558 : vector<8x128xf32>
    %560 = vector.extract_strided_slice %545 {offsets = [0, 384], sizes = [8, 128], strides = [1, 1]} : vector<8x512xf32> to vector<8x128xf32>
    %561 = arith.negf %560 : vector<8x128xf32>
    %562 = math.exp %561 : vector<8x128xf32>
    %cst_91 = arith.constant 1.000000e+00 : f32
    %563 = vector.broadcast %cst_91 : f32 to vector<8x128xf32>
    %564 = arith.addf %563, %562 : vector<8x128xf32>
    %565 = arith.divf %563, %564 : vector<8x128xf32>
    %566 = arith.mulf %557, %509 : vector<8x128xf32>
    %567 = arith.mulf %551, %559 : vector<8x128xf32>
    %568 = arith.addf %566, %567 : vector<8x128xf32>
    %569 = math.tanh %568 : vector<8x128xf32>
    %570 = arith.mulf %565, %569 : vector<8x128xf32>
    %c8 = arith.constant 8 : index
    %c0_92 = arith.constant 0 : index
    %571 = vector.load %arg1[%c8, %c0_92] : memref<40x128xf32, #tpu.memory_space<vmem>>, vector<8x128xf32>
    %572 = tpu.concatenate %571, %570, %541 in 1 : vector<8x128xf32>, vector<8x128xf32>, vector<8x128xf32> -> vector<8x384xf32>
    %cst_93 = arith.constant dense<0.000000e+00> : vector<8x512xf32>
    %573 = tpu.matmul %572, %8, %cst_93 {dimension_numbers = #tpu.dot_dimension_numbers<[1], [0], [0], [1], [0, 0, 1, 1], [], []>} : vector<8x384xf32>, vector<384x512xf32>, vector<8x512xf32> -> vector<8x512xf32>
    %574 = vector.broadcast %9 : vector<1x512xf32> to vector<8x512xf32>
    %575 = arith.addf %573, %574 : vector<8x512xf32>
    %576 = vector.extract_strided_slice %575 {offsets = [0, 0], sizes = [8, 128], strides = [1, 1]} : vector<8x512xf32> to vector<8x128xf32>
    %577 = arith.negf %576 : vector<8x128xf32>
    %578 = math.exp %577 : vector<8x128xf32>
    %cst_94 = arith.constant 1.000000e+00 : f32
    %579 = vector.broadcast %cst_94 : f32 to vector<8x128xf32>
    %580 = arith.addf %579, %578 : vector<8x128xf32>
    %581 = arith.divf %579, %580 : vector<8x128xf32>
    %582 = vector.extract_strided_slice %575 {offsets = [0, 128], sizes = [8, 128], strides = [1, 1]} : vector<8x512xf32> to vector<8x128xf32>
    %583 = arith.negf %582 : vector<8x128xf32>
    %584 = math.exp %583 : vector<8x128xf32>
    %cst_95 = arith.constant 1.000000e+00 : f32
    %585 = vector.broadcast %cst_95 : f32 to vector<8x128xf32>
    %586 = arith.addf %585, %584 : vector<8x128xf32>
    %587 = arith.divf %585, %586 : vector<8x128xf32>
    %588 = vector.extract_strided_slice %575 {offsets = [0, 256], sizes = [8, 128], strides = [1, 1]} : vector<8x512xf32> to vector<8x128xf32>
    %589 = math.tanh %588 : vector<8x128xf32>
    %590 = vector.extract_strided_slice %575 {offsets = [0, 384], sizes = [8, 128], strides = [1, 1]} : vector<8x512xf32> to vector<8x128xf32>
    %591 = arith.negf %590 : vector<8x128xf32>
    %592 = math.exp %591 : vector<8x128xf32>
    %cst_96 = arith.constant 1.000000e+00 : f32
    %593 = vector.broadcast %cst_96 : f32 to vector<8x128xf32>
    %594 = arith.addf %593, %592 : vector<8x128xf32>
    %595 = arith.divf %593, %594 : vector<8x128xf32>
    %596 = arith.mulf %587, %539 : vector<8x128xf32>
    %597 = arith.mulf %581, %589 : vector<8x128xf32>
    %598 = arith.addf %596, %597 : vector<8x128xf32>
    %599 = math.tanh %598 : vector<8x128xf32>
    %600 = arith.mulf %595, %599 : vector<8x128xf32>
    %601 = tpu.concatenate %10, %570 in 1 : vector<8x128xf32>, vector<8x128xf32> -> vector<8x256xf32>
    %cst_97 = arith.constant dense<0.000000e+00> : vector<8x512xf32>
    %602 = tpu.matmul %601, %6, %cst_97 {dimension_numbers = #tpu.dot_dimension_numbers<[1], [0], [0], [1], [0, 0, 1, 1], [], []>} : vector<8x256xf32>, vector<256x512xf32>, vector<8x512xf32> -> vector<8x512xf32>
    %603 = vector.broadcast %7 : vector<1x512xf32> to vector<8x512xf32>
    %604 = arith.addf %602, %603 : vector<8x512xf32>
    %605 = vector.extract_strided_slice %604 {offsets = [0, 0], sizes = [8, 128], strides = [1, 1]} : vector<8x512xf32> to vector<8x128xf32>
    %606 = arith.negf %605 : vector<8x128xf32>
    %607 = math.exp %606 : vector<8x128xf32>
    %cst_98 = arith.constant 1.000000e+00 : f32
    %608 = vector.broadcast %cst_98 : f32 to vector<8x128xf32>
    %609 = arith.addf %608, %607 : vector<8x128xf32>
    %610 = arith.divf %608, %609 : vector<8x128xf32>
    %611 = vector.extract_strided_slice %604 {offsets = [0, 128], sizes = [8, 128], strides = [1, 1]} : vector<8x512xf32> to vector<8x128xf32>
    %612 = arith.negf %611 : vector<8x128xf32>
    %613 = math.exp %612 : vector<8x128xf32>
    %cst_99 = arith.constant 1.000000e+00 : f32
    %614 = vector.broadcast %cst_99 : f32 to vector<8x128xf32>
    %615 = arith.addf %614, %613 : vector<8x128xf32>
    %616 = arith.divf %614, %615 : vector<8x128xf32>
    %617 = vector.extract_strided_slice %604 {offsets = [0, 256], sizes = [8, 128], strides = [1, 1]} : vector<8x512xf32> to vector<8x128xf32>
    %618 = math.tanh %617 : vector<8x128xf32>
    %619 = vector.extract_strided_slice %604 {offsets = [0, 384], sizes = [8, 128], strides = [1, 1]} : vector<8x512xf32> to vector<8x128xf32>
    %620 = arith.negf %619 : vector<8x128xf32>
    %621 = math.exp %620 : vector<8x128xf32>
    %cst_100 = arith.constant 1.000000e+00 : f32
    %622 = vector.broadcast %cst_100 : f32 to vector<8x128xf32>
    %623 = arith.addf %622, %621 : vector<8x128xf32>
    %624 = arith.divf %622, %623 : vector<8x128xf32>
    %625 = arith.mulf %616, %568 : vector<8x128xf32>
    %626 = arith.mulf %610, %618 : vector<8x128xf32>
    %627 = arith.addf %625, %626 : vector<8x128xf32>
    %628 = math.tanh %627 : vector<8x128xf32>
    %629 = arith.mulf %624, %628 : vector<8x128xf32>
    %c16 = arith.constant 16 : index
    %c0_101 = arith.constant 0 : index
    %630 = vector.load %arg1[%c16, %c0_101] : memref<40x128xf32, #tpu.memory_space<vmem>>, vector<8x128xf32>
    %631 = tpu.concatenate %630, %629, %600 in 1 : vector<8x128xf32>, vector<8x128xf32>, vector<8x128xf32> -> vector<8x384xf32>
    %cst_102 = arith.constant dense<0.000000e+00> : vector<8x512xf32>
    %632 = tpu.matmul %631, %8, %cst_102 {dimension_numbers = #tpu.dot_dimension_numbers<[1], [0], [0], [1], [0, 0, 1, 1], [], []>} : vector<8x384xf32>, vector<384x512xf32>, vector<8x512xf32> -> vector<8x512xf32>
    %633 = vector.broadcast %9 : vector<1x512xf32> to vector<8x512xf32>
    %634 = arith.addf %632, %633 : vector<8x512xf32>
    %635 = vector.extract_strided_slice %634 {offsets = [0, 0], sizes = [8, 128], strides = [1, 1]} : vector<8x512xf32> to vector<8x128xf32>
    %636 = arith.negf %635 : vector<8x128xf32>
    %637 = math.exp %636 : vector<8x128xf32>
    %cst_103 = arith.constant 1.000000e+00 : f32
    %638 = vector.broadcast %cst_103 : f32 to vector<8x128xf32>
    %639 = arith.addf %638, %637 : vector<8x128xf32>
    %640 = arith.divf %638, %639 : vector<8x128xf32>
    %641 = vector.extract_strided_slice %634 {offsets = [0, 128], sizes = [8, 128], strides = [1, 1]} : vector<8x512xf32> to vector<8x128xf32>
    %642 = arith.negf %641 : vector<8x128xf32>
    %643 = math.exp %642 : vector<8x128xf32>
    %cst_104 = arith.constant 1.000000e+00 : f32
    %644 = vector.broadcast %cst_104 : f32 to vector<8x128xf32>
    %645 = arith.addf %644, %643 : vector<8x128xf32>
    %646 = arith.divf %644, %645 : vector<8x128xf32>
    %647 = vector.extract_strided_slice %634 {offsets = [0, 256], sizes = [8, 128], strides = [1, 1]} : vector<8x512xf32> to vector<8x128xf32>
    %648 = math.tanh %647 : vector<8x128xf32>
    %649 = vector.extract_strided_slice %634 {offsets = [0, 384], sizes = [8, 128], strides = [1, 1]} : vector<8x512xf32> to vector<8x128xf32>
    %650 = arith.negf %649 : vector<8x128xf32>
    %651 = math.exp %650 : vector<8x128xf32>
    %cst_105 = arith.constant 1.000000e+00 : f32
    %652 = vector.broadcast %cst_105 : f32 to vector<8x128xf32>
    %653 = arith.addf %652, %651 : vector<8x128xf32>
    %654 = arith.divf %652, %653 : vector<8x128xf32>
    %655 = arith.mulf %646, %598 : vector<8x128xf32>
    %656 = arith.mulf %640, %648 : vector<8x128xf32>
    %657 = arith.addf %655, %656 : vector<8x128xf32>
    %658 = math.tanh %657 : vector<8x128xf32>
    %659 = arith.mulf %654, %658 : vector<8x128xf32>
    %660 = tpu.concatenate %10, %629 in 1 : vector<8x128xf32>, vector<8x128xf32> -> vector<8x256xf32>
    %cst_106 = arith.constant dense<0.000000e+00> : vector<8x512xf32>
    %661 = tpu.matmul %660, %6, %cst_106 {dimension_numbers = #tpu.dot_dimension_numbers<[1], [0], [0], [1], [0, 0, 1, 1], [], []>} : vector<8x256xf32>, vector<256x512xf32>, vector<8x512xf32> -> vector<8x512xf32>
    %662 = vector.broadcast %7 : vector<1x512xf32> to vector<8x512xf32>
    %663 = arith.addf %661, %662 : vector<8x512xf32>
    %664 = vector.extract_strided_slice %663 {offsets = [0, 0], sizes = [8, 128], strides = [1, 1]} : vector<8x512xf32> to vector<8x128xf32>
    %665 = arith.negf %664 : vector<8x128xf32>
    %666 = math.exp %665 : vector<8x128xf32>
    %cst_107 = arith.constant 1.000000e+00 : f32
    %667 = vector.broadcast %cst_107 : f32 to vector<8x128xf32>
    %668 = arith.addf %667, %666 : vector<8x128xf32>
    %669 = arith.divf %667, %668 : vector<8x128xf32>
    %670 = vector.extract_strided_slice %663 {offsets = [0, 128], sizes = [8, 128], strides = [1, 1]} : vector<8x512xf32> to vector<8x128xf32>
    %671 = arith.negf %670 : vector<8x128xf32>
    %672 = math.exp %671 : vector<8x128xf32>
    %cst_108 = arith.constant 1.000000e+00 : f32
    %673 = vector.broadcast %cst_108 : f32 to vector<8x128xf32>
    %674 = arith.addf %673, %672 : vector<8x128xf32>
    %675 = arith.divf %673, %674 : vector<8x128xf32>
    %676 = vector.extract_strided_slice %663 {offsets = [0, 256], sizes = [8, 128], strides = [1, 1]} : vector<8x512xf32> to vector<8x128xf32>
    %677 = math.tanh %676 : vector<8x128xf32>
    %678 = vector.extract_strided_slice %663 {offsets = [0, 384], sizes = [8, 128], strides = [1, 1]} : vector<8x512xf32> to vector<8x128xf32>
    %679 = arith.negf %678 : vector<8x128xf32>
    %680 = math.exp %679 : vector<8x128xf32>
    %cst_109 = arith.constant 1.000000e+00 : f32
    %681 = vector.broadcast %cst_109 : f32 to vector<8x128xf32>
    %682 = arith.addf %681, %680 : vector<8x128xf32>
    %683 = arith.divf %681, %682 : vector<8x128xf32>
    %684 = arith.mulf %675, %627 : vector<8x128xf32>
    %685 = arith.mulf %669, %677 : vector<8x128xf32>
    %686 = arith.addf %684, %685 : vector<8x128xf32>
    %687 = math.tanh %686 : vector<8x128xf32>
    %688 = arith.mulf %683, %687 : vector<8x128xf32>
    %c24 = arith.constant 24 : index
    %c0_110 = arith.constant 0 : index
    %689 = vector.load %arg1[%c24, %c0_110] : memref<40x128xf32, #tpu.memory_space<vmem>>, vector<8x128xf32>
    %690 = tpu.concatenate %689, %688, %659 in 1 : vector<8x128xf32>, vector<8x128xf32>, vector<8x128xf32> -> vector<8x384xf32>
    %cst_111 = arith.constant dense<0.000000e+00> : vector<8x512xf32>
    %691 = tpu.matmul %690, %8, %cst_111 {dimension_numbers = #tpu.dot_dimension_numbers<[1], [0], [0], [1], [0, 0, 1, 1], [], []>} : vector<8x384xf32>, vector<384x512xf32>, vector<8x512xf32> -> vector<8x512xf32>
    %692 = vector.broadcast %9 : vector<1x512xf32> to vector<8x512xf32>
    %693 = arith.addf %691, %692 : vector<8x512xf32>
    %694 = vector.extract_strided_slice %693 {offsets = [0, 0], sizes = [8, 128], strides = [1, 1]} : vector<8x512xf32> to vector<8x128xf32>
    %695 = arith.negf %694 : vector<8x128xf32>
    %696 = math.exp %695 : vector<8x128xf32>
    %cst_112 = arith.constant 1.000000e+00 : f32
    %697 = vector.broadcast %cst_112 : f32 to vector<8x128xf32>
    %698 = arith.addf %697, %696 : vector<8x128xf32>
    %699 = arith.divf %697, %698 : vector<8x128xf32>
    %700 = vector.extract_strided_slice %693 {offsets = [0, 128], sizes = [8, 128], strides = [1, 1]} : vector<8x512xf32> to vector<8x128xf32>
    %701 = arith.negf %700 : vector<8x128xf32>
    %702 = math.exp %701 : vector<8x128xf32>
    %cst_113 = arith.constant 1.000000e+00 : f32
    %703 = vector.broadcast %cst_113 : f32 to vector<8x128xf32>
    %704 = arith.addf %703, %702 : vector<8x128xf32>
    %705 = arith.divf %703, %704 : vector<8x128xf32>
    %706 = vector.extract_strided_slice %693 {offsets = [0, 256], sizes = [8, 128], strides = [1, 1]} : vector<8x512xf32> to vector<8x128xf32>
    %707 = math.tanh %706 : vector<8x128xf32>
    %708 = vector.extract_strided_slice %693 {offsets = [0, 384], sizes = [8, 128], strides = [1, 1]} : vector<8x512xf32> to vector<8x128xf32>
    %709 = arith.negf %708 : vector<8x128xf32>
    %710 = math.exp %709 : vector<8x128xf32>
    %cst_114 = arith.constant 1.000000e+00 : f32
    %711 = vector.broadcast %cst_114 : f32 to vector<8x128xf32>
    %712 = arith.addf %711, %710 : vector<8x128xf32>
    %713 = arith.divf %711, %712 : vector<8x128xf32>
    %714 = arith.mulf %705, %657 : vector<8x128xf32>
    %715 = arith.mulf %699, %707 : vector<8x128xf32>
    %716 = arith.addf %714, %715 : vector<8x128xf32>
    %717 = math.tanh %716 : vector<8x128xf32>
    %718 = arith.mulf %713, %717 : vector<8x128xf32>
    %719 = tpu.concatenate %10, %688 in 1 : vector<8x128xf32>, vector<8x128xf32> -> vector<8x256xf32>
    %cst_115 = arith.constant dense<0.000000e+00> : vector<8x512xf32>
    %720 = tpu.matmul %719, %6, %cst_115 {dimension_numbers = #tpu.dot_dimension_numbers<[1], [0], [0], [1], [0, 0, 1, 1], [], []>} : vector<8x256xf32>, vector<256x512xf32>, vector<8x512xf32> -> vector<8x512xf32>
    %721 = vector.broadcast %7 : vector<1x512xf32> to vector<8x512xf32>
    %722 = arith.addf %720, %721 : vector<8x512xf32>
    %723 = vector.extract_strided_slice %722 {offsets = [0, 0], sizes = [8, 128], strides = [1, 1]} : vector<8x512xf32> to vector<8x128xf32>
    %724 = arith.negf %723 : vector<8x128xf32>
    %725 = math.exp %724 : vector<8x128xf32>
    %cst_116 = arith.constant 1.000000e+00 : f32
    %726 = vector.broadcast %cst_116 : f32 to vector<8x128xf32>
    %727 = arith.addf %726, %725 : vector<8x128xf32>
    %728 = arith.divf %726, %727 : vector<8x128xf32>
    %729 = vector.extract_strided_slice %722 {offsets = [0, 128], sizes = [8, 128], strides = [1, 1]} : vector<8x512xf32> to vector<8x128xf32>
    %730 = arith.negf %729 : vector<8x128xf32>
    %731 = math.exp %730 : vector<8x128xf32>
    %cst_117 = arith.constant 1.000000e+00 : f32
    %732 = vector.broadcast %cst_117 : f32 to vector<8x128xf32>
    %733 = arith.addf %732, %731 : vector<8x128xf32>
    %734 = arith.divf %732, %733 : vector<8x128xf32>
    %735 = vector.extract_strided_slice %722 {offsets = [0, 256], sizes = [8, 128], strides = [1, 1]} : vector<8x512xf32> to vector<8x128xf32>
    %736 = math.tanh %735 : vector<8x128xf32>
    %737 = vector.extract_strided_slice %722 {offsets = [0, 384], sizes = [8, 128], strides = [1, 1]} : vector<8x512xf32> to vector<8x128xf32>
    %738 = arith.negf %737 : vector<8x128xf32>
    %739 = math.exp %738 : vector<8x128xf32>
    %cst_118 = arith.constant 1.000000e+00 : f32
    %740 = vector.broadcast %cst_118 : f32 to vector<8x128xf32>
    %741 = arith.addf %740, %739 : vector<8x128xf32>
    %742 = arith.divf %740, %741 : vector<8x128xf32>
    %743 = arith.mulf %734, %686 : vector<8x128xf32>
    %744 = arith.mulf %728, %736 : vector<8x128xf32>
    %745 = arith.addf %743, %744 : vector<8x128xf32>
    %746 = math.tanh %745 : vector<8x128xf32>
    %747 = arith.mulf %742, %746 : vector<8x128xf32>
    %c32 = arith.constant 32 : index
    %c0_119 = arith.constant 0 : index
    %748 = vector.load %arg1[%c32, %c0_119] : memref<40x128xf32, #tpu.memory_space<vmem>>, vector<8x128xf32>
    %749 = tpu.concatenate %748, %747, %718 in 1 : vector<8x128xf32>, vector<8x128xf32>, vector<8x128xf32> -> vector<8x384xf32>
    %cst_120 = arith.constant dense<0.000000e+00> : vector<8x512xf32>
    %750 = tpu.matmul %749, %8, %cst_120 {dimension_numbers = #tpu.dot_dimension_numbers<[1], [0], [0], [1], [0, 0, 1, 1], [], []>} : vector<8x384xf32>, vector<384x512xf32>, vector<8x512xf32> -> vector<8x512xf32>
    %751 = vector.broadcast %9 : vector<1x512xf32> to vector<8x512xf32>
    %752 = arith.addf %750, %751 : vector<8x512xf32>
    %753 = vector.extract_strided_slice %752 {offsets = [0, 0], sizes = [8, 128], strides = [1, 1]} : vector<8x512xf32> to vector<8x128xf32>
    %754 = arith.negf %753 : vector<8x128xf32>
    %755 = math.exp %754 : vector<8x128xf32>
    %cst_121 = arith.constant 1.000000e+00 : f32
    %756 = vector.broadcast %cst_121 : f32 to vector<8x128xf32>
    %757 = arith.addf %756, %755 : vector<8x128xf32>
    %758 = arith.divf %756, %757 : vector<8x128xf32>
    %759 = vector.extract_strided_slice %752 {offsets = [0, 128], sizes = [8, 128], strides = [1, 1]} : vector<8x512xf32> to vector<8x128xf32>
    %760 = arith.negf %759 : vector<8x128xf32>
    %761 = math.exp %760 : vector<8x128xf32>
    %cst_122 = arith.constant 1.000000e+00 : f32
    %762 = vector.broadcast %cst_122 : f32 to vector<8x128xf32>
    %763 = arith.addf %762, %761 : vector<8x128xf32>
    %764 = arith.divf %762, %763 : vector<8x128xf32>
    %765 = vector.extract_strided_slice %752 {offsets = [0, 256], sizes = [8, 128], strides = [1, 1]} : vector<8x512xf32> to vector<8x128xf32>
    %766 = math.tanh %765 : vector<8x128xf32>
    %767 = vector.extract_strided_slice %752 {offsets = [0, 384], sizes = [8, 128], strides = [1, 1]} : vector<8x512xf32> to vector<8x128xf32>
    %768 = arith.negf %767 : vector<8x128xf32>
    %769 = math.exp %768 : vector<8x128xf32>
    %cst_123 = arith.constant 1.000000e+00 : f32
    %770 = vector.broadcast %cst_123 : f32 to vector<8x128xf32>
    %771 = arith.addf %770, %769 : vector<8x128xf32>
    %772 = arith.divf %770, %771 : vector<8x128xf32>
    %773 = arith.mulf %764, %716 : vector<8x128xf32>
    %774 = arith.mulf %758, %766 : vector<8x128xf32>
    %775 = arith.addf %773, %774 : vector<8x128xf32>
    %776 = math.tanh %775 : vector<8x128xf32>
    %777 = arith.mulf %772, %776 : vector<8x128xf32>
    %778 = tpu.concatenate %541, %600, %659, %718, %777 in 0 : vector<8x128xf32>, vector<8x128xf32>, vector<8x128xf32>, vector<8x128xf32>, vector<8x128xf32> -> vector<40x128xf32>
    %c0_124 = arith.constant 0 : index
    %c0_125 = arith.constant 0 : index
    %779 = vector.load %arg8[%c0_124, %c0_125] : memref<128x128xf32, #tpu.memory_space<vmem>>, vector<128x128xf32>
    %cst_126 = arith.constant dense<0.000000e+00> : vector<40x128xf32>
    %780 = tpu.matmul %778, %779, %cst_126 {dimension_numbers = #tpu.dot_dimension_numbers<[1], [0], [0], [1], [0, 0, 1, 1], [], []>} : vector<40x128xf32>, vector<128x128xf32>, vector<40x128xf32> -> vector<40x128xf32>
    %c0_127 = arith.constant 0 : index
    %c0_128 = arith.constant 0 : index
    %781 = vector.load %arg9[%c0_127, %c0_128] : memref<1x128xf32, #tpu.memory_space<vmem>>, vector<1x128xf32>
    %782 = vector.broadcast %781 : vector<1x128xf32> to vector<40x128xf32>
    %783 = arith.addf %780, %782 : vector<40x128xf32>
    %784 = tpu.iota {dimensions = array<i32: 1>} : vector<40x128xi32>
    %c48_i32 = arith.constant 48 : i32
    %785 = vector.broadcast %c48_i32 : i32 to vector<40x128xi32>
    %786 = arith.cmpi slt, %784, %785 : vector<40x128xi32>
    %cst_129 = arith.constant -1.000000e+30 : f32
    %787 = vector.broadcast %cst_129 : f32 to vector<40x128xf32>
    %788 = arith.select %786, %783, %787 : vector<40x128xi1>, vector<40x128xf32>
    %cst_130 = arith.constant dense<0xFF800000> : vector<40xf32>
    %789 = vector.multi_reduction <maximumf>, %788, %cst_130 [1] : vector<40x128xf32> to vector<40xf32>
    %790 = vector.shape_cast %789 : vector<40xf32> to vector<40x1xf32>
    %791 = vector.broadcast %790 : vector<40x1xf32> to vector<40x128xf32>
    %792 = arith.subf %788, %791 : vector<40x128xf32>
    %793 = math.exp %792 : vector<40x128xf32>
    %cst_131 = arith.constant dense<0.000000e+00> : vector<40xf32>
    %794 = vector.multi_reduction <add>, %793, %cst_131 [1] : vector<40x128xf32> to vector<40xf32>
    %795 = vector.shape_cast %794 : vector<40xf32> to vector<40x1xf32>
    %796 = math.log %795 : vector<40x1xf32>
    %797 = arith.addf %790, %796 : vector<40x1xf32>
    %798 = vector.broadcast %797 : vector<40x1xf32> to vector<40x128xf32>
    %799 = arith.subf %788, %798 : vector<40x128xf32>
    %c0_132 = arith.constant 0 : index
    %c0_133 = arith.constant 0 : index
    %800 = vector.load %arg10[%c0_132, %c0_133] : memref<40x128xf32, #tpu.memory_space<vmem>>, vector<40x128xf32>
    tpu.vector_store %arg10[%c0_132, %c0_133], %799 {strides = array<i32>} : memref<40x128xf32, #tpu.memory_space<vmem>>, vector<40x128xf32>,
    return
  }
}

</mosaic_0001>

<llo_original>
// kernel: s2vt_forward.1
$region0: #{s2vt_forward.1}
  #allocation0 [shape = 'u32[]', space=smem, size = 0x4, offset = 0x4, fixed_abs, tag = 'smem constant byte address 0x4 - core index']
  #allocation1 [shape = 'u32[72,128]{1,0:T(1,128)}', space=vmem, size = 0x9000, scoped, tag = 'internal scratch']
  %s0 = inlined_call_operand.vmem [shape: f32[64,128], index: 0, kind: input, shape index: {}]
  %s1 = inlined_call_operand.vmem [shape: f32[40,128], index: 1, kind: input, shape index: {}]
  %s2 = inlined_call_operand.vmem [shape: f32[128,128], index: 2, kind: input, shape index: {}]
  %s3 = inlined_call_operand.vmem [shape: f32[1,128], index: 3, kind: input, shape index: {}]
  %s4 = inlined_call_operand.vmem [shape: f32[256,512], index: 4, kind: input, shape index: {}]
  %s5 = inlined_call_operand.vmem [shape: f32[1,512], index: 5, kind: input, shape index: {}]
  %s6 = inlined_call_operand.vmem [shape: f32[384,512], index: 6, kind: input, shape index: {}]
  %s7 = inlined_call_operand.vmem [shape: f32[1,512], index: 7, kind: input, shape index: {}]
  %s8 = inlined_call_operand.vmem [shape: f32[128,128], index: 8, kind: input, shape index: {}]
  %s9 = inlined_call_operand.vmem [shape: f32[1,128], index: 9, kind: input, shape index: {}]
  %s10 = inlined_call_operand.vmem [shape: f32[40,128], index: 10, kind: output, shape index: {}]
  %s11 = sld [smem:[#allocation0]]
  $region50: #{s2vt_forward.1} parent=0
    _
  %s13 = ssub.s32 1, %s11
  %s14 = scalar_select 0, %s13, %s11
  // Predicated region
  $region2: #{s2vt_forward.1} parent=0 // pred_check
    _
  $region3: #{s2vt_forward.1} parent=0 // pred_check_branch
    %16 = sbr.rel (0) target = $region5
  $region4: #{s2vt_forward.1} parent=0 // pred_region
    _
  $region5: #{s2vt_forward.1} parent=0 // pred_fallthru
    _
  // Predicated region
  $region6: #{s2vt_forward.1} parent=0 // pred_check
    _
  $region7: #{s2vt_forward.1} parent=0 // pred_check_branch
    %18 = sbr.rel (0) target = $region9
  $region8: #{s2vt_forward.1} parent=0 // pred_region
    _
  $region9: #{s2vt_forward.1} parent=0 // pred_fallthru
    _
  // Predicated region
  $region10: #{s2vt_forward.1} parent=0 // pred_check
    _
  $region11: #{s2vt_forward.1} parent=0 // pred_check_branch
    %20 = sbr.rel (0) target = $region13
  $region12: #{s2vt_forward.1} parent=0 // pred_region
    _
  $region13: #{s2vt_forward.1} parent=0 // pred_fallthru
    _
  // Predicated region
  $region14: #{s2vt_forward.1} parent=0 // pred_check
    _
  $region15: #{s2vt_forward.1} parent=0 // pred_check_branch
    %22 = sbr.rel (0) target = $region17
  $region16: #{s2vt_forward.1} parent=0 // pred_region
    _
  $region17: #{s2vt_forward.1} parent=0 // pred_fallthru
    _
  // Predicated region
  $region18: #{s2vt_forward.1} parent=0 // pred_check
    _
  $region19: #{s2vt_forward.1} parent=0 // pred_check_branch
    %24 = sbr.rel (0) target = $region21
  $region20: #{s2vt_forward.1} parent=0 // pred_region
    _
  $region21: #{s2vt_forward.1} parent=0 // pred_fallthru
    _
  // Predicated region
  $region22: #{s2vt_forward.1} parent=0 // pred_check
    _
  $region23: #{s2vt_forward.1} parent=0 // pred_check_branch
    %26 = sbr.rel (0) target = $region25
  $region24: #{s2vt_forward.1} parent=0 // pred_region
    _
  $region25: #{s2vt_forward.1} parent=0 // pred_fallthru
    _
  // Predicated region
  $region26: #{s2vt_forward.1} parent=0 // pred_check
    _
  $region27: #{s2vt_forward.1} parent=0 // pred_check_branch
    %28 = sbr.rel (0) target = $region29
  $region28: #{s2vt_forward.1} parent=0 // pred_region
    _
  $region29: #{s2vt_forward.1} parent=0 // pred_fallthru
    _
  // Predicated region
  $region30: #{s2vt_forward.1} parent=0 // pred_check
    _
  $region31: #{s2vt_forward.1} parent=0 // pred_check_branch
    %30 = sbr.rel (0) target = $region33
  $region32: #{s2vt_forward.1} parent=0 // pred_region
    _
  $region33: #{s2vt_forward.1} parent=0 // pred_fallthru
    _
  // Predicated region
  $region34: #{s2vt_forward.1} parent=0 // pred_check
    _
  $region35: #{s2vt_forward.1} parent=0 // pred_check_branch
    %32 = sbr.rel (0) target = $region37
  $region36: #{s2vt_forward.1} parent=0 // pred_region
    _
  $region37: #{s2vt_forward.1} parent=0 // pred_fallthru
    _
  // Predicated region
  $region38: #{s2vt_forward.1} parent=0 // pred_check
    _
  $region39: #{s2vt_forward.1} parent=0 // pred_check_branch
    %34 = sbr.rel (0) target = $region41
  $region40: #{s2vt_forward.1} parent=0 // pred_region
    _
  $region41: #{s2vt_forward.1} parent=0 // pred_fallthru
    _
  %v35 = vld [vmem:[%s0] sm:$0xff]
  %v36 = vld [vmem:[%s0 + $0x8] sm:$0xff]
  %v37 = vld [vmem:[%s0 + $0x10] sm:$0xff]
  %v38 = vld [vmem:[%s0 + $0x18] sm:$0xff]
  %v39 = vld [vmem:[%s0 + $0x20] sm:$0xff]
  %v40 = vld [vmem:[%s0 + $0x28] sm:$0xff]
  %v41 = vld [vmem:[%s0 + $0x30] sm:$0xff]
  %v42 = vld [vmem:[%s0 + $0x38] sm:$0xff]
  %v43 = vld [vmem:[%s2] sm:$0xff]
  %v44 = vld [vmem:[%s2 + $0x8] sm:$0xff]
  %v45 = vld [vmem:[%s2 + $0x10] sm:$0xff]
  %v46 = vld [vmem:[%s2 + $0x18] sm:$0xff]
  %v47 = vld [vmem:[%s2 + $0x20] sm:$0xff]
  %v48 = vld [vmem:[%s2 + $0x28] sm:$0xff]
  %v49 = vld [vmem:[%s2 + $0x30] sm:$0xff]
  %v50 = vld [vmem:[%s2 + $0x38] sm:$0xff]
  %v51 = vld [vmem:[%s2 + $0x40] sm:$0xff]
  %v52 = vld [vmem:[%s2 + $0x48] sm:$0xff]
  %v53 = vld [vmem:[%s2 + $0x50] sm:$0xff]
  %v54 = vld [vmem:[%s2 + $0x58] sm:$0xff]
  %v55 = vld [vmem:[%s2 + $0x60] sm:$0xff]
  %v56 = vld [vmem:[%s2 + $0x68] sm:$0xff]
  %v57 = vld [vmem:[%s2 + $0x70] sm:$0xff]
  %v58 = vld [vmem:[%s2 + $0x78] sm:$0xff]
  %v59 = vld [vmem:[%s3] sm:$0x1]
  %v61 = vperm.slane %v59, 0
  %63 = vmatpush.msra.mxu0 %v58
  %64 = vmatpush.msra.mxu0 %v57
  %65 = vmatpush.msra.mxu0 %v56
  %66 = vmatpush.msra.mxu0 %v55
  %67 = vmatpush.msra.mxu0 %v54
  %68 = vmatpush.msra.mxu0 %v53
  %69 = vmatpush.msra.mxu0 %v52
  %70 = vmatpush.msra.mxu0 %v51
  %71 = vmatpush.msra.mxu0 %v50
  %72 = vmatpush.msra.mxu0 %v49
  %73 = vmatpush.msra.mxu0 %v48
  %74 = vmatpush.msra.mxu0 %v47
  %75 = vmatpush.msra.mxu0 %v46
  %76 = vmatpush.msra.mxu0 %v45
  %77 = vmatpush.msra.mxu0 %v44
  %78 = vmatpush.msra.mxu0 %v43
  %79 = vmatmul.f32.gmra.mxu0 %v35
  %v80 = vpop.f32.mrf.mxu0
  %v81 = vadd.f32 %v61, %v80
  %82 = vmatmul.f32.gmra.mxu0 %v36
  %v83 = vpop.f32.mrf.mxu0
  %v84 = vadd.f32 %v61, %v83
  %85 = vmatmul.f32.gmra.mxu0 %v37
  %v86 = vpop.f32.mrf.mxu0
  %v87 = vadd.f32 %v61, %v86
  %88 = vmatmul.f32.gmra.mxu0 %v38
  %v89 = vpop.f32.mrf.mxu0
  %v90 = vadd.f32 %v61, %v89
  %91 = vmatmul.f32.gmra.mxu0 %v39
  %v92 = vpop.f32.mrf.mxu0
  %v93 = vadd.f32 %v61, %v92
  %94 = vmatmul.f32.gmra.mxu0 %v40
  %v95 = vpop.f32.mrf.mxu0
  %v96 = vadd.f32 %v61, %v95
  %97 = vmatmul.f32.gmra.mxu0 %v41
  %v98 = vpop.f32.mrf.mxu0
  %v99 = vadd.f32 %v61, %v98
  %100 = vmatmul.f32.gmra.mxu0 %v42
  %v101 = vpop.f32.mrf.mxu0
  %v102 = vadd.f32 %v61, %v101
  %103 = vdwg.mxu0
  %v104 = vld [vmem:[%s4] sm:$0xff]
  %v105 = vld [vmem:[%s4 + $0x8] sm:$0xff]
  %v106 = vld [vmem:[%s4 + $0x10] sm:$0xff]
  %v107 = vld [vmem:[%s4 + $0x18] sm:$0xff]
  %v108 = vld [vmem:[%s4 + $0x20] sm:$0xff]
  %v109 = vld [vmem:[%s4 + $0x28] sm:$0xff]
  %v110 = vld [vmem:[%s4 + $0x30] sm:$0xff]
  %v111 = vld [vmem:[%s4 + $0x38] sm:$0xff]
  %v112 = vld [vmem:[%s4 + $0x40] sm:$0xff]
  %v113 = vld [vmem:[%s4 + $0x48] sm:$0xff]
  %v114 = vld [vmem:[%s4 + $0x50] sm:$0xff]
  %v115 = vld [vmem:[%s4 + $0x58] sm:$0xff]
  %v116 = vld [vmem:[%s4 + $0x60] sm:$0xff]
  %v117 = vld [vmem:[%s4 + $0x68] sm:$0xff]
  %v118 = vld [vmem:[%s4 + $0x70] sm:$0xff]
  %v119 = vld [vmem:[%s4 + $0x78] sm:$0xff]
  %v120 = vld [vmem:[%s4 + $0x80] sm:$0xff]
  %v121 = vld [vmem:[%s4 + $0x88] sm:$0xff]
  %v122 = vld [vmem:[%s4 + $0x90] sm:$0xff]
  %v123 = vld [vmem:[%s4 + $0x98] sm:$0xff]
  %v124 = vld [vmem:[%s4 + $0xa0] sm:$0xff]
  %v125 = vld [vmem:[%s4 + $0xa8] sm:$0xff]
  %v126 = vld [vmem:[%s4 + $0xb0] sm:$0xff]
  %v127 = vld [vmem:[%s4 + $0xb8] sm:$0xff]
  %v128 = vld [vmem:[%s4 + $0xc0] sm:$0xff]
  %v129 = vld [vmem:[%s4 + $0xc8] sm:$0xff]
  %v130 = vld [vmem:[%s4 + $0xd0] sm:$0xff]
  %v131 = vld [vmem:[%s4 + $0xd8] sm:$0xff]
  %v132 = vld [vmem:[%s4 + $0xe0] sm:$0xff]
  %v133 = vld [vmem:[%s4 + $0xe8] sm:$0xff]
  %v134 = vld [vmem:[%s4 + $0xf0] sm:$0xff]
  %v135 = vld [vmem:[%s4 + $0xf8] sm:$0xff]
  %v136 = vld [vmem:[%s4 + $0x100] sm:$0xff]
  %v137 = vld [vmem:[%s4 + $0x108] sm:$0xff]
  %v138 = vld [vmem:[%s4 + $0x110] sm:$0xff]
  %v139 = vld [vmem:[%s4 + $0x118] sm:$0xff]
  %v140 = vld [vmem:[%s4 + $0x120] sm:$0xff]
  %v141 = vld [vmem:[%s4 + $0x128] sm:$0xff]
  %v142 = vld [vmem:[%s4 + $0x130] sm:$0xff]
  %v143 = vld [vmem:[%s4 + $0x138] sm:$0xff]
  %v144 = vld [vmem:[%s4 + $0x140] sm:$0xff]
  %v145 = vld [vmem:[%s4 + $0x148] sm:$0xff]
  %v146 = vld [vmem:[%s4 + $0x150] sm:$0xff]
  %v147 = vld [vmem:[%s4 + $0x158] sm:$0xff]
  %v148 = vld [vmem:[%s4 + $0x160] sm:$0xff]
  %v149 = vld [vmem:[%s4 + $0x168] sm:$0xff]
  %v150 = vld [vmem:[%s4 + $0x170] sm:$0xff]
  %v151 = vld [vmem:[%s4 + $0x178] sm:$0xff]
  %v152 = vld [vmem:[%s4 + $0x180] sm:$0xff]
  %v153 = vld [vmem:[%s4 + $0x188] sm:$0xff]
  %v154 = vld [vmem:[%s4 + $0x190] sm:$0xff]
  %v155 = vld [vmem:[%s4 + $0x198] sm:$0xff]
  %v156 = vld [vmem:[%s4 + $0x1a0] sm:$0xff]
  %v157 = vld [vmem:[%s4 + $0x1a8] sm:$0xff]
  %v158 = vld [vmem:[%s4 + $0x1b0] sm:$0xff]
  %v159 = vld [vmem:[%s4 + $0x1b8] sm:$0xff]
  %v160 = vld [vmem:[%s4 + $0x1c0] sm:$0xff]
  %v161 = vld [vmem:[%s4 + $0x1c8] sm:$0xff]
  %v162 = vld [vmem:[%s4 + $0x1d0] sm:$0xff]
  %v163 = vld [vmem:[%s4 + $0x1d8] sm:$0xff]
  %v164 = vld [vmem:[%s4 + $0x1e0] sm:$0xff]
  %v165 = vld [vmem:[%s4 + $0x1e8] sm:$0xff]
  %v166 = vld [vmem:[%s4 + $0x1f0] sm:$0xff]
  %v167 = vld [vmem:[%s4 + $0x1f8] sm:$0xff]
  %v168 = vld [vmem:[%s4 + $0x200] sm:$0xff]
  %v169 = vld [vmem:[%s4 + $0x208] sm:$0xff]
  %v170 = vld [vmem:[%s4 + $0x210] sm:$0xff]
  %v171 = vld [vmem:[%s4 + $0x218] sm:$0xff]
  %v172 = vld [vmem:[%s4 + $0x220] sm:$0xff]
  %v173 = vld [vmem:[%s4 + $0x228] sm:$0xff]
  %v174 = vld [vmem:[%s4 + $0x230] sm:$0xff]
  %v175 = vld [vmem:[%s4 + $0x238] sm:$0xff]
  %v176 = vld [vmem:[%s4 + $0x240] sm:$0xff]
  %v177 = vld [vmem:[%s4 + $0x248] sm:$0xff]
  %v178 = vld [vmem:[%s4 + $0x250] sm:$0xff]
  %v179 = vld [vmem:[%s4 + $0x258] sm:$0xff]
  %v180 = vld [vmem:[%s4 + $0x260] sm:$0xff]
  %v181 = vld [vmem:[%s4 + $0x268] sm:$0xff]
  %v182 = vld [vmem:[%s4 + $0x270] sm:$0xff]
  %v183 = vld [vmem:[%s4 + $0x278] sm:$0xff]
  %v184 = vld [vmem:[%s4 + $0x280] sm:$0xff]
  %v185 = vld [vmem:[%s4 + $0x288] sm:$0xff]
  %v186 = vld [vmem:[%s4 + $0x290] sm:$0xff]
  %v187 = vld [vmem:[%s4 + $0x298] sm:$0xff]
  %v188 = vld [vmem:[%s4 + $0x2a0] sm:$0xff]
  %v189 = vld [vmem:[%s4 + $0x2a8] sm:$0xff]
  %v190 = vld [vmem:[%s4 + $0x2b0] sm:$0xff]
  %v191 = vld [vmem:[%s4 + $0x2b8] sm:$0xff]
  %v192 = vld [vmem:[%s4 + $0x2c0] sm:$0xff]
  %v193 = vld [vmem:[%s4 + $0x2c8] sm:$0xff]
  %v194 = vld [vmem:[%s4 + $0x2d0] sm:$0xff]
  %v195 = vld [vmem:[%s4 + $0x2d8] sm:$0xff]
  %v196 = vld [vmem:[%s4 + $0x2e0] sm:$0xff]
  %v197 = vld [vmem:[%s4 + $0x2e8] sm:$0xff]
  %v198 = vld [vmem:[%s4 + $0x2f0] sm:$0xff]
  %v199 = vld [vmem:[%s4 + $0x2f8] sm:$0xff]
  %v200 = vld [vmem:[%s4 + $0x300] sm:$0xff]
  %v201 = vld [vmem:[%s4 + $0x308] sm:$0xff]
  %v202 = vld [vmem:[%s4 + $0x310] sm:$0xff]
  %v203 = vld [vmem:[%s4 + $0x318] sm:$0xff]
  %v204 = vld [vmem:[%s4 + $0x320] sm:$0xff]
  %v205 = vld [vmem:[%s4 + $0x328] sm:$0xff]
  %v206 = vld [vmem:[%s4 + $0x330] sm:$0xff]
  %v207 = vld [vmem:[%s4 + $0x338] sm:$0xff]
  %v208 = vld [vmem:[%s4 + $0x340] sm:$0xff]
  %v209 = vld [vmem:[%s4 + $0x348] sm:$0xff]
  %v210 = vld [vmem:[%s4 + $0x350] sm:$0xff]
  %v211 = vld [vmem:[%s4 + $0x358] sm:$0xff]
  %v212 = vld [vmem:[%s4 + $0x360] sm:$0xff]
  %v213 = vld [vmem:[%s4 + $0x368] sm:$0xff]
  %v214 = vld [vmem:[%s4 + $0x370] sm:$0xff]
  %v215 = vld [vmem:[%s4 + $0x378] sm:$0xff]
  %v216 = vld [vmem:[%s4 + $0x380] sm:$0xff]
  %v217 = vld [vmem:[%s4 + $0x388] sm:$0xff]
  %v218 = vld [vmem:[%s4 + $0x390] sm:$0xff]
  %v219 = vld [vmem:[%s4 + $0x398] sm:$0xff]
  %v220 = vld [vmem:[%s4 + $0x3a0] sm:$0xff]
  %v221 = vld [vmem:[%s4 + $0x3a8] sm:$0xff]
  %v222 = vld [vmem:[%s4 + $0x3b0] sm:$0xff]
  %v223 = vld [vmem:[%s4 + $0x3b8] sm:$0xff]
  %v224 = vld [vmem:[%s4 + $0x3c0] sm:$0xff]
  %v225 = vld [vmem:[%s4 + $0x3c8] sm:$0xff]
  %v226 = vld [vmem:[%s4 + $0x3d0] sm:$0xff]
  %v227 = vld [vmem:[%s4 + $0x3d8] sm:$0xff]
  %v228 = vld [vmem:[%s4 + $0x3e0] sm:$0xff]
  %v229 = vld [vmem:[%s4 + $0x3e8] sm:$0xff]
  %v230 = vld [vmem:[%s4 + $0x3f0] sm:$0xff]
  %v231 = vld [vmem:[%s4 + $0x3f8] sm:$0xff]
  %v232 = vld [vmem:[%s5] sm:$0xf]
  %v233 = vld [vmem:[%s6] sm:$0xff]
  %v234 = vld [vmem:[%s6 + $0x8] sm:$0xff]
  %v235 = vld [vmem:[%s6 + $0x10] sm:$0xff]
  %v236 = vld [vmem:[%s6 + $0x18] sm:$0xff]
  %v237 = vld [vmem:[%s6 + $0x20] sm:$0xff]
  %v238 = vld [vmem:[%s6 + $0x28] sm:$0xff]
  %v239 = vld [vmem:[%s6 + $0x30] sm:$0xff]
  %v240 = vld [vmem:[%s6 + $0x38] sm:$0xff]
  %v241 = vld [vmem:[%s6 + $0x40] sm:$0xff]
  %v242 = vld [vmem:[%s6 + $0x48] sm:$0xff]
  %v243 = vld [vmem:[%s6 + $0x50] sm:$0xff]
  %v244 = vld [vmem:[%s6 + $0x58] sm:$0xff]
  %v245 = vld [vmem:[%s6 + $0x60] sm:$0xff]
  %v246 = vld [vmem:[%s6 + $0x68] sm:$0xff]
  %v247 = vld [vmem:[%s6 + $0x70] sm:$0xff]
  %v248 = vld [vmem:[%s6 + $0x78] sm:$0xff]
  %v249 = vld [vmem:[%s6 + $0x80] sm:$0xff]
  %v250 = vld [vmem:[%s6 + $0x88] sm:$0xff]
  %v251 = vld [vmem:[%s6 + $0x90] sm:$0xff]
  %v252 = vld [vmem:[%s6 + $0x98] sm:$0xff]
  %v253 = vld [vmem:[%s6 + $0xa0] sm:$0xff]
  %v254 = vld [vmem:[%s6 + $0xa8] sm:$0xff]
  %v255 = vld [vmem:[%s6 + $0xb0] sm:$0xff]
  %v256 = vld [vmem:[%s6 + $0xb8] sm:$0xff]
  %v257 = vld [vmem:[%s6 + $0xc0] sm:$0xff]
  %v258 = vld [vmem:[%s6 + $0xc8] sm:$0xff]
  %v259 = vld [vmem:[%s6 + $0xd0] sm:$0xff]
  %v260 = vld [vmem:[%s6 + $0xd8] sm:$0xff]
  %v261 = vld [vmem:[%s6 + $0xe0] sm:$0xff]
  %v262 = vld [vmem:[%s6 + $0xe8] sm:$0xff]
  %v263 = vld [vmem:[%s6 + $0xf0] sm:$0xff]
  %v264 = vld [vmem:[%s6 + $0xf8] sm:$0xff]
  %v265 = vld [vmem:[%s6 + $0x100] sm:$0xff]
  %v266 = vld [vmem:[%s6 + $0x108] sm:$0xff]
  %v267 = vld [vmem:[%s6 + $0x110] sm:$0xff]
  %v268 = vld [vmem:[%s6 + $0x118] sm:$0xff]
  %v269 = vld [vmem:[%s6 + $0x120] sm:$0xff]
  %v270 = vld [vmem:[%s6 + $0x128] sm:$0xff]
  %v271 = vld [vmem:[%s6 + $0x130] sm:$0xff]
  %v272 = vld [vmem:[%s6 + $0x138] sm:$0xff]
  %v273 = vld [vmem:[%s6 + $0x140] sm:$0xff]
  %v274 = vld [vmem:[%s6 + $0x148] sm:$0xff]
  %v275 = vld [vmem:[%s6 + $0x150] sm:$0xff]
  %v276 = vld [vmem:[%s6 + $0x158] sm:$0xff]
  %v277 = vld [vmem:[%s6 + $0x160] sm:$0xff]
  %v278 = vld [vmem:[%s6 + $0x168] sm:$0xff]
  %v279 = vld [vmem:[%s6 + $0x170] sm:$0xff]
  %v280 = vld [vmem:[%s6 + $0x178] sm:$0xff]
  %v281 = vld [vmem:[%s6 + $0x180] sm:$0xff]
  %v282 = vld [vmem:[%s6 + $0x188] sm:$0xff]
  %v283 = vld [vmem:[%s6 + $0x190] sm:$0xff]
  %v284 = vld [vmem:[%s6 + $0x198] sm:$0xff]
  %v285 = vld [vmem:[%s6 + $0x1a0] sm:$0xff]
  %v286 = vld [vmem:[%s6 + $0x1a8] sm:$0xff]
  %v287 = vld [vmem:[%s6 + $0x1b0] sm:$0xff]
  %v288 = vld [vmem:[%s6 + $0x1b8] sm:$0xff]
  %v289 = vld [vmem:[%s6 + $0x1c0] sm:$0xff]
  %v290 = vld [vmem:[%s6 + $0x1c8] sm:$0xff]
  %v291 = vld [vmem:[%s6 + $0x1d0] sm:$0xff]
  %v292 = vld [vmem:[%s6 + $0x1d8] sm:$0xff]
  %v293 = vld [vmem:[%s6 + $0x1e0] sm:$0xff]
  %v294 = vld [vmem:[%s6 + $0x1e8] sm:$0xff]
  %v295 = vld [vmem:[%s6 + $0x1f0] sm:$0xff]
  %v296 = vld [vmem:[%s6 + $0x1f8] sm:$0xff]
  %v297 = vld [vmem:[%s6 + $0x200] sm:$0xff]
  %v298 = vld [vmem:[%s6 + $0x208] sm:$0xff]
  %v299 = vld [vmem:[%s6 + $0x210] sm:$0xff]
  %v300 = vld [vmem:[%s6 + $0x218] sm:$0xff]
  %v301 = vld [vmem:[%s6 + $0x220] sm:$0xff]
  %v302 = vld [vmem:[%s6 + $0x228] sm:$0xff]
  %v303 = vld [vmem:[%s6 + $0x230] sm:$0xff]
  %v304 = vld [vmem:[%s6 + $0x238] sm:$0xff]
  %v305 = vld [vmem:[%s6 + $0x240] sm:$0xff]
  %v306 = vld [vmem:[%s6 + $0x248] sm:$0xff]
  %v307 = vld [vmem:[%s6 + $0x250] sm:$0xff]
  %v308 = vld [vmem:[%s6 + $0x258] sm:$0xff]
  %v309 = vld [vmem:[%s6 + $0x260] sm:$0xff]
  %v310 = vld [vmem:[%s6 + $0x268] sm:$0xff]
  %v311 = vld [vmem:[%s6 + $0x270] sm:$0xff]
  %v312 = vld [vmem:[%s6 + $0x278] sm:$0xff]
  %v313 = vld [vmem:[%s6 + $0x280] sm:$0xff]
  %v314 = vld [vmem:[%s6 + $0x288] sm:$0xff]
  %v315 = vld [vmem:[%s6 + $0x290] sm:$0xff]
  %v316 = vld [vmem:[%s6 + $0x298] sm:$0xff]
  %v317 = vld [vmem:[%s6 + $0x2a0] sm:$0xff]
  %v318 = vld [vmem:[%s6 + $0x2a8] sm:$0xff]
  %v319 = vld [vmem:[%s6 + $0x2b0] sm:$0xff]
  %v320 = vld [vmem:[%s6 + $0x2b8] sm:$0xff]
  %v321 = vld [vmem:[%s6 + $0x2c0] sm:$0xff]
  %v322 = vld [vmem:[%s6 + $0x2c8] sm:$0xff]
  %v323 = vld [vmem:[%s6 + $0x2d0] sm:$0xff]
  %v324 = vld [vmem:[%s6 + $0x2d8] sm:$0xff]
  %v325 = vld [vmem:[%s6 + $0x2e0] sm:$0xff]
  %v326 = vld [vmem:[%s6 + $0x2e8] sm:$0xff]
  %v327 = vld [vmem:[%s6 + $0x2f0] sm:$0xff]
  %v328 = vld [vmem:[%s6 + $0x2f8] sm:$0xff]
  %v329 = vld [vmem:[%s6 + $0x300] sm:$0xff]
  %v330 = vld [vmem:[%s6 + $0x308] sm:$0xff]
  %v331 = vld [vmem:[%s6 + $0x310] sm:$0xff]
  %v332 = vld [vmem:[%s6 + $0x318] sm:$0xff]
  %v333 = vld [vmem:[%s6 + $0x320] sm:$0xff]
  %v334 = vld [vmem:[%s6 + $0x328] sm:$0xff]
  %v335 = vld [vmem:[%s6 + $0x330] sm:$0xff]
  %v336 = vld [vmem:[%s6 + $0x338] sm:$0xff]
  %v337 = vld [vmem:[%s6 + $0x340] sm:$0xff]
  %v338 = vld [vmem:[%s6 + $0x348] sm:$0xff]
  %v339 = vld [vmem:[%s6 + $0x350] sm:$0xff]
  %v340 = vld [vmem:[%s6 + $0x358] sm:$0xff]
  %v341 = vld [vmem:[%s6 + $0x360] sm:$0xff]
  %v342 = vld [vmem:[%s6 + $0x368] sm:$0xff]
  %v343 = vld [vmem:[%s6 + $0x370] sm:$0xff]
  %v344 = vld [vmem:[%s6 + $0x378] sm:$0xff]
  %v345 = vld [vmem:[%s6 + $0x380] sm:$0xff]
  %v346 = vld [vmem:[%s6 + $0x388] sm:$0xff]
  %v347 = vld [vmem:[%s6 + $0x390] sm:$0xff]
  %v348 = vld [vmem:[%s6 + $0x398] sm:$0xff]
  %v349 = vld [vmem:[%s6 + $0x3a0] sm:$0xff]
  %v350 = vld [vmem:[%s6 + $0x3a8] sm:$0xff]
  %v351 = vld [vmem:[%s6 + $0x3b0] sm:$0xff]
  %v352 = vld [vmem:[%s6 + $0x3b8] sm:$0xff]
  %v353 = vld [vmem:[%s6 + $0x3c0] sm:$0xff]
  %v354 = vld [vmem:[%s6 + $0x3c8] sm:$0xff]
  %v355 = vld [vmem:[%s6 + $0x3d0] sm:$0xff]
  %v356 = vld [vmem:[%s6 + $0x3d8] sm:$0xff]
  %v357 = vld [vmem:[%s6 + $0x3e0] sm:$0xff]
  %v358 = vld [vmem:[%s6 + $0x3e8] sm:$0xff]
  %v359 = vld [vmem:[%s6 + $0x3f0] sm:$0xff]
  %v360 = vld [vmem:[%s6 + $0x3f8] sm:$0xff]
  %v361 = vld [vmem:[%s6 + $0x400] sm:$0xff]
  %v362 = vld [vmem:[%s6 + $0x408] sm:$0xff]
  %v363 = vld [vmem:[%s6 + $0x410] sm:$0xff]
  %v364 = vld [vmem:[%s6 + $0x418] sm:$0xff]
  %v365 = vld [vmem:[%s6 + $0x420] sm:$0xff]
  %v366 = vld [vmem:[%s6 + $0x428] sm:$0xff]
  %v367 = vld [vmem:[%s6 + $0x430] sm:$0xff]
  %v368 = vld [vmem:[%s6 + $0x438] sm:$0xff]
  %v369 = vld [vmem:[%s6 + $0x440] sm:$0xff]
  %v370 = vld [vmem:[%s6 + $0x448] sm:$0xff]
  %v371 = vld [vmem:[%s6 + $0x450] sm:$0xff]
  %v372 = vld [vmem:[%s6 + $0x458] sm:$0xff]
  %v373 = vld [vmem:[%s6 + $0x460] sm:$0xff]
  %v374 = vld [vmem:[%s6 + $0x468] sm:$0xff]
  %v375 = vld [vmem:[%s6 + $0x470] sm:$0xff]
  %v376 = vld [vmem:[%s6 + $0x478] sm:$0xff]
  %v377 = vld [vmem:[%s6 + $0x480] sm:$0xff]
  %v378 = vld [vmem:[%s6 + $0x488] sm:$0xff]
  %v379 = vld [vmem:[%s6 + $0x490] sm:$0xff]
  %v380 = vld [vmem:[%s6 + $0x498] sm:$0xff]
  %v381 = vld [vmem:[%s6 + $0x4a0] sm:$0xff]
  %v382 = vld [vmem:[%s6 + $0x4a8] sm:$0xff]
  %v383 = vld [vmem:[%s6 + $0x4b0] sm:$0xff]
  %v384 = vld [vmem:[%s6 + $0x4b8] sm:$0xff]
  %v385 = vld [vmem:[%s6 + $0x4c0] sm:$0xff]
  %v386 = vld [vmem:[%s6 + $0x4c8] sm:$0xff]
  %v387 = vld [vmem:[%s6 + $0x4d0] sm:$0xff]
  %v388 = vld [vmem:[%s6 + $0x4d8] sm:$0xff]
  %v389 = vld [vmem:[%s6 + $0x4e0] sm:$0xff]
  %v390 = vld [vmem:[%s6 + $0x4e8] sm:$0xff]
  %v391 = vld [vmem:[%s6 + $0x4f0] sm:$0xff]
  %v392 = vld [vmem:[%s6 + $0x4f8] sm:$0xff]
  %v393 = vld [vmem:[%s6 + $0x500] sm:$0xff]
  %v394 = vld [vmem:[%s6 + $0x508] sm:$0xff]
  %v395 = vld [vmem:[%s6 + $0x510] sm:$0xff]
  %v396 = vld [vmem:[%s6 + $0x518] sm:$0xff]
  %v397 = vld [vmem:[%s6 + $0x520] sm:$0xff]
  %v398 = vld [vmem:[%s6 + $0x528] sm:$0xff]
  %v399 = vld [vmem:[%s6 + $0x530] sm:$0xff]
  %v400 = vld [vmem:[%s6 + $0x538] sm:$0xff]
  %v401 = vld [vmem:[%s6 + $0x540] sm:$0xff]
  %v402 = vld [vmem:[%s6 + $0x548] sm:$0xff]
  %v403 = vld [vmem:[%s6 + $0x550] sm:$0xff]
  %v404 = vld [vmem:[%s6 + $0x558] sm:$0xff]
  %v405 = vld [vmem:[%s6 + $0x560] sm:$0xff]
  %v406 = vld [vmem:[%s6 + $0x568] sm:$0xff]
  %v407 = vld [vmem:[%s6 + $0x570] sm:$0xff]
  %v408 = vld [vmem:[%s6 + $0x578] sm:$0xff]
  %v409 = vld [vmem:[%s6 + $0x580] sm:$0xff]
  %v410 = vld [vmem:[%s6 + $0x588] sm:$0xff]
  %v411 = vld [vmem:[%s6 + $0x590] sm:$0xff]
  %v412 = vld [vmem:[%s6 + $0x598] sm:$0xff]
  %v413 = vld [vmem:[%s6 + $0x5a0] sm:$0xff]
  %v414 = vld [vmem:[%s6 + $0x5a8] sm:$0xff]
  %v415 = vld [vmem:[%s6 + $0x5b0] sm:$0xff]
  %v416 = vld [vmem:[%s6 + $0x5b8] sm:$0xff]
  %v417 = vld [vmem:[%s6 + $0x5c0] sm:$0xff]
  %v418 = vld [vmem:[%s6 + $0x5c8] sm:$0xff]
  %v419 = vld [vmem:[%s6 + $0x5d0] sm:$0xff]
  %v420 = vld [vmem:[%s6 + $0x5d8] sm:$0xff]
  %v421 = vld [vmem:[%s6 + $0x5e0] sm:$0xff]
  %v422 = vld [vmem:[%s6 + $0x5e8] sm:$0xff]
  %v423 = vld [vmem:[%s6 + $0x5f0] sm:$0xff]
  %v424 = vld [vmem:[%s6 + $0x5f8] sm:$0xff]
  %v425 = vld [vmem:[%s7] sm:$0xf]
  %v427 = vperm.slane %v232, 0
  %v428 = vperm.slane %v232, 1
  %v429 = vperm.slane %v232, 2
  %v430 = vperm.slane %v232, 3
  %435 = vmatpush.msra.mxu0 %v164
  %436 = vmatpush.msra.mxu0 %v160
  %437 = vmatpush.msra.mxu0 %v156
  %438 = vmatpush.msra.mxu0 %v152
  %439 = vmatpush.msra.mxu0 %v148
  %440 = vmatpush.msra.mxu0 %v144
  %441 = vmatpush.msra.mxu0 %v140
  %442 = vmatpush.msra.mxu0 %v136
  %443 = vmatpush.msra.mxu0 %v132
  %444 = vmatpush.msra.mxu0 %v128
  %445 = vmatpush.msra.mxu0 %v124
  %446 = vmatpush.msra.mxu0 %v120
  %447 = vmatpush.msra.mxu0 %v116
  %448 = vmatpush.msra.mxu0 %v112
  %449 = vmatpush.msra.mxu0 %v108
  %450 = vmatpush.msra.mxu0 %v104
  %451 = vmatmul.f32.gmra.mxu0 %v81
  %v452 = vpop.f32.mrf.mxu0
  %v453 = vadd.f32 %v427, %v452
  %454 = vdwg.mxu0
  %455 = vmatpush.msra.mxu0 %v228
  %456 = vmatpush.msra.mxu0 %v224
  %457 = vmatpush.msra.mxu0 %v220
  %458 = vmatpush.msra.mxu0 %v216
  %459 = vmatpush.msra.mxu0 %v212
  %460 = vmatpush.msra.mxu0 %v208
  %461 = vmatpush.msra.mxu0 %v204
  %462 = vmatpush.msra.mxu0 %v200
  %463 = vmatpush.msra.mxu0 %v196
  %464 = vmatpush.msra.mxu0 %v192
  %465 = vmatpush.msra.mxu0 %v188
  %466 = vmatpush.msra.mxu0 %v184
  %467 = vmatpush.msra.mxu0 %v180
  %468 = vmatpush.msra.mxu0 %v176
  %469 = vmatpush.msra.mxu0 %v172
  %470 = vmatpush.msra.mxu0 %v168
  %471 = vmatmul.f32.gmra.mxu0 0.0
  %v472 = vpop.f32.mrf.mxu0
  %v473 = vadd.f32 %v453, %v472
  %474 = vdwg.mxu0
  %475 = vmatpush.msra.mxu0 %v165
  %476 = vmatpush.msra.mxu0 %v161
  %477 = vmatpush.msra.mxu0 %v157
  %478 = vmatpush.msra.mxu0 %v153
  %479 = vmatpush.msra.mxu0 %v149
  %480 = vmatpush.msra.mxu0 %v145
  %481 = vmatpush.msra.mxu0 %v141
  %482 = vmatpush.msra.mxu0 %v137
  %483 = vmatpush.msra.mxu0 %v133
  %484 = vmatpush.msra.mxu0 %v129
  %485 = vmatpush.msra.mxu0 %v125
  %486 = vmatpush.msra.mxu0 %v121
  %487 = vmatpush.msra.mxu0 %v117
  %488 = vmatpush.msra.mxu0 %v113
  %489 = vmatpush.msra.mxu0 %v109
  %490 = vmatpush.msra.mxu0 %v105
  %491 = vmatmul.f32.gmra.mxu0 %v81
  %v492 = vpop.f32.mrf.mxu0
  %v493 = vadd.f32 %v428, %v492
  %494 = vdwg.mxu0
  %495 = vmatpush.msra.mxu0 %v229
  %496 = vmatpush.msra.mxu0 %v225
  %497 = vmatpush.msra.mxu0 %v221
  %498 = vmatpush.msra.mxu0 %v217
  %499 = vmatpush.msra.mxu0 %v213
  %500 = vmatpush.msra.mxu0 %v209
  %501 = vmatpush.msra.mxu0 %v205
  %502 = vmatpush.msra.mxu0 %v201
  %503 = vmatpush.msra.mxu0 %v197
  %504 = vmatpush.msra.mxu0 %v193
  %505 = vmatpush.msra.mxu0 %v189
  %506 = vmatpush.msra.mxu0 %v185
  %507 = vmatpush.msra.mxu0 %v181
  %508 = vmatpush.msra.mxu0 %v177
  %509 = vmatpush.msra.mxu0 %v173
  %510 = vmatpush.msra.mxu0 %v169
  %511 = vmatmul.f32.gmra.mxu0 0.0
  %v512 = vpop.f32.mrf.mxu0
  %v513 = vadd.f32 %v493, %v512
  %514 = vdwg.mxu0
  %515 = vmatpush.msra.mxu0 %v166
  %516 = vmatpush.msra.mxu0 %v162
  %517 = vmatpush.msra.mxu0 %v158
  %518 = vmatpush.msra.mxu0 %v154
  %519 = vmatpush.msra.mxu0 %v150
  %520 = vmatpush.msra.mxu0 %v146
  %521 = vmatpush.msra.mxu0 %v142
  %522 = vmatpush.msra.mxu0 %v138
  %523 = vmatpush.msra.mxu0 %v134
  %524 = vmatpush.msra.mxu0 %v130
  %525 = vmatpush.msra.mxu0 %v126
  %526 = vmatpush.msra.mxu0 %v122
  %527 = vmatpush.msra.mxu0 %v118
  %528 = vmatpush.msra.mxu0 %v114
  %529 = vmatpush.msra.mxu0 %v110
  %530 = vmatpush.msra.mxu0 %v106
  %531 = vmatmul.f32.gmra.mxu0 %v81
  %v532 = vpop.f32.mrf.mxu0
  %v533 = vadd.f32 %v429, %v532
  %534 = vdwg.mxu0
  %535 = vmatpush.msra.mxu0 %v230
  %536 = vmatpush.msra.mxu0 %v226
  %537 = vmatpush.msra.mxu0 %v222
  %538 = vmatpush.msra.mxu0 %v218
  %539 = vmatpush.msra.mxu0 %v214
  %540 = vmatpush.msra.mxu0 %v210
  %541 = vmatpush.msra.mxu0 %v206
  %542 = vmatpush.msra.mxu0 %v202
  %543 = vmatpush.msra.mxu0 %v198
  %544 = vmatpush.msra.mxu0 %v194
  %545 = vmatpush.msra.mxu0 %v190
  %546 = vmatpush.msra.mxu0 %v186
  %547 = vmatpush.msra.mxu0 %v182
  %548 = vmatpush.msra.mxu0 %v178
  %549 = vmatpush.msra.mxu0 %v174
  %550 = vmatpush.msra.mxu0 %v170
  %551 = vmatmul.f32.gmra.mxu0 0.0
  %v552 = vpop.f32.mrf.mxu0
  %v553 = vadd.f32 %v533, %v552
  %554 = vdwg.mxu0
  %555 = vmatpush.msra.mxu0 %v167
  %556 = vmatpush.msra.mxu0 %v163
  %557 = vmatpush.msra.mxu0 %v159
  %558 = vmatpush.msra.mxu0 %v155
  %559 = vmatpush.msra.mxu0 %v151
  %560 = vmatpush.msra.mxu0 %v147
  %561 = vmatpush.msra.mxu0 %v143
  %562 = vmatpush.msra.mxu0 %v139
  %563 = vmatpush.msra.mxu0 %v135
  %564 = vmatpush.msra.mxu0 %v131
  %565 = vmatpush.msra.mxu0 %v127
  %566 = vmatpush.msra.mxu0 %v123
  %567 = vmatpush.msra.mxu0 %v119
  %568 = vmatpush.msra.mxu0 %v115
  %569 = vmatpush.msra.mxu0 %v111
  %570 = vmatpush.msra.mxu0 %v107
  %571 = vmatmul.f32.gmra.mxu0 %v81
  %v572 = vpop.f32.mrf.mxu0
  %v573 = vadd.f32 %v430, %v572
  %574 = vdwg.mxu0
  %575 = vmatpush.msra.mxu0 %v231
  %576 = vmatpush.msra.mxu0 %v227
  %577 = vmatpush.msra.mxu0 %v223
  %578 = vmatpush.msra.mxu0 %v219
  %579 = vmatpush.msra.mxu0 %v215
  %580 = vmatpush.msra.mxu0 %v211
  %581 = vmatpush.msra.mxu0 %v207
  %582 = vmatpush.msra.mxu0 %v203
  %583 = vmatpush.msra.mxu0 %v199
  %584 = vmatpush.msra.mxu0 %v195
  %585 = vmatpush.msra.mxu0 %v191
  %586 = vmatpush.msra.mxu0 %v187
  %587 = vmatpush.msra.mxu0 %v183
  %588 = vmatpush.msra.mxu0 %v179
  %589 = vmatpush.msra.mxu0 %v175
  %590 = vmatpush.msra.mxu0 %v171
  %591 = vmatmul.f32.gmra.mxu0 0.0
  %v592 = vpop.f32.mrf.mxu0
  %v593 = vadd.f32 %v573, %v592
  %594 = vdwg.mxu0
  %v595 = vxor.u32 %v473, 2147483648
  %v596 = vmul.f32 %v595, 1.442695
  %v597 = vpow.pop %v596
  %v598 = vadd.f32 %v597, 1.0
  %v599 = vrcp.pop %v598
  %v600 = vmul.f32 %v598, %v599
  %v601 = vsub.f32 1.0, %v600
  %v602 = vmul.f32 %v599, %v601
  %v603 = vadd.f32 %v599, %v602
  %vm604 = vweird.f32 %v598
  %vm605 = vweird.f32 %v599
  %vm606 = vmor %vm604, %vm605
  %v607 = vsel %vm606, %v599, %v603
  %v608 = vand.u32 2147483647, %v598
  %vm609 = vcmp.eq.f32.partialorder %v608, 8.507059e+37
  %v610 = vand.u32 %v598, 2147483648
  %v611 = vor.u32 1.1754944e-38, %v610
  %v612 = vsel %vm609, %v611, %v607
  %v613 = vmul.f32 1.0, %v612
  %v614 = vxor.u32 %v513, 2147483648
  %v615 = vmul.f32 %v614, 1.442695
  %v616 = vpow.pop %v615
  %v617 = vadd.f32 %v616, 1.0
  %v618 = vrcp.pop %v617
  %v619 = vmul.f32 %v617, %v618
  %v620 = vsub.f32 1.0, %v619
  %v621 = vmul.f32 %v618, %v620
  %v622 = vadd.f32 %v618, %v621
  %vm623 = vweird.f32 %v617
  %vm624 = vweird.f32 %v618
  %vm625 = vmor %vm623, %vm624
  %v626 = vsel %vm625, %v618, %v622
  %v627 = vand.u32 2147483647, %v617
  %vm628 = vcmp.eq.f32.partialorder %v627, 8.507059e+37
  %v629 = vand.u32 %v617, 2147483648
  %v630 = vor.u32 1.1754944e-38, %v629
  %v631 = vsel %vm628, %v630, %v626
  %v632 = vmul.f32 1.0, %v631
  %v633 = vtanh.pop %v553
  %v634 = vxor.u32 %v593, 2147483648
  %v635 = vmul.f32 %v634, 1.442695
  %v636 = vpow.pop %v635
  %v637 = vadd.f32 %v636, 1.0
  %v638 = vrcp.pop %v637
  %v639 = vmul.f32 %v637, %v638
  %v640 = vsub.f32 1.0, %v639
  %v641 = vmul.f32 %v638, %v640
  %v642 = vadd.f32 %v638, %v641
  %vm643 = vweird.f32 %v637
  %vm644 = vweird.f32 %v638
  %vm645 = vmor %vm643, %vm644
  %v646 = vsel %vm645, %v638, %v642
  %v647 = vand.u32 2147483647, %v637
  %vm648 = vcmp.eq.f32.partialorder %v647, 8.507059e+37
  %v649 = vand.u32 %v637, 2147483648
  %v650 = vor.u32 1.1754944e-38, %v649
  %v651 = vsel %vm648, %v650, %v646
  %v652 = vmul.f32 1.0, %v651
  %v653 = vmul.f32 %v632, 0.0
  %v654 = vmul.f32 %v613, %v633
  %v655 = vadd.f32 %v653, %v654
  %v656 = vtanh.pop %v655
  %v657 = vmul.f32 %v652, %v656
  %v659 = vperm.slane %v425, 0
  %v660 = vperm.slane %v425, 1
  %v661 = vperm.slane %v425, 2
  %v662 = vperm.slane %v425, 3
  %667 = vmatpush.msra.mxu0 %v293
  %668 = vmatpush.msra.mxu0 %v289
  %669 = vmatpush.msra.mxu0 %v285
  %670 = vmatpush.msra.mxu0 %v281
  %671 = vmatpush.msra.mxu0 %v277
  %672 = vmatpush.msra.mxu0 %v273
  %673 = vmatpush.msra.mxu0 %v269
  %674 = vmatpush.msra.mxu0 %v265
  %675 = vmatpush.msra.mxu0 %v261
  %676 = vmatpush.msra.mxu0 %v257
  %677 = vmatpush.msra.mxu0 %v253
  %678 = vmatpush.msra.mxu0 %v249
  %679 = vmatpush.msra.mxu0 %v245
  %680 = vmatpush.msra.mxu0 %v241
  %681 = vmatpush.msra.mxu0 %v237
  %682 = vmatpush.msra.mxu0 %v233
  %683 = vmatmul.f32.gmra.mxu0 0.0
  %v684 = vpop.f32.mrf.mxu0
  %v685 = vadd.f32 %v659, %v684
  %686 = vdwg.mxu0
  %687 = vmatpush.msra.mxu0 %v357
  %688 = vmatpush.msra.mxu0 %v353
  %689 = vmatpush.msra.mxu0 %v349
  %690 = vmatpush.msra.mxu0 %v345
  %691 = vmatpush.msra.mxu0 %v341
  %692 = vmatpush.msra.mxu0 %v337
  %693 = vmatpush.msra.mxu0 %v333
  %694 = vmatpush.msra.mxu0 %v329
  %695 = vmatpush.msra.mxu0 %v325
  %696 = vmatpush.msra.mxu0 %v321
  %697 = vmatpush.msra.mxu0 %v317
  %698 = vmatpush.msra.mxu0 %v313
  %699 = vmatpush.msra.mxu0 %v309
  %700 = vmatpush.msra.mxu0 %v305
  %701 = vmatpush.msra.mxu0 %v301
  %702 = vmatpush.msra.mxu0 %v297
  %703 = vmatmul.f32.gmra.mxu0 %v657
  %v704 = vpop.f32.mrf.mxu0
  %v705 = vadd.f32 %v685, %v704
  %706 = vdwg.mxu0
  %707 = vmatpush.msra.mxu0 %v421
  %708 = vmatpush.msra.mxu0 %v417
  %709 = vmatpush.msra.mxu0 %v413
  %710 = vmatpush.msra.mxu0 %v409
  %711 = vmatpush.msra.mxu0 %v405
  %712 = vmatpush.msra.mxu0 %v401
  %713 = vmatpush.msra.mxu0 %v397
  %714 = vmatpush.msra.mxu0 %v393
  %715 = vmatpush.msra.mxu0 %v389
  %716 = vmatpush.msra.mxu0 %v385
  %717 = vmatpush.msra.mxu0 %v381
  %718 = vmatpush.msra.mxu0 %v377
  %719 = vmatpush.msra.mxu0 %v373
  %720 = vmatpush.msra.mxu0 %v369
  %721 = vmatpush.msra.mxu0 %v365
  %722 = vmatpush.msra.mxu0 %v361
  %723 = vmatmul.f32.gmra.mxu0 0.0
  %v724 = vpop.f32.mrf.mxu0
  %v725 = vadd.f32 %v705, %v724
  %726 = vdwg.mxu0
  %727 = vmatpush.msra.mxu0 %v294
  %728 = vmatpush.msra.mxu0 %v290
  %729 = vmatpush.msra.mxu0 %v286
  %730 = vmatpush.msra.mxu0 %v282
  %731 = vmatpush.msra.mxu0 %v278
  %732 = vmatpush.msra.mxu0 %v274
  %733 = vmatpush.msra.mxu0 %v270
  %734 = vmatpush.msra.mxu0 %v266
  %735 = vmatpush.msra.mxu0 %v262
  %736 = vmatpush.msra.mxu0 %v258
  %737 = vmatpush.msra.mxu0 %v254
  %738 = vmatpush.msra.mxu0 %v250
  %739 = vmatpush.msra.mxu0 %v246
  %740 = vmatpush.msra.mxu0 %v242
  %741 = vmatpush.msra.mxu0 %v238
  %742 = vmatpush.msra.mxu0 %v234
  %743 = vmatmul.f32.gmra.mxu0 0.0
  %v744 = vpop.f32.mrf.mxu0
  %v745 = vadd.f32 %v660, %v744
  %746 = vdwg.mxu0
  %747 = vmatpush.msra.mxu0 %v358
  %748 = vmatpush.msra.mxu0 %v354
  %749 = vmatpush.msra.mxu0 %v350
  %750 = vmatpush.msra.mxu0 %v346
  %751 = vmatpush.msra.mxu0 %v342
  %752 = vmatpush.msra.mxu0 %v338
  %753 = vmatpush.msra.mxu0 %v334
  %754 = vmatpush.msra.mxu0 %v330
  %755 = vmatpush.msra.mxu0 %v326
  %756 = vmatpush.msra.mxu0 %v322
  %757 = vmatpush.msra.mxu0 %v318
  %758 = vmatpush.msra.mxu0 %v314
  %759 = vmatpush.msra.mxu0 %v310
  %760 = vmatpush.msra.mxu0 %v306
  %761 = vmatpush.msra.mxu0 %v302
  %762 = vmatpush.msra.mxu0 %v298
  %763 = vmatmul.f32.gmra.mxu0 %v657
  %v764 = vpop.f32.mrf.mxu0
  %v765 = vadd.f32 %v745, %v764
  %766 = vdwg.mxu0
  %767 = vmatpush.msra.mxu0 %v422
  %768 = vmatpush.msra.mxu0 %v418
  %769 = vmatpush.msra.mxu0 %v414
  %770 = vmatpush.msra.mxu0 %v410
  %771 = vmatpush.msra.mxu0 %v406
  %772 = vmatpush.msra.mxu0 %v402
  %773 = vmatpush.msra.mxu0 %v398
  %774 = vmatpush.msra.mxu0 %v394
  %775 = vmatpush.msra.mxu0 %v390
  %776 = vmatpush.msra.mxu0 %v386
  %777 = vmatpush.msra.mxu0 %v382
  %778 = vmatpush.msra.mxu0 %v378
  %779 = vmatpush.msra.mxu0 %v374
  %780 = vmatpush.msra.mxu0 %v370
  %781 = vmatpush.msra.mxu0 %v366
  %782 = vmatpush.msra.mxu0 %v362
  %783 = vmatmul.f32.gmra.mxu0 0.0
  %v784 = vpop.f32.mrf.mxu0
  %v785 = vadd.f32 %v765, %v784
  %786 = vdwg.mxu0
  %787 = vmatpush.msra.mxu0 %v295
  %788 = vmatpush.msra.mxu0 %v291
  %789 = vmatpush.msra.mxu0 %v287
  %790 = vmatpush.msra.mxu0 %v283
  %791 = vmatpush.msra.mxu0 %v279
  %792 = vmatpush.msra.mxu0 %v275
  %793 = vmatpush.msra.mxu0 %v271
  %794 = vmatpush.msra.mxu0 %v267
  %795 = vmatpush.msra.mxu0 %v263
  %796 = vmatpush.msra.mxu0 %v259
  %797 = vmatpush.msra.mxu0 %v255
  %798 = vmatpush.msra.mxu0 %v251
  %799 = vmatpush.msra.mxu0 %v247
  %800 = vmatpush.msra.mxu0 %v243
  %801 = vmatpush.msra.mxu0 %v239
  %802 = vmatpush.msra.mxu0 %v235
  %803 = vmatmul.f32.gmra.mxu0 0.0
  %v804 = vpop.f32.mrf.mxu0
  %v805 = vadd.f32 %v661, %v804
  %806 = vdwg.mxu0
  %807 = vmatpush.msra.mxu0 %v359
  %808 = vmatpush.msra.mxu0 %v355
  %809 = vmatpush.msra.mxu0 %v351
  %810 = vmatpush.msra.mxu0 %v347
  %811 = vmatpush.msra.mxu0 %v343
  %812 = vmatpush.msra.mxu0 %v339
  %813 = vmatpush.msra.mxu0 %v335
  %814 = vmatpush.msra.mxu0 %v331
  %815 = vmatpush.msra.mxu0 %v327
  %816 = vmatpush.msra.mxu0 %v323
  %817 = vmatpush.msra.mxu0 %v319
  %818 = vmatpush.msra.mxu0 %v315
  %819 = vmatpush.msra.mxu0 %v311
  %820 = vmatpush.msra.mxu0 %v307
  %821 = vmatpush.msra.mxu0 %v303
  %822 = vmatpush.msra.mxu0 %v299
  %823 = vmatmul.f32.gmra.mxu0 %v657
  %v824 = vpop.f32.mrf.mxu0
  %v825 = vadd.f32 %v805, %v824
  %826 = vdwg.mxu0
  %827 = vmatpush.msra.mxu0 %v423
  %828 = vmatpush.msra.mxu0 %v419
  %829 = vmatpush.msra.mxu0 %v415
  %830 = vmatpush.msra.mxu0 %v411
  %831 = vmatpush.msra.mxu0 %v407
  %832 = vmatpush.msra.mxu0 %v403
  %833 = vmatpush.msra.mxu0 %v399
  %834 = vmatpush.msra.mxu0 %v395
  %835 = vmatpush.msra.mxu0 %v391
  %836 = vmatpush.msra.mxu0 %v387
  %837 = vmatpush.msra.mxu0 %v383
  %838 = vmatpush.msra.mxu0 %v379
  %839 = vmatpush.msra.mxu0 %v375
  %840 = vmatpush.msra.mxu0 %v371
  %841 = vmatpush.msra.mxu0 %v367
  %842 = vmatpush.msra.mxu0 %v363
  %843 = vmatmul.f32.gmra.mxu0 0.0
  %v844 = vpop.f32.mrf.mxu0
  %v845 = vadd.f32 %v825, %v844
  %846 = vdwg.mxu0
  %847 = vmatpush.msra.mxu0 %v296
  %848 = vmatpush.msra.mxu0 %v292
  %849 = vmatpush.msra.mxu0 %v288
  %850 = vmatpush.msra.mxu0 %v284
  %851 = vmatpush.msra.mxu0 %v280
  %852 = vmatpush.msra.mxu0 %v276
  %853 = vmatpush.msra.mxu0 %v272
  %854 = vmatpush.msra.mxu0 %v268
  %855 = vmatpush.msra.mxu0 %v264
  %856 = vmatpush.msra.mxu0 %v260
  %857 = vmatpush.msra.mxu0 %v256
  %858 = vmatpush.msra.mxu0 %v252
  %859 = vmatpush.msra.mxu0 %v248
  %860 = vmatpush.msra.mxu0 %v244
  %861 = vmatpush.msra.mxu0 %v240
  %862 = vmatpush.msra.mxu0 %v236
  %863 = vmatmul.f32.gmra.mxu0 0.0
  %v864 = vpop.f32.mrf.mxu0
  %v865 = vadd.f32 %v662, %v864
  %866 = vdwg.mxu0
  %867 = vmatpush.msra.mxu0 %v360
  %868 = vmatpush.msra.mxu0 %v356
  %869 = vmatpush.msra.mxu0 %v352
  %870 = vmatpush.msra.mxu0 %v348
  %871 = vmatpush.msra.mxu0 %v344
  %872 = vmatpush.msra.mxu0 %v340
  %873 = vmatpush.msra.mxu0 %v336
  %874 = vmatpush.msra.mxu0 %v332
  %875 = vmatpush.msra.mxu0 %v328
  %876 = vmatpush.msra.mxu0 %v324
  %877 = vmatpush.msra.mxu0 %v320
  %878 = vmatpush.msra.mxu0 %v316
  %879 = vmatpush.msra.mxu0 %v312
  %880 = vmatpush.msra.mxu0 %v308
  %881 = vmatpush.msra.mxu0 %v304
  %882 = vmatpush.msra.mxu0 %v300
  %883 = vmatmul.f32.gmra.mxu0 %v657
  %v884 = vpop.f32.mrf.mxu0
  %v885 = vadd.f32 %v865, %v884
  %886 = vdwg.mxu0
  %887 = vmatpush.msra.mxu0 %v424
  %888 = vmatpush.msra.mxu0 %v420
  %889 = vmatpush.msra.mxu0 %v416
  %890 = vmatpush.msra.mxu0 %v412
  %891 = vmatpush.msra.mxu0 %v408
  %892 = vmatpush.msra.mxu0 %v404
  %893 = vmatpush.msra.mxu0 %v400
  %894 = vmatpush.msra.mxu0 %v396
  %895 = vmatpush.msra.mxu0 %v392
  %896 = vmatpush.msra.mxu0 %v388
  %897 = vmatpush.msra.mxu0 %v384
  %898 = vmatpush.msra.mxu0 %v380
  %899 = vmatpush.msra.mxu0 %v376
  %900 = vmatpush.msra.mxu0 %v372
  %901 = vmatpush.msra.mxu0 %v368
  %902 = vmatpush.msra.mxu0 %v364
  %903 = vmatmul.f32.gmra.mxu0 0.0
  %v904 = vpop.f32.mrf.mxu0
  %v905 = vadd.f32 %v885, %v904
  %906 = vdwg.mxu0
  %v907 = vxor.u32 %v725, 2147483648
  %v908 = vmul.f32 %v907, 1.442695
  %v909 = vpow.pop %v908
  %v910 = vadd.f32 %v909, 1.0
  %v911 = vrcp.pop %v910
  %v912 = vmul.f32 %v910, %v911
  %v913 = vsub.f32 1.0, %v912
  %v914 = vmul.f32 %v911, %v913
  %v915 = vadd.f32 %v911, %v914
  %vm916 = vweird.f32 %v910
  %vm917 = vweird.f32 %v911
  %vm918 = vmor %vm916, %vm917
  %v919 = vsel %vm918, %v911, %v915
  %v920 = vand.u32 2147483647, %v910
  %vm921 = vcmp.eq.f32.partialorder %v920, 8.507059e+37
  %v922 = vand.u32 %v910, 2147483648
  %v923 = vor.u32 1.1754944e-38, %v922
  %v924 = vsel %vm921, %v923, %v919
  %v925 = vmul.f32 1.0, %v924
  %v926 = vxor.u32 %v785, 2147483648
  %v927 = vmul.f32 %v926, 1.442695
  %v928 = vpow.pop %v927
  %v929 = vadd.f32 %v928, 1.0
  %v930 = vrcp.pop %v929
  %v931 = vmul.f32 %v929, %v930
  %v932 = vsub.f32 1.0, %v931
  %v933 = vmul.f32 %v930, %v932
  %v934 = vadd.f32 %v930, %v933
  %vm935 = vweird.f32 %v929
  %vm936 = vweird.f32 %v930
  %vm937 = vmor %vm935, %vm936
  %v938 = vsel %vm937, %v930, %v934
  %v939 = vand.u32 2147483647, %v929
  %vm940 = vcmp.eq.f32.partialorder %v939, 8.507059e+37
  %v941 = vand.u32 %v929, 2147483648
  %v942 = vor.u32 1.1754944e-38, %v941
  %v943 = vsel %vm940, %v942, %v938
  %v944 = vmul.f32 1.0, %v943
  %v945 = vtanh.pop %v845
  %v946 = vxor.u32 %v905, 2147483648
  %v947 = vmul.f32 %v946, 1.442695
  %v948 = vpow.pop %v947
  %v949 = vadd.f32 %v948, 1.0
  %v950 = vrcp.pop %v949
  %v951 = vmul.f32 %v949, %v950
  %v952 = vsub.f32 1.0, %v951
  %v953 = vmul.f32 %v950, %v952
  %v954 = vadd.f32 %v950, %v953
  %vm955 = vweird.f32 %v949
  %vm956 = vweird.f32 %v950
  %vm957 = vmor %vm955, %vm956
  %v958 = vsel %vm957, %v950, %v954
  %v959 = vand.u32 2147483647, %v949
  %vm960 = vcmp.eq.f32.partialorder %v959, 8.507059e+37
  %v961 = vand.u32 %v949, 2147483648
  %v962 = vor.u32 1.1754944e-38, %v961
  %v963 = vsel %vm960, %v962, %v958
  %v964 = vmul.f32 1.0, %v963
  %v965 = vmul.f32 %v944, 0.0
  %v966 = vmul.f32 %v925, %v945
  %v967 = vadd.f32 %v965, %v966
  %v968 = vtanh.pop %v967
  %v969 = vmul.f32 %v964, %v968
  %970 = vmatpush.msra.mxu0 %v164
  %971 = vmatpush.msra.mxu0 %v160
  %972 = vmatpush.msra.mxu0 %v156
  %973 = vmatpush.msra.mxu0 %v152
  %974 = vmatpush.msra.mxu0 %v148
  %975 = vmatpush.msra.mxu0 %v144
  %976 = vmatpush.msra.mxu0 %v140
  %977 = vmatpush.msra.mxu0 %v136
  %978 = vmatpush.msra.mxu0 %v132
  %979 = vmatpush.msra.mxu0 %v128
  %980 = vmatpush.msra.mxu0 %v124
  %981 = vmatpush.msra.mxu0 %v120
  %982 = vmatpush.msra.mxu0 %v116
  %983 = vmatpush.msra.mxu0 %v112
  %984 = vmatpush.msra.mxu0 %v108
  %985 = vmatpush.msra.mxu0 %v104
  %986 = vmatmul.f32.gmra.mxu0 %v84
  %v987 = vpop.f32.mrf.mxu0
  %v988 = vadd.f32 %v427, %v987
  %989 = vdwg.mxu0
  %990 = vmatpush.msra.mxu0 %v228
  %991 = vmatpush.msra.mxu0 %v224
  %992 = vmatpush.msra.mxu0 %v220
  %993 = vmatpush.msra.mxu0 %v216
  %994 = vmatpush.msra.mxu0 %v212
  %995 = vmatpush.msra.mxu0 %v208
  %996 = vmatpush.msra.mxu0 %v204
  %997 = vmatpush.msra.mxu0 %v200
  %998 = vmatpush.msra.mxu0 %v196
  %999 = vmatpush.msra.mxu0 %v192
  %1000 = vmatpush.msra.mxu0 %v188
  %1001 = vmatpush.msra.mxu0 %v184
  %1002 = vmatpush.msra.mxu0 %v180
  %1003 = vmatpush.msra.mxu0 %v176
  %1004 = vmatpush.msra.mxu0 %v172
  %1005 = vmatpush.msra.mxu0 %v168
  %1006 = vmatmul.f32.gmra.mxu0 %v657
  %v1007 = vpop.f32.mrf.mxu0
  %v1008 = vadd.f32 %v988, %v1007
  %1009 = vdwg.mxu0
  %1010 = vmatpush.msra.mxu0 %v165
  %1011 = vmatpush.msra.mxu0 %v161
  %1012 = vmatpush.msra.mxu0 %v157
  %1013 = vmatpush.msra.mxu0 %v153
  %1014 = vmatpush.msra.mxu0 %v149
  %1015 = vmatpush.msra.mxu0 %v145
  %1016 = vmatpush.msra.mxu0 %v141
  %1017 = vmatpush.msra.mxu0 %v137
  %1018 = vmatpush.msra.mxu0 %v133
  %1019 = vmatpush.msra.mxu0 %v129
  %1020 = vmatpush.msra.mxu0 %v125
  %1021 = vmatpush.msra.mxu0 %v121
  %1022 = vmatpush.msra.mxu0 %v117
  %1023 = vmatpush.msra.mxu0 %v113
  %1024 = vmatpush.msra.mxu0 %v109
  %1025 = vmatpush.msra.mxu0 %v105
  %1026 = vmatmul.f32.gmra.mxu0 %v84
  %v1027 = vpop.f32.mrf.mxu0
  %v1028 = vadd.f32 %v428, %v1027
  %1029 = vdwg.mxu0
  %1030 = vmatpush.msra.mxu0 %v229
  %1031 = vmatpush.msra.mxu0 %v225
  %1032 = vmatpush.msra.mxu0 %v221
  %1033 = vmatpush.msra.mxu0 %v217
  %1034 = vmatpush.msra.mxu0 %v213
  %1035 = vmatpush.msra.mxu0 %v209
  %1036 = vmatpush.msra.mxu0 %v205
  %1037 = vmatpush.msra.mxu0 %v201
  %1038 = vmatpush.msra.mxu0 %v197
  %1039 = vmatpush.msra.mxu0 %v193
  %1040 = vmatpush.msra.mxu0 %v189
  %1041 = vmatpush.msra.mxu0 %v185
  %1042 = vmatpush.msra.mxu0 %v181
  %1043 = vmatpush.msra.mxu0 %v177
  %1044 = vmatpush.msra.mxu0 %v173
  %1045 = vmatpush.msra.mxu0 %v169
  %1046 = vmatmul.f32.gmra.mxu0 %v657
  %v1047 = vpop.f32.mrf.mxu0
  %v1048 = vadd.f32 %v1028, %v1047
  %1049 = vdwg.mxu0
  %1050 = vmatpush.msra.mxu0 %v166
  %1051 = vmatpush.msra.mxu0 %v162
  %1052 = vmatpush.msra.mxu0 %v158
  %1053 = vmatpush.msra.mxu0 %v154
  %1054 = vmatpush.msra.mxu0 %v150
  %1055 = vmatpush.msra.mxu0 %v146
  %1056 = vmatpush.msra.mxu0 %v142
  %1057 = vmatpush.msra.mxu0 %v138
  %1058 = vmatpush.msra.mxu0 %v134
  %1059 = vmatpush.msra.mxu0 %v130
  %1060 = vmatpush.msra.mxu0 %v126
  %1061 = vmatpush.msra.mxu0 %v122
  %1062 = vmatpush.msra.mxu0 %v118
  %1063 = vmatpush.msra.mxu0 %v114
  %1064 = vmatpush.msra.mxu0 %v110
  %1065 = vmatpush.msra.mxu0 %v106
  %1066 = vmatmul.f32.gmra.mxu0 %v84
  %v1067 = vpop.f32.mrf.mxu0
  %v1068 = vadd.f32 %v429, %v1067
  %1069 = vdwg.mxu0
  %1070 = vmatpush.msra.mxu0 %v230
  %1071 = vmatpush.msra.mxu0 %v226
  %1072 = vmatpush.msra.mxu0 %v222
  %1073 = vmatpush.msra.mxu0 %v218
  %1074 = vmatpush.msra.mxu0 %v214
  %1075 = vmatpush.msra.mxu0 %v210
  %1076 = vmatpush.msra.mxu0 %v206
  %1077 = vmatpush.msra.mxu0 %v202
  %1078 = vmatpush.msra.mxu0 %v198
  %1079 = vmatpush.msra.mxu0 %v194
  %1080 = vmatpush.msra.mxu0 %v190
  %1081 = vmatpush.msra.mxu0 %v186
  %1082 = vmatpush.msra.mxu0 %v182
  %1083 = vmatpush.msra.mxu0 %v178
  %1084 = vmatpush.msra.mxu0 %v174
  %1085 = vmatpush.msra.mxu0 %v170
  %1086 = vmatmul.f32.gmra.mxu0 %v657
  %v1087 = vpop.f32.mrf.mxu0
  %v1088 = vadd.f32 %v1068, %v1087
  %1089 = vdwg.mxu0
  %1090 = vmatpush.msra.mxu0 %v167
  %1091 = vmatpush.msra.mxu0 %v163
  %1092 = vmatpush.msra.mxu0 %v159
  %1093 = vmatpush.msra.mxu0 %v155
  %1094 = vmatpush.msra.mxu0 %v151
  %1095 = vmatpush.msra.mxu0 %v147
  %1096 = vmatpush.msra.mxu0 %v143
  %1097 = vmatpush.msra.mxu0 %v139
  %1098 = vmatpush.msra.mxu0 %v135
  %1099 = vmatpush.msra.mxu0 %v131
  %1100 = vmatpush.msra.mxu0 %v127
  %1101 = vmatpush.msra.mxu0 %v123
  %1102 = vmatpush.msra.mxu0 %v119
  %1103 = vmatpush.msra.mxu0 %v115
  %1104 = vmatpush.msra.mxu0 %v111
  %1105 = vmatpush.msra.mxu0 %v107
  %1106 = vmatmul.f32.gmra.mxu0 %v84
  %v1107 = vpop.f32.mrf.mxu0
  %v1108 = vadd.f32 %v430, %v1107
  %1109 = vdwg.mxu0
  %1110 = vmatpush.msra.mxu0 %v231
  %1111 = vmatpush.msra.mxu0 %v227
  %1112 = vmatpush.msra.mxu0 %v223
  %1113 = vmatpush.msra.mxu0 %v219
  %1114 = vmatpush.msra.mxu0 %v215
  %1115 = vmatpush.msra.mxu0 %v211
  %1116 = vmatpush.msra.mxu0 %v207
  %1117 = vmatpush.msra.mxu0 %v203
  %1118 = vmatpush.msra.mxu0 %v199
  %1119 = vmatpush.msra.mxu0 %v195
  %1120 = vmatpush.msra.mxu0 %v191
  %1121 = vmatpush.msra.mxu0 %v187
  %1122 = vmatpush.msra.mxu0 %v183
  %1123 = vmatpush.msra.mxu0 %v179
  %1124 = vmatpush.msra.mxu0 %v175
  %1125 = vmatpush.msra.mxu0 %v171
  %1126 = vmatmul.f32.gmra.mxu0 %v657
  %v1127 = vpop.f32.mrf.mxu0
  %v1128 = vadd.f32 %v1108, %v1127
  %1129 = vdwg.mxu0
  %v1130 = vxor.u32 %v1008, 2147483648
  %v1131 = vmul.f32 %v1130, 1.442695
  %v1132 = vpow.pop %v1131
  %v1133 = vadd.f32 %v1132, 1.0
  %v1134 = vrcp.pop %v1133
  %v1135 = vmul.f32 %v1133, %v1134
  %v1136 = vsub.f32 1.0, %v1135
  %v1137 = vmul.f32 %v1134, %v1136
  %v1138 = vadd.f32 %v1134, %v1137
  %vm1139 = vweird.f32 %v1133
  %vm1140 = vweird.f32 %v1134
  %vm1141 = vmor %vm1139, %vm1140
  %v1142 = vsel %vm1141, %v1134, %v1138
  %v1143 = vand.u32 2147483647, %v1133
  %vm1144 = vcmp.eq.f32.partialorder %v1143, 8.507059e+37
  %v1145 = vand.u32 %v1133, 2147483648
  %v1146 = vor.u32 1.1754944e-38, %v1145
  %v1147 = vsel %vm1144, %v1146, %v1142
  %v1148 = vmul.f32 1.0, %v1147
  %v1149 = vxor.u32 %v1048, 2147483648
  %v1150 = vmul.f32 %v1149, 1.442695
  %v1151 = vpow.pop %v1150
  %v1152 = vadd.f32 %v1151, 1.0
  %v1153 = vrcp.pop %v1152
  %v1154 = vmul.f32 %v1152, %v1153
  %v1155 = vsub.f32 1.0, %v1154
  %v1156 = vmul.f32 %v1153, %v1155
  %v1157 = vadd.f32 %v1153, %v1156
  %vm1158 = vweird.f32 %v1152
  %vm1159 = vweird.f32 %v1153
  %vm1160 = vmor %vm1158, %vm1159
  %v1161 = vsel %vm1160, %v1153, %v1157
  %v1162 = vand.u32 2147483647, %v1152
  %vm1163 = vcmp.eq.f32.partialorder %v1162, 8.507059e+37
  %v1164 = vand.u32 %v1152, 2147483648
  %v1165 = vor.u32 1.1754944e-38, %v1164
  %v1166 = vsel %vm1163, %v1165, %v1161
  %v1167 = vmul.f32 1.0, %v1166
  %v1168 = vtanh.pop %v1088
  %v1169 = vxor.u32 %v1128, 2147483648
  %v1170 = vmul.f32 %v1169, 1.442695
  %v1171 = vpow.pop %v1170
  %v1172 = vadd.f32 %v1171, 1.0
  %v1173 = vrcp.pop %v1172
  %v1174 = vmul.f32 %v1172, %v1173
  %v1175 = vsub.f32 1.0, %v1174
  %v1176 = vmul.f32 %v1173, %v1175
  %v1177 = vadd.f32 %v1173, %v1176
  %vm1178 = vweird.f32 %v1172
  %vm1179 = vweird.f32 %v1173
  %vm1180 = vmor %vm1178, %vm1179
  %v1181 = vsel %vm1180, %v1173, %v1177
  %v1182 = vand.u32 2147483647, %v1172
  %vm1183 = vcmp.eq.f32.partialorder %v1182, 8.507059e+37
  %v1184 = vand.u32 %v1172, 2147483648
  %v1185 = vor.u32 1.1754944e-38, %v1184
  %v1186 = vsel %vm1183, %v1185, %v1181
  %v1187 = vmul.f32 1.0, %v1186
  %v1188 = vmul.f32 %v1167, %v655
  %v1189 = vmul.f32 %v1148, %v1168
  %v1190 = vadd.f32 %v1188, %v1189
  %v1191 = vtanh.pop %v1190
  %v1192 = vmul.f32 %v1187, %v1191
  %1193 = vmatpush.msra.mxu0 %v357
  %1194 = vmatpush.msra.mxu0 %v353
  %1195 = vmatpush.msra.mxu0 %v349
  %1196 = vmatpush.msra.mxu0 %v345
  %1197 = vmatpush.msra.mxu0 %v341
  %1198 = vmatpush.msra.mxu0 %v337
  %1199 = vmatpush.msra.mxu0 %v333
  %1200 = vmatpush.msra.mxu0 %v329
  %1201 = vmatpush.msra.mxu0 %v325
  %1202 = vmatpush.msra.mxu0 %v321
  %1203 = vmatpush.msra.mxu0 %v317
  %1204 = vmatpush.msra.mxu0 %v313
  %1205 = vmatpush.msra.mxu0 %v309
  %1206 = vmatpush.msra.mxu0 %v305
  %1207 = vmatpush.msra.mxu0 %v301
  %1208 = vmatpush.msra.mxu0 %v297
  %1209 = vmatmul.f32.gmra.mxu0 %v1192
  %v1210 = vpop.f32.mrf.mxu0
  %v1211 = vadd.f32 %v685, %v1210
  %1212 = vdwg.mxu0
  %1213 = vmatpush.msra.mxu0 %v421
  %1214 = vmatpush.msra.mxu0 %v417
  %1215 = vmatpush.msra.mxu0 %v413
  %1216 = vmatpush.msra.mxu0 %v409
  %1217 = vmatpush.msra.mxu0 %v405
  %1218 = vmatpush.msra.mxu0 %v401
  %1219 = vmatpush.msra.mxu0 %v397
  %1220 = vmatpush.msra.mxu0 %v393
  %1221 = vmatpush.msra.mxu0 %v389
  %1222 = vmatpush.msra.mxu0 %v385
  %1223 = vmatpush.msra.mxu0 %v381
  %1224 = vmatpush.msra.mxu0 %v377
  %1225 = vmatpush.msra.mxu0 %v373
  %1226 = vmatpush.msra.mxu0 %v369
  %1227 = vmatpush.msra.mxu0 %v365
  %1228 = vmatpush.msra.mxu0 %v361
  %1229 = vmatmul.f32.gmra.mxu0 %v969
  %v1230 = vpop.f32.mrf.mxu0
  %v1231 = vadd.f32 %v1211, %v1230
  %1232 = vdwg.mxu0
  %1233 = vmatpush.msra.mxu0 %v358
  %1234 = vmatpush.msra.mxu0 %v354
  %1235 = vmatpush.msra.mxu0 %v350
  %1236 = vmatpush.msra.mxu0 %v346
  %1237 = vmatpush.msra.mxu0 %v342
  %1238 = vmatpush.msra.mxu0 %v338
  %1239 = vmatpush.msra.mxu0 %v334
  %1240 = vmatpush.msra.mxu0 %v330
  %1241 = vmatpush.msra.mxu0 %v326
  %1242 = vmatpush.msra.mxu0 %v322
  %1243 = vmatpush.msra.mxu0 %v318
  %1244 = vmatpush.msra.mxu0 %v314
  %1245 = vmatpush.msra.mxu0 %v310
  %1246 = vmatpush.msra.mxu0 %v306
  %1247 = vmatpush.msra.mxu0 %v302
  %1248 = vmatpush.msra.mxu0 %v298
  %1249 = vmatmul.f32.gmra.mxu0 %v1192
  %v1250 = vpop.f32.mrf.mxu0
  %v1251 = vadd.f32 %v745, %v1250
  %1252 = vdwg.mxu0
  %1253 = vmatpush.msra.mxu0 %v422
  %1254 = vmatpush.msra.mxu0 %v418
  %1255 = vmatpush.msra.mxu0 %v414
  %1256 = vmatpush.msra.mxu0 %v410
  %1257 = vmatpush.msra.mxu0 %v406
  %1258 = vmatpush.msra.mxu0 %v402
  %1259 = vmatpush.msra.mxu0 %v398
  %1260 = vmatpush.msra.mxu0 %v394
  %1261 = vmatpush.msra.mxu0 %v390
  %1262 = vmatpush.msra.mxu0 %v386
  %1263 = vmatpush.msra.mxu0 %v382
  %1264 = vmatpush.msra.mxu0 %v378
  %1265 = vmatpush.msra.mxu0 %v374
  %1266 = vmatpush.msra.mxu0 %v370
  %1267 = vmatpush.msra.mxu0 %v366
  %1268 = vmatpush.msra.mxu0 %v362
  %1269 = vmatmul.f32.gmra.mxu0 %v969
  %v1270 = vpop.f32.mrf.mxu0
  %v1271 = vadd.f32 %v1251, %v1270
  %1272 = vdwg.mxu0
  %1273 = vmatpush.msra.mxu0 %v359
  %1274 = vmatpush.msra.mxu0 %v355
  %1275 = vmatpush.msra.mxu0 %v351
  %1276 = vmatpush.msra.mxu0 %v347
  %1277 = vmatpush.msra.mxu0 %v343
  %1278 = vmatpush.msra.mxu0 %v339
  %1279 = vmatpush.msra.mxu0 %v335
  %1280 = vmatpush.msra.mxu0 %v331
  %1281 = vmatpush.msra.mxu0 %v327
  %1282 = vmatpush.msra.mxu0 %v323
  %1283 = vmatpush.msra.mxu0 %v319
  %1284 = vmatpush.msra.mxu0 %v315
  %1285 = vmatpush.msra.mxu0 %v311
  %1286 = vmatpush.msra.mxu0 %v307
  %1287 = vmatpush.msra.mxu0 %v303
  %1288 = vmatpush.msra.mxu0 %v299
  %1289 = vmatmul.f32.gmra.mxu0 %v1192
  %v1290 = vpop.f32.mrf.mxu0
  %v1291 = vadd.f32 %v805, %v1290
  %1292 = vdwg.mxu0
  %1293 = vmatpush.msra.mxu0 %v423
  %1294 = vmatpush.msra.mxu0 %v419
  %1295 = vmatpush.msra.mxu0 %v415
  %1296 = vmatpush.msra.mxu0 %v411
  %1297 = vmatpush.msra.mxu0 %v407
  %1298 = vmatpush.msra.mxu0 %v403
  %1299 = vmatpush.msra.mxu0 %v399
  %1300 = vmatpush.msra.mxu0 %v395
  %1301 = vmatpush.msra.mxu0 %v391
  %1302 = vmatpush.msra.mxu0 %v387
  %1303 = vmatpush.msra.mxu0 %v383
  %1304 = vmatpush.msra.mxu0 %v379
  %1305 = vmatpush.msra.mxu0 %v375
  %1306 = vmatpush.msra.mxu0 %v371
  %1307 = vmatpush.msra.mxu0 %v367
  %1308 = vmatpush.msra.mxu0 %v363
  %1309 = vmatmul.f32.gmra.mxu0 %v969
  %v1310 = vpop.f32.mrf.mxu0
  %v1311 = vadd.f32 %v1291, %v1310
  %1312 = vdwg.mxu0
  %1313 = vmatpush.msra.mxu0 %v360
  %1314 = vmatpush.msra.mxu0 %v356
  %1315 = vmatpush.msra.mxu0 %v352
  %1316 = vmatpush.msra.mxu0 %v348
  %1317 = vmatpush.msra.mxu0 %v344
  %1318 = vmatpush.msra.mxu0 %v340
  %1319 = vmatpush.msra.mxu0 %v336
  %1320 = vmatpush.msra.mxu0 %v332
  %1321 = vmatpush.msra.mxu0 %v328
  %1322 = vmatpush.msra.mxu0 %v324
  %1323 = vmatpush.msra.mxu0 %v320
  %1324 = vmatpush.msra.mxu0 %v316
  %1325 = vmatpush.msra.mxu0 %v312
  %1326 = vmatpush.msra.mxu0 %v308
  %1327 = vmatpush.msra.mxu0 %v304
  %1328 = vmatpush.msra.mxu0 %v300
  %1329 = vmatmul.f32.gmra.mxu0 %v1192
  %v1330 = vpop.f32.mrf.mxu0
  %v1331 = vadd.f32 %v865, %v1330
  %1332 = vdwg.mxu0
  %1333 = vmatpush.msra.mxu0 %v424
  %1334 = vmatpush.msra.mxu0 %v420
  %1335 = vmatpush.msra.mxu0 %v416
  %1336 = vmatpush.msra.mxu0 %v412
  %1337 = vmatpush.msra.mxu0 %v408
  %1338 = vmatpush.msra.mxu0 %v404
  %1339 = vmatpush.msra.mxu0 %v400
  %1340 = vmatpush.msra.mxu0 %v396
  %1341 = vmatpush.msra.mxu0 %v392
  %1342 = vmatpush.msra.mxu0 %v388
  %1343 = vmatpush.msra.mxu0 %v384
  %1344 = vmatpush.msra.mxu0 %v380
  %1345 = vmatpush.msra.mxu0 %v376
  %1346 = vmatpush.msra.mxu0 %v372
  %1347 = vmatpush.msra.mxu0 %v368
  %1348 = vmatpush.msra.mxu0 %v364
  %1349 = vmatmul.f32.gmra.mxu0 %v969
  %v1350 = vpop.f32.mrf.mxu0
  %v1351 = vadd.f32 %v1331, %v1350
  %1352 = vdwg.mxu0
  %v1353 = vxor.u32 %v1231, 2147483648
  %v1354 = vmul.f32 %v1353, 1.442695
  %v1355 = vpow.pop %v1354
  %v1356 = vadd.f32 %v1355, 1.0
  %v1357 = vrcp.pop %v1356
  %v1358 = vmul.f32 %v1356, %v1357
  %v1359 = vsub.f32 1.0, %v1358
  %v1360 = vmul.f32 %v1357, %v1359
  %v1361 = vadd.f32 %v1357, %v1360
  %vm1362 = vweird.f32 %v1356
  %vm1363 = vweird.f32 %v1357
  %vm1364 = vmor %vm1362, %vm1363
  %v1365 = vsel %vm1364, %v1357, %v1361
  %v1366 = vand.u32 2147483647, %v1356
  %vm1367 = vcmp.eq.f32.partialorder %v1366, 8.507059e+37
  %v1368 = vand.u32 %v1356, 2147483648
  %v1369 = vor.u32 1.1754944e-38, %v1368
  %v1370 = vsel %vm1367, %v1369, %v1365
  %v1371 = vmul.f32 1.0, %v1370
  %v1372 = vxor.u32 %v1271, 2147483648
  %v1373 = vmul.f32 %v1372, 1.442695
  %v1374 = vpow.pop %v1373
  %v1375 = vadd.f32 %v1374, 1.0
  %v1376 = vrcp.pop %v1375
  %v1377 = vmul.f32 %v1375, %v1376
  %v1378 = vsub.f32 1.0, %v1377
  %v1379 = vmul.f32 %v1376, %v1378
  %v1380 = vadd.f32 %v1376, %v1379
  %vm1381 = vweird.f32 %v1375
  %vm1382 = vweird.f32 %v1376
  %vm1383 = vmor %vm1381, %vm1382
  %v1384 = vsel %vm1383, %v1376, %v1380
  %v1385 = vand.u32 2147483647, %v1375
  %vm1386 = vcmp.eq.f32.partialorder %v1385, 8.507059e+37
  %v1387 = vand.u32 %v1375, 2147483648
  %v1388 = vor.u32 1.1754944e-38, %v1387
  %v1389 = vsel %vm1386, %v1388, %v1384
  %v1390 = vmul.f32 1.0, %v1389
  %v1391 = vtanh.pop %v1311
  %v1392 = vxor.u32 %v1351, 2147483648
  %v1393 = vmul.f32 %v1392, 1.442695
  %v1394 = vpow.pop %v1393
  %v1395 = vadd.f32 %v1394, 1.0
  %v1396 = vrcp.pop %v1395
  %v1397 = vmul.f32 %v1395, %v1396
  %v1398 = vsub.f32 1.0, %v1397
  %v1399 = vmul.f32 %v1396, %v1398
  %v1400 = vadd.f32 %v1396, %v1399
  %vm1401 = vweird.f32 %v1395
  %vm1402 = vweird.f32 %v1396
  %vm1403 = vmor %vm1401, %vm1402
  %v1404 = vsel %vm1403, %v1396, %v1400
  %v1405 = vand.u32 2147483647, %v1395
  %vm1406 = vcmp.eq.f32.partialorder %v1405, 8.507059e+37
  %v1407 = vand.u32 %v1395, 2147483648
  %v1408 = vor.u32 1.1754944e-38, %v1407
  %v1409 = vsel %vm1406, %v1408, %v1404
  %v1410 = vmul.f32 1.0, %v1409
  %v1411 = vmul.f32 %v1390, %v967
  %v1412 = vmul.f32 %v1371, %v1391
  %v1413 = vadd.f32 %v1411, %v1412
  %v1414 = vtanh.pop %v1413
  %v1415 = vmul.f32 %v1410, %v1414
  %1416 = vmatpush.msra.mxu0 %v164
  %1417 = vmatpush.msra.mxu0 %v160
  %1418 = vmatpush.msra.mxu0 %v156
  %1419 = vmatpush.msra.mxu0 %v152
  %1420 = vmatpush.msra.mxu0 %v148
  %1421 = vmatpush.msra.mxu0 %v144
  %1422 = vmatpush.msra.mxu0 %v140
  %1423 = vmatpush.msra.mxu0 %v136
  %1424 = vmatpush.msra.mxu0 %v132
  %1425 = vmatpush.msra.mxu0 %v128
  %1426 = vmatpush.msra.mxu0 %v124
  %1427 = vmatpush.msra.mxu0 %v120
  %1428 = vmatpush.msra.mxu0 %v116
  %1429 = vmatpush.msra.mxu0 %v112
  %1430 = vmatpush.msra.mxu0 %v108
  %1431 = vmatpush.msra.mxu0 %v104
  %1432 = vmatmul.f32.gmra.mxu0 %v87
  %v1433 = vpop.f32.mrf.mxu0
  %v1434 = vadd.f32 %v427, %v1433
  %1435 = vdwg.mxu0
  %1436 = vmatpush.msra.mxu0 %v228
  %1437 = vmatpush.msra.mxu0 %v224
  %1438 = vmatpush.msra.mxu0 %v220
  %1439 = vmatpush.msra.mxu0 %v216
  %1440 = vmatpush.msra.mxu0 %v212
  %1441 = vmatpush.msra.mxu0 %v208
  %1442 = vmatpush.msra.mxu0 %v204
  %1443 = vmatpush.msra.mxu0 %v200
  %1444 = vmatpush.msra.mxu0 %v196
  %1445 = vmatpush.msra.mxu0 %v192
  %1446 = vmatpush.msra.mxu0 %v188
  %1447 = vmatpush.msra.mxu0 %v184
  %1448 = vmatpush.msra.mxu0 %v180
  %1449 = vmatpush.msra.mxu0 %v176
  %1450 = vmatpush.msra.mxu0 %v172
  %1451 = vmatpush.msra.mxu0 %v168
  %1452 = vmatmul.f32.gmra.mxu0 %v1192
  %v1453 = vpop.f32.mrf.mxu0
  %v1454 = vadd.f32 %v1434, %v1453
  %1455 = vdwg.mxu0
  %1456 = vmatpush.msra.mxu0 %v165
  %1457 = vmatpush.msra.mxu0 %v161
  %1458 = vmatpush.msra.mxu0 %v157
  %1459 = vmatpush.msra.mxu0 %v153
  %1460 = vmatpush.msra.mxu0 %v149
  %1461 = vmatpush.msra.mxu0 %v145
  %1462 = vmatpush.msra.mxu0 %v141
  %1463 = vmatpush.msra.mxu0 %v137
  %1464 = vmatpush.msra.mxu0 %v133
  %1465 = vmatpush.msra.mxu0 %v129
  %1466 = vmatpush.msra.mxu0 %v125
  %1467 = vmatpush.msra.mxu0 %v121
  %1468 = vmatpush.msra.mxu0 %v117
  %1469 = vmatpush.msra.mxu0 %v113
  %1470 = vmatpush.msra.mxu0 %v109
  %1471 = vmatpush.msra.mxu0 %v105
  %1472 = vmatmul.f32.gmra.mxu0 %v87
  %v1473 = vpop.f32.mrf.mxu0
  %v1474 = vadd.f32 %v428, %v1473
  %1475 = vdwg.mxu0
  %1476 = vmatpush.msra.mxu0 %v229
  %1477 = vmatpush.msra.mxu0 %v225
  %1478 = vmatpush.msra.mxu0 %v221
  %1479 = vmatpush.msra.mxu0 %v217
  %1480 = vmatpush.msra.mxu0 %v213
  %1481 = vmatpush.msra.mxu0 %v209
  %1482 = vmatpush.msra.mxu0 %v205
  %1483 = vmatpush.msra.mxu0 %v201
  %1484 = vmatpush.msra.mxu0 %v197
  %1485 = vmatpush.msra.mxu0 %v193
  %1486 = vmatpush.msra.mxu0 %v189
  %1487 = vmatpush.msra.mxu0 %v185
  %1488 = vmatpush.msra.mxu0 %v181
  %1489 = vmatpush.msra.mxu0 %v177
  %1490 = vmatpush.msra.mxu0 %v173
  %1491 = vmatpush.msra.mxu0 %v169
  %1492 = vmatmul.f32.gmra.mxu0 %v1192
  %v1493 = vpop.f32.mrf.mxu0
  %v1494 = vadd.f32 %v1474, %v1493
  %1495 = vdwg.mxu0
  %1496 = vmatpush.msra.mxu0 %v166
  %1497 = vmatpush.msra.mxu0 %v162
  %1498 = vmatpush.msra.mxu0 %v158
  %1499 = vmatpush.msra.mxu0 %v154
  %1500 = vmatpush.msra.mxu0 %v150
  %1501 = vmatpush.msra.mxu0 %v146
  %1502 = vmatpush.msra.mxu0 %v142
  %1503 = vmatpush.msra.mxu0 %v138
  %1504 = vmatpush.msra.mxu0 %v134
  %1505 = vmatpush.msra.mxu0 %v130
  %1506 = vmatpush.msra.mxu0 %v126
  %1507 = vmatpush.msra.mxu0 %v122
  %1508 = vmatpush.msra.mxu0 %v118
  %1509 = vmatpush.msra.mxu0 %v114
  %1510 = vmatpush.msra.mxu0 %v110
  %1511 = vmatpush.msra.mxu0 %v106
  %1512 = vmatmul.f32.gmra.mxu0 %v87
  %v1513 = vpop.f32.mrf.mxu0
  %v1514 = vadd.f32 %v429, %v1513
  %1515 = vdwg.mxu0
  %1516 = vmatpush.msra.mxu0 %v230
  %1517 = vmatpush.msra.mxu0 %v226
  %1518 = vmatpush.msra.mxu0 %v222
  %1519 = vmatpush.msra.mxu0 %v218
  %1520 = vmatpush.msra.mxu0 %v214
  %1521 = vmatpush.msra.mxu0 %v210
  %1522 = vmatpush.msra.mxu0 %v206
  %1523 = vmatpush.msra.mxu0 %v202
  %1524 = vmatpush.msra.mxu0 %v198
  %1525 = vmatpush.msra.mxu0 %v194
  %1526 = vmatpush.msra.mxu0 %v190
  %1527 = vmatpush.msra.mxu0 %v186
  %1528 = vmatpush.msra.mxu0 %v182
  %1529 = vmatpush.msra.mxu0 %v178
  %1530 = vmatpush.msra.mxu0 %v174
  %1531 = vmatpush.msra.mxu0 %v170
  %1532 = vmatmul.f32.gmra.mxu0 %v1192
  %v1533 = vpop.f32.mrf.mxu0
  %v1534 = vadd.f32 %v1514, %v1533
  %1535 = vdwg.mxu0
  %1536 = vmatpush.msra.mxu0 %v167
  %1537 = vmatpush.msra.mxu0 %v163
  %1538 = vmatpush.msra.mxu0 %v159
  %1539 = vmatpush.msra.mxu0 %v155
  %1540 = vmatpush.msra.mxu0 %v151
  %1541 = vmatpush.msra.mxu0 %v147
  %1542 = vmatpush.msra.mxu0 %v143
  %1543 = vmatpush.msra.mxu0 %v139
  %1544 = vmatpush.msra.mxu0 %v135
  %1545 = vmatpush.msra.mxu0 %v131
  %1546 = vmatpush.msra.mxu0 %v127
  %1547 = vmatpush.msra.mxu0 %v123
  %1548 = vmatpush.msra.mxu0 %v119
  %1549 = vmatpush.msra.mxu0 %v115
  %1550 = vmatpush.msra.mxu0 %v111
  %1551 = vmatpush.msra.mxu0 %v107
  %1552 = vmatmul.f32.gmra.mxu0 %v87
  %v1553 = vpop.f32.mrf.mxu0
  %v1554 = vadd.f32 %v430, %v1553
  %1555 = vdwg.mxu0
  %1556 = vmatpush.msra.mxu0 %v231
  %1557 = vmatpush.msra.mxu0 %v227
  %1558 = vmatpush.msra.mxu0 %v223
  %1559 = vmatpush.msra.mxu0 %v219
  %1560 = vmatpush.msra.mxu0 %v215
  %1561 = vmatpush.msra.mxu0 %v211
  %1562 = vmatpush.msra.mxu0 %v207
  %1563 = vmatpush.msra.mxu0 %v203
  %1564 = vmatpush.msra.mxu0 %v199
  %1565 = vmatpush.msra.mxu0 %v195
  %1566 = vmatpush.msra.mxu0 %v191
  %1567 = vmatpush.msra.mxu0 %v187
  %1568 = vmatpush.msra.mxu0 %v183
  %1569 = vmatpush.msra.mxu0 %v179
  %1570 = vmatpush.msra.mxu0 %v175
  %1571 = vmatpush.msra.mxu0 %v171
  %1572 = vmatmul.f32.gmra.mxu0 %v1192
  %v1573 = vpop.f32.mrf.mxu0
  %v1574 = vadd.f32 %v1554, %v1573
  %1575 = vdwg.mxu0
  %v1576 = vxor.u32 %v1454, 2147483648
  %v1577 = vmul.f32 %v1576, 1.442695
  %v1578 = vpow.pop %v1577
  %v1579 = vadd.f32 %v1578, 1.0
  %v1580 = vrcp.pop %v1579
  %v1581 = vmul.f32 %v1579, %v1580
  %v1582 = vsub.f32 1.0, %v1581
  %v1583 = vmul.f32 %v1580, %v1582
  %v1584 = vadd.f32 %v1580, %v1583
  %vm1585 = vweird.f32 %v1579
  %vm1586 = vweird.f32 %v1580
  %vm1587 = vmor %vm1585, %vm1586
  %v1588 = vsel %vm1587, %v1580, %v1584
  %v1589 = vand.u32 2147483647, %v1579
  %vm1590 = vcmp.eq.f32.partialorder %v1589, 8.507059e+37
  %v1591 = vand.u32 %v1579, 2147483648
  %v1592 = vor.u32 1.1754944e-38, %v1591
  %v1593 = vsel %vm1590, %v1592, %v1588
  %v1594 = vmul.f32 1.0, %v1593
  %v1595 = vxor.u32 %v1494, 2147483648
  %v1596 = vmul.f32 %v1595, 1.442695
  %v1597 = vpow.pop %v1596
  %v1598 = vadd.f32 %v1597, 1.0
  %v1599 = vrcp.pop %v1598
  %v1600 = vmul.f32 %v1598, %v1599
  %v1601 = vsub.f32 1.0, %v1600
  %v1602 = vmul.f32 %v1599, %v1601
  %v1603 = vadd.f32 %v1599, %v1602
  %vm1604 = vweird.f32 %v1598
  %vm1605 = vweird.f32 %v1599
  %vm1606 = vmor %vm1604, %vm1605
  %v1607 = vsel %vm1606, %v1599, %v1603
  %v1608 = vand.u32 2147483647, %v1598
  %vm1609 = vcmp.eq.f32.partialorder %v1608, 8.507059e+37
  %v1610 = vand.u32 %v1598, 2147483648
  %v1611 = vor.u32 1.1754944e-38, %v1610
  %v1612 = vsel %vm1609, %v1611, %v1607
  %v1613 = vmul.f32 1.0, %v1612
  %v1614 = vtanh.pop %v1534
  %v1615 = vxor.u32 %v1574, 2147483648
  %v1616 = vmul.f32 %v1615, 1.442695
  %v1617 = vpow.pop %v1616
  %v1618 = vadd.f32 %v1617, 1.0
  %v1619 = vrcp.pop %v1618
  %v1620 = vmul.f32 %v1618, %v1619
  %v1621 = vsub.f32 1.0, %v1620
  %v1622 = vmul.f32 %v1619, %v1621
  %v1623 = vadd.f32 %v1619, %v1622
  %vm1624 = vweird.f32 %v1618
  %vm1625 = vweird.f32 %v1619
  %vm1626 = vmor %vm1624, %vm1625
  %v1627 = vsel %vm1626, %v1619, %v1623
  %v1628 = vand.u32 2147483647, %v1618
  %vm1629 = vcmp.eq.f32.partialorder %v1628, 8.507059e+37
  %v1630 = vand.u32 %v1618, 2147483648
  %v1631 = vor.u32 1.1754944e-38, %v1630
  %v1632 = vsel %vm1629, %v1631, %v1627
  %v1633 = vmul.f32 1.0, %v1632
  %v1634 = vmul.f32 %v1613, %v1190
  %v1635 = vmul.f32 %v1594, %v1614
  %v1636 = vadd.f32 %v1634, %v1635
  %v1637 = vtanh.pop %v1636
  %v1638 = vmul.f32 %v1633, %v1637
  %1639 = vmatpush.msra.mxu0 %v357
  %1640 = vmatpush.msra.mxu0 %v353
  %1641 = vmatpush.msra.mxu0 %v349
  %1642 = vmatpush.msra.mxu0 %v345
  %1643 = vmatpush.msra.mxu0 %v341
  %1644 = vmatpush.msra.mxu0 %v337
  %1645 = vmatpush.msra.mxu0 %v333
  %1646 = vmatpush.msra.mxu0 %v329
  %1647 = vmatpush.msra.mxu0 %v325
  %1648 = vmatpush.msra.mxu0 %v321
  %1649 = vmatpush.msra.mxu0 %v317
  %1650 = vmatpush.msra.mxu0 %v313
  %1651 = vmatpush.msra.mxu0 %v309
  %1652 = vmatpush.msra.mxu0 %v305
  %1653 = vmatpush.msra.mxu0 %v301
  %1654 = vmatpush.msra.mxu0 %v297
  %1655 = vmatmul.f32.gmra.mxu0 %v1638
  %v1656 = vpop.f32.mrf.mxu0
  %v1657 = vadd.f32 %v685, %v1656
  %1658 = vdwg.mxu0
  %1659 = vmatpush.msra.mxu0 %v421
  %1660 = vmatpush.msra.mxu0 %v417
  %1661 = vmatpush.msra.mxu0 %v413
  %1662 = vmatpush.msra.mxu0 %v409
  %1663 = vmatpush.msra.mxu0 %v405
  %1664 = vmatpush.msra.mxu0 %v401
  %1665 = vmatpush.msra.mxu0 %v397
  %1666 = vmatpush.msra.mxu0 %v393
  %1667 = vmatpush.msra.mxu0 %v389
  %1668 = vmatpush.msra.mxu0 %v385
  %1669 = vmatpush.msra.mxu0 %v381
  %1670 = vmatpush.msra.mxu0 %v377
  %1671 = vmatpush.msra.mxu0 %v373
  %1672 = vmatpush.msra.mxu0 %v369
  %1673 = vmatpush.msra.mxu0 %v365
  %1674 = vmatpush.msra.mxu0 %v361
  %1675 = vmatmul.f32.gmra.mxu0 %v1415
  %v1676 = vpop.f32.mrf.mxu0
  %v1677 = vadd.f32 %v1657, %v1676
  %1678 = vdwg.mxu0
  %1679 = vmatpush.msra.mxu0 %v358
  %1680 = vmatpush.msra.mxu0 %v354
  %1681 = vmatpush.msra.mxu0 %v350
  %1682 = vmatpush.msra.mxu0 %v346
  %1683 = vmatpush.msra.mxu0 %v342
  %1684 = vmatpush.msra.mxu0 %v338
  %1685 = vmatpush.msra.mxu0 %v334
  %1686 = vmatpush.msra.mxu0 %v330
  %1687 = vmatpush.msra.mxu0 %v326
  %1688 = vmatpush.msra.mxu0 %v322
  %1689 = vmatpush.msra.mxu0 %v318
  %1690 = vmatpush.msra.mxu0 %v314
  %1691 = vmatpush.msra.mxu0 %v310
  %1692 = vmatpush.msra.mxu0 %v306
  %1693 = vmatpush.msra.mxu0 %v302
  %1694 = vmatpush.msra.mxu0 %v298
  %1695 = vmatmul.f32.gmra.mxu0 %v1638
  %v1696 = vpop.f32.mrf.mxu0
  %v1697 = vadd.f32 %v745, %v1696
  %1698 = vdwg.mxu0
  %1699 = vmatpush.msra.mxu0 %v422
  %1700 = vmatpush.msra.mxu0 %v418
  %1701 = vmatpush.msra.mxu0 %v414
  %1702 = vmatpush.msra.mxu0 %v410
  %1703 = vmatpush.msra.mxu0 %v406
  %1704 = vmatpush.msra.mxu0 %v402
  %1705 = vmatpush.msra.mxu0 %v398
  %1706 = vmatpush.msra.mxu0 %v394
  %1707 = vmatpush.msra.mxu0 %v390
  %1708 = vmatpush.msra.mxu0 %v386
  %1709 = vmatpush.msra.mxu0 %v382
  %1710 = vmatpush.msra.mxu0 %v378
  %1711 = vmatpush.msra.mxu0 %v374
  %1712 = vmatpush.msra.mxu0 %v370
  %1713 = vmatpush.msra.mxu0 %v366
  %1714 = vmatpush.msra.mxu0 %v362
  %1715 = vmatmul.f32.gmra.mxu0 %v1415
  %v1716 = vpop.f32.mrf.mxu0
  %v1717 = vadd.f32 %v1697, %v1716
  %1718 = vdwg.mxu0
  %1719 = vmatpush.msra.mxu0 %v359
  %1720 = vmatpush.msra.mxu0 %v355
  %1721 = vmatpush.msra.mxu0 %v351
  %1722 = vmatpush.msra.mxu0 %v347
  %1723 = vmatpush.msra.mxu0 %v343
  %1724 = vmatpush.msra.mxu0 %v339
  %1725 = vmatpush.msra.mxu0 %v335
  %1726 = vmatpush.msra.mxu0 %v331
  %1727 = vmatpush.msra.mxu0 %v327
  %1728 = vmatpush.msra.mxu0 %v323
  %1729 = vmatpush.msra.mxu0 %v319
  %1730 = vmatpush.msra.mxu0 %v315
  %1731 = vmatpush.msra.mxu0 %v311
  %1732 = vmatpush.msra.mxu0 %v307
  %1733 = vmatpush.msra.mxu0 %v303
  %1734 = vmatpush.msra.mxu0 %v299
  %1735 = vmatmul.f32.gmra.mxu0 %v1638
  %v1736 = vpop.f32.mrf.mxu0
  %v1737 = vadd.f32 %v805, %v1736
  %1738 = vdwg.mxu0
  %1739 = vmatpush.msra.mxu0 %v423
  %1740 = vmatpush.msra.mxu0 %v419
  %1741 = vmatpush.msra.mxu0 %v415
  %1742 = vmatpush.msra.mxu0 %v411
  %1743 = vmatpush.msra.mxu0 %v407
  %1744 = vmatpush.msra.mxu0 %v403
  %1745 = vmatpush.msra.mxu0 %v399
  %1746 = vmatpush.msra.mxu0 %v395
  %1747 = vmatpush.msra.mxu0 %v391
  %1748 = vmatpush.msra.mxu0 %v387
  %1749 = vmatpush.msra.mxu0 %v383
  %1750 = vmatpush.msra.mxu0 %v379
  %1751 = vmatpush.msra.mxu0 %v375
  %1752 = vmatpush.msra.mxu0 %v371
  %1753 = vmatpush.msra.mxu0 %v367
  %1754 = vmatpush.msra.mxu0 %v363
  %1755 = vmatmul.f32.gmra.mxu0 %v1415
  %v1756 = vpop.f32.mrf.mxu0
  %v1757 = vadd.f32 %v1737, %v1756
  %1758 = vdwg.mxu0
  %1759 = vmatpush.msra.mxu0 %v360
  %1760 = vmatpush.msra.mxu0 %v356
  %1761 = vmatpush.msra.mxu0 %v352
  %1762 = vmatpush.msra.mxu0 %v348
  %1763 = vmatpush.msra.mxu0 %v344
  %1764 = vmatpush.msra.mxu0 %v340
  %1765 = vmatpush.msra.mxu0 %v336
  %1766 = vmatpush.msra.mxu0 %v332
  %1767 = vmatpush.msra.mxu0 %v328
  %1768 = vmatpush.msra.mxu0 %v324
  %1769 = vmatpush.msra.mxu0 %v320
  %1770 = vmatpush.msra.mxu0 %v316
  %1771 = vmatpush.msra.mxu0 %v312
  %1772 = vmatpush.msra.mxu0 %v308
  %1773 = vmatpush.msra.mxu0 %v304
  %1774 = vmatpush.msra.mxu0 %v300
  %1775 = vmatmul.f32.gmra.mxu0 %v1638
  %v1776 = vpop.f32.mrf.mxu0
  %v1777 = vadd.f32 %v865, %v1776
  %1778 = vdwg.mxu0
  %1779 = vmatpush.msra.mxu0 %v424
  %1780 = vmatpush.msra.mxu0 %v420
  %1781 = vmatpush.msra.mxu0 %v416
  %1782 = vmatpush.msra.mxu0 %v412
  %1783 = vmatpush.msra.mxu0 %v408
  %1784 = vmatpush.msra.mxu0 %v404
  %1785 = vmatpush.msra.mxu0 %v400
  %1786 = vmatpush.msra.mxu0 %v396
  %1787 = vmatpush.msra.mxu0 %v392
  %1788 = vmatpush.msra.mxu0 %v388
  %1789 = vmatpush.msra.mxu0 %v384
  %1790 = vmatpush.msra.mxu0 %v380
  %1791 = vmatpush.msra.mxu0 %v376
  %1792 = vmatpush.msra.mxu0 %v372
  %1793 = vmatpush.msra.mxu0 %v368
  %1794 = vmatpush.msra.mxu0 %v364
  %1795 = vmatmul.f32.gmra.mxu0 %v1415
  %v1796 = vpop.f32.mrf.mxu0
  %v1797 = vadd.f32 %v1777, %v1796
  %1798 = vdwg.mxu0
  %v1799 = vxor.u32 %v1677, 2147483648
  %v1800 = vmul.f32 %v1799, 1.442695
  %v1801 = vpow.pop %v1800
  %v1802 = vadd.f32 %v1801, 1.0
  %v1803 = vrcp.pop %v1802
  %v1804 = vmul.f32 %v1802, %v1803
  %v1805 = vsub.f32 1.0, %v1804
  %v1806 = vmul.f32 %v1803, %v1805
  %v1807 = vadd.f32 %v1803, %v1806
  %vm1808 = vweird.f32 %v1802
  %vm1809 = vweird.f32 %v1803
  %vm1810 = vmor %vm1808, %vm1809
  %v1811 = vsel %vm1810, %v1803, %v1807
  %v1812 = vand.u32 2147483647, %v1802
  %vm1813 = vcmp.eq.f32.partialorder %v1812, 8.507059e+37
  %v1814 = vand.u32 %v1802, 2147483648
  %v1815 = vor.u32 1.1754944e-38, %v1814
  %v1816 = vsel %vm1813, %v1815, %v1811
  %v1817 = vmul.f32 1.0, %v1816
  %v1818 = vxor.u32 %v1717, 2147483648
  %v1819 = vmul.f32 %v1818, 1.442695
  %v1820 = vpow.pop %v1819
  %v1821 = vadd.f32 %v1820, 1.0
  %v1822 = vrcp.pop %v1821
  %v1823 = vmul.f32 %v1821, %v1822
  %v1824 = vsub.f32 1.0, %v1823
  %v1825 = vmul.f32 %v1822, %v1824
  %v1826 = vadd.f32 %v1822, %v1825
  %vm1827 = vweird.f32 %v1821
  %vm1828 = vweird.f32 %v1822
  %vm1829 = vmor %vm1827, %vm1828
  %v1830 = vsel %vm1829, %v1822, %v1826
  %v1831 = vand.u32 2147483647, %v1821
  %vm1832 = vcmp.eq.f32.partialorder %v1831, 8.507059e+37
  %v1833 = vand.u32 %v1821, 2147483648
  %v1834 = vor.u32 1.1754944e-38, %v1833
  %v1835 = vsel %vm1832, %v1834, %v1830
  %v1836 = vmul.f32 1.0, %v1835
  %v1837 = vtanh.pop %v1757
  %v1838 = vxor.u32 %v1797, 2147483648
  %v1839 = vmul.f32 %v1838, 1.442695
  %v1840 = vpow.pop %v1839
  %v1841 = vadd.f32 %v1840, 1.0
  %v1842 = vrcp.pop %v1841
  %v1843 = vmul.f32 %v1841, %v1842
  %v1844 = vsub.f32 1.0, %v1843
  %v1845 = vmul.f32 %v1842, %v1844
  %v1846 = vadd.f32 %v1842, %v1845
  %vm1847 = vweird.f32 %v1841
  %vm1848 = vweird.f32 %v1842
  %vm1849 = vmor %vm1847, %vm1848
  %v1850 = vsel %vm1849, %v1842, %v1846
  %v1851 = vand.u32 2147483647, %v1841
  %vm1852 = vcmp.eq.f32.partialorder %v1851, 8.507059e+37
  %v1853 = vand.u32 %v1841, 2147483648
  %v1854 = vor.u32 1.1754944e-38, %v1853
  %v1855 = vsel %vm1852, %v1854, %v1850
  %v1856 = vmul.f32 1.0, %v1855
  %v1857 = vmul.f32 %v1836, %v1413
  %v1858 = vmul.f32 %v1817, %v1837
  %v1859 = vadd.f32 %v1857, %v1858
  %v1860 = vtanh.pop %v1859
  %v1861 = vmul.f32 %v1856, %v1860
  %1862 = vmatpush.msra.mxu0 %v164
  %1863 = vmatpush.msra.mxu0 %v160
  %1864 = vmatpush.msra.mxu0 %v156
  %1865 = vmatpush.msra.mxu0 %v152
  %1866 = vmatpush.msra.mxu0 %v148
  %1867 = vmatpush.msra.mxu0 %v144
  %1868 = vmatpush.msra.mxu0 %v140
  %1869 = vmatpush.msra.mxu0 %v136
  %1870 = vmatpush.msra.mxu0 %v132
  %1871 = vmatpush.msra.mxu0 %v128
  %1872 = vmatpush.msra.mxu0 %v124
  %1873 = vmatpush.msra.mxu0 %v120
  %1874 = vmatpush.msra.mxu0 %v116
  %1875 = vmatpush.msra.mxu0 %v112
  %1876 = vmatpush.msra.mxu0 %v108
  %1877 = vmatpush.msra.mxu0 %v104
  %1878 = vmatmul.f32.gmra.mxu0 %v90
  %v1879 = vpop.f32.mrf.mxu0
  %v1880 = vadd.f32 %v427, %v1879
  %1881 = vdwg.mxu0
  %1882 = vmatpush.msra.mxu0 %v228
  %1883 = vmatpush.msra.mxu0 %v224
  %1884 = vmatpush.msra.mxu0 %v220
  %1885 = vmatpush.msra.mxu0 %v216
  %1886 = vmatpush.msra.mxu0 %v212
  %1887 = vmatpush.msra.mxu0 %v208
  %1888 = vmatpush.msra.mxu0 %v204
  %1889 = vmatpush.msra.mxu0 %v200
  %1890 = vmatpush.msra.mxu0 %v196
  %1891 = vmatpush.msra.mxu0 %v192
  %1892 = vmatpush.msra.mxu0 %v188
  %1893 = vmatpush.msra.mxu0 %v184
  %1894 = vmatpush.msra.mxu0 %v180
  %1895 = vmatpush.msra.mxu0 %v176
  %1896 = vmatpush.msra.mxu0 %v172
  %1897 = vmatpush.msra.mxu0 %v168
  %1898 = vmatmul.f32.gmra.mxu0 %v1638
  %v1899 = vpop.f32.mrf.mxu0
  %v1900 = vadd.f32 %v1880, %v1899
  %1901 = vdwg.mxu0
  %1902 = vmatpush.msra.mxu0 %v165
  %1903 = vmatpush.msra.mxu0 %v161
  %1904 = vmatpush.msra.mxu0 %v157
  %1905 = vmatpush.msra.mxu0 %v153
  %1906 = vmatpush.msra.mxu0 %v149
  %1907 = vmatpush.msra.mxu0 %v145
  %1908 = vmatpush.msra.mxu0 %v141
  %1909 = vmatpush.msra.mxu0 %v137
  %1910 = vmatpush.msra.mxu0 %v133
  %1911 = vmatpush.msra.mxu0 %v129
  %1912 = vmatpush.msra.mxu0 %v125
  %1913 = vmatpush.msra.mxu0 %v121
  %1914 = vmatpush.msra.mxu0 %v117
  %1915 = vmatpush.msra.mxu0 %v113
  %1916 = vmatpush.msra.mxu0 %v109
  %1917 = vmatpush.msra.mxu0 %v105
  %1918 = vmatmul.f32.gmra.mxu0 %v90
  %v1919 = vpop.f32.mrf.mxu0
  %v1920 = vadd.f32 %v428, %v1919
  %1921 = vdwg.mxu0
  %1922 = vmatpush.msra.mxu0 %v229
  %1923 = vmatpush.msra.mxu0 %v225
  %1924 = vmatpush.msra.mxu0 %v221
  %1925 = vmatpush.msra.mxu0 %v217
  %1926 = vmatpush.msra.mxu0 %v213
  %1927 = vmatpush.msra.mxu0 %v209
  %1928 = vmatpush.msra.mxu0 %v205
  %1929 = vmatpush.msra.mxu0 %v201
  %1930 = vmatpush.msra.mxu0 %v197
  %1931 = vmatpush.msra.mxu0 %v193
  %1932 = vmatpush.msra.mxu0 %v189
  %1933 = vmatpush.msra.mxu0 %v185
  %1934 = vmatpush.msra.mxu0 %v181
  %1935 = vmatpush.msra.mxu0 %v177
  %1936 = vmatpush.msra.mxu0 %v173
  %1937 = vmatpush.msra.mxu0 %v169
  %1938 = vmatmul.f32.gmra.mxu0 %v1638
  %v1939 = vpop.f32.mrf.mxu0
  %v1940 = vadd.f32 %v1920, %v1939
  %1941 = vdwg.mxu0
  %1942 = vmatpush.msra.mxu0 %v166
  %1943 = vmatpush.msra.mxu0 %v162
  %1944 = vmatpush.msra.mxu0 %v158
  %1945 = vmatpush.msra.mxu0 %v154
  %1946 = vmatpush.msra.mxu0 %v150
  %1947 = vmatpush.msra.mxu0 %v146
  %1948 = vmatpush.msra.mxu0 %v142
  %1949 = vmatpush.msra.mxu0 %v138
  %1950 = vmatpush.msra.mxu0 %v134
  %1951 = vmatpush.msra.mxu0 %v130
  %1952 = vmatpush.msra.mxu0 %v126
  %1953 = vmatpush.msra.mxu0 %v122
  %1954 = vmatpush.msra.mxu0 %v118
  %1955 = vmatpush.msra.mxu0 %v114
  %1956 = vmatpush.msra.mxu0 %v110
  %1957 = vmatpush.msra.mxu0 %v106
  %1958 = vmatmul.f32.gmra.mxu0 %v90
  %v1959 = vpop.f32.mrf.mxu0
  %v1960 = vadd.f32 %v429, %v1959
  %1961 = vdwg.mxu0
  %1962 = vmatpush.msra.mxu0 %v230
  %1963 = vmatpush.msra.mxu0 %v226
  %1964 = vmatpush.msra.mxu0 %v222
  %1965 = vmatpush.msra.mxu0 %v218
  %1966 = vmatpush.msra.mxu0 %v214
  %1967 = vmatpush.msra.mxu0 %v210
  %1968 = vmatpush.msra.mxu0 %v206
  %1969 = vmatpush.msra.mxu0 %v202
  %1970 = vmatpush.msra.mxu0 %v198
  %1971 = vmatpush.msra.mxu0 %v194
  %1972 = vmatpush.msra.mxu0 %v190
  %1973 = vmatpush.msra.mxu0 %v186
  %1974 = vmatpush.msra.mxu0 %v182
  %1975 = vmatpush.msra.mxu0 %v178
  %1976 = vmatpush.msra.mxu0 %v174
  %1977 = vmatpush.msra.mxu0 %v170
  %1978 = vmatmul.f32.gmra.mxu0 %v1638
  %v1979 = vpop.f32.mrf.mxu0
  %v1980 = vadd.f32 %v1960, %v1979
  %1981 = vdwg.mxu0
  %1982 = vmatpush.msra.mxu0 %v167
  %1983 = vmatpush.msra.mxu0 %v163
  %1984 = vmatpush.msra.mxu0 %v159
  %1985 = vmatpush.msra.mxu0 %v155
  %1986 = vmatpush.msra.mxu0 %v151
  %1987 = vmatpush.msra.mxu0 %v147
  %1988 = vmatpush.msra.mxu0 %v143
  %1989 = vmatpush.msra.mxu0 %v139
  %1990 = vmatpush.msra.mxu0 %v135
  %1991 = vmatpush.msra.mxu0 %v131
  %1992 = vmatpush.msra.mxu0 %v127
  %1993 = vmatpush.msra.mxu0 %v123
  %1994 = vmatpush.msra.mxu0 %v119
  %1995 = vmatpush.msra.mxu0 %v115
  %1996 = vmatpush.msra.mxu0 %v111
  %1997 = vmatpush.msra.mxu0 %v107
  %1998 = vmatmul.f32.gmra.mxu0 %v90
  %v1999 = vpop.f32.mrf.mxu0
  %v2000 = vadd.f32 %v430, %v1999
  %2001 = vdwg.mxu0
  %2002 = vmatpush.msra.mxu0 %v231
  %2003 = vmatpush.msra.mxu0 %v227
  %2004 = vmatpush.msra.mxu0 %v223
  %2005 = vmatpush.msra.mxu0 %v219
  %2006 = vmatpush.msra.mxu0 %v215
  %2007 = vmatpush.msra.mxu0 %v211
  %2008 = vmatpush.msra.mxu0 %v207
  %2009 = vmatpush.msra.mxu0 %v203
  %2010 = vmatpush.msra.mxu0 %v199
  %2011 = vmatpush.msra.mxu0 %v195
  %2012 = vmatpush.msra.mxu0 %v191
  %2013 = vmatpush.msra.mxu0 %v187
  %2014 = vmatpush.msra.mxu0 %v183
  %2015 = vmatpush.msra.mxu0 %v179
  %2016 = vmatpush.msra.mxu0 %v175
  %2017 = vmatpush.msra.mxu0 %v171
  %2018 = vmatmul.f32.gmra.mxu0 %v1638
  %v2019 = vpop.f32.mrf.mxu0
  %v2020 = vadd.f32 %v2000, %v2019
  %2021 = vdwg.mxu0
  %v2022 = vxor.u32 %v1900, 2147483648
  %v2023 = vmul.f32 %v2022, 1.442695
  %v2024 = vpow.pop %v2023
  %v2025 = vadd.f32 %v2024, 1.0
  %v2026 = vrcp.pop %v2025
  %v2027 = vmul.f32 %v2025, %v2026
  %v2028 = vsub.f32 1.0, %v2027
  %v2029 = vmul.f32 %v2026, %v2028
  %v2030 = vadd.f32 %v2026, %v2029
  %vm2031 = vweird.f32 %v2025
  %vm2032 = vweird.f32 %v2026
  %vm2033 = vmor %vm2031, %vm2032
  %v2034 = vsel %vm2033, %v2026, %v2030
  %v2035 = vand.u32 2147483647, %v2025
  %vm2036 = vcmp.eq.f32.partialorder %v2035, 8.507059e+37
  %v2037 = vand.u32 %v2025, 2147483648
  %v2038 = vor.u32 1.1754944e-38, %v2037
  %v2039 = vsel %vm2036, %v2038, %v2034
  %v2040 = vmul.f32 1.0, %v2039
  %v2041 = vxor.u32 %v1940, 2147483648
  %v2042 = vmul.f32 %v2041, 1.442695
  %v2043 = vpow.pop %v2042
  %v2044 = vadd.f32 %v2043, 1.0
  %v2045 = vrcp.pop %v2044
  %v2046 = vmul.f32 %v2044, %v2045
  %v2047 = vsub.f32 1.0, %v2046
  %v2048 = vmul.f32 %v2045, %v2047
  %v2049 = vadd.f32 %v2045, %v2048
  %vm2050 = vweird.f32 %v2044
  %vm2051 = vweird.f32 %v2045
  %vm2052 = vmor %vm2050, %vm2051
  %v2053 = vsel %vm2052, %v2045, %v2049
  %v2054 = vand.u32 2147483647, %v2044
  %vm2055 = vcmp.eq.f32.partialorder %v2054, 8.507059e+37
  %v2056 = vand.u32 %v2044, 2147483648
  %v2057 = vor.u32 1.1754944e-38, %v2056
  %v2058 = vsel %vm2055, %v2057, %v2053
  %v2059 = vmul.f32 1.0, %v2058
  %v2060 = vtanh.pop %v1980
  %v2061 = vxor.u32 %v2020, 2147483648
  %v2062 = vmul.f32 %v2061, 1.442695
  %v2063 = vpow.pop %v2062
  %v2064 = vadd.f32 %v2063, 1.0
  %v2065 = vrcp.pop %v2064
  %v2066 = vmul.f32 %v2064, %v2065
  %v2067 = vsub.f32 1.0, %v2066
  %v2068 = vmul.f32 %v2065, %v2067
  %v2069 = vadd.f32 %v2065, %v2068
  %vm2070 = vweird.f32 %v2064
  %vm2071 = vweird.f32 %v2065
  %vm2072 = vmor %vm2070, %vm2071
  %v2073 = vsel %vm2072, %v2065, %v2069
  %v2074 = vand.u32 2147483647, %v2064
  %vm2075 = vcmp.eq.f32.partialorder %v2074, 8.507059e+37
  %v2076 = vand.u32 %v2064, 2147483648
  %v2077 = vor.u32 1.1754944e-38, %v2076
  %v2078 = vsel %vm2075, %v2077, %v2073
  %v2079 = vmul.f32 1.0, %v2078
  %v2080 = vmul.f32 %v2059, %v1636
  %v2081 = vmul.f32 %v2040, %v2060
  %v2082 = vadd.f32 %v2080, %v2081
  %v2083 = vtanh.pop %v2082
  %v2084 = vmul.f32 %v2079, %v2083
  %2085 = vmatpush.msra.mxu0 %v357
  %2086 = vmatpush.msra.mxu0 %v353
  %2087 = vmatpush.msra.mxu0 %v349
  %2088 = vmatpush.msra.mxu0 %v345
  %2089 = vmatpush.msra.mxu0 %v341
  %2090 = vmatpush.msra.mxu0 %v337
  %2091 = vmatpush.msra.mxu0 %v333
  %2092 = vmatpush.msra.mxu0 %v329
  %2093 = vmatpush.msra.mxu0 %v325
  %2094 = vmatpush.msra.mxu0 %v321
  %2095 = vmatpush.msra.mxu0 %v317
  %2096 = vmatpush.msra.mxu0 %v313
  %2097 = vmatpush.msra.mxu0 %v309
  %2098 = vmatpush.msra.mxu0 %v305
  %2099 = vmatpush.msra.mxu0 %v301
  %2100 = vmatpush.msra.mxu0 %v297
  %2101 = vmatmul.f32.gmra.mxu0 %v2084
  %v2102 = vpop.f32.mrf.mxu0
  %v2103 = vadd.f32 %v685, %v2102
  %2104 = vdwg.mxu0
  %2105 = vmatpush.msra.mxu0 %v421
  %2106 = vmatpush.msra.mxu0 %v417
  %2107 = vmatpush.msra.mxu0 %v413
  %2108 = vmatpush.msra.mxu0 %v409
  %2109 = vmatpush.msra.mxu0 %v405
  %2110 = vmatpush.msra.mxu0 %v401
  %2111 = vmatpush.msra.mxu0 %v397
  %2112 = vmatpush.msra.mxu0 %v393
  %2113 = vmatpush.msra.mxu0 %v389
  %2114 = vmatpush.msra.mxu0 %v385
  %2115 = vmatpush.msra.mxu0 %v381
  %2116 = vmatpush.msra.mxu0 %v377
  %2117 = vmatpush.msra.mxu0 %v373
  %2118 = vmatpush.msra.mxu0 %v369
  %2119 = vmatpush.msra.mxu0 %v365
  %2120 = vmatpush.msra.mxu0 %v361
  %2121 = vmatmul.f32.gmra.mxu0 %v1861
  %v2122 = vpop.f32.mrf.mxu0
  %v2123 = vadd.f32 %v2103, %v2122
  %2124 = vdwg.mxu0
  %2125 = vmatpush.msra.mxu0 %v358
  %2126 = vmatpush.msra.mxu0 %v354
  %2127 = vmatpush.msra.mxu0 %v350
  %2128 = vmatpush.msra.mxu0 %v346
  %2129 = vmatpush.msra.mxu0 %v342
  %2130 = vmatpush.msra.mxu0 %v338
  %2131 = vmatpush.msra.mxu0 %v334
  %2132 = vmatpush.msra.mxu0 %v330
  %2133 = vmatpush.msra.mxu0 %v326
  %2134 = vmatpush.msra.mxu0 %v322
  %2135 = vmatpush.msra.mxu0 %v318
  %2136 = vmatpush.msra.mxu0 %v314
  %2137 = vmatpush.msra.mxu0 %v310
  %2138 = vmatpush.msra.mxu0 %v306
  %2139 = vmatpush.msra.mxu0 %v302
  %2140 = vmatpush.msra.mxu0 %v298
  %2141 = vmatmul.f32.gmra.mxu0 %v2084
  %v2142 = vpop.f32.mrf.mxu0
  %v2143 = vadd.f32 %v745, %v2142
  %2144 = vdwg.mxu0
  %2145 = vmatpush.msra.mxu0 %v422
  %2146 = vmatpush.msra.mxu0 %v418
  %2147 = vmatpush.msra.mxu0 %v414
  %2148 = vmatpush.msra.mxu0 %v410
  %2149 = vmatpush.msra.mxu0 %v406
  %2150 = vmatpush.msra.mxu0 %v402
  %2151 = vmatpush.msra.mxu0 %v398
  %2152 = vmatpush.msra.mxu0 %v394
  %2153 = vmatpush.msra.mxu0 %v390
  %2154 = vmatpush.msra.mxu0 %v386
  %2155 = vmatpush.msra.mxu0 %v382
  %2156 = vmatpush.msra.mxu0 %v378
  %2157 = vmatpush.msra.mxu0 %v374
  %2158 = vmatpush.msra.mxu0 %v370
  %2159 = vmatpush.msra.mxu0 %v366
  %2160 = vmatpush.msra.mxu0 %v362
  %2161 = vmatmul.f32.gmra.mxu0 %v1861
  %v2162 = vpop.f32.mrf.mxu0
  %v2163 = vadd.f32 %v2143, %v2162
  %2164 = vdwg.mxu0
  %2165 = vmatpush.msra.mxu0 %v359
  %2166 = vmatpush.msra.mxu0 %v355
  %2167 = vmatpush.msra.mxu0 %v351
  %2168 = vmatpush.msra.mxu0 %v347
  %2169 = vmatpush.msra.mxu0 %v343
  %2170 = vmatpush.msra.mxu0 %v339
  %2171 = vmatpush.msra.mxu0 %v335
  %2172 = vmatpush.msra.mxu0 %v331
  %2173 = vmatpush.msra.mxu0 %v327
  %2174 = vmatpush.msra.mxu0 %v323
  %2175 = vmatpush.msra.mxu0 %v319
  %2176 = vmatpush.msra.mxu0 %v315
  %2177 = vmatpush.msra.mxu0 %v311
  %2178 = vmatpush.msra.mxu0 %v307
  %2179 = vmatpush.msra.mxu0 %v303
  %2180 = vmatpush.msra.mxu0 %v299
  %2181 = vmatmul.f32.gmra.mxu0 %v2084
  %v2182 = vpop.f32.mrf.mxu0
  %v2183 = vadd.f32 %v805, %v2182
  %2184 = vdwg.mxu0
  %2185 = vmatpush.msra.mxu0 %v423
  %2186 = vmatpush.msra.mxu0 %v419
  %2187 = vmatpush.msra.mxu0 %v415
  %2188 = vmatpush.msra.mxu0 %v411
  %2189 = vmatpush.msra.mxu0 %v407
  %2190 = vmatpush.msra.mxu0 %v403
  %2191 = vmatpush.msra.mxu0 %v399
  %2192 = vmatpush.msra.mxu0 %v395
  %2193 = vmatpush.msra.mxu0 %v391
  %2194 = vmatpush.msra.mxu0 %v387
  %2195 = vmatpush.msra.mxu0 %v383
  %2196 = vmatpush.msra.mxu0 %v379
  %2197 = vmatpush.msra.mxu0 %v375
  %2198 = vmatpush.msra.mxu0 %v371
  %2199 = vmatpush.msra.mxu0 %v367
  %2200 = vmatpush.msra.mxu0 %v363
  %2201 = vmatmul.f32.gmra.mxu0 %v1861
  %v2202 = vpop.f32.mrf.mxu0
  %v2203 = vadd.f32 %v2183, %v2202
  %2204 = vdwg.mxu0
  %2205 = vmatpush.msra.mxu0 %v360
  %2206 = vmatpush.msra.mxu0 %v356
  %2207 = vmatpush.msra.mxu0 %v352
  %2208 = vmatpush.msra.mxu0 %v348
  %2209 = vmatpush.msra.mxu0 %v344
  %2210 = vmatpush.msra.mxu0 %v340
  %2211 = vmatpush.msra.mxu0 %v336
  %2212 = vmatpush.msra.mxu0 %v332
  %2213 = vmatpush.msra.mxu0 %v328
  %2214 = vmatpush.msra.mxu0 %v324
  %2215 = vmatpush.msra.mxu0 %v320
  %2216 = vmatpush.msra.mxu0 %v316
  %2217 = vmatpush.msra.mxu0 %v312
  %2218 = vmatpush.msra.mxu0 %v308
  %2219 = vmatpush.msra.mxu0 %v304
  %2220 = vmatpush.msra.mxu0 %v300
  %2221 = vmatmul.f32.gmra.mxu0 %v2084
  %v2222 = vpop.f32.mrf.mxu0
  %v2223 = vadd.f32 %v865, %v2222
  %2224 = vdwg.mxu0
  %2225 = vmatpush.msra.mxu0 %v424
  %2226 = vmatpush.msra.mxu0 %v420
  %2227 = vmatpush.msra.mxu0 %v416
  %2228 = vmatpush.msra.mxu0 %v412
  %2229 = vmatpush.msra.mxu0 %v408
  %2230 = vmatpush.msra.mxu0 %v404
  %2231 = vmatpush.msra.mxu0 %v400
  %2232 = vmatpush.msra.mxu0 %v396
  %2233 = vmatpush.msra.mxu0 %v392
  %2234 = vmatpush.msra.mxu0 %v388
  %2235 = vmatpush.msra.mxu0 %v384
  %2236 = vmatpush.msra.mxu0 %v380
  %2237 = vmatpush.msra.mxu0 %v376
  %2238 = vmatpush.msra.mxu0 %v372
  %2239 = vmatpush.msra.mxu0 %v368
  %2240 = vmatpush.msra.mxu0 %v364
  %2241 = vmatmul.f32.gmra.mxu0 %v1861
  %v2242 = vpop.f32.mrf.mxu0
  %v2243 = vadd.f32 %v2223, %v2242
  %2244 = vdwg.mxu0
  %v2245 = vxor.u32 %v2123, 2147483648
  %v2246 = vmul.f32 %v2245, 1.442695
  %v2247 = vpow.pop %v2246
  %v2248 = vadd.f32 %v2247, 1.0
  %v2249 = vrcp.pop %v2248
  %v2250 = vmul.f32 %v2248, %v2249
  %v2251 = vsub.f32 1.0, %v2250
  %v2252 = vmul.f32 %v2249, %v2251
  %v2253 = vadd.f32 %v2249, %v2252
  %vm2254 = vweird.f32 %v2248
  %vm2255 = vweird.f32 %v2249
  %vm2256 = vmor %vm2254, %vm2255
  %v2257 = vsel %vm2256, %v2249, %v2253
  %v2258 = vand.u32 2147483647, %v2248
  %vm2259 = vcmp.eq.f32.partialorder %v2258, 8.507059e+37
  %v2260 = vand.u32 %v2248, 2147483648
  %v2261 = vor.u32 1.1754944e-38, %v2260
  %v2262 = vsel %vm2259, %v2261, %v2257
  %v2263 = vmul.f32 1.0, %v2262
  %v2264 = vxor.u32 %v2163, 2147483648
  %v2265 = vmul.f32 %v2264, 1.442695
  %v2266 = vpow.pop %v2265
  %v2267 = vadd.f32 %v2266, 1.0
  %v2268 = vrcp.pop %v2267
  %v2269 = vmul.f32 %v2267, %v2268
  %v2270 = vsub.f32 1.0, %v2269
  %v2271 = vmul.f32 %v2268, %v2270
  %v2272 = vadd.f32 %v2268, %v2271
  %vm2273 = vweird.f32 %v2267
  %vm2274 = vweird.f32 %v2268
  %vm2275 = vmor %vm2273, %vm2274
  %v2276 = vsel %vm2275, %v2268, %v2272
  %v2277 = vand.u32 2147483647, %v2267
  %vm2278 = vcmp.eq.f32.partialorder %v2277, 8.507059e+37
  %v2279 = vand.u32 %v2267, 2147483648
  %v2280 = vor.u32 1.1754944e-38, %v2279
  %v2281 = vsel %vm2278, %v2280, %v2276
  %v2282 = vmul.f32 1.0, %v2281
  %v2283 = vtanh.pop %v2203
  %v2284 = vxor.u32 %v2243, 2147483648
  %v2285 = vmul.f32 %v2284, 1.442695
  %v2286 = vpow.pop %v2285
  %v2287 = vadd.f32 %v2286, 1.0
  %v2288 = vrcp.pop %v2287
  %v2289 = vmul.f32 %v2287, %v2288
  %v2290 = vsub.f32 1.0, %v2289
  %v2291 = vmul.f32 %v2288, %v2290
  %v2292 = vadd.f32 %v2288, %v2291
  %vm2293 = vweird.f32 %v2287
  %vm2294 = vweird.f32 %v2288
  %vm2295 = vmor %vm2293, %vm2294
  %v2296 = vsel %vm2295, %v2288, %v2292
  %v2297 = vand.u32 2147483647, %v2287
  %vm2298 = vcmp.eq.f32.partialorder %v2297, 8.507059e+37
  %v2299 = vand.u32 %v2287, 2147483648
  %v2300 = vor.u32 1.1754944e-38, %v2299
  %v2301 = vsel %vm2298, %v2300, %v2296
  %v2302 = vmul.f32 1.0, %v2301
  %v2303 = vmul.f32 %v2282, %v1859
  %v2304 = vmul.f32 %v2263, %v2283
  %v2305 = vadd.f32 %v2303, %v2304
  %v2306 = vtanh.pop %v2305
  %v2307 = vmul.f32 %v2302, %v2306
  %2308 = vmatpush.msra.mxu0 %v164
  %2309 = vmatpush.msra.mxu0 %v160
  %2310 = vmatpush.msra.mxu0 %v156
  %2311 = vmatpush.msra.mxu0 %v152
  %2312 = vmatpush.msra.mxu0 %v148
  %2313 = vmatpush.msra.mxu0 %v144
  %2314 = vmatpush.msra.mxu0 %v140
  %2315 = vmatpush.msra.mxu0 %v136
  %2316 = vmatpush.msra.mxu0 %v132
  %2317 = vmatpush.msra.mxu0 %v128
  %2318 = vmatpush.msra.mxu0 %v124
  %2319 = vmatpush.msra.mxu0 %v120
  %2320 = vmatpush.msra.mxu0 %v116
  %2321 = vmatpush.msra.mxu0 %v112
  %2322 = vmatpush.msra.mxu0 %v108
  %2323 = vmatpush.msra.mxu0 %v104
  %2324 = vmatmul.f32.gmra.mxu0 %v93
  %v2325 = vpop.f32.mrf.mxu0
  %v2326 = vadd.f32 %v427, %v2325
  %2327 = vdwg.mxu0
  %2328 = vmatpush.msra.mxu0 %v228
  %2329 = vmatpush.msra.mxu0 %v224
  %2330 = vmatpush.msra.mxu0 %v220
  %2331 = vmatpush.msra.mxu0 %v216
  %2332 = vmatpush.msra.mxu0 %v212
  %2333 = vmatpush.msra.mxu0 %v208
  %2334 = vmatpush.msra.mxu0 %v204
  %2335 = vmatpush.msra.mxu0 %v200
  %2336 = vmatpush.msra.mxu0 %v196
  %2337 = vmatpush.msra.mxu0 %v192
  %2338 = vmatpush.msra.mxu0 %v188
  %2339 = vmatpush.msra.mxu0 %v184
  %2340 = vmatpush.msra.mxu0 %v180
  %2341 = vmatpush.msra.mxu0 %v176
  %2342 = vmatpush.msra.mxu0 %v172
  %2343 = vmatpush.msra.mxu0 %v168
  %2344 = vmatmul.f32.gmra.mxu0 %v2084
  %v2345 = vpop.f32.mrf.mxu0
  %v2346 = vadd.f32 %v2326, %v2345
  %2347 = vdwg.mxu0
  %2348 = vmatpush.msra.mxu0 %v165
  %2349 = vmatpush.msra.mxu0 %v161
  %2350 = vmatpush.msra.mxu0 %v157
  %2351 = vmatpush.msra.mxu0 %v153
  %2352 = vmatpush.msra.mxu0 %v149
  %2353 = vmatpush.msra.mxu0 %v145
  %2354 = vmatpush.msra.mxu0 %v141
  %2355 = vmatpush.msra.mxu0 %v137
  %2356 = vmatpush.msra.mxu0 %v133
  %2357 = vmatpush.msra.mxu0 %v129
  %2358 = vmatpush.msra.mxu0 %v125
  %2359 = vmatpush.msra.mxu0 %v121
  %2360 = vmatpush.msra.mxu0 %v117
  %2361 = vmatpush.msra.mxu0 %v113
  %2362 = vmatpush.msra.mxu0 %v109
  %2363 = vmatpush.msra.mxu0 %v105
  %2364 = vmatmul.f32.gmra.mxu0 %v93
  %v2365 = vpop.f32.mrf.mxu0
  %v2366 = vadd.f32 %v428, %v2365
  %2367 = vdwg.mxu0
  %2368 = vmatpush.msra.mxu0 %v229
  %2369 = vmatpush.msra.mxu0 %v225
  %2370 = vmatpush.msra.mxu0 %v221
  %2371 = vmatpush.msra.mxu0 %v217
  %2372 = vmatpush.msra.mxu0 %v213
  %2373 = vmatpush.msra.mxu0 %v209
  %2374 = vmatpush.msra.mxu0 %v205
  %2375 = vmatpush.msra.mxu0 %v201
  %2376 = vmatpush.msra.mxu0 %v197
  %2377 = vmatpush.msra.mxu0 %v193
  %2378 = vmatpush.msra.mxu0 %v189
  %2379 = vmatpush.msra.mxu0 %v185
  %2380 = vmatpush.msra.mxu0 %v181
  %2381 = vmatpush.msra.mxu0 %v177
  %2382 = vmatpush.msra.mxu0 %v173
  %2383 = vmatpush.msra.mxu0 %v169
  %2384 = vmatmul.f32.gmra.mxu0 %v2084
  %v2385 = vpop.f32.mrf.mxu0
  %v2386 = vadd.f32 %v2366, %v2385
  %2387 = vdwg.mxu0
  %2388 = vmatpush.msra.mxu0 %v166
  %2389 = vmatpush.msra.mxu0 %v162
  %2390 = vmatpush.msra.mxu0 %v158
  %2391 = vmatpush.msra.mxu0 %v154
  %2392 = vmatpush.msra.mxu0 %v150
  %2393 = vmatpush.msra.mxu0 %v146
  %2394 = vmatpush.msra.mxu0 %v142
  %2395 = vmatpush.msra.mxu0 %v138
  %2396 = vmatpush.msra.mxu0 %v134
  %2397 = vmatpush.msra.mxu0 %v130
  %2398 = vmatpush.msra.mxu0 %v126
  %2399 = vmatpush.msra.mxu0 %v122
  %2400 = vmatpush.msra.mxu0 %v118
  %2401 = vmatpush.msra.mxu0 %v114
  %2402 = vmatpush.msra.mxu0 %v110
  %2403 = vmatpush.msra.mxu0 %v106
  %2404 = vmatmul.f32.gmra.mxu0 %v93
  %v2405 = vpop.f32.mrf.mxu0
  %v2406 = vadd.f32 %v429, %v2405
  %2407 = vdwg.mxu0
  %2408 = vmatpush.msra.mxu0 %v230
  %2409 = vmatpush.msra.mxu0 %v226
  %2410 = vmatpush.msra.mxu0 %v222
  %2411 = vmatpush.msra.mxu0 %v218
  %2412 = vmatpush.msra.mxu0 %v214
  %2413 = vmatpush.msra.mxu0 %v210
  %2414 = vmatpush.msra.mxu0 %v206
  %2415 = vmatpush.msra.mxu0 %v202
  %2416 = vmatpush.msra.mxu0 %v198
  %2417 = vmatpush.msra.mxu0 %v194
  %2418 = vmatpush.msra.mxu0 %v190
  %2419 = vmatpush.msra.mxu0 %v186
  %2420 = vmatpush.msra.mxu0 %v182
  %2421 = vmatpush.msra.mxu0 %v178
  %2422 = vmatpush.msra.mxu0 %v174
  %2423 = vmatpush.msra.mxu0 %v170
  %2424 = vmatmul.f32.gmra.mxu0 %v2084
  %v2425 = vpop.f32.mrf.mxu0
  %v2426 = vadd.f32 %v2406, %v2425
  %2427 = vdwg.mxu0
  %2428 = vmatpush.msra.mxu0 %v167
  %2429 = vmatpush.msra.mxu0 %v163
  %2430 = vmatpush.msra.mxu0 %v159
  %2431 = vmatpush.msra.mxu0 %v155
  %2432 = vmatpush.msra.mxu0 %v151
  %2433 = vmatpush.msra.mxu0 %v147
  %2434 = vmatpush.msra.mxu0 %v143
  %2435 = vmatpush.msra.mxu0 %v139
  %2436 = vmatpush.msra.mxu0 %v135
  %2437 = vmatpush.msra.mxu0 %v131
  %2438 = vmatpush.msra.mxu0 %v127
  %2439 = vmatpush.msra.mxu0 %v123
  %2440 = vmatpush.msra.mxu0 %v119
  %2441 = vmatpush.msra.mxu0 %v115
  %2442 = vmatpush.msra.mxu0 %v111
  %2443 = vmatpush.msra.mxu0 %v107
  %2444 = vmatmul.f32.gmra.mxu0 %v93
  %v2445 = vpop.f32.mrf.mxu0
  %v2446 = vadd.f32 %v430, %v2445
  %2447 = vdwg.mxu0
  %2448 = vmatpush.msra.mxu0 %v231
  %2449 = vmatpush.msra.mxu0 %v227
  %2450 = vmatpush.msra.mxu0 %v223
  %2451 = vmatpush.msra.mxu0 %v219
  %2452 = vmatpush.msra.mxu0 %v215
  %2453 = vmatpush.msra.mxu0 %v211
  %2454 = vmatpush.msra.mxu0 %v207
  %2455 = vmatpush.msra.mxu0 %v203
  %2456 = vmatpush.msra.mxu0 %v199
  %2457 = vmatpush.msra.mxu0 %v195
  %2458 = vmatpush.msra.mxu0 %v191
  %2459 = vmatpush.msra.mxu0 %v187
  %2460 = vmatpush.msra.mxu0 %v183
  %2461 = vmatpush.msra.mxu0 %v179
  %2462 = vmatpush.msra.mxu0 %v175
  %2463 = vmatpush.msra.mxu0 %v171
  %2464 = vmatmul.f32.gmra.mxu0 %v2084
  %v2465 = vpop.f32.mrf.mxu0
  %v2466 = vadd.f32 %v2446, %v2465
  %2467 = vdwg.mxu0
  %v2468 = vxor.u32 %v2346, 2147483648
  %v2469 = vmul.f32 %v2468, 1.442695
  %v2470 = vpow.pop %v2469
  %v2471 = vadd.f32 %v2470, 1.0
  %v2472 = vrcp.pop %v2471
  %v2473 = vmul.f32 %v2471, %v2472
  %v2474 = vsub.f32 1.0, %v2473
  %v2475 = vmul.f32 %v2472, %v2474
  %v2476 = vadd.f32 %v2472, %v2475
  %vm2477 = vweird.f32 %v2471
  %vm2478 = vweird.f32 %v2472
  %vm2479 = vmor %vm2477, %vm2478
  %v2480 = vsel %vm2479, %v2472, %v2476
  %v2481 = vand.u32 2147483647, %v2471
  %vm2482 = vcmp.eq.f32.partialorder %v2481, 8.507059e+37
  %v2483 = vand.u32 %v2471, 2147483648
  %v2484 = vor.u32 1.1754944e-38, %v2483
  %v2485 = vsel %vm2482, %v2484, %v2480
  %v2486 = vmul.f32 1.0, %v2485
  %v2487 = vxor.u32 %v2386, 2147483648
  %v2488 = vmul.f32 %v2487, 1.442695
  %v2489 = vpow.pop %v2488
  %v2490 = vadd.f32 %v2489, 1.0
  %v2491 = vrcp.pop %v2490
  %v2492 = vmul.f32 %v2490, %v2491
  %v2493 = vsub.f32 1.0, %v2492
  %v2494 = vmul.f32 %v2491, %v2493
  %v2495 = vadd.f32 %v2491, %v2494
  %vm2496 = vweird.f32 %v2490
  %vm2497 = vweird.f32 %v2491
  %vm2498 = vmor %vm2496, %vm2497
  %v2499 = vsel %vm2498, %v2491, %v2495
  %v2500 = vand.u32 2147483647, %v2490
  %vm2501 = vcmp.eq.f32.partialorder %v2500, 8.507059e+37
  %v2502 = vand.u32 %v2490, 2147483648
  %v2503 = vor.u32 1.1754944e-38, %v2502
  %v2504 = vsel %vm2501, %v2503, %v2499
  %v2505 = vmul.f32 1.0, %v2504
  %v2506 = vtanh.pop %v2426
  %v2507 = vxor.u32 %v2466, 2147483648
  %v2508 = vmul.f32 %v2507, 1.442695
  %v2509 = vpow.pop %v2508
  %v2510 = vadd.f32 %v2509, 1.0
  %v2511 = vrcp.pop %v2510
  %v2512 = vmul.f32 %v2510, %v2511
  %v2513 = vsub.f32 1.0, %v2512
  %v2514 = vmul.f32 %v2511, %v2513
  %v2515 = vadd.f32 %v2511, %v2514
  %vm2516 = vweird.f32 %v2510
  %vm2517 = vweird.f32 %v2511
  %vm2518 = vmor %vm2516, %vm2517
  %v2519 = vsel %vm2518, %v2511, %v2515
  %v2520 = vand.u32 2147483647, %v2510
  %vm2521 = vcmp.eq.f32.partialorder %v2520, 8.507059e+37
  %v2522 = vand.u32 %v2510, 2147483648
  %v2523 = vor.u32 1.1754944e-38, %v2522
  %v2524 = vsel %vm2521, %v2523, %v2519
  %v2525 = vmul.f32 1.0, %v2524
  %v2526 = vmul.f32 %v2505, %v2082
  %v2527 = vmul.f32 %v2486, %v2506
  %v2528 = vadd.f32 %v2526, %v2527
  %v2529 = vtanh.pop %v2528
  %v2530 = vmul.f32 %v2525, %v2529
  %2531 = vmatpush.msra.mxu0 %v357
  %2532 = vmatpush.msra.mxu0 %v353
  %2533 = vmatpush.msra.mxu0 %v349
  %2534 = vmatpush.msra.mxu0 %v345
  %2535 = vmatpush.msra.mxu0 %v341
  %2536 = vmatpush.msra.mxu0 %v337
  %2537 = vmatpush.msra.mxu0 %v333
  %2538 = vmatpush.msra.mxu0 %v329
  %2539 = vmatpush.msra.mxu0 %v325
  %2540 = vmatpush.msra.mxu0 %v321
  %2541 = vmatpush.msra.mxu0 %v317
  %2542 = vmatpush.msra.mxu0 %v313
  %2543 = vmatpush.msra.mxu0 %v309
  %2544 = vmatpush.msra.mxu0 %v305
  %2545 = vmatpush.msra.mxu0 %v301
  %2546 = vmatpush.msra.mxu0 %v297
  %2547 = vmatmul.f32.gmra.mxu0 %v2530
  %v2548 = vpop.f32.mrf.mxu0
  %v2549 = vadd.f32 %v685, %v2548
  %2550 = vdwg.mxu0
  %2551 = vmatpush.msra.mxu0 %v421
  %2552 = vmatpush.msra.mxu0 %v417
  %2553 = vmatpush.msra.mxu0 %v413
  %2554 = vmatpush.msra.mxu0 %v409
  %2555 = vmatpush.msra.mxu0 %v405
  %2556 = vmatpush.msra.mxu0 %v401
  %2557 = vmatpush.msra.mxu0 %v397
  %2558 = vmatpush.msra.mxu0 %v393
  %2559 = vmatpush.msra.mxu0 %v389
  %2560 = vmatpush.msra.mxu0 %v385
  %2561 = vmatpush.msra.mxu0 %v381
  %2562 = vmatpush.msra.mxu0 %v377
  %2563 = vmatpush.msra.mxu0 %v373
  %2564 = vmatpush.msra.mxu0 %v369
  %2565 = vmatpush.msra.mxu0 %v365
  %2566 = vmatpush.msra.mxu0 %v361
  %2567 = vmatmul.f32.gmra.mxu0 %v2307
  %v2568 = vpop.f32.mrf.mxu0
  %v2569 = vadd.f32 %v2549, %v2568
  %2570 = vdwg.mxu0
  %2571 = vmatpush.msra.mxu0 %v358
  %2572 = vmatpush.msra.mxu0 %v354
  %2573 = vmatpush.msra.mxu0 %v350
  %2574 = vmatpush.msra.mxu0 %v346
  %2575 = vmatpush.msra.mxu0 %v342
  %2576 = vmatpush.msra.mxu0 %v338
  %2577 = vmatpush.msra.mxu0 %v334
  %2578 = vmatpush.msra.mxu0 %v330
  %2579 = vmatpush.msra.mxu0 %v326
  %2580 = vmatpush.msra.mxu0 %v322
  %2581 = vmatpush.msra.mxu0 %v318
  %2582 = vmatpush.msra.mxu0 %v314
  %2583 = vmatpush.msra.mxu0 %v310
  %2584 = vmatpush.msra.mxu0 %v306
  %2585 = vmatpush.msra.mxu0 %v302
  %2586 = vmatpush.msra.mxu0 %v298
  %2587 = vmatmul.f32.gmra.mxu0 %v2530
  %v2588 = vpop.f32.mrf.mxu0
  %v2589 = vadd.f32 %v745, %v2588
  %2590 = vdwg.mxu0
  %2591 = vmatpush.msra.mxu0 %v422
  %2592 = vmatpush.msra.mxu0 %v418
  %2593 = vmatpush.msra.mxu0 %v414
  %2594 = vmatpush.msra.mxu0 %v410
  %2595 = vmatpush.msra.mxu0 %v406
  %2596 = vmatpush.msra.mxu0 %v402
  %2597 = vmatpush.msra.mxu0 %v398
  %2598 = vmatpush.msra.mxu0 %v394
  %2599 = vmatpush.msra.mxu0 %v390
  %2600 = vmatpush.msra.mxu0 %v386
  %2601 = vmatpush.msra.mxu0 %v382
  %2602 = vmatpush.msra.mxu0 %v378
  %2603 = vmatpush.msra.mxu0 %v374
  %2604 = vmatpush.msra.mxu0 %v370
  %2605 = vmatpush.msra.mxu0 %v366
  %2606 = vmatpush.msra.mxu0 %v362
  %2607 = vmatmul.f32.gmra.mxu0 %v2307
  %v2608 = vpop.f32.mrf.mxu0
  %v2609 = vadd.f32 %v2589, %v2608
  %2610 = vdwg.mxu0
  %2611 = vmatpush.msra.mxu0 %v359
  %2612 = vmatpush.msra.mxu0 %v355
  %2613 = vmatpush.msra.mxu0 %v351
  %2614 = vmatpush.msra.mxu0 %v347
  %2615 = vmatpush.msra.mxu0 %v343
  %2616 = vmatpush.msra.mxu0 %v339
  %2617 = vmatpush.msra.mxu0 %v335
  %2618 = vmatpush.msra.mxu0 %v331
  %2619 = vmatpush.msra.mxu0 %v327
  %2620 = vmatpush.msra.mxu0 %v323
  %2621 = vmatpush.msra.mxu0 %v319
  %2622 = vmatpush.msra.mxu0 %v315
  %2623 = vmatpush.msra.mxu0 %v311
  %2624 = vmatpush.msra.mxu0 %v307
  %2625 = vmatpush.msra.mxu0 %v303
  %2626 = vmatpush.msra.mxu0 %v299
  %2627 = vmatmul.f32.gmra.mxu0 %v2530
  %v2628 = vpop.f32.mrf.mxu0
  %v2629 = vadd.f32 %v805, %v2628
  %2630 = vdwg.mxu0
  %2631 = vmatpush.msra.mxu0 %v423
  %2632 = vmatpush.msra.mxu0 %v419
  %2633 = vmatpush.msra.mxu0 %v415
  %2634 = vmatpush.msra.mxu0 %v411
  %2635 = vmatpush.msra.mxu0 %v407
  %2636 = vmatpush.msra.mxu0 %v403
  %2637 = vmatpush.msra.mxu0 %v399
  %2638 = vmatpush.msra.mxu0 %v395
  %2639 = vmatpush.msra.mxu0 %v391
  %2640 = vmatpush.msra.mxu0 %v387
  %2641 = vmatpush.msra.mxu0 %v383
  %2642 = vmatpush.msra.mxu0 %v379
  %2643 = vmatpush.msra.mxu0 %v375
  %2644 = vmatpush.msra.mxu0 %v371
  %2645 = vmatpush.msra.mxu0 %v367
  %2646 = vmatpush.msra.mxu0 %v363
  %2647 = vmatmul.f32.gmra.mxu0 %v2307
  %v2648 = vpop.f32.mrf.mxu0
  %v2649 = vadd.f32 %v2629, %v2648
  %2650 = vdwg.mxu0
  %2651 = vmatpush.msra.mxu0 %v360
  %2652 = vmatpush.msra.mxu0 %v356
  %2653 = vmatpush.msra.mxu0 %v352
  %2654 = vmatpush.msra.mxu0 %v348
  %2655 = vmatpush.msra.mxu0 %v344
  %2656 = vmatpush.msra.mxu0 %v340
  %2657 = vmatpush.msra.mxu0 %v336
  %2658 = vmatpush.msra.mxu0 %v332
  %2659 = vmatpush.msra.mxu0 %v328
  %2660 = vmatpush.msra.mxu0 %v324
  %2661 = vmatpush.msra.mxu0 %v320
  %2662 = vmatpush.msra.mxu0 %v316
  %2663 = vmatpush.msra.mxu0 %v312
  %2664 = vmatpush.msra.mxu0 %v308
  %2665 = vmatpush.msra.mxu0 %v304
  %2666 = vmatpush.msra.mxu0 %v300
  %2667 = vmatmul.f32.gmra.mxu0 %v2530
  %v2668 = vpop.f32.mrf.mxu0
  %v2669 = vadd.f32 %v865, %v2668
  %2670 = vdwg.mxu0
  %2671 = vmatpush.msra.mxu0 %v424
  %2672 = vmatpush.msra.mxu0 %v420
  %2673 = vmatpush.msra.mxu0 %v416
  %2674 = vmatpush.msra.mxu0 %v412
  %2675 = vmatpush.msra.mxu0 %v408
  %2676 = vmatpush.msra.mxu0 %v404
  %2677 = vmatpush.msra.mxu0 %v400
  %2678 = vmatpush.msra.mxu0 %v396
  %2679 = vmatpush.msra.mxu0 %v392
  %2680 = vmatpush.msra.mxu0 %v388
  %2681 = vmatpush.msra.mxu0 %v384
  %2682 = vmatpush.msra.mxu0 %v380
  %2683 = vmatpush.msra.mxu0 %v376
  %2684 = vmatpush.msra.mxu0 %v372
  %2685 = vmatpush.msra.mxu0 %v368
  %2686 = vmatpush.msra.mxu0 %v364
  %2687 = vmatmul.f32.gmra.mxu0 %v2307
  %v2688 = vpop.f32.mrf.mxu0
  %v2689 = vadd.f32 %v2669, %v2688
  %2690 = vdwg.mxu0
  %v2691 = vxor.u32 %v2569, 2147483648
  %v2692 = vmul.f32 %v2691, 1.442695
  %v2693 = vpow.pop %v2692
  %v2694 = vadd.f32 %v2693, 1.0
  %v2695 = vrcp.pop %v2694
  %v2696 = vmul.f32 %v2694, %v2695
  %v2697 = vsub.f32 1.0, %v2696
  %v2698 = vmul.f32 %v2695, %v2697
  %v2699 = vadd.f32 %v2695, %v2698
  %vm2700 = vweird.f32 %v2694
  %vm2701 = vweird.f32 %v2695
  %vm2702 = vmor %vm2700, %vm2701
  %v2703 = vsel %vm2702, %v2695, %v2699
  %v2704 = vand.u32 2147483647, %v2694
  %vm2705 = vcmp.eq.f32.partialorder %v2704, 8.507059e+37
  %v2706 = vand.u32 %v2694, 2147483648
  %v2707 = vor.u32 1.1754944e-38, %v2706
  %v2708 = vsel %vm2705, %v2707, %v2703
  %v2709 = vmul.f32 1.0, %v2708
  %v2710 = vxor.u32 %v2609, 2147483648
  %v2711 = vmul.f32 %v2710, 1.442695
  %v2712 = vpow.pop %v2711
  %v2713 = vadd.f32 %v2712, 1.0
  %v2714 = vrcp.pop %v2713
  %v2715 = vmul.f32 %v2713, %v2714
  %v2716 = vsub.f32 1.0, %v2715
  %v2717 = vmul.f32 %v2714, %v2716
  %v2718 = vadd.f32 %v2714, %v2717
  %vm2719 = vweird.f32 %v2713
  %vm2720 = vweird.f32 %v2714
  %vm2721 = vmor %vm2719, %vm2720
  %v2722 = vsel %vm2721, %v2714, %v2718
  %v2723 = vand.u32 2147483647, %v2713
  %vm2724 = vcmp.eq.f32.partialorder %v2723, 8.507059e+37
  %v2725 = vand.u32 %v2713, 2147483648
  %v2726 = vor.u32 1.1754944e-38, %v2725
  %v2727 = vsel %vm2724, %v2726, %v2722
  %v2728 = vmul.f32 1.0, %v2727
  %v2729 = vtanh.pop %v2649
  %v2730 = vxor.u32 %v2689, 2147483648
  %v2731 = vmul.f32 %v2730, 1.442695
  %v2732 = vpow.pop %v2731
  %v2733 = vadd.f32 %v2732, 1.0
  %v2734 = vrcp.pop %v2733
  %v2735 = vmul.f32 %v2733, %v2734
  %v2736 = vsub.f32 1.0, %v2735
  %v2737 = vmul.f32 %v2734, %v2736
  %v2738 = vadd.f32 %v2734, %v2737
  %vm2739 = vweird.f32 %v2733
  %vm2740 = vweird.f32 %v2734
  %vm2741 = vmor %vm2739, %vm2740
  %v2742 = vsel %vm2741, %v2734, %v2738
  %v2743 = vand.u32 2147483647, %v2733
  %vm2744 = vcmp.eq.f32.partialorder %v2743, 8.507059e+37
  %v2745 = vand.u32 %v2733, 2147483648
  %v2746 = vor.u32 1.1754944e-38, %v2745
  %v2747 = vsel %vm2744, %v2746, %v2742
  %v2748 = vmul.f32 1.0, %v2747
  %v2749 = vmul.f32 %v2728, %v2305
  %v2750 = vmul.f32 %v2709, %v2729
  %v2751 = vadd.f32 %v2749, %v2750
  %v2752 = vtanh.pop %v2751
  %v2753 = vmul.f32 %v2748, %v2752
  %2754 = vmatpush.msra.mxu0 %v164
  %2755 = vmatpush.msra.mxu0 %v160
  %2756 = vmatpush.msra.mxu0 %v156
  %2757 = vmatpush.msra.mxu0 %v152
  %2758 = vmatpush.msra.mxu0 %v148
  %2759 = vmatpush.msra.mxu0 %v144
  %2760 = vmatpush.msra.mxu0 %v140
  %2761 = vmatpush.msra.mxu0 %v136
  %2762 = vmatpush.msra.mxu0 %v132
  %2763 = vmatpush.msra.mxu0 %v128
  %2764 = vmatpush.msra.mxu0 %v124
  %2765 = vmatpush.msra.mxu0 %v120
  %2766 = vmatpush.msra.mxu0 %v116
  %2767 = vmatpush.msra.mxu0 %v112
  %2768 = vmatpush.msra.mxu0 %v108
  %2769 = vmatpush.msra.mxu0 %v104
  %2770 = vmatmul.f32.gmra.mxu0 %v96
  %v2771 = vpop.f32.mrf.mxu0
  %v2772 = vadd.f32 %v427, %v2771
  %2773 = vdwg.mxu0
  %2774 = vmatpush.msra.mxu0 %v228
  %2775 = vmatpush.msra.mxu0 %v224
  %2776 = vmatpush.msra.mxu0 %v220
  %2777 = vmatpush.msra.mxu0 %v216
  %2778 = vmatpush.msra.mxu0 %v212
  %2779 = vmatpush.msra.mxu0 %v208
  %2780 = vmatpush.msra.mxu0 %v204
  %2781 = vmatpush.msra.mxu0 %v200
  %2782 = vmatpush.msra.mxu0 %v196
  %2783 = vmatpush.msra.mxu0 %v192
  %2784 = vmatpush.msra.mxu0 %v188
  %2785 = vmatpush.msra.mxu0 %v184
  %2786 = vmatpush.msra.mxu0 %v180
  %2787 = vmatpush.msra.mxu0 %v176
  %2788 = vmatpush.msra.mxu0 %v172
  %2789 = vmatpush.msra.mxu0 %v168
  %2790 = vmatmul.f32.gmra.mxu0 %v2530
  %v2791 = vpop.f32.mrf.mxu0
  %v2792 = vadd.f32 %v2772, %v2791
  %2793 = vdwg.mxu0
  %2794 = vmatpush.msra.mxu0 %v165
  %2795 = vmatpush.msra.mxu0 %v161
  %2796 = vmatpush.msra.mxu0 %v157
  %2797 = vmatpush.msra.mxu0 %v153
  %2798 = vmatpush.msra.mxu0 %v149
  %2799 = vmatpush.msra.mxu0 %v145
  %2800 = vmatpush.msra.mxu0 %v141
  %2801 = vmatpush.msra.mxu0 %v137
  %2802 = vmatpush.msra.mxu0 %v133
  %2803 = vmatpush.msra.mxu0 %v129
  %2804 = vmatpush.msra.mxu0 %v125
  %2805 = vmatpush.msra.mxu0 %v121
  %2806 = vmatpush.msra.mxu0 %v117
  %2807 = vmatpush.msra.mxu0 %v113
  %2808 = vmatpush.msra.mxu0 %v109
  %2809 = vmatpush.msra.mxu0 %v105
  %2810 = vmatmul.f32.gmra.mxu0 %v96
  %v2811 = vpop.f32.mrf.mxu0
  %v2812 = vadd.f32 %v428, %v2811
  %2813 = vdwg.mxu0
  %2814 = vmatpush.msra.mxu0 %v229
  %2815 = vmatpush.msra.mxu0 %v225
  %2816 = vmatpush.msra.mxu0 %v221
  %2817 = vmatpush.msra.mxu0 %v217
  %2818 = vmatpush.msra.mxu0 %v213
  %2819 = vmatpush.msra.mxu0 %v209
  %2820 = vmatpush.msra.mxu0 %v205
  %2821 = vmatpush.msra.mxu0 %v201
  %2822 = vmatpush.msra.mxu0 %v197
  %2823 = vmatpush.msra.mxu0 %v193
  %2824 = vmatpush.msra.mxu0 %v189
  %2825 = vmatpush.msra.mxu0 %v185
  %2826 = vmatpush.msra.mxu0 %v181
  %2827 = vmatpush.msra.mxu0 %v177
  %2828 = vmatpush.msra.mxu0 %v173
  %2829 = vmatpush.msra.mxu0 %v169
  %2830 = vmatmul.f32.gmra.mxu0 %v2530
  %v2831 = vpop.f32.mrf.mxu0
  %v2832 = vadd.f32 %v2812, %v2831
  %2833 = vdwg.mxu0
  %2834 = vmatpush.msra.mxu0 %v166
  %2835 = vmatpush.msra.mxu0 %v162
  %2836 = vmatpush.msra.mxu0 %v158
  %2837 = vmatpush.msra.mxu0 %v154
  %2838 = vmatpush.msra.mxu0 %v150
  %2839 = vmatpush.msra.mxu0 %v146
  %2840 = vmatpush.msra.mxu0 %v142
  %2841 = vmatpush.msra.mxu0 %v138
  %2842 = vmatpush.msra.mxu0 %v134
  %2843 = vmatpush.msra.mxu0 %v130
  %2844 = vmatpush.msra.mxu0 %v126
  %2845 = vmatpush.msra.mxu0 %v122
  %2846 = vmatpush.msra.mxu0 %v118
  %2847 = vmatpush.msra.mxu0 %v114
  %2848 = vmatpush.msra.mxu0 %v110
  %2849 = vmatpush.msra.mxu0 %v106
  %2850 = vmatmul.f32.gmra.mxu0 %v96
  %v2851 = vpop.f32.mrf.mxu0
  %v2852 = vadd.f32 %v429, %v2851
  %2853 = vdwg.mxu0
  %2854 = vmatpush.msra.mxu0 %v230
  %2855 = vmatpush.msra.mxu0 %v226
  %2856 = vmatpush.msra.mxu0 %v222
  %2857 = vmatpush.msra.mxu0 %v218
  %2858 = vmatpush.msra.mxu0 %v214
  %2859 = vmatpush.msra.mxu0 %v210
  %2860 = vmatpush.msra.mxu0 %v206
  %2861 = vmatpush.msra.mxu0 %v202
  %2862 = vmatpush.msra.mxu0 %v198
  %2863 = vmatpush.msra.mxu0 %v194
  %2864 = vmatpush.msra.mxu0 %v190
  %2865 = vmatpush.msra.mxu0 %v186
  %2866 = vmatpush.msra.mxu0 %v182
  %2867 = vmatpush.msra.mxu0 %v178
  %2868 = vmatpush.msra.mxu0 %v174
  %2869 = vmatpush.msra.mxu0 %v170
  %2870 = vmatmul.f32.gmra.mxu0 %v2530
  %v2871 = vpop.f32.mrf.mxu0
  %v2872 = vadd.f32 %v2852, %v2871
  %2873 = vdwg.mxu0
  %2874 = vmatpush.msra.mxu0 %v167
  %2875 = vmatpush.msra.mxu0 %v163
  %2876 = vmatpush.msra.mxu0 %v159
  %2877 = vmatpush.msra.mxu0 %v155
  %2878 = vmatpush.msra.mxu0 %v151
  %2879 = vmatpush.msra.mxu0 %v147
  %2880 = vmatpush.msra.mxu0 %v143
  %2881 = vmatpush.msra.mxu0 %v139
  %2882 = vmatpush.msra.mxu0 %v135
  %2883 = vmatpush.msra.mxu0 %v131
  %2884 = vmatpush.msra.mxu0 %v127
  %2885 = vmatpush.msra.mxu0 %v123
  %2886 = vmatpush.msra.mxu0 %v119
  %2887 = vmatpush.msra.mxu0 %v115
  %2888 = vmatpush.msra.mxu0 %v111
  %2889 = vmatpush.msra.mxu0 %v107
  %2890 = vmatmul.f32.gmra.mxu0 %v96
  %v2891 = vpop.f32.mrf.mxu0
  %v2892 = vadd.f32 %v430, %v2891
  %2893 = vdwg.mxu0
  %2894 = vmatpush.msra.mxu0 %v231
  %2895 = vmatpush.msra.mxu0 %v227
  %2896 = vmatpush.msra.mxu0 %v223
  %2897 = vmatpush.msra.mxu0 %v219
  %2898 = vmatpush.msra.mxu0 %v215
  %2899 = vmatpush.msra.mxu0 %v211
  %2900 = vmatpush.msra.mxu0 %v207
  %2901 = vmatpush.msra.mxu0 %v203
  %2902 = vmatpush.msra.mxu0 %v199
  %2903 = vmatpush.msra.mxu0 %v195
  %2904 = vmatpush.msra.mxu0 %v191
  %2905 = vmatpush.msra.mxu0 %v187
  %2906 = vmatpush.msra.mxu0 %v183
  %2907 = vmatpush.msra.mxu0 %v179
  %2908 = vmatpush.msra.mxu0 %v175
  %2909 = vmatpush.msra.mxu0 %v171
  %2910 = vmatmul.f32.gmra.mxu0 %v2530
  %v2911 = vpop.f32.mrf.mxu0
  %v2912 = vadd.f32 %v2892, %v2911
  %2913 = vdwg.mxu0
  %v2914 = vxor.u32 %v2792, 2147483648
  %v2915 = vmul.f32 %v2914, 1.442695
  %v2916 = vpow.pop %v2915
  %v2917 = vadd.f32 %v2916, 1.0
  %v2918 = vrcp.pop %v2917
  %v2919 = vmul.f32 %v2917, %v2918
  %v2920 = vsub.f32 1.0, %v2919
  %v2921 = vmul.f32 %v2918, %v2920
  %v2922 = vadd.f32 %v2918, %v2921
  %vm2923 = vweird.f32 %v2917
  %vm2924 = vweird.f32 %v2918
  %vm2925 = vmor %vm2923, %vm2924
  %v2926 = vsel %vm2925, %v2918, %v2922
  %v2927 = vand.u32 2147483647, %v2917
  %vm2928 = vcmp.eq.f32.partialorder %v2927, 8.507059e+37
  %v2929 = vand.u32 %v2917, 2147483648
  %v2930 = vor.u32 1.1754944e-38, %v2929
  %v2931 = vsel %vm2928, %v2930, %v2926
  %v2932 = vmul.f32 1.0, %v2931
  %v2933 = vxor.u32 %v2832, 2147483648
  %v2934 = vmul.f32 %v2933, 1.442695
  %v2935 = vpow.pop %v2934
  %v2936 = vadd.f32 %v2935, 1.0
  %v2937 = vrcp.pop %v2936
  %v2938 = vmul.f32 %v2936, %v2937
  %v2939 = vsub.f32 1.0, %v2938
  %v2940 = vmul.f32 %v2937, %v2939
  %v2941 = vadd.f32 %v2937, %v2940
  %vm2942 = vweird.f32 %v2936
  %vm2943 = vweird.f32 %v2937
  %vm2944 = vmor %vm2942, %vm2943
  %v2945 = vsel %vm2944, %v2937, %v2941
  %v2946 = vand.u32 2147483647, %v2936
  %vm2947 = vcmp.eq.f32.partialorder %v2946, 8.507059e+37
  %v2948 = vand.u32 %v2936, 2147483648
  %v2949 = vor.u32 1.1754944e-38, %v2948
  %v2950 = vsel %vm2947, %v2949, %v2945
  %v2951 = vmul.f32 1.0, %v2950
  %v2952 = vtanh.pop %v2872
  %v2953 = vxor.u32 %v2912, 2147483648
  %v2954 = vmul.f32 %v2953, 1.442695
  %v2955 = vpow.pop %v2954
  %v2956 = vadd.f32 %v2955, 1.0
  %v2957 = vrcp.pop %v2956
  %v2958 = vmul.f32 %v2956, %v2957
  %v2959 = vsub.f32 1.0, %v2958
  %v2960 = vmul.f32 %v2957, %v2959
  %v2961 = vadd.f32 %v2957, %v2960
  %vm2962 = vweird.f32 %v2956
  %vm2963 = vweird.f32 %v2957
  %vm2964 = vmor %vm2962, %vm2963
  %v2965 = vsel %vm2964, %v2957, %v2961
  %v2966 = vand.u32 2147483647, %v2956
  %vm2967 = vcmp.eq.f32.partialorder %v2966, 8.507059e+37
  %v2968 = vand.u32 %v2956, 2147483648
  %v2969 = vor.u32 1.1754944e-38, %v2968
  %v2970 = vsel %vm2967, %v2969, %v2965
  %v2971 = vmul.f32 1.0, %v2970
  %v2972 = vmul.f32 %v2951, %v2528
  %v2973 = vmul.f32 %v2932, %v2952
  %v2974 = vadd.f32 %v2972, %v2973
  %v2975 = vtanh.pop %v2974
  %v2976 = vmul.f32 %v2971, %v2975
  %2977 = vmatpush.msra.mxu0 %v357
  %2978 = vmatpush.msra.mxu0 %v353
  %2979 = vmatpush.msra.mxu0 %v349
  %2980 = vmatpush.msra.mxu0 %v345
  %2981 = vmatpush.msra.mxu0 %v341
  %2982 = vmatpush.msra.mxu0 %v337
  %2983 = vmatpush.msra.mxu0 %v333
  %2984 = vmatpush.msra.mxu0 %v329
  %2985 = vmatpush.msra.mxu0 %v325
  %2986 = vmatpush.msra.mxu0 %v321
  %2987 = vmatpush.msra.mxu0 %v317
  %2988 = vmatpush.msra.mxu0 %v313
  %2989 = vmatpush.msra.mxu0 %v309
  %2990 = vmatpush.msra.mxu0 %v305
  %2991 = vmatpush.msra.mxu0 %v301
  %2992 = vmatpush.msra.mxu0 %v297
  %2993 = vmatmul.f32.gmra.mxu0 %v2976
  %v2994 = vpop.f32.mrf.mxu0
  %v2995 = vadd.f32 %v685, %v2994
  %2996 = vdwg.mxu0
  %2997 = vmatpush.msra.mxu0 %v421
  %2998 = vmatpush.msra.mxu0 %v417
  %2999 = vmatpush.msra.mxu0 %v413
  %3000 = vmatpush.msra.mxu0 %v409
  %3001 = vmatpush.msra.mxu0 %v405
  %3002 = vmatpush.msra.mxu0 %v401
  %3003 = vmatpush.msra.mxu0 %v397
  %3004 = vmatpush.msra.mxu0 %v393
  %3005 = vmatpush.msra.mxu0 %v389
  %3006 = vmatpush.msra.mxu0 %v385
  %3007 = vmatpush.msra.mxu0 %v381
  %3008 = vmatpush.msra.mxu0 %v377
  %3009 = vmatpush.msra.mxu0 %v373
  %3010 = vmatpush.msra.mxu0 %v369
  %3011 = vmatpush.msra.mxu0 %v365
  %3012 = vmatpush.msra.mxu0 %v361
  %3013 = vmatmul.f32.gmra.mxu0 %v2753
  %v3014 = vpop.f32.mrf.mxu0
  %v3015 = vadd.f32 %v2995, %v3014
  %3016 = vdwg.mxu0
  %3017 = vmatpush.msra.mxu0 %v358
  %3018 = vmatpush.msra.mxu0 %v354
  %3019 = vmatpush.msra.mxu0 %v350
  %3020 = vmatpush.msra.mxu0 %v346
  %3021 = vmatpush.msra.mxu0 %v342
  %3022 = vmatpush.msra.mxu0 %v338
  %3023 = vmatpush.msra.mxu0 %v334
  %3024 = vmatpush.msra.mxu0 %v330
  %3025 = vmatpush.msra.mxu0 %v326
  %3026 = vmatpush.msra.mxu0 %v322
  %3027 = vmatpush.msra.mxu0 %v318
  %3028 = vmatpush.msra.mxu0 %v314
  %3029 = vmatpush.msra.mxu0 %v310
  %3030 = vmatpush.msra.mxu0 %v306
  %3031 = vmatpush.msra.mxu0 %v302
  %3032 = vmatpush.msra.mxu0 %v298
  %3033 = vmatmul.f32.gmra.mxu0 %v2976
  %v3034 = vpop.f32.mrf.mxu0
  %v3035 = vadd.f32 %v745, %v3034
  %3036 = vdwg.mxu0
  %3037 = vmatpush.msra.mxu0 %v422
  %3038 = vmatpush.msra.mxu0 %v418
  %3039 = vmatpush.msra.mxu0 %v414
  %3040 = vmatpush.msra.mxu0 %v410
  %3041 = vmatpush.msra.mxu0 %v406
  %3042 = vmatpush.msra.mxu0 %v402
  %3043 = vmatpush.msra.mxu0 %v398
  %3044 = vmatpush.msra.mxu0 %v394
  %3045 = vmatpush.msra.mxu0 %v390
  %3046 = vmatpush.msra.mxu0 %v386
  %3047 = vmatpush.msra.mxu0 %v382
  %3048 = vmatpush.msra.mxu0 %v378
  %3049 = vmatpush.msra.mxu0 %v374
  %3050 = vmatpush.msra.mxu0 %v370
  %3051 = vmatpush.msra.mxu0 %v366
  %3052 = vmatpush.msra.mxu0 %v362
  %3053 = vmatmul.f32.gmra.mxu0 %v2753
  %v3054 = vpop.f32.mrf.mxu0
  %v3055 = vadd.f32 %v3035, %v3054
  %3056 = vdwg.mxu0
  %3057 = vmatpush.msra.mxu0 %v359
  %3058 = vmatpush.msra.mxu0 %v355
  %3059 = vmatpush.msra.mxu0 %v351
  %3060 = vmatpush.msra.mxu0 %v347
  %3061 = vmatpush.msra.mxu0 %v343
  %3062 = vmatpush.msra.mxu0 %v339
  %3063 = vmatpush.msra.mxu0 %v335
  %3064 = vmatpush.msra.mxu0 %v331
  %3065 = vmatpush.msra.mxu0 %v327
  %3066 = vmatpush.msra.mxu0 %v323
  %3067 = vmatpush.msra.mxu0 %v319
  %3068 = vmatpush.msra.mxu0 %v315
  %3069 = vmatpush.msra.mxu0 %v311
  %3070 = vmatpush.msra.mxu0 %v307
  %3071 = vmatpush.msra.mxu0 %v303
  %3072 = vmatpush.msra.mxu0 %v299
  %3073 = vmatmul.f32.gmra.mxu0 %v2976
  %v3074 = vpop.f32.mrf.mxu0
  %v3075 = vadd.f32 %v805, %v3074
  %3076 = vdwg.mxu0
  %3077 = vmatpush.msra.mxu0 %v423
  %3078 = vmatpush.msra.mxu0 %v419
  %3079 = vmatpush.msra.mxu0 %v415
  %3080 = vmatpush.msra.mxu0 %v411
  %3081 = vmatpush.msra.mxu0 %v407
  %3082 = vmatpush.msra.mxu0 %v403
  %3083 = vmatpush.msra.mxu0 %v399
  %3084 = vmatpush.msra.mxu0 %v395
  %3085 = vmatpush.msra.mxu0 %v391
  %3086 = vmatpush.msra.mxu0 %v387
  %3087 = vmatpush.msra.mxu0 %v383
  %3088 = vmatpush.msra.mxu0 %v379
  %3089 = vmatpush.msra.mxu0 %v375
  %3090 = vmatpush.msra.mxu0 %v371
  %3091 = vmatpush.msra.mxu0 %v367
  %3092 = vmatpush.msra.mxu0 %v363
  %3093 = vmatmul.f32.gmra.mxu0 %v2753
  %v3094 = vpop.f32.mrf.mxu0
  %v3095 = vadd.f32 %v3075, %v3094
  %3096 = vdwg.mxu0
  %3097 = vmatpush.msra.mxu0 %v360
  %3098 = vmatpush.msra.mxu0 %v356
  %3099 = vmatpush.msra.mxu0 %v352
  %3100 = vmatpush.msra.mxu0 %v348
  %3101 = vmatpush.msra.mxu0 %v344
  %3102 = vmatpush.msra.mxu0 %v340
  %3103 = vmatpush.msra.mxu0 %v336
  %3104 = vmatpush.msra.mxu0 %v332
  %3105 = vmatpush.msra.mxu0 %v328
  %3106 = vmatpush.msra.mxu0 %v324
  %3107 = vmatpush.msra.mxu0 %v320
  %3108 = vmatpush.msra.mxu0 %v316
  %3109 = vmatpush.msra.mxu0 %v312
  %3110 = vmatpush.msra.mxu0 %v308
  %3111 = vmatpush.msra.mxu0 %v304
  %3112 = vmatpush.msra.mxu0 %v300
  %3113 = vmatmul.f32.gmra.mxu0 %v2976
  %v3114 = vpop.f32.mrf.mxu0
  %v3115 = vadd.f32 %v865, %v3114
  %3116 = vdwg.mxu0
  %3117 = vmatpush.msra.mxu0 %v424
  %3118 = vmatpush.msra.mxu0 %v420
  %3119 = vmatpush.msra.mxu0 %v416
  %3120 = vmatpush.msra.mxu0 %v412
  %3121 = vmatpush.msra.mxu0 %v408
  %3122 = vmatpush.msra.mxu0 %v404
  %3123 = vmatpush.msra.mxu0 %v400
  %3124 = vmatpush.msra.mxu0 %v396
  %3125 = vmatpush.msra.mxu0 %v392
  %3126 = vmatpush.msra.mxu0 %v388
  %3127 = vmatpush.msra.mxu0 %v384
  %3128 = vmatpush.msra.mxu0 %v380
  %3129 = vmatpush.msra.mxu0 %v376
  %3130 = vmatpush.msra.mxu0 %v372
  %3131 = vmatpush.msra.mxu0 %v368
  %3132 = vmatpush.msra.mxu0 %v364
  %3133 = vmatmul.f32.gmra.mxu0 %v2753
  %v3134 = vpop.f32.mrf.mxu0
  %v3135 = vadd.f32 %v3115, %v3134
  %3136 = vdwg.mxu0
  %v3137 = vxor.u32 %v3015, 2147483648
  %v3138 = vmul.f32 %v3137, 1.442695
  %v3139 = vpow.pop %v3138
  %v3140 = vadd.f32 %v3139, 1.0
  %v3141 = vrcp.pop %v3140
  %v3142 = vmul.f32 %v3140, %v3141
  %v3143 = vsub.f32 1.0, %v3142
  %v3144 = vmul.f32 %v3141, %v3143
  %v3145 = vadd.f32 %v3141, %v3144
  %vm3146 = vweird.f32 %v3140
  %vm3147 = vweird.f32 %v3141
  %vm3148 = vmor %vm3146, %vm3147
  %v3149 = vsel %vm3148, %v3141, %v3145
  %v3150 = vand.u32 2147483647, %v3140
  %vm3151 = vcmp.eq.f32.partialorder %v3150, 8.507059e+37
  %v3152 = vand.u32 %v3140, 2147483648
  %v3153 = vor.u32 1.1754944e-38, %v3152
  %v3154 = vsel %vm3151, %v3153, %v3149
  %v3155 = vmul.f32 1.0, %v3154
  %v3156 = vxor.u32 %v3055, 2147483648
  %v3157 = vmul.f32 %v3156, 1.442695
  %v3158 = vpow.pop %v3157
  %v3159 = vadd.f32 %v3158, 1.0
  %v3160 = vrcp.pop %v3159
  %v3161 = vmul.f32 %v3159, %v3160
  %v3162 = vsub.f32 1.0, %v3161
  %v3163 = vmul.f32 %v3160, %v3162
  %v3164 = vadd.f32 %v3160, %v3163
  %vm3165 = vweird.f32 %v3159
  %vm3166 = vweird.f32 %v3160
  %vm3167 = vmor %vm3165, %vm3166
  %v3168 = vsel %vm3167, %v3160, %v3164
  %v3169 = vand.u32 2147483647, %v3159
  %vm3170 = vcmp.eq.f32.partialorder %v3169, 8.507059e+37
  %v3171 = vand.u32 %v3159, 2147483648
  %v3172 = vor.u32 1.1754944e-38, %v3171
  %v3173 = vsel %vm3170, %v3172, %v3168
  %v3174 = vmul.f32 1.0, %v3173
  %v3175 = vtanh.pop %v3095
  %v3176 = vxor.u32 %v3135, 2147483648
  %v3177 = vmul.f32 %v3176, 1.442695
  %v3178 = vpow.pop %v3177
  %v3179 = vadd.f32 %v3178, 1.0
  %v3180 = vrcp.pop %v3179
  %v3181 = vmul.f32 %v3179, %v3180
  %v3182 = vsub.f32 1.0, %v3181
  %v3183 = vmul.f32 %v3180, %v3182
  %v3184 = vadd.f32 %v3180, %v3183
  %vm3185 = vweird.f32 %v3179
  %vm3186 = vweird.f32 %v3180
  %vm3187 = vmor %vm3185, %vm3186
  %v3188 = vsel %vm3187, %v3180, %v3184
  %v3189 = vand.u32 2147483647, %v3179
  %vm3190 = vcmp.eq.f32.partialorder %v3189, 8.507059e+37
  %v3191 = vand.u32 %v3179, 2147483648
  %v3192 = vor.u32 1.1754944e-38, %v3191
  %v3193 = vsel %vm3190, %v3192, %v3188
  %v3194 = vmul.f32 1.0, %v3193
  %v3195 = vmul.f32 %v3174, %v2751
  %v3196 = vmul.f32 %v3155, %v3175
  %v3197 = vadd.f32 %v3195, %v3196
  %v3198 = vtanh.pop %v3197
  %v3199 = vmul.f32 %v3194, %v3198
  %3200 = vmatpush.msra.mxu0 %v164
  %3201 = vmatpush.msra.mxu0 %v160
  %3202 = vmatpush.msra.mxu0 %v156
  %3203 = vmatpush.msra.mxu0 %v152
  %3204 = vmatpush.msra.mxu0 %v148
  %3205 = vmatpush.msra.mxu0 %v144
  %3206 = vmatpush.msra.mxu0 %v140
  %3207 = vmatpush.msra.mxu0 %v136
  %3208 = vmatpush.msra.mxu0 %v132
  %3209 = vmatpush.msra.mxu0 %v128
  %3210 = vmatpush.msra.mxu0 %v124
  %3211 = vmatpush.msra.mxu0 %v120
  %3212 = vmatpush.msra.mxu0 %v116
  %3213 = vmatpush.msra.mxu0 %v112
  %3214 = vmatpush.msra.mxu0 %v108
  %3215 = vmatpush.msra.mxu0 %v104
  %3216 = vmatmul.f32.gmra.mxu0 %v99
  %v3217 = vpop.f32.mrf.mxu0
  %v3218 = vadd.f32 %v427, %v3217
  %3219 = vdwg.mxu0
  %3220 = vmatpush.msra.mxu0 %v228
  %3221 = vmatpush.msra.mxu0 %v224
  %3222 = vmatpush.msra.mxu0 %v220
  %3223 = vmatpush.msra.mxu0 %v216
  %3224 = vmatpush.msra.mxu0 %v212
  %3225 = vmatpush.msra.mxu0 %v208
  %3226 = vmatpush.msra.mxu0 %v204
  %3227 = vmatpush.msra.mxu0 %v200
  %3228 = vmatpush.msra.mxu0 %v196
  %3229 = vmatpush.msra.mxu0 %v192
  %3230 = vmatpush.msra.mxu0 %v188
  %3231 = vmatpush.msra.mxu0 %v184
  %3232 = vmatpush.msra.mxu0 %v180
  %3233 = vmatpush.msra.mxu0 %v176
  %3234 = vmatpush.msra.mxu0 %v172
  %3235 = vmatpush.msra.mxu0 %v168
  %3236 = vmatmul.f32.gmra.mxu0 %v2976
  %v3237 = vpop.f32.mrf.mxu0
  %v3238 = vadd.f32 %v3218, %v3237
  %3239 = vdwg.mxu0
  %3240 = vmatpush.msra.mxu0 %v165
  %3241 = vmatpush.msra.mxu0 %v161
  %3242 = vmatpush.msra.mxu0 %v157
  %3243 = vmatpush.msra.mxu0 %v153
  %3244 = vmatpush.msra.mxu0 %v149
  %3245 = vmatpush.msra.mxu0 %v145
  %3246 = vmatpush.msra.mxu0 %v141
  %3247 = vmatpush.msra.mxu0 %v137
  %3248 = vmatpush.msra.mxu0 %v133
  %3249 = vmatpush.msra.mxu0 %v129
  %3250 = vmatpush.msra.mxu0 %v125
  %3251 = vmatpush.msra.mxu0 %v121
  %3252 = vmatpush.msra.mxu0 %v117
  %3253 = vmatpush.msra.mxu0 %v113
  %3254 = vmatpush.msra.mxu0 %v109
  %3255 = vmatpush.msra.mxu0 %v105
  %3256 = vmatmul.f32.gmra.mxu0 %v99
  %v3257 = vpop.f32.mrf.mxu0
  %v3258 = vadd.f32 %v428, %v3257
  %3259 = vdwg.mxu0
  %3260 = vmatpush.msra.mxu0 %v229
  %3261 = vmatpush.msra.mxu0 %v225
  %3262 = vmatpush.msra.mxu0 %v221
  %3263 = vmatpush.msra.mxu0 %v217
  %3264 = vmatpush.msra.mxu0 %v213
  %3265 = vmatpush.msra.mxu0 %v209
  %3266 = vmatpush.msra.mxu0 %v205
  %3267 = vmatpush.msra.mxu0 %v201
  %3268 = vmatpush.msra.mxu0 %v197
  %3269 = vmatpush.msra.mxu0 %v193
  %3270 = vmatpush.msra.mxu0 %v189
  %3271 = vmatpush.msra.mxu0 %v185
  %3272 = vmatpush.msra.mxu0 %v181
  %3273 = vmatpush.msra.mxu0 %v177
  %3274 = vmatpush.msra.mxu0 %v173
  %3275 = vmatpush.msra.mxu0 %v169
  %3276 = vmatmul.f32.gmra.mxu0 %v2976
  %v3277 = vpop.f32.mrf.mxu0
  %v3278 = vadd.f32 %v3258, %v3277
  %3279 = vdwg.mxu0
  %3280 = vmatpush.msra.mxu0 %v166
  %3281 = vmatpush.msra.mxu0 %v162
  %3282 = vmatpush.msra.mxu0 %v158
  %3283 = vmatpush.msra.mxu0 %v154
  %3284 = vmatpush.msra.mxu0 %v150
  %3285 = vmatpush.msra.mxu0 %v146
  %3286 = vmatpush.msra.mxu0 %v142
  %3287 = vmatpush.msra.mxu0 %v138
  %3288 = vmatpush.msra.mxu0 %v134
  %3289 = vmatpush.msra.mxu0 %v130
  %3290 = vmatpush.msra.mxu0 %v126
  %3291 = vmatpush.msra.mxu0 %v122
  %3292 = vmatpush.msra.mxu0 %v118
  %3293 = vmatpush.msra.mxu0 %v114
  %3294 = vmatpush.msra.mxu0 %v110
  %3295 = vmatpush.msra.mxu0 %v106
  %3296 = vmatmul.f32.gmra.mxu0 %v99
  %v3297 = vpop.f32.mrf.mxu0
  %v3298 = vadd.f32 %v429, %v3297
  %3299 = vdwg.mxu0
  %3300 = vmatpush.msra.mxu0 %v230
  %3301 = vmatpush.msra.mxu0 %v226
  %3302 = vmatpush.msra.mxu0 %v222
  %3303 = vmatpush.msra.mxu0 %v218
  %3304 = vmatpush.msra.mxu0 %v214
  %3305 = vmatpush.msra.mxu0 %v210
  %3306 = vmatpush.msra.mxu0 %v206
  %3307 = vmatpush.msra.mxu0 %v202
  %3308 = vmatpush.msra.mxu0 %v198
  %3309 = vmatpush.msra.mxu0 %v194
  %3310 = vmatpush.msra.mxu0 %v190
  %3311 = vmatpush.msra.mxu0 %v186
  %3312 = vmatpush.msra.mxu0 %v182
  %3313 = vmatpush.msra.mxu0 %v178
  %3314 = vmatpush.msra.mxu0 %v174
  %3315 = vmatpush.msra.mxu0 %v170
  %3316 = vmatmul.f32.gmra.mxu0 %v2976
  %v3317 = vpop.f32.mrf.mxu0
  %v3318 = vadd.f32 %v3298, %v3317
  %3319 = vdwg.mxu0
  %3320 = vmatpush.msra.mxu0 %v167
  %3321 = vmatpush.msra.mxu0 %v163
  %3322 = vmatpush.msra.mxu0 %v159
  %3323 = vmatpush.msra.mxu0 %v155
  %3324 = vmatpush.msra.mxu0 %v151
  %3325 = vmatpush.msra.mxu0 %v147
  %3326 = vmatpush.msra.mxu0 %v143
  %3327 = vmatpush.msra.mxu0 %v139
  %3328 = vmatpush.msra.mxu0 %v135
  %3329 = vmatpush.msra.mxu0 %v131
  %3330 = vmatpush.msra.mxu0 %v127
  %3331 = vmatpush.msra.mxu0 %v123
  %3332 = vmatpush.msra.mxu0 %v119
  %3333 = vmatpush.msra.mxu0 %v115
  %3334 = vmatpush.msra.mxu0 %v111
  %3335 = vmatpush.msra.mxu0 %v107
  %3336 = vmatmul.f32.gmra.mxu0 %v99
  %v3337 = vpop.f32.mrf.mxu0
  %v3338 = vadd.f32 %v430, %v3337
  %3339 = vdwg.mxu0
  %3340 = vmatpush.msra.mxu0 %v231
  %3341 = vmatpush.msra.mxu0 %v227
  %3342 = vmatpush.msra.mxu0 %v223
  %3343 = vmatpush.msra.mxu0 %v219
  %3344 = vmatpush.msra.mxu0 %v215
  %3345 = vmatpush.msra.mxu0 %v211
  %3346 = vmatpush.msra.mxu0 %v207
  %3347 = vmatpush.msra.mxu0 %v203
  %3348 = vmatpush.msra.mxu0 %v199
  %3349 = vmatpush.msra.mxu0 %v195
  %3350 = vmatpush.msra.mxu0 %v191
  %3351 = vmatpush.msra.mxu0 %v187
  %3352 = vmatpush.msra.mxu0 %v183
  %3353 = vmatpush.msra.mxu0 %v179
  %3354 = vmatpush.msra.mxu0 %v175
  %3355 = vmatpush.msra.mxu0 %v171
  %3356 = vmatmul.f32.gmra.mxu0 %v2976
  %v3357 = vpop.f32.mrf.mxu0
  %v3358 = vadd.f32 %v3338, %v3357
  %3359 = vdwg.mxu0
  %v3360 = vxor.u32 %v3238, 2147483648
  %v3361 = vmul.f32 %v3360, 1.442695
  %v3362 = vpow.pop %v3361
  %v3363 = vadd.f32 %v3362, 1.0
  %v3364 = vrcp.pop %v3363
  %v3365 = vmul.f32 %v3363, %v3364
  %v3366 = vsub.f32 1.0, %v3365
  %v3367 = vmul.f32 %v3364, %v3366
  %v3368 = vadd.f32 %v3364, %v3367
  %vm3369 = vweird.f32 %v3363
  %vm3370 = vweird.f32 %v3364
  %vm3371 = vmor %vm3369, %vm3370
  %v3372 = vsel %vm3371, %v3364, %v3368
  %v3373 = vand.u32 2147483647, %v3363
  %vm3374 = vcmp.eq.f32.partialorder %v3373, 8.507059e+37
  %v3375 = vand.u32 %v3363, 2147483648
  %v3376 = vor.u32 1.1754944e-38, %v3375
  %v3377 = vsel %vm3374, %v3376, %v3372
  %v3378 = vmul.f32 1.0, %v3377
  %v3379 = vxor.u32 %v3278, 2147483648
  %v3380 = vmul.f32 %v3379, 1.442695
  %v3381 = vpow.pop %v3380
  %v3382 = vadd.f32 %v3381, 1.0
  %v3383 = vrcp.pop %v3382
  %v3384 = vmul.f32 %v3382, %v3383
  %v3385 = vsub.f32 1.0, %v3384
  %v3386 = vmul.f32 %v3383, %v3385
  %v3387 = vadd.f32 %v3383, %v3386
  %vm3388 = vweird.f32 %v3382
  %vm3389 = vweird.f32 %v3383
  %vm3390 = vmor %vm3388, %vm3389
  %v3391 = vsel %vm3390, %v3383, %v3387
  %v3392 = vand.u32 2147483647, %v3382
  %vm3393 = vcmp.eq.f32.partialorder %v3392, 8.507059e+37
  %v3394 = vand.u32 %v3382, 2147483648
  %v3395 = vor.u32 1.1754944e-38, %v3394
  %v3396 = vsel %vm3393, %v3395, %v3391
  %v3397 = vmul.f32 1.0, %v3396
  %v3398 = vtanh.pop %v3318
  %v3399 = vxor.u32 %v3358, 2147483648
  %v3400 = vmul.f32 %v3399, 1.442695
  %v3401 = vpow.pop %v3400
  %v3402 = vadd.f32 %v3401, 1.0
  %v3403 = vrcp.pop %v3402
  %v3404 = vmul.f32 %v3402, %v3403
  %v3405 = vsub.f32 1.0, %v3404
  %v3406 = vmul.f32 %v3403, %v3405
  %v3407 = vadd.f32 %v3403, %v3406
  %vm3408 = vweird.f32 %v3402
  %vm3409 = vweird.f32 %v3403
  %vm3410 = vmor %vm3408, %vm3409
  %v3411 = vsel %vm3410, %v3403, %v3407
  %v3412 = vand.u32 2147483647, %v3402
  %vm3413 = vcmp.eq.f32.partialorder %v3412, 8.507059e+37
  %v3414 = vand.u32 %v3402, 2147483648
  %v3415 = vor.u32 1.1754944e-38, %v3414
  %v3416 = vsel %vm3413, %v3415, %v3411
  %v3417 = vmul.f32 1.0, %v3416
  %v3418 = vmul.f32 %v3397, %v2974
  %v3419 = vmul.f32 %v3378, %v3398
  %v3420 = vadd.f32 %v3418, %v3419
  %v3421 = vtanh.pop %v3420
  %v3422 = vmul.f32 %v3417, %v3421
  %3423 = vmatpush.msra.mxu0 %v357
  %3424 = vmatpush.msra.mxu0 %v353
  %3425 = vmatpush.msra.mxu0 %v349
  %3426 = vmatpush.msra.mxu0 %v345
  %3427 = vmatpush.msra.mxu0 %v341
  %3428 = vmatpush.msra.mxu0 %v337
  %3429 = vmatpush.msra.mxu0 %v333
  %3430 = vmatpush.msra.mxu0 %v329
  %3431 = vmatpush.msra.mxu0 %v325
  %3432 = vmatpush.msra.mxu0 %v321
  %3433 = vmatpush.msra.mxu0 %v317
  %3434 = vmatpush.msra.mxu0 %v313
  %3435 = vmatpush.msra.mxu0 %v309
  %3436 = vmatpush.msra.mxu0 %v305
  %3437 = vmatpush.msra.mxu0 %v301
  %3438 = vmatpush.msra.mxu0 %v297
  %3439 = vmatmul.f32.gmra.mxu0 %v3422
  %v3440 = vpop.f32.mrf.mxu0
  %v3441 = vadd.f32 %v685, %v3440
  %3442 = vdwg.mxu0
  %3443 = vmatpush.msra.mxu0 %v421
  %3444 = vmatpush.msra.mxu0 %v417
  %3445 = vmatpush.msra.mxu0 %v413
  %3446 = vmatpush.msra.mxu0 %v409
  %3447 = vmatpush.msra.mxu0 %v405
  %3448 = vmatpush.msra.mxu0 %v401
  %3449 = vmatpush.msra.mxu0 %v397
  %3450 = vmatpush.msra.mxu0 %v393
  %3451 = vmatpush.msra.mxu0 %v389
  %3452 = vmatpush.msra.mxu0 %v385
  %3453 = vmatpush.msra.mxu0 %v381
  %3454 = vmatpush.msra.mxu0 %v377
  %3455 = vmatpush.msra.mxu0 %v373
  %3456 = vmatpush.msra.mxu0 %v369
  %3457 = vmatpush.msra.mxu0 %v365
  %3458 = vmatpush.msra.mxu0 %v361
  %3459 = vmatmul.f32.gmra.mxu0 %v3199
  %v3460 = vpop.f32.mrf.mxu0
  %v3461 = vadd.f32 %v3441, %v3460
  %3462 = vdwg.mxu0
  %3463 = vmatpush.msra.mxu0 %v358
  %3464 = vmatpush.msra.mxu0 %v354
  %3465 = vmatpush.msra.mxu0 %v350
  %3466 = vmatpush.msra.mxu0 %v346
  %3467 = vmatpush.msra.mxu0 %v342
  %3468 = vmatpush.msra.mxu0 %v338
  %3469 = vmatpush.msra.mxu0 %v334
  %3470 = vmatpush.msra.mxu0 %v330
  %3471 = vmatpush.msra.mxu0 %v326
  %3472 = vmatpush.msra.mxu0 %v322
  %3473 = vmatpush.msra.mxu0 %v318
  %3474 = vmatpush.msra.mxu0 %v314
  %3475 = vmatpush.msra.mxu0 %v310
  %3476 = vmatpush.msra.mxu0 %v306
  %3477 = vmatpush.msra.mxu0 %v302
  %3478 = vmatpush.msra.mxu0 %v298
  %3479 = vmatmul.f32.gmra.mxu0 %v3422
  %v3480 = vpop.f32.mrf.mxu0
  %v3481 = vadd.f32 %v745, %v3480
  %3482 = vdwg.mxu0
  %3483 = vmatpush.msra.mxu0 %v422
  %3484 = vmatpush.msra.mxu0 %v418
  %3485 = vmatpush.msra.mxu0 %v414
  %3486 = vmatpush.msra.mxu0 %v410
  %3487 = vmatpush.msra.mxu0 %v406
  %3488 = vmatpush.msra.mxu0 %v402
  %3489 = vmatpush.msra.mxu0 %v398
  %3490 = vmatpush.msra.mxu0 %v394
  %3491 = vmatpush.msra.mxu0 %v390
  %3492 = vmatpush.msra.mxu0 %v386
  %3493 = vmatpush.msra.mxu0 %v382
  %3494 = vmatpush.msra.mxu0 %v378
  %3495 = vmatpush.msra.mxu0 %v374
  %3496 = vmatpush.msra.mxu0 %v370
  %3497 = vmatpush.msra.mxu0 %v366
  %3498 = vmatpush.msra.mxu0 %v362
  %3499 = vmatmul.f32.gmra.mxu0 %v3199
  %v3500 = vpop.f32.mrf.mxu0
  %v3501 = vadd.f32 %v3481, %v3500
  %3502 = vdwg.mxu0
  %3503 = vmatpush.msra.mxu0 %v359
  %3504 = vmatpush.msra.mxu0 %v355
  %3505 = vmatpush.msra.mxu0 %v351
  %3506 = vmatpush.msra.mxu0 %v347
  %3507 = vmatpush.msra.mxu0 %v343
  %3508 = vmatpush.msra.mxu0 %v339
  %3509 = vmatpush.msra.mxu0 %v335
  %3510 = vmatpush.msra.mxu0 %v331
  %3511 = vmatpush.msra.mxu0 %v327
  %3512 = vmatpush.msra.mxu0 %v323
  %3513 = vmatpush.msra.mxu0 %v319
  %3514 = vmatpush.msra.mxu0 %v315
  %3515 = vmatpush.msra.mxu0 %v311
  %3516 = vmatpush.msra.mxu0 %v307
  %3517 = vmatpush.msra.mxu0 %v303
  %3518 = vmatpush.msra.mxu0 %v299
  %3519 = vmatmul.f32.gmra.mxu0 %v3422
  %v3520 = vpop.f32.mrf.mxu0
  %v3521 = vadd.f32 %v805, %v3520
  %3522 = vdwg.mxu0
  %3523 = vmatpush.msra.mxu0 %v423
  %3524 = vmatpush.msra.mxu0 %v419
  %3525 = vmatpush.msra.mxu0 %v415
  %3526 = vmatpush.msra.mxu0 %v411
  %3527 = vmatpush.msra.mxu0 %v407
  %3528 = vmatpush.msra.mxu0 %v403
  %3529 = vmatpush.msra.mxu0 %v399
  %3530 = vmatpush.msra.mxu0 %v395
  %3531 = vmatpush.msra.mxu0 %v391
  %3532 = vmatpush.msra.mxu0 %v387
  %3533 = vmatpush.msra.mxu0 %v383
  %3534 = vmatpush.msra.mxu0 %v379
  %3535 = vmatpush.msra.mxu0 %v375
  %3536 = vmatpush.msra.mxu0 %v371
  %3537 = vmatpush.msra.mxu0 %v367
  %3538 = vmatpush.msra.mxu0 %v363
  %3539 = vmatmul.f32.gmra.mxu0 %v3199
  %v3540 = vpop.f32.mrf.mxu0
  %v3541 = vadd.f32 %v3521, %v3540
  %3542 = vdwg.mxu0
  %3543 = vmatpush.msra.mxu0 %v360
  %3544 = vmatpush.msra.mxu0 %v356
  %3545 = vmatpush.msra.mxu0 %v352
  %3546 = vmatpush.msra.mxu0 %v348
  %3547 = vmatpush.msra.mxu0 %v344
  %3548 = vmatpush.msra.mxu0 %v340
  %3549 = vmatpush.msra.mxu0 %v336
  %3550 = vmatpush.msra.mxu0 %v332
  %3551 = vmatpush.msra.mxu0 %v328
  %3552 = vmatpush.msra.mxu0 %v324
  %3553 = vmatpush.msra.mxu0 %v320
  %3554 = vmatpush.msra.mxu0 %v316
  %3555 = vmatpush.msra.mxu0 %v312
  %3556 = vmatpush.msra.mxu0 %v308
  %3557 = vmatpush.msra.mxu0 %v304
  %3558 = vmatpush.msra.mxu0 %v300
  %3559 = vmatmul.f32.gmra.mxu0 %v3422
  %v3560 = vpop.f32.mrf.mxu0
  %v3561 = vadd.f32 %v865, %v3560
  %3562 = vdwg.mxu0
  %3563 = vmatpush.msra.mxu0 %v424
  %3564 = vmatpush.msra.mxu0 %v420
  %3565 = vmatpush.msra.mxu0 %v416
  %3566 = vmatpush.msra.mxu0 %v412
  %3567 = vmatpush.msra.mxu0 %v408
  %3568 = vmatpush.msra.mxu0 %v404
  %3569 = vmatpush.msra.mxu0 %v400
  %3570 = vmatpush.msra.mxu0 %v396
  %3571 = vmatpush.msra.mxu0 %v392
  %3572 = vmatpush.msra.mxu0 %v388
  %3573 = vmatpush.msra.mxu0 %v384
  %3574 = vmatpush.msra.mxu0 %v380
  %3575 = vmatpush.msra.mxu0 %v376
  %3576 = vmatpush.msra.mxu0 %v372
  %3577 = vmatpush.msra.mxu0 %v368
  %3578 = vmatpush.msra.mxu0 %v364
  %3579 = vmatmul.f32.gmra.mxu0 %v3199
  %v3580 = vpop.f32.mrf.mxu0
  %v3581 = vadd.f32 %v3561, %v3580
  %3582 = vdwg.mxu0
  %v3583 = vxor.u32 %v3461, 2147483648
  %v3584 = vmul.f32 %v3583, 1.442695
  %v3585 = vpow.pop %v3584
  %v3586 = vadd.f32 %v3585, 1.0
  %v3587 = vrcp.pop %v3586
  %v3588 = vmul.f32 %v3586, %v3587
  %v3589 = vsub.f32 1.0, %v3588
  %v3590 = vmul.f32 %v3587, %v3589
  %v3591 = vadd.f32 %v3587, %v3590
  %vm3592 = vweird.f32 %v3586
  %vm3593 = vweird.f32 %v3587
  %vm3594 = vmor %vm3592, %vm3593
  %v3595 = vsel %vm3594, %v3587, %v3591
  %v3596 = vand.u32 2147483647, %v3586
  %vm3597 = vcmp.eq.f32.partialorder %v3596, 8.507059e+37
  %v3598 = vand.u32 %v3586, 2147483648
  %v3599 = vor.u32 1.1754944e-38, %v3598
  %v3600 = vsel %vm3597, %v3599, %v3595
  %v3601 = vmul.f32 1.0, %v3600
  %v3602 = vxor.u32 %v3501, 2147483648
  %v3603 = vmul.f32 %v3602, 1.442695
  %v3604 = vpow.pop %v3603
  %v3605 = vadd.f32 %v3604, 1.0
  %v3606 = vrcp.pop %v3605
  %v3607 = vmul.f32 %v3605, %v3606
  %v3608 = vsub.f32 1.0, %v3607
  %v3609 = vmul.f32 %v3606, %v3608
  %v3610 = vadd.f32 %v3606, %v3609
  %vm3611 = vweird.f32 %v3605
  %vm3612 = vweird.f32 %v3606
  %vm3613 = vmor %vm3611, %vm3612
  %v3614 = vsel %vm3613, %v3606, %v3610
  %v3615 = vand.u32 2147483647, %v3605
  %vm3616 = vcmp.eq.f32.partialorder %v3615, 8.507059e+37
  %v3617 = vand.u32 %v3605, 2147483648
  %v3618 = vor.u32 1.1754944e-38, %v3617
  %v3619 = vsel %vm3616, %v3618, %v3614
  %v3620 = vmul.f32 1.0, %v3619
  %v3621 = vtanh.pop %v3541
  %v3622 = vxor.u32 %v3581, 2147483648
  %v3623 = vmul.f32 %v3622, 1.442695
  %v3624 = vpow.pop %v3623
  %v3625 = vadd.f32 %v3624, 1.0
  %v3626 = vrcp.pop %v3625
  %v3627 = vmul.f32 %v3625, %v3626
  %v3628 = vsub.f32 1.0, %v3627
  %v3629 = vmul.f32 %v3626, %v3628
  %v3630 = vadd.f32 %v3626, %v3629
  %vm3631 = vweird.f32 %v3625
  %vm3632 = vweird.f32 %v3626
  %vm3633 = vmor %vm3631, %vm3632
  %v3634 = vsel %vm3633, %v3626, %v3630
  %v3635 = vand.u32 2147483647, %v3625
  %vm3636 = vcmp.eq.f32.partialorder %v3635, 8.507059e+37
  %v3637 = vand.u32 %v3625, 2147483648
  %v3638 = vor.u32 1.1754944e-38, %v3637
  %v3639 = vsel %vm3636, %v3638, %v3634
  %v3640 = vmul.f32 1.0, %v3639
  %v3641 = vmul.f32 %v3620, %v3197
  %v3642 = vmul.f32 %v3601, %v3621
  %v3643 = vadd.f32 %v3641, %v3642
  %v3644 = vtanh.pop %v3643
  %v3645 = vmul.f32 %v3640, %v3644
  %3646 = vmatpush.msra.mxu0 %v164
  %3647 = vmatpush.msra.mxu0 %v160
  %3648 = vmatpush.msra.mxu0 %v156
  %3649 = vmatpush.msra.mxu0 %v152
  %3650 = vmatpush.msra.mxu0 %v148
  %3651 = vmatpush.msra.mxu0 %v144
  %3652 = vmatpush.msra.mxu0 %v140
  %3653 = vmatpush.msra.mxu0 %v136
  %3654 = vmatpush.msra.mxu0 %v132
  %3655 = vmatpush.msra.mxu0 %v128
  %3656 = vmatpush.msra.mxu0 %v124
  %3657 = vmatpush.msra.mxu0 %v120
  %3658 = vmatpush.msra.mxu0 %v116
  %3659 = vmatpush.msra.mxu0 %v112
  %3660 = vmatpush.msra.mxu0 %v108
  %3661 = vmatpush.msra.mxu0 %v104
  %3662 = vmatmul.f32.gmra.mxu0 %v102
  %v3663 = vpop.f32.mrf.mxu0
  %v3664 = vadd.f32 %v427, %v3663
  %3665 = vdwg.mxu0
  %3666 = vmatpush.msra.mxu0 %v228
  %3667 = vmatpush.msra.mxu0 %v224
  %3668 = vmatpush.msra.mxu0 %v220
  %3669 = vmatpush.msra.mxu0 %v216
  %3670 = vmatpush.msra.mxu0 %v212
  %3671 = vmatpush.msra.mxu0 %v208
  %3672 = vmatpush.msra.mxu0 %v204
  %3673 = vmatpush.msra.mxu0 %v200
  %3674 = vmatpush.msra.mxu0 %v196
  %3675 = vmatpush.msra.mxu0 %v192
  %3676 = vmatpush.msra.mxu0 %v188
  %3677 = vmatpush.msra.mxu0 %v184
  %3678 = vmatpush.msra.mxu0 %v180
  %3679 = vmatpush.msra.mxu0 %v176
  %3680 = vmatpush.msra.mxu0 %v172
  %3681 = vmatpush.msra.mxu0 %v168
  %3682 = vmatmul.f32.gmra.mxu0 %v3422
  %v3683 = vpop.f32.mrf.mxu0
  %v3684 = vadd.f32 %v3664, %v3683
  %3685 = vdwg.mxu0
  %3686 = vmatpush.msra.mxu0 %v165
  %3687 = vmatpush.msra.mxu0 %v161
  %3688 = vmatpush.msra.mxu0 %v157
  %3689 = vmatpush.msra.mxu0 %v153
  %3690 = vmatpush.msra.mxu0 %v149
  %3691 = vmatpush.msra.mxu0 %v145
  %3692 = vmatpush.msra.mxu0 %v141
  %3693 = vmatpush.msra.mxu0 %v137
  %3694 = vmatpush.msra.mxu0 %v133
  %3695 = vmatpush.msra.mxu0 %v129
  %3696 = vmatpush.msra.mxu0 %v125
  %3697 = vmatpush.msra.mxu0 %v121
  %3698 = vmatpush.msra.mxu0 %v117
  %3699 = vmatpush.msra.mxu0 %v113
  %3700 = vmatpush.msra.mxu0 %v109
  %3701 = vmatpush.msra.mxu0 %v105
  %3702 = vmatmul.f32.gmra.mxu0 %v102
  %v3703 = vpop.f32.mrf.mxu0
  %v3704 = vadd.f32 %v428, %v3703
  %3705 = vdwg.mxu0
  %3706 = vmatpush.msra.mxu0 %v229
  %3707 = vmatpush.msra.mxu0 %v225
  %3708 = vmatpush.msra.mxu0 %v221
  %3709 = vmatpush.msra.mxu0 %v217
  %3710 = vmatpush.msra.mxu0 %v213
  %3711 = vmatpush.msra.mxu0 %v209
  %3712 = vmatpush.msra.mxu0 %v205
  %3713 = vmatpush.msra.mxu0 %v201
  %3714 = vmatpush.msra.mxu0 %v197
  %3715 = vmatpush.msra.mxu0 %v193
  %3716 = vmatpush.msra.mxu0 %v189
  %3717 = vmatpush.msra.mxu0 %v185
  %3718 = vmatpush.msra.mxu0 %v181
  %3719 = vmatpush.msra.mxu0 %v177
  %3720 = vmatpush.msra.mxu0 %v173
  %3721 = vmatpush.msra.mxu0 %v169
  %3722 = vmatmul.f32.gmra.mxu0 %v3422
  %v3723 = vpop.f32.mrf.mxu0
  %v3724 = vadd.f32 %v3704, %v3723
  %3725 = vdwg.mxu0
  %3726 = vmatpush.msra.mxu0 %v166
  %3727 = vmatpush.msra.mxu0 %v162
  %3728 = vmatpush.msra.mxu0 %v158
  %3729 = vmatpush.msra.mxu0 %v154
  %3730 = vmatpush.msra.mxu0 %v150
  %3731 = vmatpush.msra.mxu0 %v146
  %3732 = vmatpush.msra.mxu0 %v142
  %3733 = vmatpush.msra.mxu0 %v138
  %3734 = vmatpush.msra.mxu0 %v134
  %3735 = vmatpush.msra.mxu0 %v130
  %3736 = vmatpush.msra.mxu0 %v126
  %3737 = vmatpush.msra.mxu0 %v122
  %3738 = vmatpush.msra.mxu0 %v118
  %3739 = vmatpush.msra.mxu0 %v114
  %3740 = vmatpush.msra.mxu0 %v110
  %3741 = vmatpush.msra.mxu0 %v106
  %3742 = vmatmul.f32.gmra.mxu0 %v102
  %v3743 = vpop.f32.mrf.mxu0
  %v3744 = vadd.f32 %v429, %v3743
  %3745 = vdwg.mxu0
  %3746 = vmatpush.msra.mxu0 %v230
  %3747 = vmatpush.msra.mxu0 %v226
  %3748 = vmatpush.msra.mxu0 %v222
  %3749 = vmatpush.msra.mxu0 %v218
  %3750 = vmatpush.msra.mxu0 %v214
  %3751 = vmatpush.msra.mxu0 %v210
  %3752 = vmatpush.msra.mxu0 %v206
  %3753 = vmatpush.msra.mxu0 %v202
  %3754 = vmatpush.msra.mxu0 %v198
  %3755 = vmatpush.msra.mxu0 %v194
  %3756 = vmatpush.msra.mxu0 %v190
  %3757 = vmatpush.msra.mxu0 %v186
  %3758 = vmatpush.msra.mxu0 %v182
  %3759 = vmatpush.msra.mxu0 %v178
  %3760 = vmatpush.msra.mxu0 %v174
  %3761 = vmatpush.msra.mxu0 %v170
  %3762 = vmatmul.f32.gmra.mxu0 %v3422
  %v3763 = vpop.f32.mrf.mxu0
  %v3764 = vadd.f32 %v3744, %v3763
  %3765 = vdwg.mxu0
  %3766 = vmatpush.msra.mxu0 %v167
  %3767 = vmatpush.msra.mxu0 %v163
  %3768 = vmatpush.msra.mxu0 %v159
  %3769 = vmatpush.msra.mxu0 %v155
  %3770 = vmatpush.msra.mxu0 %v151
  %3771 = vmatpush.msra.mxu0 %v147
  %3772 = vmatpush.msra.mxu0 %v143
  %3773 = vmatpush.msra.mxu0 %v139
  %3774 = vmatpush.msra.mxu0 %v135
  %3775 = vmatpush.msra.mxu0 %v131
  %3776 = vmatpush.msra.mxu0 %v127
  %3777 = vmatpush.msra.mxu0 %v123
  %3778 = vmatpush.msra.mxu0 %v119
  %3779 = vmatpush.msra.mxu0 %v115
  %3780 = vmatpush.msra.mxu0 %v111
  %3781 = vmatpush.msra.mxu0 %v107
  %3782 = vmatmul.f32.gmra.mxu0 %v102
  %v3783 = vpop.f32.mrf.mxu0
  %v3784 = vadd.f32 %v430, %v3783
  %3785 = vdwg.mxu0
  %3786 = vmatpush.msra.mxu0 %v231
  %3787 = vmatpush.msra.mxu0 %v227
  %3788 = vmatpush.msra.mxu0 %v223
  %3789 = vmatpush.msra.mxu0 %v219
  %3790 = vmatpush.msra.mxu0 %v215
  %3791 = vmatpush.msra.mxu0 %v211
  %3792 = vmatpush.msra.mxu0 %v207
  %3793 = vmatpush.msra.mxu0 %v203
  %3794 = vmatpush.msra.mxu0 %v199
  %3795 = vmatpush.msra.mxu0 %v195
  %3796 = vmatpush.msra.mxu0 %v191
  %3797 = vmatpush.msra.mxu0 %v187
  %3798 = vmatpush.msra.mxu0 %v183
  %3799 = vmatpush.msra.mxu0 %v179
  %3800 = vmatpush.msra.mxu0 %v175
  %3801 = vmatpush.msra.mxu0 %v171
  %3802 = vmatmul.f32.gmra.mxu0 %v3422
  %v3803 = vpop.f32.mrf.mxu0
  %v3804 = vadd.f32 %v3784, %v3803
  %3805 = vdwg.mxu0
  %v3806 = vxor.u32 %v3684, 2147483648
  %v3807 = vmul.f32 %v3806, 1.442695
  %v3808 = vpow.pop %v3807
  %v3809 = vadd.f32 %v3808, 1.0
  %v3810 = vrcp.pop %v3809
  %v3811 = vmul.f32 %v3809, %v3810
  %v3812 = vsub.f32 1.0, %v3811
  %v3813 = vmul.f32 %v3810, %v3812
  %v3814 = vadd.f32 %v3810, %v3813
  %vm3815 = vweird.f32 %v3809
  %vm3816 = vweird.f32 %v3810
  %vm3817 = vmor %vm3815, %vm3816
  %v3818 = vsel %vm3817, %v3810, %v3814
  %v3819 = vand.u32 2147483647, %v3809
  %vm3820 = vcmp.eq.f32.partialorder %v3819, 8.507059e+37
  %v3821 = vand.u32 %v3809, 2147483648
  %v3822 = vor.u32 1.1754944e-38, %v3821
  %v3823 = vsel %vm3820, %v3822, %v3818
  %v3824 = vmul.f32 1.0, %v3823
  %v3825 = vxor.u32 %v3724, 2147483648
  %v3826 = vmul.f32 %v3825, 1.442695
  %v3827 = vpow.pop %v3826
  %v3828 = vadd.f32 %v3827, 1.0
  %v3829 = vrcp.pop %v3828
  %v3830 = vmul.f32 %v3828, %v3829
  %v3831 = vsub.f32 1.0, %v3830
  %v3832 = vmul.f32 %v3829, %v3831
  %v3833 = vadd.f32 %v3829, %v3832
  %vm3834 = vweird.f32 %v3828
  %vm3835 = vweird.f32 %v3829
  %vm3836 = vmor %vm3834, %vm3835
  %v3837 = vsel %vm3836, %v3829, %v3833
  %v3838 = vand.u32 2147483647, %v3828
  %vm3839 = vcmp.eq.f32.partialorder %v3838, 8.507059e+37
  %v3840 = vand.u32 %v3828, 2147483648
  %v3841 = vor.u32 1.1754944e-38, %v3840
  %v3842 = vsel %vm3839, %v3841, %v3837
  %v3843 = vmul.f32 1.0, %v3842
  %v3844 = vtanh.pop %v3764
  %v3845 = vxor.u32 %v3804, 2147483648
  %v3846 = vmul.f32 %v3845, 1.442695
  %v3847 = vpow.pop %v3846
  %v3848 = vadd.f32 %v3847, 1.0
  %v3849 = vrcp.pop %v3848
  %v3850 = vmul.f32 %v3848, %v3849
  %v3851 = vsub.f32 1.0, %v3850
  %v3852 = vmul.f32 %v3849, %v3851
  %v3853 = vadd.f32 %v3849, %v3852
  %vm3854 = vweird.f32 %v3848
  %vm3855 = vweird.f32 %v3849
  %vm3856 = vmor %vm3854, %vm3855
  %v3857 = vsel %vm3856, %v3849, %v3853
  %v3858 = vand.u32 2147483647, %v3848
  %vm3859 = vcmp.eq.f32.partialorder %v3858, 8.507059e+37
  %v3860 = vand.u32 %v3848, 2147483648
  %v3861 = vor.u32 1.1754944e-38, %v3860
  %v3862 = vsel %vm3859, %v3861, %v3857
  %v3863 = vmul.f32 1.0, %v3862
  %v3864 = vmul.f32 %v3843, %v3420
  %v3865 = vmul.f32 %v3824, %v3844
  %v3866 = vadd.f32 %v3864, %v3865
  %v3867 = vtanh.pop %v3866
  %v3868 = vmul.f32 %v3863, %v3867
  %3869 = vmatpush.msra.mxu0 %v357
  %3870 = vmatpush.msra.mxu0 %v353
  %3871 = vmatpush.msra.mxu0 %v349
  %3872 = vmatpush.msra.mxu0 %v345
  %3873 = vmatpush.msra.mxu0 %v341
  %3874 = vmatpush.msra.mxu0 %v337
  %3875 = vmatpush.msra.mxu0 %v333
  %3876 = vmatpush.msra.mxu0 %v329
  %3877 = vmatpush.msra.mxu0 %v325
  %3878 = vmatpush.msra.mxu0 %v321
  %3879 = vmatpush.msra.mxu0 %v317
  %3880 = vmatpush.msra.mxu0 %v313
  %3881 = vmatpush.msra.mxu0 %v309
  %3882 = vmatpush.msra.mxu0 %v305
  %3883 = vmatpush.msra.mxu0 %v301
  %3884 = vmatpush.msra.mxu0 %v297
  %3885 = vmatmul.f32.gmra.mxu0 %v3868
  %v3886 = vpop.f32.mrf.mxu0
  %v3887 = vadd.f32 %v685, %v3886
  %3888 = vdwg.mxu0
  %3889 = vmatpush.msra.mxu0 %v421
  %3890 = vmatpush.msra.mxu0 %v417
  %3891 = vmatpush.msra.mxu0 %v413
  %3892 = vmatpush.msra.mxu0 %v409
  %3893 = vmatpush.msra.mxu0 %v405
  %3894 = vmatpush.msra.mxu0 %v401
  %3895 = vmatpush.msra.mxu0 %v397
  %3896 = vmatpush.msra.mxu0 %v393
  %3897 = vmatpush.msra.mxu0 %v389
  %3898 = vmatpush.msra.mxu0 %v385
  %3899 = vmatpush.msra.mxu0 %v381
  %3900 = vmatpush.msra.mxu0 %v377
  %3901 = vmatpush.msra.mxu0 %v373
  %3902 = vmatpush.msra.mxu0 %v369
  %3903 = vmatpush.msra.mxu0 %v365
  %3904 = vmatpush.msra.mxu0 %v361
  %3905 = vmatmul.f32.gmra.mxu0 %v3645
  %v3906 = vpop.f32.mrf.mxu0
  %v3907 = vadd.f32 %v3887, %v3906
  %3908 = vdwg.mxu0
  %3909 = vmatpush.msra.mxu0 %v358
  %3910 = vmatpush.msra.mxu0 %v354
  %3911 = vmatpush.msra.mxu0 %v350
  %3912 = vmatpush.msra.mxu0 %v346
  %3913 = vmatpush.msra.mxu0 %v342
  %3914 = vmatpush.msra.mxu0 %v338
  %3915 = vmatpush.msra.mxu0 %v334
  %3916 = vmatpush.msra.mxu0 %v330
  %3917 = vmatpush.msra.mxu0 %v326
  %3918 = vmatpush.msra.mxu0 %v322
  %3919 = vmatpush.msra.mxu0 %v318
  %3920 = vmatpush.msra.mxu0 %v314
  %3921 = vmatpush.msra.mxu0 %v310
  %3922 = vmatpush.msra.mxu0 %v306
  %3923 = vmatpush.msra.mxu0 %v302
  %3924 = vmatpush.msra.mxu0 %v298
  %3925 = vmatmul.f32.gmra.mxu0 %v3868
  %v3926 = vpop.f32.mrf.mxu0
  %v3927 = vadd.f32 %v745, %v3926
  %3928 = vdwg.mxu0
  %3929 = vmatpush.msra.mxu0 %v422
  %3930 = vmatpush.msra.mxu0 %v418
  %3931 = vmatpush.msra.mxu0 %v414
  %3932 = vmatpush.msra.mxu0 %v410
  %3933 = vmatpush.msra.mxu0 %v406
  %3934 = vmatpush.msra.mxu0 %v402
  %3935 = vmatpush.msra.mxu0 %v398
  %3936 = vmatpush.msra.mxu0 %v394
  %3937 = vmatpush.msra.mxu0 %v390
  %3938 = vmatpush.msra.mxu0 %v386
  %3939 = vmatpush.msra.mxu0 %v382
  %3940 = vmatpush.msra.mxu0 %v378
  %3941 = vmatpush.msra.mxu0 %v374
  %3942 = vmatpush.msra.mxu0 %v370
  %3943 = vmatpush.msra.mxu0 %v366
  %3944 = vmatpush.msra.mxu0 %v362
  %3945 = vmatmul.f32.gmra.mxu0 %v3645
  %v3946 = vpop.f32.mrf.mxu0
  %v3947 = vadd.f32 %v3927, %v3946
  %3948 = vdwg.mxu0
  %3949 = vmatpush.msra.mxu0 %v359
  %3950 = vmatpush.msra.mxu0 %v355
  %3951 = vmatpush.msra.mxu0 %v351
  %3952 = vmatpush.msra.mxu0 %v347
  %3953 = vmatpush.msra.mxu0 %v343
  %3954 = vmatpush.msra.mxu0 %v339
  %3955 = vmatpush.msra.mxu0 %v335
  %3956 = vmatpush.msra.mxu0 %v331
  %3957 = vmatpush.msra.mxu0 %v327
  %3958 = vmatpush.msra.mxu0 %v323
  %3959 = vmatpush.msra.mxu0 %v319
  %3960 = vmatpush.msra.mxu0 %v315
  %3961 = vmatpush.msra.mxu0 %v311
  %3962 = vmatpush.msra.mxu0 %v307
  %3963 = vmatpush.msra.mxu0 %v303
  %3964 = vmatpush.msra.mxu0 %v299
  %3965 = vmatmul.f32.gmra.mxu0 %v3868
  %v3966 = vpop.f32.mrf.mxu0
  %v3967 = vadd.f32 %v805, %v3966
  %3968 = vdwg.mxu0
  %3969 = vmatpush.msra.mxu0 %v423
  %3970 = vmatpush.msra.mxu0 %v419
  %3971 = vmatpush.msra.mxu0 %v415
  %3972 = vmatpush.msra.mxu0 %v411
  %3973 = vmatpush.msra.mxu0 %v407
  %3974 = vmatpush.msra.mxu0 %v403
  %3975 = vmatpush.msra.mxu0 %v399
  %3976 = vmatpush.msra.mxu0 %v395
  %3977 = vmatpush.msra.mxu0 %v391
  %3978 = vmatpush.msra.mxu0 %v387
  %3979 = vmatpush.msra.mxu0 %v383
  %3980 = vmatpush.msra.mxu0 %v379
  %3981 = vmatpush.msra.mxu0 %v375
  %3982 = vmatpush.msra.mxu0 %v371
  %3983 = vmatpush.msra.mxu0 %v367
  %3984 = vmatpush.msra.mxu0 %v363
  %3985 = vmatmul.f32.gmra.mxu0 %v3645
  %v3986 = vpop.f32.mrf.mxu0
  %v3987 = vadd.f32 %v3967, %v3986
  %3988 = vdwg.mxu0
  %3989 = vmatpush.msra.mxu0 %v360
  %3990 = vmatpush.msra.mxu0 %v356
  %3991 = vmatpush.msra.mxu0 %v352
  %3992 = vmatpush.msra.mxu0 %v348
  %3993 = vmatpush.msra.mxu0 %v344
  %3994 = vmatpush.msra.mxu0 %v340
  %3995 = vmatpush.msra.mxu0 %v336
  %3996 = vmatpush.msra.mxu0 %v332
  %3997 = vmatpush.msra.mxu0 %v328
  %3998 = vmatpush.msra.mxu0 %v324
  %3999 = vmatpush.msra.mxu0 %v320
  %4000 = vmatpush.msra.mxu0 %v316
  %4001 = vmatpush.msra.mxu0 %v312
  %4002 = vmatpush.msra.mxu0 %v308
  %4003 = vmatpush.msra.mxu0 %v304
  %4004 = vmatpush.msra.mxu0 %v300
  %4005 = vmatmul.f32.gmra.mxu0 %v3868
  %v4006 = vpop.f32.mrf.mxu0
  %v4007 = vadd.f32 %v865, %v4006
  %4008 = vdwg.mxu0
  %4009 = vmatpush.msra.mxu0 %v424
  %4010 = vmatpush.msra.mxu0 %v420
  %4011 = vmatpush.msra.mxu0 %v416
  %4012 = vmatpush.msra.mxu0 %v412
  %4013 = vmatpush.msra.mxu0 %v408
  %4014 = vmatpush.msra.mxu0 %v404
  %4015 = vmatpush.msra.mxu0 %v400
  %4016 = vmatpush.msra.mxu0 %v396
  %4017 = vmatpush.msra.mxu0 %v392
  %4018 = vmatpush.msra.mxu0 %v388
  %4019 = vmatpush.msra.mxu0 %v384
  %4020 = vmatpush.msra.mxu0 %v380
  %4021 = vmatpush.msra.mxu0 %v376
  %4022 = vmatpush.msra.mxu0 %v372
  %4023 = vmatpush.msra.mxu0 %v368
  %4024 = vmatpush.msra.mxu0 %v364
  %4025 = vmatmul.f32.gmra.mxu0 %v3645
  %v4026 = vpop.f32.mrf.mxu0
  %v4027 = vadd.f32 %v4007, %v4026
  %4028 = vdwg.mxu0
  %v4029 = vxor.u32 %v3907, 2147483648
  %v4030 = vmul.f32 %v4029, 1.442695
  %v4031 = vpow.pop %v4030
  %v4032 = vadd.f32 %v4031, 1.0
  %v4033 = vrcp.pop %v4032
  %v4034 = vmul.f32 %v4032, %v4033
  %v4035 = vsub.f32 1.0, %v4034
  %v4036 = vmul.f32 %v4033, %v4035
  %v4037 = vadd.f32 %v4033, %v4036
  %vm4038 = vweird.f32 %v4032
  %vm4039 = vweird.f32 %v4033
  %vm4040 = vmor %vm4038, %vm4039
  %v4041 = vsel %vm4040, %v4033, %v4037
  %v4042 = vand.u32 2147483647, %v4032
  %vm4043 = vcmp.eq.f32.partialorder %v4042, 8.507059e+37
  %v4044 = vand.u32 %v4032, 2147483648
  %v4045 = vor.u32 1.1754944e-38, %v4044
  %v4046 = vsel %vm4043, %v4045, %v4041
  %v4047 = vmul.f32 1.0, %v4046
  %v4048 = vxor.u32 %v3947, 2147483648
  %v4049 = vmul.f32 %v4048, 1.442695
  %v4050 = vpow.pop %v4049
  %v4051 = vadd.f32 %v4050, 1.0
  %v4052 = vrcp.pop %v4051
  %v4053 = vmul.f32 %v4051, %v4052
  %v4054 = vsub.f32 1.0, %v4053
  %v4055 = vmul.f32 %v4052, %v4054
  %v4056 = vadd.f32 %v4052, %v4055
  %vm4057 = vweird.f32 %v4051
  %vm4058 = vweird.f32 %v4052
  %vm4059 = vmor %vm4057, %vm4058
  %v4060 = vsel %vm4059, %v4052, %v4056
  %v4061 = vand.u32 2147483647, %v4051
  %vm4062 = vcmp.eq.f32.partialorder %v4061, 8.507059e+37
  %v4063 = vand.u32 %v4051, 2147483648
  %v4064 = vor.u32 1.1754944e-38, %v4063
  %v4065 = vsel %vm4062, %v4064, %v4060
  %v4066 = vmul.f32 1.0, %v4065
  %v4067 = vtanh.pop %v3987
  %v4068 = vxor.u32 %v4027, 2147483648
  %v4069 = vmul.f32 %v4068, 1.442695
  %v4070 = vpow.pop %v4069
  %v4071 = vadd.f32 %v4070, 1.0
  %v4072 = vrcp.pop %v4071
  %v4073 = vmul.f32 %v4071, %v4072
  %v4074 = vsub.f32 1.0, %v4073
  %v4075 = vmul.f32 %v4072, %v4074
  %v4076 = vadd.f32 %v4072, %v4075
  %vm4077 = vweird.f32 %v4071
  %vm4078 = vweird.f32 %v4072
  %vm4079 = vmor %vm4077, %vm4078
  %v4080 = vsel %vm4079, %v4072, %v4076
  %v4081 = vand.u32 2147483647, %v4071
  %vm4082 = vcmp.eq.f32.partialorder %v4081, 8.507059e+37
  %v4083 = vand.u32 %v4071, 2147483648
  %v4084 = vor.u32 1.1754944e-38, %v4083
  %v4085 = vsel %vm4082, %v4084, %v4080
  %v4086 = vmul.f32 1.0, %v4085
  %v4087 = vmul.f32 %v4066, %v3643
  %v4088 = vmul.f32 %v4047, %v4067
  %v4089 = vadd.f32 %v4087, %v4088
  %v4090 = vtanh.pop %v4089
  %v4091 = vmul.f32 %v4086, %v4090
  %4092 = vmatpush.msra.mxu0 %v164
  %4093 = vmatpush.msra.mxu0 %v160
  %4094 = vmatpush.msra.mxu0 %v156
  %4095 = vmatpush.msra.mxu0 %v152
  %4096 = vmatpush.msra.mxu0 %v148
  %4097 = vmatpush.msra.mxu0 %v144
  %4098 = vmatpush.msra.mxu0 %v140
  %4099 = vmatpush.msra.mxu0 %v136
  %4100 = vmatpush.msra.mxu0 %v132
  %4101 = vmatpush.msra.mxu0 %v128
  %4102 = vmatpush.msra.mxu0 %v124
  %4103 = vmatpush.msra.mxu0 %v120
  %4104 = vmatpush.msra.mxu0 %v116
  %4105 = vmatpush.msra.mxu0 %v112
  %4106 = vmatpush.msra.mxu0 %v108
  %4107 = vmatpush.msra.mxu0 %v104
  %4108 = vmatmul.f32.gmra.mxu0 0.0
  %v4109 = vpop.f32.mrf.mxu0
  %v4110 = vadd.f32 %v427, %v4109
  %4111 = vdwg.mxu0
  %4112 = vmatpush.msra.mxu0 %v228
  %4113 = vmatpush.msra.mxu0 %v224
  %4114 = vmatpush.msra.mxu0 %v220
  %4115 = vmatpush.msra.mxu0 %v216
  %4116 = vmatpush.msra.mxu0 %v212
  %4117 = vmatpush.msra.mxu0 %v208
  %4118 = vmatpush.msra.mxu0 %v204
  %4119 = vmatpush.msra.mxu0 %v200
  %4120 = vmatpush.msra.mxu0 %v196
  %4121 = vmatpush.msra.mxu0 %v192
  %4122 = vmatpush.msra.mxu0 %v188
  %4123 = vmatpush.msra.mxu0 %v184
  %4124 = vmatpush.msra.mxu0 %v180
  %4125 = vmatpush.msra.mxu0 %v176
  %4126 = vmatpush.msra.mxu0 %v172
  %4127 = vmatpush.msra.mxu0 %v168
  %4128 = vmatmul.f32.gmra.mxu0 %v3868
  %v4129 = vpop.f32.mrf.mxu0
  %v4130 = vadd.f32 %v4110, %v4129
  %4131 = vdwg.mxu0
  %4132 = vmatpush.msra.mxu0 %v165
  %4133 = vmatpush.msra.mxu0 %v161
  %4134 = vmatpush.msra.mxu0 %v157
  %4135 = vmatpush.msra.mxu0 %v153
  %4136 = vmatpush.msra.mxu0 %v149
  %4137 = vmatpush.msra.mxu0 %v145
  %4138 = vmatpush.msra.mxu0 %v141
  %4139 = vmatpush.msra.mxu0 %v137
  %4140 = vmatpush.msra.mxu0 %v133
  %4141 = vmatpush.msra.mxu0 %v129
  %4142 = vmatpush.msra.mxu0 %v125
  %4143 = vmatpush.msra.mxu0 %v121
  %4144 = vmatpush.msra.mxu0 %v117
  %4145 = vmatpush.msra.mxu0 %v113
  %4146 = vmatpush.msra.mxu0 %v109
  %4147 = vmatpush.msra.mxu0 %v105
  %4148 = vmatmul.f32.gmra.mxu0 0.0
  %v4149 = vpop.f32.mrf.mxu0
  %v4150 = vadd.f32 %v428, %v4149
  %4151 = vdwg.mxu0
  %4152 = vmatpush.msra.mxu0 %v229
  %4153 = vmatpush.msra.mxu0 %v225
  %4154 = vmatpush.msra.mxu0 %v221
  %4155 = vmatpush.msra.mxu0 %v217
  %4156 = vmatpush.msra.mxu0 %v213
  %4157 = vmatpush.msra.mxu0 %v209
  %4158 = vmatpush.msra.mxu0 %v205
  %4159 = vmatpush.msra.mxu0 %v201
  %4160 = vmatpush.msra.mxu0 %v197
  %4161 = vmatpush.msra.mxu0 %v193
  %4162 = vmatpush.msra.mxu0 %v189
  %4163 = vmatpush.msra.mxu0 %v185
  %4164 = vmatpush.msra.mxu0 %v181
  %4165 = vmatpush.msra.mxu0 %v177
  %4166 = vmatpush.msra.mxu0 %v173
  %4167 = vmatpush.msra.mxu0 %v169
  %4168 = vmatmul.f32.gmra.mxu0 %v3868
  %v4169 = vpop.f32.mrf.mxu0
  %v4170 = vadd.f32 %v4150, %v4169
  %4171 = vdwg.mxu0
  %4172 = vmatpush.msra.mxu0 %v166
  %4173 = vmatpush.msra.mxu0 %v162
  %4174 = vmatpush.msra.mxu0 %v158
  %4175 = vmatpush.msra.mxu0 %v154
  %4176 = vmatpush.msra.mxu0 %v150
  %4177 = vmatpush.msra.mxu0 %v146
  %4178 = vmatpush.msra.mxu0 %v142
  %4179 = vmatpush.msra.mxu0 %v138
  %4180 = vmatpush.msra.mxu0 %v134
  %4181 = vmatpush.msra.mxu0 %v130
  %4182 = vmatpush.msra.mxu0 %v126
  %4183 = vmatpush.msra.mxu0 %v122
  %4184 = vmatpush.msra.mxu0 %v118
  %4185 = vmatpush.msra.mxu0 %v114
  %4186 = vmatpush.msra.mxu0 %v110
  %4187 = vmatpush.msra.mxu0 %v106
  %4188 = vmatmul.f32.gmra.mxu0 0.0
  %v4189 = vpop.f32.mrf.mxu0
  %v4190 = vadd.f32 %v429, %v4189
  %4191 = vdwg.mxu0
  %4192 = vmatpush.msra.mxu0 %v230
  %4193 = vmatpush.msra.mxu0 %v226
  %4194 = vmatpush.msra.mxu0 %v222
  %4195 = vmatpush.msra.mxu0 %v218
  %4196 = vmatpush.msra.mxu0 %v214
  %4197 = vmatpush.msra.mxu0 %v210
  %4198 = vmatpush.msra.mxu0 %v206
  %4199 = vmatpush.msra.mxu0 %v202
  %4200 = vmatpush.msra.mxu0 %v198
  %4201 = vmatpush.msra.mxu0 %v194
  %4202 = vmatpush.msra.mxu0 %v190
  %4203 = vmatpush.msra.mxu0 %v186
  %4204 = vmatpush.msra.mxu0 %v182
  %4205 = vmatpush.msra.mxu0 %v178
  %4206 = vmatpush.msra.mxu0 %v174
  %4207 = vmatpush.msra.mxu0 %v170
  %4208 = vmatmul.f32.gmra.mxu0 %v3868
  %v4209 = vpop.f32.mrf.mxu0
  %v4210 = vadd.f32 %v4190, %v4209
  %4211 = vdwg.mxu0
  %4212 = vmatpush.msra.mxu0 %v167
  %4213 = vmatpush.msra.mxu0 %v163
  %4214 = vmatpush.msra.mxu0 %v159
  %4215 = vmatpush.msra.mxu0 %v155
  %4216 = vmatpush.msra.mxu0 %v151
  %4217 = vmatpush.msra.mxu0 %v147
  %4218 = vmatpush.msra.mxu0 %v143
  %4219 = vmatpush.msra.mxu0 %v139
  %4220 = vmatpush.msra.mxu0 %v135
  %4221 = vmatpush.msra.mxu0 %v131
  %4222 = vmatpush.msra.mxu0 %v127
  %4223 = vmatpush.msra.mxu0 %v123
  %4224 = vmatpush.msra.mxu0 %v119
  %4225 = vmatpush.msra.mxu0 %v115
  %4226 = vmatpush.msra.mxu0 %v111
  %4227 = vmatpush.msra.mxu0 %v107
  %4228 = vmatmul.f32.gmra.mxu0 0.0
  %v4229 = vpop.f32.mrf.mxu0
  %v4230 = vadd.f32 %v430, %v4229
  %4231 = vdwg.mxu0
  %4232 = vmatpush.msra.mxu0 %v231
  %4233 = vmatpush.msra.mxu0 %v227
  %4234 = vmatpush.msra.mxu0 %v223
  %4235 = vmatpush.msra.mxu0 %v219
  %4236 = vmatpush.msra.mxu0 %v215
  %4237 = vmatpush.msra.mxu0 %v211
  %4238 = vmatpush.msra.mxu0 %v207
  %4239 = vmatpush.msra.mxu0 %v203
  %4240 = vmatpush.msra.mxu0 %v199
  %4241 = vmatpush.msra.mxu0 %v195
  %4242 = vmatpush.msra.mxu0 %v191
  %4243 = vmatpush.msra.mxu0 %v187
  %4244 = vmatpush.msra.mxu0 %v183
  %4245 = vmatpush.msra.mxu0 %v179
  %4246 = vmatpush.msra.mxu0 %v175
  %4247 = vmatpush.msra.mxu0 %v171
  %4248 = vmatmul.f32.gmra.mxu0 %v3868
  %v4249 = vpop.f32.mrf.mxu0
  %v4250 = vadd.f32 %v4230, %v4249
  %4251 = vdwg.mxu0
  %v4252 = vxor.u32 %v4130, 2147483648
  %v4253 = vmul.f32 %v4252, 1.442695
  %v4254 = vpow.pop %v4253
  %v4255 = vadd.f32 %v4254, 1.0
  %v4256 = vrcp.pop %v4255
  %v4257 = vmul.f32 %v4255, %v4256
  %v4258 = vsub.f32 1.0, %v4257
  %v4259 = vmul.f32 %v4256, %v4258
  %v4260 = vadd.f32 %v4256, %v4259
  %vm4261 = vweird.f32 %v4255
  %vm4262 = vweird.f32 %v4256
  %vm4263 = vmor %vm4261, %vm4262
  %v4264 = vsel %vm4263, %v4256, %v4260
  %v4265 = vand.u32 2147483647, %v4255
  %vm4266 = vcmp.eq.f32.partialorder %v4265, 8.507059e+37
  %v4267 = vand.u32 %v4255, 2147483648
  %v4268 = vor.u32 1.1754944e-38, %v4267
  %v4269 = vsel %vm4266, %v4268, %v4264
  %v4270 = vmul.f32 1.0, %v4269
  %v4271 = vxor.u32 %v4170, 2147483648
  %v4272 = vmul.f32 %v4271, 1.442695
  %v4273 = vpow.pop %v4272
  %v4274 = vadd.f32 %v4273, 1.0
  %v4275 = vrcp.pop %v4274
  %v4276 = vmul.f32 %v4274, %v4275
  %v4277 = vsub.f32 1.0, %v4276
  %v4278 = vmul.f32 %v4275, %v4277
  %v4279 = vadd.f32 %v4275, %v4278
  %vm4280 = vweird.f32 %v4274
  %vm4281 = vweird.f32 %v4275
  %vm4282 = vmor %vm4280, %vm4281
  %v4283 = vsel %vm4282, %v4275, %v4279
  %v4284 = vand.u32 2147483647, %v4274
  %vm4285 = vcmp.eq.f32.partialorder %v4284, 8.507059e+37
  %v4286 = vand.u32 %v4274, 2147483648
  %v4287 = vor.u32 1.1754944e-38, %v4286
  %v4288 = vsel %vm4285, %v4287, %v4283
  %v4289 = vmul.f32 1.0, %v4288
  %v4290 = vtanh.pop %v4210
  %v4291 = vxor.u32 %v4250, 2147483648
  %v4292 = vmul.f32 %v4291, 1.442695
  %v4293 = vpow.pop %v4292
  %v4294 = vadd.f32 %v4293, 1.0
  %v4295 = vrcp.pop %v4294
  %v4296 = vmul.f32 %v4294, %v4295
  %v4297 = vsub.f32 1.0, %v4296
  %v4298 = vmul.f32 %v4295, %v4297
  %v4299 = vadd.f32 %v4295, %v4298
  %vm4300 = vweird.f32 %v4294
  %vm4301 = vweird.f32 %v4295
  %vm4302 = vmor %vm4300, %vm4301
  %v4303 = vsel %vm4302, %v4295, %v4299
  %v4304 = vand.u32 2147483647, %v4294
  %vm4305 = vcmp.eq.f32.partialorder %v4304, 8.507059e+37
  %v4306 = vand.u32 %v4294, 2147483648
  %v4307 = vor.u32 1.1754944e-38, %v4306
  %v4308 = vsel %vm4305, %v4307, %v4303
  %v4309 = vmul.f32 1.0, %v4308
  %v4310 = vmul.f32 %v4289, %v3866
  %v4311 = vmul.f32 %v4270, %v4290
  %v4312 = vadd.f32 %v4310, %v4311
  %v4313 = vtanh.pop %v4312
  %v4314 = vmul.f32 %v4309, %v4313
  %v4315 = vld [vmem:[%s1] sm:$0xff]
  %4316 = vmatpush.msra.mxu0 %v293
  %4317 = vmatpush.msra.mxu0 %v289
  %4318 = vmatpush.msra.mxu0 %v285
  %4319 = vmatpush.msra.mxu0 %v281
  %4320 = vmatpush.msra.mxu0 %v277
  %4321 = vmatpush.msra.mxu0 %v273
  %4322 = vmatpush.msra.mxu0 %v269
  %4323 = vmatpush.msra.mxu0 %v265
  %4324 = vmatpush.msra.mxu0 %v261
  %4325 = vmatpush.msra.mxu0 %v257
  %4326 = vmatpush.msra.mxu0 %v253
  %4327 = vmatpush.msra.mxu0 %v249
  %4328 = vmatpush.msra.mxu0 %v245
  %4329 = vmatpush.msra.mxu0 %v241
  %4330 = vmatpush.msra.mxu0 %v237
  %4331 = vmatpush.msra.mxu0 %v233
  %4332 = vmatmul.f32.gmra.mxu0 %v4315
  %v4333 = vpop.f32.mrf.mxu0
  %v4334 = vadd.f32 %v659, %v4333
  %4335 = vdwg.mxu0
  %4336 = vmatpush.msra.mxu0 %v357
  %4337 = vmatpush.msra.mxu0 %v353
  %4338 = vmatpush.msra.mxu0 %v349
  %4339 = vmatpush.msra.mxu0 %v345
  %4340 = vmatpush.msra.mxu0 %v341
  %4341 = vmatpush.msra.mxu0 %v337
  %4342 = vmatpush.msra.mxu0 %v333
  %4343 = vmatpush.msra.mxu0 %v329
  %4344 = vmatpush.msra.mxu0 %v325
  %4345 = vmatpush.msra.mxu0 %v321
  %4346 = vmatpush.msra.mxu0 %v317
  %4347 = vmatpush.msra.mxu0 %v313
  %4348 = vmatpush.msra.mxu0 %v309
  %4349 = vmatpush.msra.mxu0 %v305
  %4350 = vmatpush.msra.mxu0 %v301
  %4351 = vmatpush.msra.mxu0 %v297
  %4352 = vmatmul.f32.gmra.mxu0 %v4314
  %v4353 = vpop.f32.mrf.mxu0
  %v4354 = vadd.f32 %v4334, %v4353
  %4355 = vdwg.mxu0
  %4356 = vmatpush.msra.mxu0 %v421
  %4357 = vmatpush.msra.mxu0 %v417
  %4358 = vmatpush.msra.mxu0 %v413
  %4359 = vmatpush.msra.mxu0 %v409
  %4360 = vmatpush.msra.mxu0 %v405
  %4361 = vmatpush.msra.mxu0 %v401
  %4362 = vmatpush.msra.mxu0 %v397
  %4363 = vmatpush.msra.mxu0 %v393
  %4364 = vmatpush.msra.mxu0 %v389
  %4365 = vmatpush.msra.mxu0 %v385
  %4366 = vmatpush.msra.mxu0 %v381
  %4367 = vmatpush.msra.mxu0 %v377
  %4368 = vmatpush.msra.mxu0 %v373
  %4369 = vmatpush.msra.mxu0 %v369
  %4370 = vmatpush.msra.mxu0 %v365
  %4371 = vmatpush.msra.mxu0 %v361
  %4372 = vmatmul.f32.gmra.mxu0 %v4091
  %v4373 = vpop.f32.mrf.mxu0
  %v4374 = vadd.f32 %v4354, %v4373
  %4375 = vdwg.mxu0
  %4376 = vmatpush.msra.mxu0 %v294
  %4377 = vmatpush.msra.mxu0 %v290
  %4378 = vmatpush.msra.mxu0 %v286
  %4379 = vmatpush.msra.mxu0 %v282
  %4380 = vmatpush.msra.mxu0 %v278
  %4381 = vmatpush.msra.mxu0 %v274
  %4382 = vmatpush.msra.mxu0 %v270
  %4383 = vmatpush.msra.mxu0 %v266
  %4384 = vmatpush.msra.mxu0 %v262
  %4385 = vmatpush.msra.mxu0 %v258
  %4386 = vmatpush.msra.mxu0 %v254
  %4387 = vmatpush.msra.mxu0 %v250
  %4388 = vmatpush.msra.mxu0 %v246
  %4389 = vmatpush.msra.mxu0 %v242
  %4390 = vmatpush.msra.mxu0 %v238
  %4391 = vmatpush.msra.mxu0 %v234
  %4392 = vmatmul.f32.gmra.mxu0 %v4315
  %v4393 = vpop.f32.mrf.mxu0
  %v4394 = vadd.f32 %v660, %v4393
  %4395 = vdwg.mxu0
  %4396 = vmatpush.msra.mxu0 %v358
  %4397 = vmatpush.msra.mxu0 %v354
  %4398 = vmatpush.msra.mxu0 %v350
  %4399 = vmatpush.msra.mxu0 %v346
  %4400 = vmatpush.msra.mxu0 %v342
  %4401 = vmatpush.msra.mxu0 %v338
  %4402 = vmatpush.msra.mxu0 %v334
  %4403 = vmatpush.msra.mxu0 %v330
  %4404 = vmatpush.msra.mxu0 %v326
  %4405 = vmatpush.msra.mxu0 %v322
  %4406 = vmatpush.msra.mxu0 %v318
  %4407 = vmatpush.msra.mxu0 %v314
  %4408 = vmatpush.msra.mxu0 %v310
  %4409 = vmatpush.msra.mxu0 %v306
  %4410 = vmatpush.msra.mxu0 %v302
  %4411 = vmatpush.msra.mxu0 %v298
  %4412 = vmatmul.f32.gmra.mxu0 %v4314
  %v4413 = vpop.f32.mrf.mxu0
  %v4414 = vadd.f32 %v4394, %v4413
  %4415 = vdwg.mxu0
  %4416 = vmatpush.msra.mxu0 %v422
  %4417 = vmatpush.msra.mxu0 %v418
  %4418 = vmatpush.msra.mxu0 %v414
  %4419 = vmatpush.msra.mxu0 %v410
  %4420 = vmatpush.msra.mxu0 %v406
  %4421 = vmatpush.msra.mxu0 %v402
  %4422 = vmatpush.msra.mxu0 %v398
  %4423 = vmatpush.msra.mxu0 %v394
  %4424 = vmatpush.msra.mxu0 %v390
  %4425 = vmatpush.msra.mxu0 %v386
  %4426 = vmatpush.msra.mxu0 %v382
  %4427 = vmatpush.msra.mxu0 %v378
  %4428 = vmatpush.msra.mxu0 %v374
  %4429 = vmatpush.msra.mxu0 %v370
  %4430 = vmatpush.msra.mxu0 %v366
  %4431 = vmatpush.msra.mxu0 %v362
  %4432 = vmatmul.f32.gmra.mxu0 %v4091
  %v4433 = vpop.f32.mrf.mxu0
  %v4434 = vadd.f32 %v4414, %v4433
  %4435 = vdwg.mxu0
  %4436 = vmatpush.msra.mxu0 %v295
  %4437 = vmatpush.msra.mxu0 %v291
  %4438 = vmatpush.msra.mxu0 %v287
  %4439 = vmatpush.msra.mxu0 %v283
  %4440 = vmatpush.msra.mxu0 %v279
  %4441 = vmatpush.msra.mxu0 %v275
  %4442 = vmatpush.msra.mxu0 %v271
  %4443 = vmatpush.msra.mxu0 %v267
  %4444 = vmatpush.msra.mxu0 %v263
  %4445 = vmatpush.msra.mxu0 %v259
  %4446 = vmatpush.msra.mxu0 %v255
  %4447 = vmatpush.msra.mxu0 %v251
  %4448 = vmatpush.msra.mxu0 %v247
  %4449 = vmatpush.msra.mxu0 %v243
  %4450 = vmatpush.msra.mxu0 %v239
  %4451 = vmatpush.msra.mxu0 %v235
  %4452 = vmatmul.f32.gmra.mxu0 %v4315
  %v4453 = vpop.f32.mrf.mxu0
  %v4454 = vadd.f32 %v661, %v4453
  %4455 = vdwg.mxu0
  %4456 = vmatpush.msra.mxu0 %v359
  %4457 = vmatpush.msra.mxu0 %v355
  %4458 = vmatpush.msra.mxu0 %v351
  %4459 = vmatpush.msra.mxu0 %v347
  %4460 = vmatpush.msra.mxu0 %v343
  %4461 = vmatpush.msra.mxu0 %v339
  %4462 = vmatpush.msra.mxu0 %v335
  %4463 = vmatpush.msra.mxu0 %v331
  %4464 = vmatpush.msra.mxu0 %v327
  %4465 = vmatpush.msra.mxu0 %v323
  %4466 = vmatpush.msra.mxu0 %v319
  %4467 = vmatpush.msra.mxu0 %v315
  %4468 = vmatpush.msra.mxu0 %v311
  %4469 = vmatpush.msra.mxu0 %v307
  %4470 = vmatpush.msra.mxu0 %v303
  %4471 = vmatpush.msra.mxu0 %v299
  %4472 = vmatmul.f32.gmra.mxu0 %v4314
  %v4473 = vpop.f32.mrf.mxu0
  %v4474 = vadd.f32 %v4454, %v4473
  %4475 = vdwg.mxu0
  %4476 = vmatpush.msra.mxu0 %v423
  %4477 = vmatpush.msra.mxu0 %v419
  %4478 = vmatpush.msra.mxu0 %v415
  %4479 = vmatpush.msra.mxu0 %v411
  %4480 = vmatpush.msra.mxu0 %v407
  %4481 = vmatpush.msra.mxu0 %v403
  %4482 = vmatpush.msra.mxu0 %v399
  %4483 = vmatpush.msra.mxu0 %v395
  %4484 = vmatpush.msra.mxu0 %v391
  %4485 = vmatpush.msra.mxu0 %v387
  %4486 = vmatpush.msra.mxu0 %v383
  %4487 = vmatpush.msra.mxu0 %v379
  %4488 = vmatpush.msra.mxu0 %v375
  %4489 = vmatpush.msra.mxu0 %v371
  %4490 = vmatpush.msra.mxu0 %v367
  %4491 = vmatpush.msra.mxu0 %v363
  %4492 = vmatmul.f32.gmra.mxu0 %v4091
  %v4493 = vpop.f32.mrf.mxu0
  %v4494 = vadd.f32 %v4474, %v4493
  %4495 = vdwg.mxu0
  %4496 = vmatpush.msra.mxu0 %v296
  %4497 = vmatpush.msra.mxu0 %v292
  %4498 = vmatpush.msra.mxu0 %v288
  %4499 = vmatpush.msra.mxu0 %v284
  %4500 = vmatpush.msra.mxu0 %v280
  %4501 = vmatpush.msra.mxu0 %v276
  %4502 = vmatpush.msra.mxu0 %v272
  %4503 = vmatpush.msra.mxu0 %v268
  %4504 = vmatpush.msra.mxu0 %v264
  %4505 = vmatpush.msra.mxu0 %v260
  %4506 = vmatpush.msra.mxu0 %v256
  %4507 = vmatpush.msra.mxu0 %v252
  %4508 = vmatpush.msra.mxu0 %v248
  %4509 = vmatpush.msra.mxu0 %v244
  %4510 = vmatpush.msra.mxu0 %v240
  %4511 = vmatpush.msra.mxu0 %v236
  %4512 = vmatmul.f32.gmra.mxu0 %v4315
  %v4513 = vpop.f32.mrf.mxu0
  %v4514 = vadd.f32 %v662, %v4513
  %4515 = vdwg.mxu0
  %4516 = vmatpush.msra.mxu0 %v360
  %4517 = vmatpush.msra.mxu0 %v356
  %4518 = vmatpush.msra.mxu0 %v352
  %4519 = vmatpush.msra.mxu0 %v348
  %4520 = vmatpush.msra.mxu0 %v344
  %4521 = vmatpush.msra.mxu0 %v340
  %4522 = vmatpush.msra.mxu0 %v336
  %4523 = vmatpush.msra.mxu0 %v332
  %4524 = vmatpush.msra.mxu0 %v328
  %4525 = vmatpush.msra.mxu0 %v324
  %4526 = vmatpush.msra.mxu0 %v320
  %4527 = vmatpush.msra.mxu0 %v316
  %4528 = vmatpush.msra.mxu0 %v312
  %4529 = vmatpush.msra.mxu0 %v308
  %4530 = vmatpush.msra.mxu0 %v304
  %4531 = vmatpush.msra.mxu0 %v300
  %4532 = vmatmul.f32.gmra.mxu0 %v4314
  %v4533 = vpop.f32.mrf.mxu0
  %v4534 = vadd.f32 %v4514, %v4533
  %4535 = vdwg.mxu0
  %4536 = vmatpush.msra.mxu0 %v424
  %4537 = vmatpush.msra.mxu0 %v420
  %4538 = vmatpush.msra.mxu0 %v416
  %4539 = vmatpush.msra.mxu0 %v412
  %4540 = vmatpush.msra.mxu0 %v408
  %4541 = vmatpush.msra.mxu0 %v404
  %4542 = vmatpush.msra.mxu0 %v400
  %4543 = vmatpush.msra.mxu0 %v396
  %4544 = vmatpush.msra.mxu0 %v392
  %4545 = vmatpush.msra.mxu0 %v388
  %4546 = vmatpush.msra.mxu0 %v384
  %4547 = vmatpush.msra.mxu0 %v380
  %4548 = vmatpush.msra.mxu0 %v376
  %4549 = vmatpush.msra.mxu0 %v372
  %4550 = vmatpush.msra.mxu0 %v368
  %4551 = vmatpush.msra.mxu0 %v364
  %4552 = vmatmul.f32.gmra.mxu0 %v4091
  %v4553 = vpop.f32.mrf.mxu0
  %v4554 = vadd.f32 %v4534, %v4553
  %4555 = vdwg.mxu0
  %v4556 = vxor.u32 %v4374, 2147483648
  %v4557 = vmul.f32 %v4556, 1.442695
  %v4558 = vpow.pop %v4557
  %v4559 = vadd.f32 %v4558, 1.0
  %v4560 = vrcp.pop %v4559
  %v4561 = vmul.f32 %v4559, %v4560
  %v4562 = vsub.f32 1.0, %v4561
  %v4563 = vmul.f32 %v4560, %v4562
  %v4564 = vadd.f32 %v4560, %v4563
  %vm4565 = vweird.f32 %v4559
  %vm4566 = vweird.f32 %v4560
  %vm4567 = vmor %vm4565, %vm4566
  %v4568 = vsel %vm4567, %v4560, %v4564
  %v4569 = vand.u32 2147483647, %v4559
  %vm4570 = vcmp.eq.f32.partialorder %v4569, 8.507059e+37
  %v4571 = vand.u32 %v4559, 2147483648
  %v4572 = vor.u32 1.1754944e-38, %v4571
  %v4573 = vsel %vm4570, %v4572, %v4568
  %v4574 = vmul.f32 1.0, %v4573
  %v4575 = vxor.u32 %v4434, 2147483648
  %v4576 = vmul.f32 %v4575, 1.442695
  %v4577 = vpow.pop %v4576
  %v4578 = vadd.f32 %v4577, 1.0
  %v4579 = vrcp.pop %v4578
  %v4580 = vmul.f32 %v4578, %v4579
  %v4581 = vsub.f32 1.0, %v4580
  %v4582 = vmul.f32 %v4579, %v4581
  %v4583 = vadd.f32 %v4579, %v4582
  %vm4584 = vweird.f32 %v4578
  %vm4585 = vweird.f32 %v4579
  %vm4586 = vmor %vm4584, %vm4585
  %v4587 = vsel %vm4586, %v4579, %v4583
  %v4588 = vand.u32 2147483647, %v4578
  %vm4589 = vcmp.eq.f32.partialorder %v4588, 8.507059e+37
  %v4590 = vand.u32 %v4578, 2147483648
  %v4591 = vor.u32 1.1754944e-38, %v4590
  %v4592 = vsel %vm4589, %v4591, %v4587
  %v4593 = vmul.f32 1.0, %v4592
  %v4594 = vtanh.pop %v4494
  %v4595 = vxor.u32 %v4554, 2147483648
  %v4596 = vmul.f32 %v4595, 1.442695
  %v4597 = vpow.pop %v4596
  %v4598 = vadd.f32 %v4597, 1.0
  %v4599 = vrcp.pop %v4598
  %v4600 = vmul.f32 %v4598, %v4599
  %v4601 = vsub.f32 1.0, %v4600
  %v4602 = vmul.f32 %v4599, %v4601
  %v4603 = vadd.f32 %v4599, %v4602
  %vm4604 = vweird.f32 %v4598
  %vm4605 = vweird.f32 %v4599
  %vm4606 = vmor %vm4604, %vm4605
  %v4607 = vsel %vm4606, %v4599, %v4603
  %v4608 = vand.u32 2147483647, %v4598
  %vm4609 = vcmp.eq.f32.partialorder %v4608, 8.507059e+37
  %v4610 = vand.u32 %v4598, 2147483648
  %v4611 = vor.u32 1.1754944e-38, %v4610
  %v4612 = vsel %vm4609, %v4611, %v4607
  %v4613 = vmul.f32 1.0, %v4612
  %v4614 = vmul.f32 %v4593, %v4089
  %v4615 = vmul.f32 %v4574, %v4594
  %v4616 = vadd.f32 %v4614, %v4615
  %v4617 = vtanh.pop %v4616
  %v4618 = vmul.f32 %v4613, %v4617
  %4619 = vmatpush.msra.mxu0 %v228
  %4620 = vmatpush.msra.mxu0 %v224
  %4621 = vmatpush.msra.mxu0 %v220
  %4622 = vmatpush.msra.mxu0 %v216
  %4623 = vmatpush.msra.mxu0 %v212
  %4624 = vmatpush.msra.mxu0 %v208
  %4625 = vmatpush.msra.mxu0 %v204
  %4626 = vmatpush.msra.mxu0 %v200
  %4627 = vmatpush.msra.mxu0 %v196
  %4628 = vmatpush.msra.mxu0 %v192
  %4629 = vmatpush.msra.mxu0 %v188
  %4630 = vmatpush.msra.mxu0 %v184
  %4631 = vmatpush.msra.mxu0 %v180
  %4632 = vmatpush.msra.mxu0 %v176
  %4633 = vmatpush.msra.mxu0 %v172
  %4634 = vmatpush.msra.mxu0 %v168
  %4635 = vmatmul.f32.gmra.mxu0 %v4314
  %v4636 = vpop.f32.mrf.mxu0
  %v4637 = vadd.f32 %v4110, %v4636
  %4638 = vdwg.mxu0
  %4639 = vmatpush.msra.mxu0 %v229
  %4640 = vmatpush.msra.mxu0 %v225
  %4641 = vmatpush.msra.mxu0 %v221
  %4642 = vmatpush.msra.mxu0 %v217
  %4643 = vmatpush.msra.mxu0 %v213
  %4644 = vmatpush.msra.mxu0 %v209
  %4645 = vmatpush.msra.mxu0 %v205
  %4646 = vmatpush.msra.mxu0 %v201
  %4647 = vmatpush.msra.mxu0 %v197
  %4648 = vmatpush.msra.mxu0 %v193
  %4649 = vmatpush.msra.mxu0 %v189
  %4650 = vmatpush.msra.mxu0 %v185
  %4651 = vmatpush.msra.mxu0 %v181
  %4652 = vmatpush.msra.mxu0 %v177
  %4653 = vmatpush.msra.mxu0 %v173
  %4654 = vmatpush.msra.mxu0 %v169
  %4655 = vmatmul.f32.gmra.mxu0 %v4314
  %v4656 = vpop.f32.mrf.mxu0
  %v4657 = vadd.f32 %v4150, %v4656
  %4658 = vdwg.mxu0
  %4659 = vmatpush.msra.mxu0 %v230
  %4660 = vmatpush.msra.mxu0 %v226
  %4661 = vmatpush.msra.mxu0 %v222
  %4662 = vmatpush.msra.mxu0 %v218
  %4663 = vmatpush.msra.mxu0 %v214
  %4664 = vmatpush.msra.mxu0 %v210
  %4665 = vmatpush.msra.mxu0 %v206
  %4666 = vmatpush.msra.mxu0 %v202
  %4667 = vmatpush.msra.mxu0 %v198
  %4668 = vmatpush.msra.mxu0 %v194
  %4669 = vmatpush.msra.mxu0 %v190
  %4670 = vmatpush.msra.mxu0 %v186
  %4671 = vmatpush.msra.mxu0 %v182
  %4672 = vmatpush.msra.mxu0 %v178
  %4673 = vmatpush.msra.mxu0 %v174
  %4674 = vmatpush.msra.mxu0 %v170
  %4675 = vmatmul.f32.gmra.mxu0 %v4314
  %v4676 = vpop.f32.mrf.mxu0
  %v4677 = vadd.f32 %v4190, %v4676
  %4678 = vdwg.mxu0
  %4679 = vmatpush.msra.mxu0 %v231
  %4680 = vmatpush.msra.mxu0 %v227
  %4681 = vmatpush.msra.mxu0 %v223
  %4682 = vmatpush.msra.mxu0 %v219
  %4683 = vmatpush.msra.mxu0 %v215
  %4684 = vmatpush.msra.mxu0 %v211
  %4685 = vmatpush.msra.mxu0 %v207
  %4686 = vmatpush.msra.mxu0 %v203
  %4687 = vmatpush.msra.mxu0 %v199
  %4688 = vmatpush.msra.mxu0 %v195
  %4689 = vmatpush.msra.mxu0 %v191
  %4690 = vmatpush.msra.mxu0 %v187
  %4691 = vmatpush.msra.mxu0 %v183
  %4692 = vmatpush.msra.mxu0 %v179
  %4693 = vmatpush.msra.mxu0 %v175
  %4694 = vmatpush.msra.mxu0 %v171
  %4695 = vmatmul.f32.gmra.mxu0 %v4314
  %v4696 = vpop.f32.mrf.mxu0
  %v4697 = vadd.f32 %v4230, %v4696
  %4698 = vdwg.mxu0
  %v4699 = vxor.u32 %v4637, 2147483648
  %v4700 = vmul.f32 %v4699, 1.442695
  %v4701 = vpow.pop %v4700
  %v4702 = vadd.f32 %v4701, 1.0
  %v4703 = vrcp.pop %v4702
  %v4704 = vmul.f32 %v4702, %v4703
  %v4705 = vsub.f32 1.0, %v4704
  %v4706 = vmul.f32 %v4703, %v4705
  %v4707 = vadd.f32 %v4703, %v4706
  %vm4708 = vweird.f32 %v4702
  %vm4709 = vweird.f32 %v4703
  %vm4710 = vmor %vm4708, %vm4709
  %v4711 = vsel %vm4710, %v4703, %v4707
  %v4712 = vand.u32 2147483647, %v4702
  %vm4713 = vcmp.eq.f32.partialorder %v4712, 8.507059e+37
  %v4714 = vand.u32 %v4702, 2147483648
  %v4715 = vor.u32 1.1754944e-38, %v4714
  %v4716 = vsel %vm4713, %v4715, %v4711
  %v4717 = vmul.f32 1.0, %v4716
  %v4718 = vxor.u32 %v4657, 2147483648
  %v4719 = vmul.f32 %v4718, 1.442695
  %v4720 = vpow.pop %v4719
  %v4721 = vadd.f32 %v4720, 1.0
  %v4722 = vrcp.pop %v4721
  %v4723 = vmul.f32 %v4721, %v4722
  %v4724 = vsub.f32 1.0, %v4723
  %v4725 = vmul.f32 %v4722, %v4724
  %v4726 = vadd.f32 %v4722, %v4725
  %vm4727 = vweird.f32 %v4721
  %vm4728 = vweird.f32 %v4722
  %vm4729 = vmor %vm4727, %vm4728
  %v4730 = vsel %vm4729, %v4722, %v4726
  %v4731 = vand.u32 2147483647, %v4721
  %vm4732 = vcmp.eq.f32.partialorder %v4731, 8.507059e+37
  %v4733 = vand.u32 %v4721, 2147483648
  %v4734 = vor.u32 1.1754944e-38, %v4733
  %v4735 = vsel %vm4732, %v4734, %v4730
  %v4736 = vmul.f32 1.0, %v4735
  %v4737 = vtanh.pop %v4677
  %v4738 = vxor.u32 %v4697, 2147483648
  %v4739 = vmul.f32 %v4738, 1.442695
  %v4740 = vpow.pop %v4739
  %v4741 = vadd.f32 %v4740, 1.0
  %v4742 = vrcp.pop %v4741
  %v4743 = vmul.f32 %v4741, %v4742
  %v4744 = vsub.f32 1.0, %v4743
  %v4745 = vmul.f32 %v4742, %v4744
  %v4746 = vadd.f32 %v4742, %v4745
  %vm4747 = vweird.f32 %v4741
  %vm4748 = vweird.f32 %v4742
  %vm4749 = vmor %vm4747, %vm4748
  %v4750 = vsel %vm4749, %v4742, %v4746
  %v4751 = vand.u32 2147483647, %v4741
  %vm4752 = vcmp.eq.f32.partialorder %v4751, 8.507059e+37
  %v4753 = vand.u32 %v4741, 2147483648
  %v4754 = vor.u32 1.1754944e-38, %v4753
  %v4755 = vsel %vm4752, %v4754, %v4750
  %v4756 = vmul.f32 1.0, %v4755
  %v4757 = vmul.f32 %v4736, %v4312
  %v4758 = vmul.f32 %v4717, %v4737
  %v4759 = vadd.f32 %v4757, %v4758
  %v4760 = vtanh.pop %v4759
  %v4761 = vmul.f32 %v4756, %v4760
  %v4762 = vld [vmem:[%s1 + $0x8] sm:$0xff]
  %4763 = vmatpush.msra.mxu0 %v293
  %4764 = vmatpush.msra.mxu0 %v289
  %4765 = vmatpush.msra.mxu0 %v285
  %4766 = vmatpush.msra.mxu0 %v281
  %4767 = vmatpush.msra.mxu0 %v277
  %4768 = vmatpush.msra.mxu0 %v273
  %4769 = vmatpush.msra.mxu0 %v269
  %4770 = vmatpush.msra.mxu0 %v265
  %4771 = vmatpush.msra.mxu0 %v261
  %4772 = vmatpush.msra.mxu0 %v257
  %4773 = vmatpush.msra.mxu0 %v253
  %4774 = vmatpush.msra.mxu0 %v249
  %4775 = vmatpush.msra.mxu0 %v245
  %4776 = vmatpush.msra.mxu0 %v241
  %4777 = vmatpush.msra.mxu0 %v237
  %4778 = vmatpush.msra.mxu0 %v233
  %4779 = vmatmul.f32.gmra.mxu0 %v4762
  %v4780 = vpop.f32.mrf.mxu0
  %v4781 = vadd.f32 %v659, %v4780
  %4782 = vdwg.mxu0
  %4783 = vmatpush.msra.mxu0 %v357
  %4784 = vmatpush.msra.mxu0 %v353
  %4785 = vmatpush.msra.mxu0 %v349
  %4786 = vmatpush.msra.mxu0 %v345
  %4787 = vmatpush.msra.mxu0 %v341
  %4788 = vmatpush.msra.mxu0 %v337
  %4789 = vmatpush.msra.mxu0 %v333
  %4790 = vmatpush.msra.mxu0 %v329
  %4791 = vmatpush.msra.mxu0 %v325
  %4792 = vmatpush.msra.mxu0 %v321
  %4793 = vmatpush.msra.mxu0 %v317
  %4794 = vmatpush.msra.mxu0 %v313
  %4795 = vmatpush.msra.mxu0 %v309
  %4796 = vmatpush.msra.mxu0 %v305
  %4797 = vmatpush.msra.mxu0 %v301
  %4798 = vmatpush.msra.mxu0 %v297
  %4799 = vmatmul.f32.gmra.mxu0 %v4761
  %v4800 = vpop.f32.mrf.mxu0
  %v4801 = vadd.f32 %v4781, %v4800
  %4802 = vdwg.mxu0
  %4803 = vmatpush.msra.mxu0 %v421
  %4804 = vmatpush.msra.mxu0 %v417
  %4805 = vmatpush.msra.mxu0 %v413
  %4806 = vmatpush.msra.mxu0 %v409
  %4807 = vmatpush.msra.mxu0 %v405
  %4808 = vmatpush.msra.mxu0 %v401
  %4809 = vmatpush.msra.mxu0 %v397
  %4810 = vmatpush.msra.mxu0 %v393
  %4811 = vmatpush.msra.mxu0 %v389
  %4812 = vmatpush.msra.mxu0 %v385
  %4813 = vmatpush.msra.mxu0 %v381
  %4814 = vmatpush.msra.mxu0 %v377
  %4815 = vmatpush.msra.mxu0 %v373
  %4816 = vmatpush.msra.mxu0 %v369
  %4817 = vmatpush.msra.mxu0 %v365
  %4818 = vmatpush.msra.mxu0 %v361
  %4819 = vmatmul.f32.gmra.mxu0 %v4618
  %v4820 = vpop.f32.mrf.mxu0
  %v4821 = vadd.f32 %v4801, %v4820
  %4822 = vdwg.mxu0
  %4823 = vmatpush.msra.mxu0 %v294
  %4824 = vmatpush.msra.mxu0 %v290
  %4825 = vmatpush.msra.mxu0 %v286
  %4826 = vmatpush.msra.mxu0 %v282
  %4827 = vmatpush.msra.mxu0 %v278
  %4828 = vmatpush.msra.mxu0 %v274
  %4829 = vmatpush.msra.mxu0 %v270
  %4830 = vmatpush.msra.mxu0 %v266
  %4831 = vmatpush.msra.mxu0 %v262
  %4832 = vmatpush.msra.mxu0 %v258
  %4833 = vmatpush.msra.mxu0 %v254
  %4834 = vmatpush.msra.mxu0 %v250
  %4835 = vmatpush.msra.mxu0 %v246
  %4836 = vmatpush.msra.mxu0 %v242
  %4837 = vmatpush.msra.mxu0 %v238
  %4838 = vmatpush.msra.mxu0 %v234
  %4839 = vmatmul.f32.gmra.mxu0 %v4762
  %v4840 = vpop.f32.mrf.mxu0
  %v4841 = vadd.f32 %v660, %v4840
  %4842 = vdwg.mxu0
  %4843 = vmatpush.msra.mxu0 %v358
  %4844 = vmatpush.msra.mxu0 %v354
  %4845 = vmatpush.msra.mxu0 %v350
  %4846 = vmatpush.msra.mxu0 %v346
  %4847 = vmatpush.msra.mxu0 %v342
  %4848 = vmatpush.msra.mxu0 %v338
  %4849 = vmatpush.msra.mxu0 %v334
  %4850 = vmatpush.msra.mxu0 %v330
  %4851 = vmatpush.msra.mxu0 %v326
  %4852 = vmatpush.msra.mxu0 %v322
  %4853 = vmatpush.msra.mxu0 %v318
  %4854 = vmatpush.msra.mxu0 %v314
  %4855 = vmatpush.msra.mxu0 %v310
  %4856 = vmatpush.msra.mxu0 %v306
  %4857 = vmatpush.msra.mxu0 %v302
  %4858 = vmatpush.msra.mxu0 %v298
  %4859 = vmatmul.f32.gmra.mxu0 %v4761
  %v4860 = vpop.f32.mrf.mxu0
  %v4861 = vadd.f32 %v4841, %v4860
  %4862 = vdwg.mxu0
  %4863 = vmatpush.msra.mxu0 %v422
  %4864 = vmatpush.msra.mxu0 %v418
  %4865 = vmatpush.msra.mxu0 %v414
  %4866 = vmatpush.msra.mxu0 %v410
  %4867 = vmatpush.msra.mxu0 %v406
  %4868 = vmatpush.msra.mxu0 %v402
  %4869 = vmatpush.msra.mxu0 %v398
  %4870 = vmatpush.msra.mxu0 %v394
  %4871 = vmatpush.msra.mxu0 %v390
  %4872 = vmatpush.msra.mxu0 %v386
  %4873 = vmatpush.msra.mxu0 %v382
  %4874 = vmatpush.msra.mxu0 %v378
  %4875 = vmatpush.msra.mxu0 %v374
  %4876 = vmatpush.msra.mxu0 %v370
  %4877 = vmatpush.msra.mxu0 %v366
  %4878 = vmatpush.msra.mxu0 %v362
  %4879 = vmatmul.f32.gmra.mxu0 %v4618
  %v4880 = vpop.f32.mrf.mxu0
  %v4881 = vadd.f32 %v4861, %v4880
  %4882 = vdwg.mxu0
  %4883 = vmatpush.msra.mxu0 %v295
  %4884 = vmatpush.msra.mxu0 %v291
  %4885 = vmatpush.msra.mxu0 %v287
  %4886 = vmatpush.msra.mxu0 %v283
  %4887 = vmatpush.msra.mxu0 %v279
  %4888 = vmatpush.msra.mxu0 %v275
  %4889 = vmatpush.msra.mxu0 %v271
  %4890 = vmatpush.msra.mxu0 %v267
  %4891 = vmatpush.msra.mxu0 %v263
  %4892 = vmatpush.msra.mxu0 %v259
  %4893 = vmatpush.msra.mxu0 %v255
  %4894 = vmatpush.msra.mxu0 %v251
  %4895 = vmatpush.msra.mxu0 %v247
  %4896 = vmatpush.msra.mxu0 %v243
  %4897 = vmatpush.msra.mxu0 %v239
  %4898 = vmatpush.msra.mxu0 %v235
  %4899 = vmatmul.f32.gmra.mxu0 %v4762
  %v4900 = vpop.f32.mrf.mxu0
  %v4901 = vadd.f32 %v661, %v4900
  %4902 = vdwg.mxu0
  %4903 = vmatpush.msra.mxu0 %v359
  %4904 = vmatpush.msra.mxu0 %v355
  %4905 = vmatpush.msra.mxu0 %v351
  %4906 = vmatpush.msra.mxu0 %v347
  %4907 = vmatpush.msra.mxu0 %v343
  %4908 = vmatpush.msra.mxu0 %v339
  %4909 = vmatpush.msra.mxu0 %v335
  %4910 = vmatpush.msra.mxu0 %v331
  %4911 = vmatpush.msra.mxu0 %v327
  %4912 = vmatpush.msra.mxu0 %v323
  %4913 = vmatpush.msra.mxu0 %v319
  %4914 = vmatpush.msra.mxu0 %v315
  %4915 = vmatpush.msra.mxu0 %v311
  %4916 = vmatpush.msra.mxu0 %v307
  %4917 = vmatpush.msra.mxu0 %v303
  %4918 = vmatpush.msra.mxu0 %v299
  %4919 = vmatmul.f32.gmra.mxu0 %v4761
  %v4920 = vpop.f32.mrf.mxu0
  %v4921 = vadd.f32 %v4901, %v4920
  %4922 = vdwg.mxu0
  %4923 = vmatpush.msra.mxu0 %v423
  %4924 = vmatpush.msra.mxu0 %v419
  %4925 = vmatpush.msra.mxu0 %v415
  %4926 = vmatpush.msra.mxu0 %v411
  %4927 = vmatpush.msra.mxu0 %v407
  %4928 = vmatpush.msra.mxu0 %v403
  %4929 = vmatpush.msra.mxu0 %v399
  %4930 = vmatpush.msra.mxu0 %v395
  %4931 = vmatpush.msra.mxu0 %v391
  %4932 = vmatpush.msra.mxu0 %v387
  %4933 = vmatpush.msra.mxu0 %v383
  %4934 = vmatpush.msra.mxu0 %v379
  %4935 = vmatpush.msra.mxu0 %v375
  %4936 = vmatpush.msra.mxu0 %v371
  %4937 = vmatpush.msra.mxu0 %v367
  %4938 = vmatpush.msra.mxu0 %v363
  %4939 = vmatmul.f32.gmra.mxu0 %v4618
  %v4940 = vpop.f32.mrf.mxu0
  %v4941 = vadd.f32 %v4921, %v4940
  %4942 = vdwg.mxu0
  %4943 = vmatpush.msra.mxu0 %v296
  %4944 = vmatpush.msra.mxu0 %v292
  %4945 = vmatpush.msra.mxu0 %v288
  %4946 = vmatpush.msra.mxu0 %v284
  %4947 = vmatpush.msra.mxu0 %v280
  %4948 = vmatpush.msra.mxu0 %v276
  %4949 = vmatpush.msra.mxu0 %v272
  %4950 = vmatpush.msra.mxu0 %v268
  %4951 = vmatpush.msra.mxu0 %v264
  %4952 = vmatpush.msra.mxu0 %v260
  %4953 = vmatpush.msra.mxu0 %v256
  %4954 = vmatpush.msra.mxu0 %v252
  %4955 = vmatpush.msra.mxu0 %v248
  %4956 = vmatpush.msra.mxu0 %v244
  %4957 = vmatpush.msra.mxu0 %v240
  %4958 = vmatpush.msra.mxu0 %v236
  %4959 = vmatmul.f32.gmra.mxu0 %v4762
  %v4960 = vpop.f32.mrf.mxu0
  %v4961 = vadd.f32 %v662, %v4960
  %4962 = vdwg.mxu0
  %4963 = vmatpush.msra.mxu0 %v360
  %4964 = vmatpush.msra.mxu0 %v356
  %4965 = vmatpush.msra.mxu0 %v352
  %4966 = vmatpush.msra.mxu0 %v348
  %4967 = vmatpush.msra.mxu0 %v344
  %4968 = vmatpush.msra.mxu0 %v340
  %4969 = vmatpush.msra.mxu0 %v336
  %4970 = vmatpush.msra.mxu0 %v332
  %4971 = vmatpush.msra.mxu0 %v328
  %4972 = vmatpush.msra.mxu0 %v324
  %4973 = vmatpush.msra.mxu0 %v320
  %4974 = vmatpush.msra.mxu0 %v316
  %4975 = vmatpush.msra.mxu0 %v312
  %4976 = vmatpush.msra.mxu0 %v308
  %4977 = vmatpush.msra.mxu0 %v304
  %4978 = vmatpush.msra.mxu0 %v300
  %4979 = vmatmul.f32.gmra.mxu0 %v4761
  %v4980 = vpop.f32.mrf.mxu0
  %v4981 = vadd.f32 %v4961, %v4980
  %4982 = vdwg.mxu0
  %4983 = vmatpush.msra.mxu0 %v424
  %4984 = vmatpush.msra.mxu0 %v420
  %4985 = vmatpush.msra.mxu0 %v416
  %4986 = vmatpush.msra.mxu0 %v412
  %4987 = vmatpush.msra.mxu0 %v408
  %4988 = vmatpush.msra.mxu0 %v404
  %4989 = vmatpush.msra.mxu0 %v400
  %4990 = vmatpush.msra.mxu0 %v396
  %4991 = vmatpush.msra.mxu0 %v392
  %4992 = vmatpush.msra.mxu0 %v388
  %4993 = vmatpush.msra.mxu0 %v384
  %4994 = vmatpush.msra.mxu0 %v380
  %4995 = vmatpush.msra.mxu0 %v376
  %4996 = vmatpush.msra.mxu0 %v372
  %4997 = vmatpush.msra.mxu0 %v368
  %4998 = vmatpush.msra.mxu0 %v364
  %4999 = vmatmul.f32.gmra.mxu0 %v4618
  %v5000 = vpop.f32.mrf.mxu0
  %v5001 = vadd.f32 %v4981, %v5000
  %5002 = vdwg.mxu0
  %v5003 = vxor.u32 %v4821, 2147483648
  %v5004 = vmul.f32 %v5003, 1.442695
  %v5005 = vpow.pop %v5004
  %v5006 = vadd.f32 %v5005, 1.0
  %v5007 = vrcp.pop %v5006
  %v5008 = vmul.f32 %v5006, %v5007
  %v5009 = vsub.f32 1.0, %v5008
  %v5010 = vmul.f32 %v5007, %v5009
  %v5011 = vadd.f32 %v5007, %v5010
  %vm5012 = vweird.f32 %v5006
  %vm5013 = vweird.f32 %v5007
  %vm5014 = vmor %vm5012, %vm5013
  %v5015 = vsel %vm5014, %v5007, %v5011
  %v5016 = vand.u32 2147483647, %v5006
  %vm5017 = vcmp.eq.f32.partialorder %v5016, 8.507059e+37
  %v5018 = vand.u32 %v5006, 2147483648
  %v5019 = vor.u32 1.1754944e-38, %v5018
  %v5020 = vsel %vm5017, %v5019, %v5015
  %v5021 = vmul.f32 1.0, %v5020
  %v5022 = vxor.u32 %v4881, 2147483648
  %v5023 = vmul.f32 %v5022, 1.442695
  %v5024 = vpow.pop %v5023
  %v5025 = vadd.f32 %v5024, 1.0
  %v5026 = vrcp.pop %v5025
  %v5027 = vmul.f32 %v5025, %v5026
  %v5028 = vsub.f32 1.0, %v5027
  %v5029 = vmul.f32 %v5026, %v5028
  %v5030 = vadd.f32 %v5026, %v5029
  %vm5031 = vweird.f32 %v5025
  %vm5032 = vweird.f32 %v5026
  %vm5033 = vmor %vm5031, %vm5032
  %v5034 = vsel %vm5033, %v5026, %v5030
  %v5035 = vand.u32 2147483647, %v5025
  %vm5036 = vcmp.eq.f32.partialorder %v5035, 8.507059e+37
  %v5037 = vand.u32 %v5025, 2147483648
  %v5038 = vor.u32 1.1754944e-38, %v5037
  %v5039 = vsel %vm5036, %v5038, %v5034
  %v5040 = vmul.f32 1.0, %v5039
  %v5041 = vtanh.pop %v4941
  %v5042 = vxor.u32 %v5001, 2147483648
  %v5043 = vmul.f32 %v5042, 1.442695
  %v5044 = vpow.pop %v5043
  %v5045 = vadd.f32 %v5044, 1.0
  %v5046 = vrcp.pop %v5045
  %v5047 = vmul.f32 %v5045, %v5046
  %v5048 = vsub.f32 1.0, %v5047
  %v5049 = vmul.f32 %v5046, %v5048
  %v5050 = vadd.f32 %v5046, %v5049
  %vm5051 = vweird.f32 %v5045
  %vm5052 = vweird.f32 %v5046
  %vm5053 = vmor %vm5051, %vm5052
  %v5054 = vsel %vm5053, %v5046, %v5050
  %v5055 = vand.u32 2147483647, %v5045
  %vm5056 = vcmp.eq.f32.partialorder %v5055, 8.507059e+37
  %v5057 = vand.u32 %v5045, 2147483648
  %v5058 = vor.u32 1.1754944e-38, %v5057
  %v5059 = vsel %vm5056, %v5058, %v5054
  %v5060 = vmul.f32 1.0, %v5059
  %v5061 = vmul.f32 %v5040, %v4616
  %v5062 = vmul.f32 %v5021, %v5041
  %v5063 = vadd.f32 %v5061, %v5062
  %v5064 = vtanh.pop %v5063
  %v5065 = vmul.f32 %v5060, %v5064
  %5066 = vmatpush.msra.mxu0 %v228
  %5067 = vmatpush.msra.mxu0 %v224
  %5068 = vmatpush.msra.mxu0 %v220
  %5069 = vmatpush.msra.mxu0 %v216
  %5070 = vmatpush.msra.mxu0 %v212
  %5071 = vmatpush.msra.mxu0 %v208
  %5072 = vmatpush.msra.mxu0 %v204
  %5073 = vmatpush.msra.mxu0 %v200
  %5074 = vmatpush.msra.mxu0 %v196
  %5075 = vmatpush.msra.mxu0 %v192
  %5076 = vmatpush.msra.mxu0 %v188
  %5077 = vmatpush.msra.mxu0 %v184
  %5078 = vmatpush.msra.mxu0 %v180
  %5079 = vmatpush.msra.mxu0 %v176
  %5080 = vmatpush.msra.mxu0 %v172
  %5081 = vmatpush.msra.mxu0 %v168
  %5082 = vmatmul.f32.gmra.mxu0 %v4761
  %v5083 = vpop.f32.mrf.mxu0
  %v5084 = vadd.f32 %v4110, %v5083
  %5085 = vdwg.mxu0
  %5086 = vmatpush.msra.mxu0 %v229
  %5087 = vmatpush.msra.mxu0 %v225
  %5088 = vmatpush.msra.mxu0 %v221
  %5089 = vmatpush.msra.mxu0 %v217
  %5090 = vmatpush.msra.mxu0 %v213
  %5091 = vmatpush.msra.mxu0 %v209
  %5092 = vmatpush.msra.mxu0 %v205
  %5093 = vmatpush.msra.mxu0 %v201
  %5094 = vmatpush.msra.mxu0 %v197
  %5095 = vmatpush.msra.mxu0 %v193
  %5096 = vmatpush.msra.mxu0 %v189
  %5097 = vmatpush.msra.mxu0 %v185
  %5098 = vmatpush.msra.mxu0 %v181
  %5099 = vmatpush.msra.mxu0 %v177
  %5100 = vmatpush.msra.mxu0 %v173
  %5101 = vmatpush.msra.mxu0 %v169
  %5102 = vmatmul.f32.gmra.mxu0 %v4761
  %v5103 = vpop.f32.mrf.mxu0
  %v5104 = vadd.f32 %v4150, %v5103
  %5105 = vdwg.mxu0
  %5106 = vmatpush.msra.mxu0 %v230
  %5107 = vmatpush.msra.mxu0 %v226
  %5108 = vmatpush.msra.mxu0 %v222
  %5109 = vmatpush.msra.mxu0 %v218
  %5110 = vmatpush.msra.mxu0 %v214
  %5111 = vmatpush.msra.mxu0 %v210
  %5112 = vmatpush.msra.mxu0 %v206
  %5113 = vmatpush.msra.mxu0 %v202
  %5114 = vmatpush.msra.mxu0 %v198
  %5115 = vmatpush.msra.mxu0 %v194
  %5116 = vmatpush.msra.mxu0 %v190
  %5117 = vmatpush.msra.mxu0 %v186
  %5118 = vmatpush.msra.mxu0 %v182
  %5119 = vmatpush.msra.mxu0 %v178
  %5120 = vmatpush.msra.mxu0 %v174
  %5121 = vmatpush.msra.mxu0 %v170
  %5122 = vmatmul.f32.gmra.mxu0 %v4761
  %v5123 = vpop.f32.mrf.mxu0
  %v5124 = vadd.f32 %v4190, %v5123
  %5125 = vdwg.mxu0
  %5126 = vmatpush.msra.mxu0 %v231
  %5127 = vmatpush.msra.mxu0 %v227
  %5128 = vmatpush.msra.mxu0 %v223
  %5129 = vmatpush.msra.mxu0 %v219
  %5130 = vmatpush.msra.mxu0 %v215
  %5131 = vmatpush.msra.mxu0 %v211
  %5132 = vmatpush.msra.mxu0 %v207
  %5133 = vmatpush.msra.mxu0 %v203
  %5134 = vmatpush.msra.mxu0 %v199
  %5135 = vmatpush.msra.mxu0 %v195
  %5136 = vmatpush.msra.mxu0 %v191
  %5137 = vmatpush.msra.mxu0 %v187
  %5138 = vmatpush.msra.mxu0 %v183
  %5139 = vmatpush.msra.mxu0 %v179
  %5140 = vmatpush.msra.mxu0 %v175
  %5141 = vmatpush.msra.mxu0 %v171
  %5142 = vmatmul.f32.gmra.mxu0 %v4761
  %v5143 = vpop.f32.mrf.mxu0
  %v5144 = vadd.f32 %v4230, %v5143
  %5145 = vdwg.mxu0
  %v5146 = vxor.u32 %v5084, 2147483648
  %v5147 = vmul.f32 %v5146, 1.442695
  %v5148 = vpow.pop %v5147
  %v5149 = vadd.f32 %v5148, 1.0
  %v5150 = vrcp.pop %v5149
  %v5151 = vmul.f32 %v5149, %v5150
  %v5152 = vsub.f32 1.0, %v5151
  %v5153 = vmul.f32 %v5150, %v5152
  %v5154 = vadd.f32 %v5150, %v5153
  %vm5155 = vweird.f32 %v5149
  %vm5156 = vweird.f32 %v5150
  %vm5157 = vmor %vm5155, %vm5156
  %v5158 = vsel %vm5157, %v5150, %v5154
  %v5159 = vand.u32 2147483647, %v5149
  %vm5160 = vcmp.eq.f32.partialorder %v5159, 8.507059e+37
  %v5161 = vand.u32 %v5149, 2147483648
  %v5162 = vor.u32 1.1754944e-38, %v5161
  %v5163 = vsel %vm5160, %v5162, %v5158
  %v5164 = vmul.f32 1.0, %v5163
  %v5165 = vxor.u32 %v5104, 2147483648
  %v5166 = vmul.f32 %v5165, 1.442695
  %v5167 = vpow.pop %v5166
  %v5168 = vadd.f32 %v5167, 1.0
  %v5169 = vrcp.pop %v5168
  %v5170 = vmul.f32 %v5168, %v5169
  %v5171 = vsub.f32 1.0, %v5170
  %v5172 = vmul.f32 %v5169, %v5171
  %v5173 = vadd.f32 %v5169, %v5172
  %vm5174 = vweird.f32 %v5168
  %vm5175 = vweird.f32 %v5169
  %vm5176 = vmor %vm5174, %vm5175
  %v5177 = vsel %vm5176, %v5169, %v5173
  %v5178 = vand.u32 2147483647, %v5168
  %vm5179 = vcmp.eq.f32.partialorder %v5178, 8.507059e+37
  %v5180 = vand.u32 %v5168, 2147483648
  %v5181 = vor.u32 1.1754944e-38, %v5180
  %v5182 = vsel %vm5179, %v5181, %v5177
  %v5183 = vmul.f32 1.0, %v5182
  %v5184 = vtanh.pop %v5124
  %v5185 = vxor.u32 %v5144, 2147483648
  %v5186 = vmul.f32 %v5185, 1.442695
  %v5187 = vpow.pop %v5186
  %v5188 = vadd.f32 %v5187, 1.0
  %v5189 = vrcp.pop %v5188
  %v5190 = vmul.f32 %v5188, %v5189
  %v5191 = vsub.f32 1.0, %v5190
  %v5192 = vmul.f32 %v5189, %v5191
  %v5193 = vadd.f32 %v5189, %v5192
  %vm5194 = vweird.f32 %v5188
  %vm5195 = vweird.f32 %v5189
  %vm5196 = vmor %vm5194, %vm5195
  %v5197 = vsel %vm5196, %v5189, %v5193
  %v5198 = vand.u32 2147483647, %v5188
  %vm5199 = vcmp.eq.f32.partialorder %v5198, 8.507059e+37
  %v5200 = vand.u32 %v5188, 2147483648
  %v5201 = vor.u32 1.1754944e-38, %v5200
  %v5202 = vsel %vm5199, %v5201, %v5197
  %v5203 = vmul.f32 1.0, %v5202
  %v5204 = vmul.f32 %v5183, %v4759
  %v5205 = vmul.f32 %v5164, %v5184
  %v5206 = vadd.f32 %v5204, %v5205
  %v5207 = vtanh.pop %v5206
  %v5208 = vmul.f32 %v5203, %v5207
  %v5209 = vld [vmem:[%s1 + $0x10] sm:$0xff]
  %5210 = vmatpush.msra.mxu0 %v293
  %5211 = vmatpush.msra.mxu0 %v289
  %5212 = vmatpush.msra.mxu0 %v285
  %5213 = vmatpush.msra.mxu0 %v281
  %5214 = vmatpush.msra.mxu0 %v277
  %5215 = vmatpush.msra.mxu0 %v273
  %5216 = vmatpush.msra.mxu0 %v269
  %5217 = vmatpush.msra.mxu0 %v265
  %5218 = vmatpush.msra.mxu0 %v261
  %5219 = vmatpush.msra.mxu0 %v257
  %5220 = vmatpush.msra.mxu0 %v253
  %5221 = vmatpush.msra.mxu0 %v249
  %5222 = vmatpush.msra.mxu0 %v245
  %5223 = vmatpush.msra.mxu0 %v241
  %5224 = vmatpush.msra.mxu0 %v237
  %5225 = vmatpush.msra.mxu0 %v233
  %5226 = vmatmul.f32.gmra.mxu0 %v5209
  %v5227 = vpop.f32.mrf.mxu0
  %v5228 = vadd.f32 %v659, %v5227
  %5229 = vdwg.mxu0
  %5230 = vmatpush.msra.mxu0 %v357
  %5231 = vmatpush.msra.mxu0 %v353
  %5232 = vmatpush.msra.mxu0 %v349
  %5233 = vmatpush.msra.mxu0 %v345
  %5234 = vmatpush.msra.mxu0 %v341
  %5235 = vmatpush.msra.mxu0 %v337
  %5236 = vmatpush.msra.mxu0 %v333
  %5237 = vmatpush.msra.mxu0 %v329
  %5238 = vmatpush.msra.mxu0 %v325
  %5239 = vmatpush.msra.mxu0 %v321
  %5240 = vmatpush.msra.mxu0 %v317
  %5241 = vmatpush.msra.mxu0 %v313
  %5242 = vmatpush.msra.mxu0 %v309
  %5243 = vmatpush.msra.mxu0 %v305
  %5244 = vmatpush.msra.mxu0 %v301
  %5245 = vmatpush.msra.mxu0 %v297
  %5246 = vmatmul.f32.gmra.mxu0 %v5208
  %v5247 = vpop.f32.mrf.mxu0
  %v5248 = vadd.f32 %v5228, %v5247
  %5249 = vdwg.mxu0
  %5250 = vmatpush.msra.mxu0 %v421
  %5251 = vmatpush.msra.mxu0 %v417
  %5252 = vmatpush.msra.mxu0 %v413
  %5253 = vmatpush.msra.mxu0 %v409
  %5254 = vmatpush.msra.mxu0 %v405
  %5255 = vmatpush.msra.mxu0 %v401
  %5256 = vmatpush.msra.mxu0 %v397
  %5257 = vmatpush.msra.mxu0 %v393
  %5258 = vmatpush.msra.mxu0 %v389
  %5259 = vmatpush.msra.mxu0 %v385
  %5260 = vmatpush.msra.mxu0 %v381
  %5261 = vmatpush.msra.mxu0 %v377
  %5262 = vmatpush.msra.mxu0 %v373
  %5263 = vmatpush.msra.mxu0 %v369
  %5264 = vmatpush.msra.mxu0 %v365
  %5265 = vmatpush.msra.mxu0 %v361
  %5266 = vmatmul.f32.gmra.mxu0 %v5065
  %v5267 = vpop.f32.mrf.mxu0
  %v5268 = vadd.f32 %v5248, %v5267
  %5269 = vdwg.mxu0
  %5270 = vmatpush.msra.mxu0 %v294
  %5271 = vmatpush.msra.mxu0 %v290
  %5272 = vmatpush.msra.mxu0 %v286
  %5273 = vmatpush.msra.mxu0 %v282
  %5274 = vmatpush.msra.mxu0 %v278
  %5275 = vmatpush.msra.mxu0 %v274
  %5276 = vmatpush.msra.mxu0 %v270
  %5277 = vmatpush.msra.mxu0 %v266
  %5278 = vmatpush.msra.mxu0 %v262
  %5279 = vmatpush.msra.mxu0 %v258
  %5280 = vmatpush.msra.mxu0 %v254
  %5281 = vmatpush.msra.mxu0 %v250
  %5282 = vmatpush.msra.mxu0 %v246
  %5283 = vmatpush.msra.mxu0 %v242
  %5284 = vmatpush.msra.mxu0 %v238
  %5285 = vmatpush.msra.mxu0 %v234
  %5286 = vmatmul.f32.gmra.mxu0 %v5209
  %v5287 = vpop.f32.mrf.mxu0
  %v5288 = vadd.f32 %v660, %v5287
  %5289 = vdwg.mxu0
  %5290 = vmatpush.msra.mxu0 %v358
  %5291 = vmatpush.msra.mxu0 %v354
  %5292 = vmatpush.msra.mxu0 %v350
  %5293 = vmatpush.msra.mxu0 %v346
  %5294 = vmatpush.msra.mxu0 %v342
  %5295 = vmatpush.msra.mxu0 %v338
  %5296 = vmatpush.msra.mxu0 %v334
  %5297 = vmatpush.msra.mxu0 %v330
  %5298 = vmatpush.msra.mxu0 %v326
  %5299 = vmatpush.msra.mxu0 %v322
  %5300 = vmatpush.msra.mxu0 %v318
  %5301 = vmatpush.msra.mxu0 %v314
  %5302 = vmatpush.msra.mxu0 %v310
  %5303 = vmatpush.msra.mxu0 %v306
  %5304 = vmatpush.msra.mxu0 %v302
  %5305 = vmatpush.msra.mxu0 %v298
  %5306 = vmatmul.f32.gmra.mxu0 %v5208
  %v5307 = vpop.f32.mrf.mxu0
  %v5308 = vadd.f32 %v5288, %v5307
  %5309 = vdwg.mxu0
  %5310 = vmatpush.msra.mxu0 %v422
  %5311 = vmatpush.msra.mxu0 %v418
  %5312 = vmatpush.msra.mxu0 %v414
  %5313 = vmatpush.msra.mxu0 %v410
  %5314 = vmatpush.msra.mxu0 %v406
  %5315 = vmatpush.msra.mxu0 %v402
  %5316 = vmatpush.msra.mxu0 %v398
  %5317 = vmatpush.msra.mxu0 %v394
  %5318 = vmatpush.msra.mxu0 %v390
  %5319 = vmatpush.msra.mxu0 %v386
  %5320 = vmatpush.msra.mxu0 %v382
  %5321 = vmatpush.msra.mxu0 %v378
  %5322 = vmatpush.msra.mxu0 %v374
  %5323 = vmatpush.msra.mxu0 %v370
  %5324 = vmatpush.msra.mxu0 %v366
  %5325 = vmatpush.msra.mxu0 %v362
  %5326 = vmatmul.f32.gmra.mxu0 %v5065
  %v5327 = vpop.f32.mrf.mxu0
  %v5328 = vadd.f32 %v5308, %v5327
  %5329 = vdwg.mxu0
  %5330 = vmatpush.msra.mxu0 %v295
  %5331 = vmatpush.msra.mxu0 %v291
  %5332 = vmatpush.msra.mxu0 %v287
  %5333 = vmatpush.msra.mxu0 %v283
  %5334 = vmatpush.msra.mxu0 %v279
  %5335 = vmatpush.msra.mxu0 %v275
  %5336 = vmatpush.msra.mxu0 %v271
  %5337 = vmatpush.msra.mxu0 %v267
  %5338 = vmatpush.msra.mxu0 %v263
  %5339 = vmatpush.msra.mxu0 %v259
  %5340 = vmatpush.msra.mxu0 %v255
  %5341 = vmatpush.msra.mxu0 %v251
  %5342 = vmatpush.msra.mxu0 %v247
  %5343 = vmatpush.msra.mxu0 %v243
  %5344 = vmatpush.msra.mxu0 %v239
  %5345 = vmatpush.msra.mxu0 %v235
  %5346 = vmatmul.f32.gmra.mxu0 %v5209
  %v5347 = vpop.f32.mrf.mxu0
  %v5348 = vadd.f32 %v661, %v5347
  %5349 = vdwg.mxu0
  %5350 = vmatpush.msra.mxu0 %v359
  %5351 = vmatpush.msra.mxu0 %v355
  %5352 = vmatpush.msra.mxu0 %v351
  %5353 = vmatpush.msra.mxu0 %v347
  %5354 = vmatpush.msra.mxu0 %v343
  %5355 = vmatpush.msra.mxu0 %v339
  %5356 = vmatpush.msra.mxu0 %v335
  %5357 = vmatpush.msra.mxu0 %v331
  %5358 = vmatpush.msra.mxu0 %v327
  %5359 = vmatpush.msra.mxu0 %v323
  %5360 = vmatpush.msra.mxu0 %v319
  %5361 = vmatpush.msra.mxu0 %v315
  %5362 = vmatpush.msra.mxu0 %v311
  %5363 = vmatpush.msra.mxu0 %v307
  %5364 = vmatpush.msra.mxu0 %v303
  %5365 = vmatpush.msra.mxu0 %v299
  %5366 = vmatmul.f32.gmra.mxu0 %v5208
  %v5367 = vpop.f32.mrf.mxu0
  %v5368 = vadd.f32 %v5348, %v5367
  %5369 = vdwg.mxu0
  %5370 = vmatpush.msra.mxu0 %v423
  %5371 = vmatpush.msra.mxu0 %v419
  %5372 = vmatpush.msra.mxu0 %v415
  %5373 = vmatpush.msra.mxu0 %v411
  %5374 = vmatpush.msra.mxu0 %v407
  %5375 = vmatpush.msra.mxu0 %v403
  %5376 = vmatpush.msra.mxu0 %v399
  %5377 = vmatpush.msra.mxu0 %v395
  %5378 = vmatpush.msra.mxu0 %v391
  %5379 = vmatpush.msra.mxu0 %v387
  %5380 = vmatpush.msra.mxu0 %v383
  %5381 = vmatpush.msra.mxu0 %v379
  %5382 = vmatpush.msra.mxu0 %v375
  %5383 = vmatpush.msra.mxu0 %v371
  %5384 = vmatpush.msra.mxu0 %v367
  %5385 = vmatpush.msra.mxu0 %v363
  %5386 = vmatmul.f32.gmra.mxu0 %v5065
  %v5387 = vpop.f32.mrf.mxu0
  %v5388 = vadd.f32 %v5368, %v5387
  %5389 = vdwg.mxu0
  %5390 = vmatpush.msra.mxu0 %v296
  %5391 = vmatpush.msra.mxu0 %v292
  %5392 = vmatpush.msra.mxu0 %v288
  %5393 = vmatpush.msra.mxu0 %v284
  %5394 = vmatpush.msra.mxu0 %v280
  %5395 = vmatpush.msra.mxu0 %v276
  %5396 = vmatpush.msra.mxu0 %v272
  %5397 = vmatpush.msra.mxu0 %v268
  %5398 = vmatpush.msra.mxu0 %v264
  %5399 = vmatpush.msra.mxu0 %v260
  %5400 = vmatpush.msra.mxu0 %v256
  %5401 = vmatpush.msra.mxu0 %v252
  %5402 = vmatpush.msra.mxu0 %v248
  %5403 = vmatpush.msra.mxu0 %v244
  %5404 = vmatpush.msra.mxu0 %v240
  %5405 = vmatpush.msra.mxu0 %v236
  %5406 = vmatmul.f32.gmra.mxu0 %v5209
  %v5407 = vpop.f32.mrf.mxu0
  %v5408 = vadd.f32 %v662, %v5407
  %5409 = vdwg.mxu0
  %5410 = vmatpush.msra.mxu0 %v360
  %5411 = vmatpush.msra.mxu0 %v356
  %5412 = vmatpush.msra.mxu0 %v352
  %5413 = vmatpush.msra.mxu0 %v348
  %5414 = vmatpush.msra.mxu0 %v344
  %5415 = vmatpush.msra.mxu0 %v340
  %5416 = vmatpush.msra.mxu0 %v336
  %5417 = vmatpush.msra.mxu0 %v332
  %5418 = vmatpush.msra.mxu0 %v328
  %5419 = vmatpush.msra.mxu0 %v324
  %5420 = vmatpush.msra.mxu0 %v320
  %5421 = vmatpush.msra.mxu0 %v316
  %5422 = vmatpush.msra.mxu0 %v312
  %5423 = vmatpush.msra.mxu0 %v308
  %5424 = vmatpush.msra.mxu0 %v304
  %5425 = vmatpush.msra.mxu0 %v300
  %5426 = vmatmul.f32.gmra.mxu0 %v5208
  %v5427 = vpop.f32.mrf.mxu0
  %v5428 = vadd.f32 %v5408, %v5427
  %5429 = vdwg.mxu0
  %5430 = vmatpush.msra.mxu0 %v424
  %5431 = vmatpush.msra.mxu0 %v420
  %5432 = vmatpush.msra.mxu0 %v416
  %5433 = vmatpush.msra.mxu0 %v412
  %5434 = vmatpush.msra.mxu0 %v408
  %5435 = vmatpush.msra.mxu0 %v404
  %5436 = vmatpush.msra.mxu0 %v400
  %5437 = vmatpush.msra.mxu0 %v396
  %5438 = vmatpush.msra.mxu0 %v392
  %5439 = vmatpush.msra.mxu0 %v388
  %5440 = vmatpush.msra.mxu0 %v384
  %5441 = vmatpush.msra.mxu0 %v380
  %5442 = vmatpush.msra.mxu0 %v376
  %5443 = vmatpush.msra.mxu0 %v372
  %5444 = vmatpush.msra.mxu0 %v368
  %5445 = vmatpush.msra.mxu0 %v364
  %5446 = vmatmul.f32.gmra.mxu0 %v5065
  %v5447 = vpop.f32.mrf.mxu0
  %v5448 = vadd.f32 %v5428, %v5447
  %5449 = vdwg.mxu0
  %v5450 = vxor.u32 %v5268, 2147483648
  %v5451 = vmul.f32 %v5450, 1.442695
  %v5452 = vpow.pop %v5451
  %v5453 = vadd.f32 %v5452, 1.0
  %v5454 = vrcp.pop %v5453
  %v5455 = vmul.f32 %v5453, %v5454
  %v5456 = vsub.f32 1.0, %v5455
  %v5457 = vmul.f32 %v5454, %v5456
  %v5458 = vadd.f32 %v5454, %v5457
  %vm5459 = vweird.f32 %v5453
  %vm5460 = vweird.f32 %v5454
  %vm5461 = vmor %vm5459, %vm5460
  %v5462 = vsel %vm5461, %v5454, %v5458
  %v5463 = vand.u32 2147483647, %v5453
  %vm5464 = vcmp.eq.f32.partialorder %v5463, 8.507059e+37
  %v5465 = vand.u32 %v5453, 2147483648
  %v5466 = vor.u32 1.1754944e-38, %v5465
  %v5467 = vsel %vm5464, %v5466, %v5462
  %v5468 = vmul.f32 1.0, %v5467
  %v5469 = vxor.u32 %v5328, 2147483648
  %v5470 = vmul.f32 %v5469, 1.442695
  %v5471 = vpow.pop %v5470
  %v5472 = vadd.f32 %v5471, 1.0
  %v5473 = vrcp.pop %v5472
  %v5474 = vmul.f32 %v5472, %v5473
  %v5475 = vsub.f32 1.0, %v5474
  %v5476 = vmul.f32 %v5473, %v5475
  %v5477 = vadd.f32 %v5473, %v5476
  %vm5478 = vweird.f32 %v5472
  %vm5479 = vweird.f32 %v5473
  %vm5480 = vmor %vm5478, %vm5479
  %v5481 = vsel %vm5480, %v5473, %v5477
  %v5482 = vand.u32 2147483647, %v5472
  %vm5483 = vcmp.eq.f32.partialorder %v5482, 8.507059e+37
  %v5484 = vand.u32 %v5472, 2147483648
  %v5485 = vor.u32 1.1754944e-38, %v5484
  %v5486 = vsel %vm5483, %v5485, %v5481
  %v5487 = vmul.f32 1.0, %v5486
  %v5488 = vtanh.pop %v5388
  %v5489 = vxor.u32 %v5448, 2147483648
  %v5490 = vmul.f32 %v5489, 1.442695
  %v5491 = vpow.pop %v5490
  %v5492 = vadd.f32 %v5491, 1.0
  %v5493 = vrcp.pop %v5492
  %v5494 = vmul.f32 %v5492, %v5493
  %v5495 = vsub.f32 1.0, %v5494
  %v5496 = vmul.f32 %v5493, %v5495
  %v5497 = vadd.f32 %v5493, %v5496
  %vm5498 = vweird.f32 %v5492
  %vm5499 = vweird.f32 %v5493
  %vm5500 = vmor %vm5498, %vm5499
  %v5501 = vsel %vm5500, %v5493, %v5497
  %v5502 = vand.u32 2147483647, %v5492
  %vm5503 = vcmp.eq.f32.partialorder %v5502, 8.507059e+37
  %v5504 = vand.u32 %v5492, 2147483648
  %v5505 = vor.u32 1.1754944e-38, %v5504
  %v5506 = vsel %vm5503, %v5505, %v5501
  %v5507 = vmul.f32 1.0, %v5506
  %v5508 = vmul.f32 %v5487, %v5063
  %v5509 = vmul.f32 %v5468, %v5488
  %v5510 = vadd.f32 %v5508, %v5509
  %v5511 = vtanh.pop %v5510
  %v5512 = vmul.f32 %v5507, %v5511
  %5513 = vmatpush.msra.mxu0 %v228
  %5514 = vmatpush.msra.mxu0 %v224
  %5515 = vmatpush.msra.mxu0 %v220
  %5516 = vmatpush.msra.mxu0 %v216
  %5517 = vmatpush.msra.mxu0 %v212
  %5518 = vmatpush.msra.mxu0 %v208
  %5519 = vmatpush.msra.mxu0 %v204
  %5520 = vmatpush.msra.mxu0 %v200
  %5521 = vmatpush.msra.mxu0 %v196
  %5522 = vmatpush.msra.mxu0 %v192
  %5523 = vmatpush.msra.mxu0 %v188
  %5524 = vmatpush.msra.mxu0 %v184
  %5525 = vmatpush.msra.mxu0 %v180
  %5526 = vmatpush.msra.mxu0 %v176
  %5527 = vmatpush.msra.mxu0 %v172
  %5528 = vmatpush.msra.mxu0 %v168
  %5529 = vmatmul.f32.gmra.mxu0 %v5208
  %v5530 = vpop.f32.mrf.mxu0
  %v5531 = vadd.f32 %v4110, %v5530
  %5532 = vdwg.mxu0
  %5533 = vmatpush.msra.mxu0 %v229
  %5534 = vmatpush.msra.mxu0 %v225
  %5535 = vmatpush.msra.mxu0 %v221
  %5536 = vmatpush.msra.mxu0 %v217
  %5537 = vmatpush.msra.mxu0 %v213
  %5538 = vmatpush.msra.mxu0 %v209
  %5539 = vmatpush.msra.mxu0 %v205
  %5540 = vmatpush.msra.mxu0 %v201
  %5541 = vmatpush.msra.mxu0 %v197
  %5542 = vmatpush.msra.mxu0 %v193
  %5543 = vmatpush.msra.mxu0 %v189
  %5544 = vmatpush.msra.mxu0 %v185
  %5545 = vmatpush.msra.mxu0 %v181
  %5546 = vmatpush.msra.mxu0 %v177
  %5547 = vmatpush.msra.mxu0 %v173
  %5548 = vmatpush.msra.mxu0 %v169
  %5549 = vmatmul.f32.gmra.mxu0 %v5208
  %v5550 = vpop.f32.mrf.mxu0
  %v5551 = vadd.f32 %v4150, %v5550
  %5552 = vdwg.mxu0
  %5553 = vmatpush.msra.mxu0 %v230
  %5554 = vmatpush.msra.mxu0 %v226
  %5555 = vmatpush.msra.mxu0 %v222
  %5556 = vmatpush.msra.mxu0 %v218
  %5557 = vmatpush.msra.mxu0 %v214
  %5558 = vmatpush.msra.mxu0 %v210
  %5559 = vmatpush.msra.mxu0 %v206
  %5560 = vmatpush.msra.mxu0 %v202
  %5561 = vmatpush.msra.mxu0 %v198
  %5562 = vmatpush.msra.mxu0 %v194
  %5563 = vmatpush.msra.mxu0 %v190
  %5564 = vmatpush.msra.mxu0 %v186
  %5565 = vmatpush.msra.mxu0 %v182
  %5566 = vmatpush.msra.mxu0 %v178
  %5567 = vmatpush.msra.mxu0 %v174
  %5568 = vmatpush.msra.mxu0 %v170
  %5569 = vmatmul.f32.gmra.mxu0 %v5208
  %v5570 = vpop.f32.mrf.mxu0
  %v5571 = vadd.f32 %v4190, %v5570
  %5572 = vdwg.mxu0
  %5573 = vmatpush.msra.mxu0 %v231
  %5574 = vmatpush.msra.mxu0 %v227
  %5575 = vmatpush.msra.mxu0 %v223
  %5576 = vmatpush.msra.mxu0 %v219
  %5577 = vmatpush.msra.mxu0 %v215
  %5578 = vmatpush.msra.mxu0 %v211
  %5579 = vmatpush.msra.mxu0 %v207
  %5580 = vmatpush.msra.mxu0 %v203
  %5581 = vmatpush.msra.mxu0 %v199
  %5582 = vmatpush.msra.mxu0 %v195
  %5583 = vmatpush.msra.mxu0 %v191
  %5584 = vmatpush.msra.mxu0 %v187
  %5585 = vmatpush.msra.mxu0 %v183
  %5586 = vmatpush.msra.mxu0 %v179
  %5587 = vmatpush.msra.mxu0 %v175
  %5588 = vmatpush.msra.mxu0 %v171
  %5589 = vmatmul.f32.gmra.mxu0 %v5208
  %v5590 = vpop.f32.mrf.mxu0
  %v5591 = vadd.f32 %v4230, %v5590
  %5592 = vdwg.mxu0
  %v5593 = vxor.u32 %v5531, 2147483648
  %v5594 = vmul.f32 %v5593, 1.442695
  %v5595 = vpow.pop %v5594
  %v5596 = vadd.f32 %v5595, 1.0
  %v5597 = vrcp.pop %v5596
  %v5598 = vmul.f32 %v5596, %v5597
  %v5599 = vsub.f32 1.0, %v5598
  %v5600 = vmul.f32 %v5597, %v5599
  %v5601 = vadd.f32 %v5597, %v5600
  %vm5602 = vweird.f32 %v5596
  %vm5603 = vweird.f32 %v5597
  %vm5604 = vmor %vm5602, %vm5603
  %v5605 = vsel %vm5604, %v5597, %v5601
  %v5606 = vand.u32 2147483647, %v5596
  %vm5607 = vcmp.eq.f32.partialorder %v5606, 8.507059e+37
  %v5608 = vand.u32 %v5596, 2147483648
  %v5609 = vor.u32 1.1754944e-38, %v5608
  %v5610 = vsel %vm5607, %v5609, %v5605
  %v5611 = vmul.f32 1.0, %v5610
  %v5612 = vxor.u32 %v5551, 2147483648
  %v5613 = vmul.f32 %v5612, 1.442695
  %v5614 = vpow.pop %v5613
  %v5615 = vadd.f32 %v5614, 1.0
  %v5616 = vrcp.pop %v5615
  %v5617 = vmul.f32 %v5615, %v5616
  %v5618 = vsub.f32 1.0, %v5617
  %v5619 = vmul.f32 %v5616, %v5618
  %v5620 = vadd.f32 %v5616, %v5619
  %vm5621 = vweird.f32 %v5615
  %vm5622 = vweird.f32 %v5616
  %vm5623 = vmor %vm5621, %vm5622
  %v5624 = vsel %vm5623, %v5616, %v5620
  %v5625 = vand.u32 2147483647, %v5615
  %vm5626 = vcmp.eq.f32.partialorder %v5625, 8.507059e+37
  %v5627 = vand.u32 %v5615, 2147483648
  %v5628 = vor.u32 1.1754944e-38, %v5627
  %v5629 = vsel %vm5626, %v5628, %v5624
  %v5630 = vmul.f32 1.0, %v5629
  %v5631 = vtanh.pop %v5571
  %v5632 = vxor.u32 %v5591, 2147483648
  %v5633 = vmul.f32 %v5632, 1.442695
  %v5634 = vpow.pop %v5633
  %v5635 = vadd.f32 %v5634, 1.0
  %v5636 = vrcp.pop %v5635
  %v5637 = vmul.f32 %v5635, %v5636
  %v5638 = vsub.f32 1.0, %v5637
  %v5639 = vmul.f32 %v5636, %v5638
  %v5640 = vadd.f32 %v5636, %v5639
  %vm5641 = vweird.f32 %v5635
  %vm5642 = vweird.f32 %v5636
  %vm5643 = vmor %vm5641, %vm5642
  %v5644 = vsel %vm5643, %v5636, %v5640
  %v5645 = vand.u32 2147483647, %v5635
  %vm5646 = vcmp.eq.f32.partialorder %v5645, 8.507059e+37
  %v5647 = vand.u32 %v5635, 2147483648
  %v5648 = vor.u32 1.1754944e-38, %v5647
  %v5649 = vsel %vm5646, %v5648, %v5644
  %v5650 = vmul.f32 1.0, %v5649
  %v5651 = vmul.f32 %v5630, %v5206
  %v5652 = vmul.f32 %v5611, %v5631
  %v5653 = vadd.f32 %v5651, %v5652
  %v5654 = vtanh.pop %v5653
  %v5655 = vmul.f32 %v5650, %v5654
  %v5656 = vld [vmem:[%s1 + $0x18] sm:$0xff]
  %5657 = vmatpush.msra.mxu0 %v293
  %5658 = vmatpush.msra.mxu0 %v289
  %5659 = vmatpush.msra.mxu0 %v285
  %5660 = vmatpush.msra.mxu0 %v281
  %5661 = vmatpush.msra.mxu0 %v277
  %5662 = vmatpush.msra.mxu0 %v273
  %5663 = vmatpush.msra.mxu0 %v269
  %5664 = vmatpush.msra.mxu0 %v265
  %5665 = vmatpush.msra.mxu0 %v261
  %5666 = vmatpush.msra.mxu0 %v257
  %5667 = vmatpush.msra.mxu0 %v253
  %5668 = vmatpush.msra.mxu0 %v249
  %5669 = vmatpush.msra.mxu0 %v245
  %5670 = vmatpush.msra.mxu0 %v241
  %5671 = vmatpush.msra.mxu0 %v237
  %5672 = vmatpush.msra.mxu0 %v233
  %5673 = vmatmul.f32.gmra.mxu0 %v5656
  %v5674 = vpop.f32.mrf.mxu0
  %v5675 = vadd.f32 %v659, %v5674
  %5676 = vdwg.mxu0
  %5677 = vmatpush.msra.mxu0 %v357
  %5678 = vmatpush.msra.mxu0 %v353
  %5679 = vmatpush.msra.mxu0 %v349
  %5680 = vmatpush.msra.mxu0 %v345
  %5681 = vmatpush.msra.mxu0 %v341
  %5682 = vmatpush.msra.mxu0 %v337
  %5683 = vmatpush.msra.mxu0 %v333
  %5684 = vmatpush.msra.mxu0 %v329
  %5685 = vmatpush.msra.mxu0 %v325
  %5686 = vmatpush.msra.mxu0 %v321
  %5687 = vmatpush.msra.mxu0 %v317
  %5688 = vmatpush.msra.mxu0 %v313
  %5689 = vmatpush.msra.mxu0 %v309
  %5690 = vmatpush.msra.mxu0 %v305
  %5691 = vmatpush.msra.mxu0 %v301
  %5692 = vmatpush.msra.mxu0 %v297
  %5693 = vmatmul.f32.gmra.mxu0 %v5655
  %v5694 = vpop.f32.mrf.mxu0
  %v5695 = vadd.f32 %v5675, %v5694
  %5696 = vdwg.mxu0
  %5697 = vmatpush.msra.mxu0 %v421
  %5698 = vmatpush.msra.mxu0 %v417
  %5699 = vmatpush.msra.mxu0 %v413
  %5700 = vmatpush.msra.mxu0 %v409
  %5701 = vmatpush.msra.mxu0 %v405
  %5702 = vmatpush.msra.mxu0 %v401
  %5703 = vmatpush.msra.mxu0 %v397
  %5704 = vmatpush.msra.mxu0 %v393
  %5705 = vmatpush.msra.mxu0 %v389
  %5706 = vmatpush.msra.mxu0 %v385
  %5707 = vmatpush.msra.mxu0 %v381
  %5708 = vmatpush.msra.mxu0 %v377
  %5709 = vmatpush.msra.mxu0 %v373
  %5710 = vmatpush.msra.mxu0 %v369
  %5711 = vmatpush.msra.mxu0 %v365
  %5712 = vmatpush.msra.mxu0 %v361
  %5713 = vmatmul.f32.gmra.mxu0 %v5512
  %v5714 = vpop.f32.mrf.mxu0
  %v5715 = vadd.f32 %v5695, %v5714
  %5716 = vdwg.mxu0
  %5717 = vmatpush.msra.mxu0 %v294
  %5718 = vmatpush.msra.mxu0 %v290
  %5719 = vmatpush.msra.mxu0 %v286
  %5720 = vmatpush.msra.mxu0 %v282
  %5721 = vmatpush.msra.mxu0 %v278
  %5722 = vmatpush.msra.mxu0 %v274
  %5723 = vmatpush.msra.mxu0 %v270
  %5724 = vmatpush.msra.mxu0 %v266
  %5725 = vmatpush.msra.mxu0 %v262
  %5726 = vmatpush.msra.mxu0 %v258
  %5727 = vmatpush.msra.mxu0 %v254
  %5728 = vmatpush.msra.mxu0 %v250
  %5729 = vmatpush.msra.mxu0 %v246
  %5730 = vmatpush.msra.mxu0 %v242
  %5731 = vmatpush.msra.mxu0 %v238
  %5732 = vmatpush.msra.mxu0 %v234
  %5733 = vmatmul.f32.gmra.mxu0 %v5656
  %v5734 = vpop.f32.mrf.mxu0
  %v5735 = vadd.f32 %v660, %v5734
  %5736 = vdwg.mxu0
  %5737 = vmatpush.msra.mxu0 %v358
  %5738 = vmatpush.msra.mxu0 %v354
  %5739 = vmatpush.msra.mxu0 %v350
  %5740 = vmatpush.msra.mxu0 %v346
  %5741 = vmatpush.msra.mxu0 %v342
  %5742 = vmatpush.msra.mxu0 %v338
  %5743 = vmatpush.msra.mxu0 %v334
  %5744 = vmatpush.msra.mxu0 %v330
  %5745 = vmatpush.msra.mxu0 %v326
  %5746 = vmatpush.msra.mxu0 %v322
  %5747 = vmatpush.msra.mxu0 %v318
  %5748 = vmatpush.msra.mxu0 %v314
  %5749 = vmatpush.msra.mxu0 %v310
  %5750 = vmatpush.msra.mxu0 %v306
  %5751 = vmatpush.msra.mxu0 %v302
  %5752 = vmatpush.msra.mxu0 %v298
  %5753 = vmatmul.f32.gmra.mxu0 %v5655
  %v5754 = vpop.f32.mrf.mxu0
  %v5755 = vadd.f32 %v5735, %v5754
  %5756 = vdwg.mxu0
  %5757 = vmatpush.msra.mxu0 %v422
  %5758 = vmatpush.msra.mxu0 %v418
  %5759 = vmatpush.msra.mxu0 %v414
  %5760 = vmatpush.msra.mxu0 %v410
  %5761 = vmatpush.msra.mxu0 %v406
  %5762 = vmatpush.msra.mxu0 %v402
  %5763 = vmatpush.msra.mxu0 %v398
  %5764 = vmatpush.msra.mxu0 %v394
  %5765 = vmatpush.msra.mxu0 %v390
  %5766 = vmatpush.msra.mxu0 %v386
  %5767 = vmatpush.msra.mxu0 %v382
  %5768 = vmatpush.msra.mxu0 %v378
  %5769 = vmatpush.msra.mxu0 %v374
  %5770 = vmatpush.msra.mxu0 %v370
  %5771 = vmatpush.msra.mxu0 %v366
  %5772 = vmatpush.msra.mxu0 %v362
  %5773 = vmatmul.f32.gmra.mxu0 %v5512
  %v5774 = vpop.f32.mrf.mxu0
  %v5775 = vadd.f32 %v5755, %v5774
  %5776 = vdwg.mxu0
  %5777 = vmatpush.msra.mxu0 %v295
  %5778 = vmatpush.msra.mxu0 %v291
  %5779 = vmatpush.msra.mxu0 %v287
  %5780 = vmatpush.msra.mxu0 %v283
  %5781 = vmatpush.msra.mxu0 %v279
  %5782 = vmatpush.msra.mxu0 %v275
  %5783 = vmatpush.msra.mxu0 %v271
  %5784 = vmatpush.msra.mxu0 %v267
  %5785 = vmatpush.msra.mxu0 %v263
  %5786 = vmatpush.msra.mxu0 %v259
  %5787 = vmatpush.msra.mxu0 %v255
  %5788 = vmatpush.msra.mxu0 %v251
  %5789 = vmatpush.msra.mxu0 %v247
  %5790 = vmatpush.msra.mxu0 %v243
  %5791 = vmatpush.msra.mxu0 %v239
  %5792 = vmatpush.msra.mxu0 %v235
  %5793 = vmatmul.f32.gmra.mxu0 %v5656
  %v5794 = vpop.f32.mrf.mxu0
  %v5795 = vadd.f32 %v661, %v5794
  %5796 = vdwg.mxu0
  %5797 = vmatpush.msra.mxu0 %v359
  %5798 = vmatpush.msra.mxu0 %v355
  %5799 = vmatpush.msra.mxu0 %v351
  %5800 = vmatpush.msra.mxu0 %v347
  %5801 = vmatpush.msra.mxu0 %v343
  %5802 = vmatpush.msra.mxu0 %v339
  %5803 = vmatpush.msra.mxu0 %v335
  %5804 = vmatpush.msra.mxu0 %v331
  %5805 = vmatpush.msra.mxu0 %v327
  %5806 = vmatpush.msra.mxu0 %v323
  %5807 = vmatpush.msra.mxu0 %v319
  %5808 = vmatpush.msra.mxu0 %v315
  %5809 = vmatpush.msra.mxu0 %v311
  %5810 = vmatpush.msra.mxu0 %v307
  %5811 = vmatpush.msra.mxu0 %v303
  %5812 = vmatpush.msra.mxu0 %v299
  %5813 = vmatmul.f32.gmra.mxu0 %v5655
  %v5814 = vpop.f32.mrf.mxu0
  %v5815 = vadd.f32 %v5795, %v5814
  %5816 = vdwg.mxu0
  %5817 = vmatpush.msra.mxu0 %v423
  %5818 = vmatpush.msra.mxu0 %v419
  %5819 = vmatpush.msra.mxu0 %v415
  %5820 = vmatpush.msra.mxu0 %v411
  %5821 = vmatpush.msra.mxu0 %v407
  %5822 = vmatpush.msra.mxu0 %v403
  %5823 = vmatpush.msra.mxu0 %v399
  %5824 = vmatpush.msra.mxu0 %v395
  %5825 = vmatpush.msra.mxu0 %v391
  %5826 = vmatpush.msra.mxu0 %v387
  %5827 = vmatpush.msra.mxu0 %v383
  %5828 = vmatpush.msra.mxu0 %v379
  %5829 = vmatpush.msra.mxu0 %v375
  %5830 = vmatpush.msra.mxu0 %v371
  %5831 = vmatpush.msra.mxu0 %v367
  %5832 = vmatpush.msra.mxu0 %v363
  %5833 = vmatmul.f32.gmra.mxu0 %v5512
  %v5834 = vpop.f32.mrf.mxu0
  %v5835 = vadd.f32 %v5815, %v5834
  %5836 = vdwg.mxu0
  %5837 = vmatpush.msra.mxu0 %v296
  %5838 = vmatpush.msra.mxu0 %v292
  %5839 = vmatpush.msra.mxu0 %v288
  %5840 = vmatpush.msra.mxu0 %v284
  %5841 = vmatpush.msra.mxu0 %v280
  %5842 = vmatpush.msra.mxu0 %v276
  %5843 = vmatpush.msra.mxu0 %v272
  %5844 = vmatpush.msra.mxu0 %v268
  %5845 = vmatpush.msra.mxu0 %v264
  %5846 = vmatpush.msra.mxu0 %v260
  %5847 = vmatpush.msra.mxu0 %v256
  %5848 = vmatpush.msra.mxu0 %v252
  %5849 = vmatpush.msra.mxu0 %v248
  %5850 = vmatpush.msra.mxu0 %v244
  %5851 = vmatpush.msra.mxu0 %v240
  %5852 = vmatpush.msra.mxu0 %v236
  %5853 = vmatmul.f32.gmra.mxu0 %v5656
  %v5854 = vpop.f32.mrf.mxu0
  %v5855 = vadd.f32 %v662, %v5854
  %5856 = vdwg.mxu0
  %5857 = vmatpush.msra.mxu0 %v360
  %5858 = vmatpush.msra.mxu0 %v356
  %5859 = vmatpush.msra.mxu0 %v352
  %5860 = vmatpush.msra.mxu0 %v348
  %5861 = vmatpush.msra.mxu0 %v344
  %5862 = vmatpush.msra.mxu0 %v340
  %5863 = vmatpush.msra.mxu0 %v336
  %5864 = vmatpush.msra.mxu0 %v332
  %5865 = vmatpush.msra.mxu0 %v328
  %5866 = vmatpush.msra.mxu0 %v324
  %5867 = vmatpush.msra.mxu0 %v320
  %5868 = vmatpush.msra.mxu0 %v316
  %5869 = vmatpush.msra.mxu0 %v312
  %5870 = vmatpush.msra.mxu0 %v308
  %5871 = vmatpush.msra.mxu0 %v304
  %5872 = vmatpush.msra.mxu0 %v300
  %5873 = vmatmul.f32.gmra.mxu0 %v5655
  %v5874 = vpop.f32.mrf.mxu0
  %v5875 = vadd.f32 %v5855, %v5874
  %5876 = vdwg.mxu0
  %5877 = vmatpush.msra.mxu0 %v424
  %5878 = vmatpush.msra.mxu0 %v420
  %5879 = vmatpush.msra.mxu0 %v416
  %5880 = vmatpush.msra.mxu0 %v412
  %5881 = vmatpush.msra.mxu0 %v408
  %5882 = vmatpush.msra.mxu0 %v404
  %5883 = vmatpush.msra.mxu0 %v400
  %5884 = vmatpush.msra.mxu0 %v396
  %5885 = vmatpush.msra.mxu0 %v392
  %5886 = vmatpush.msra.mxu0 %v388
  %5887 = vmatpush.msra.mxu0 %v384
  %5888 = vmatpush.msra.mxu0 %v380
  %5889 = vmatpush.msra.mxu0 %v376
  %5890 = vmatpush.msra.mxu0 %v372
  %5891 = vmatpush.msra.mxu0 %v368
  %5892 = vmatpush.msra.mxu0 %v364
  %5893 = vmatmul.f32.gmra.mxu0 %v5512
  %v5894 = vpop.f32.mrf.mxu0
  %v5895 = vadd.f32 %v5875, %v5894
  %5896 = vdwg.mxu0
  %v5897 = vxor.u32 %v5715, 2147483648
  %v5898 = vmul.f32 %v5897, 1.442695
  %v5899 = vpow.pop %v5898
  %v5900 = vadd.f32 %v5899, 1.0
  %v5901 = vrcp.pop %v5900
  %v5902 = vmul.f32 %v5900, %v5901
  %v5903 = vsub.f32 1.0, %v5902
  %v5904 = vmul.f32 %v5901, %v5903
  %v5905 = vadd.f32 %v5901, %v5904
  %vm5906 = vweird.f32 %v5900
  %vm5907 = vweird.f32 %v5901
  %vm5908 = vmor %vm5906, %vm5907
  %v5909 = vsel %vm5908, %v5901, %v5905
  %v5910 = vand.u32 2147483647, %v5900
  %vm5911 = vcmp.eq.f32.partialorder %v5910, 8.507059e+37
  %v5912 = vand.u32 %v5900, 2147483648
  %v5913 = vor.u32 1.1754944e-38, %v5912
  %v5914 = vsel %vm5911, %v5913, %v5909
  %v5915 = vmul.f32 1.0, %v5914
  %v5916 = vxor.u32 %v5775, 2147483648
  %v5917 = vmul.f32 %v5916, 1.442695
  %v5918 = vpow.pop %v5917
  %v5919 = vadd.f32 %v5918, 1.0
  %v5920 = vrcp.pop %v5919
  %v5921 = vmul.f32 %v5919, %v5920
  %v5922 = vsub.f32 1.0, %v5921
  %v5923 = vmul.f32 %v5920, %v5922
  %v5924 = vadd.f32 %v5920, %v5923
  %vm5925 = vweird.f32 %v5919
  %vm5926 = vweird.f32 %v5920
  %vm5927 = vmor %vm5925, %vm5926
  %v5928 = vsel %vm5927, %v5920, %v5924
  %v5929 = vand.u32 2147483647, %v5919
  %vm5930 = vcmp.eq.f32.partialorder %v5929, 8.507059e+37
  %v5931 = vand.u32 %v5919, 2147483648
  %v5932 = vor.u32 1.1754944e-38, %v5931
  %v5933 = vsel %vm5930, %v5932, %v5928
  %v5934 = vmul.f32 1.0, %v5933
  %v5935 = vtanh.pop %v5835
  %v5936 = vxor.u32 %v5895, 2147483648
  %v5937 = vmul.f32 %v5936, 1.442695
  %v5938 = vpow.pop %v5937
  %v5939 = vadd.f32 %v5938, 1.0
  %v5940 = vrcp.pop %v5939
  %v5941 = vmul.f32 %v5939, %v5940
  %v5942 = vsub.f32 1.0, %v5941
  %v5943 = vmul.f32 %v5940, %v5942
  %v5944 = vadd.f32 %v5940, %v5943
  %vm5945 = vweird.f32 %v5939
  %vm5946 = vweird.f32 %v5940
  %vm5947 = vmor %vm5945, %vm5946
  %v5948 = vsel %vm5947, %v5940, %v5944
  %v5949 = vand.u32 2147483647, %v5939
  %vm5950 = vcmp.eq.f32.partialorder %v5949, 8.507059e+37
  %v5951 = vand.u32 %v5939, 2147483648
  %v5952 = vor.u32 1.1754944e-38, %v5951
  %v5953 = vsel %vm5950, %v5952, %v5948
  %v5954 = vmul.f32 1.0, %v5953
  %v5955 = vmul.f32 %v5934, %v5510
  %v5956 = vmul.f32 %v5915, %v5935
  %v5957 = vadd.f32 %v5955, %v5956
  %v5958 = vtanh.pop %v5957
  %v5959 = vmul.f32 %v5954, %v5958
  %5960 = vmatpush.msra.mxu0 %v228
  %5961 = vmatpush.msra.mxu0 %v224
  %5962 = vmatpush.msra.mxu0 %v220
  %5963 = vmatpush.msra.mxu0 %v216
  %5964 = vmatpush.msra.mxu0 %v212
  %5965 = vmatpush.msra.mxu0 %v208
  %5966 = vmatpush.msra.mxu0 %v204
  %5967 = vmatpush.msra.mxu0 %v200
  %5968 = vmatpush.msra.mxu0 %v196
  %5969 = vmatpush.msra.mxu0 %v192
  %5970 = vmatpush.msra.mxu0 %v188
  %5971 = vmatpush.msra.mxu0 %v184
  %5972 = vmatpush.msra.mxu0 %v180
  %5973 = vmatpush.msra.mxu0 %v176
  %5974 = vmatpush.msra.mxu0 %v172
  %5975 = vmatpush.msra.mxu0 %v168
  %5976 = vmatmul.f32.gmra.mxu0 %v5655
  %v5977 = vpop.f32.mrf.mxu0
  %v5978 = vadd.f32 %v4110, %v5977
  %5979 = vdwg.mxu0
  %5980 = vmatpush.msra.mxu0 %v229
  %5981 = vmatpush.msra.mxu0 %v225
  %5982 = vmatpush.msra.mxu0 %v221
  %5983 = vmatpush.msra.mxu0 %v217
  %5984 = vmatpush.msra.mxu0 %v213
  %5985 = vmatpush.msra.mxu0 %v209
  %5986 = vmatpush.msra.mxu0 %v205
  %5987 = vmatpush.msra.mxu0 %v201
  %5988 = vmatpush.msra.mxu0 %v197
  %5989 = vmatpush.msra.mxu0 %v193
  %5990 = vmatpush.msra.mxu0 %v189
  %5991 = vmatpush.msra.mxu0 %v185
  %5992 = vmatpush.msra.mxu0 %v181
  %5993 = vmatpush.msra.mxu0 %v177
  %5994 = vmatpush.msra.mxu0 %v173
  %5995 = vmatpush.msra.mxu0 %v169
  %5996 = vmatmul.f32.gmra.mxu0 %v5655
  %v5997 = vpop.f32.mrf.mxu0
  %v5998 = vadd.f32 %v4150, %v5997
  %5999 = vdwg.mxu0
  %6000 = vmatpush.msra.mxu0 %v230
  %6001 = vmatpush.msra.mxu0 %v226
  %6002 = vmatpush.msra.mxu0 %v222
  %6003 = vmatpush.msra.mxu0 %v218
  %6004 = vmatpush.msra.mxu0 %v214
  %6005 = vmatpush.msra.mxu0 %v210
  %6006 = vmatpush.msra.mxu0 %v206
  %6007 = vmatpush.msra.mxu0 %v202
  %6008 = vmatpush.msra.mxu0 %v198
  %6009 = vmatpush.msra.mxu0 %v194
  %6010 = vmatpush.msra.mxu0 %v190
  %6011 = vmatpush.msra.mxu0 %v186
  %6012 = vmatpush.msra.mxu0 %v182
  %6013 = vmatpush.msra.mxu0 %v178
  %6014 = vmatpush.msra.mxu0 %v174
  %6015 = vmatpush.msra.mxu0 %v170
  %6016 = vmatmul.f32.gmra.mxu0 %v5655
  %v6017 = vpop.f32.mrf.mxu0
  %v6018 = vadd.f32 %v4190, %v6017
  %6019 = vdwg.mxu0
  %6020 = vmatpush.msra.mxu0 %v231
  %6021 = vmatpush.msra.mxu0 %v227
  %6022 = vmatpush.msra.mxu0 %v223
  %6023 = vmatpush.msra.mxu0 %v219
  %6024 = vmatpush.msra.mxu0 %v215
  %6025 = vmatpush.msra.mxu0 %v211
  %6026 = vmatpush.msra.mxu0 %v207
  %6027 = vmatpush.msra.mxu0 %v203
  %6028 = vmatpush.msra.mxu0 %v199
  %6029 = vmatpush.msra.mxu0 %v195
  %6030 = vmatpush.msra.mxu0 %v191
  %6031 = vmatpush.msra.mxu0 %v187
  %6032 = vmatpush.msra.mxu0 %v183
  %6033 = vmatpush.msra.mxu0 %v179
  %6034 = vmatpush.msra.mxu0 %v175
  %6035 = vmatpush.msra.mxu0 %v171
  %6036 = vmatmul.f32.gmra.mxu0 %v5655
  %v6037 = vpop.f32.mrf.mxu0
  %v6038 = vadd.f32 %v4230, %v6037
  %6039 = vdwg.mxu0
  %v6040 = vxor.u32 %v5978, 2147483648
  %v6041 = vmul.f32 %v6040, 1.442695
  %v6042 = vpow.pop %v6041
  %v6043 = vadd.f32 %v6042, 1.0
  %v6044 = vrcp.pop %v6043
  %v6045 = vmul.f32 %v6043, %v6044
  %v6046 = vsub.f32 1.0, %v6045
  %v6047 = vmul.f32 %v6044, %v6046
  %v6048 = vadd.f32 %v6044, %v6047
  %vm6049 = vweird.f32 %v6043
  %vm6050 = vweird.f32 %v6044
  %vm6051 = vmor %vm6049, %vm6050
  %v6052 = vsel %vm6051, %v6044, %v6048
  %v6053 = vand.u32 2147483647, %v6043
  %vm6054 = vcmp.eq.f32.partialorder %v6053, 8.507059e+37
  %v6055 = vand.u32 %v6043, 2147483648
  %v6056 = vor.u32 1.1754944e-38, %v6055
  %v6057 = vsel %vm6054, %v6056, %v6052
  %v6058 = vmul.f32 1.0, %v6057
  %v6059 = vxor.u32 %v5998, 2147483648
  %v6060 = vmul.f32 %v6059, 1.442695
  %v6061 = vpow.pop %v6060
  %v6062 = vadd.f32 %v6061, 1.0
  %v6063 = vrcp.pop %v6062
  %v6064 = vmul.f32 %v6062, %v6063
  %v6065 = vsub.f32 1.0, %v6064
  %v6066 = vmul.f32 %v6063, %v6065
  %v6067 = vadd.f32 %v6063, %v6066
  %vm6068 = vweird.f32 %v6062
  %vm6069 = vweird.f32 %v6063
  %vm6070 = vmor %vm6068, %vm6069
  %v6071 = vsel %vm6070, %v6063, %v6067
  %v6072 = vand.u32 2147483647, %v6062
  %vm6073 = vcmp.eq.f32.partialorder %v6072, 8.507059e+37
  %v6074 = vand.u32 %v6062, 2147483648
  %v6075 = vor.u32 1.1754944e-38, %v6074
  %v6076 = vsel %vm6073, %v6075, %v6071
  %v6077 = vmul.f32 1.0, %v6076
  %v6078 = vtanh.pop %v6018
  %v6079 = vxor.u32 %v6038, 2147483648
  %v6080 = vmul.f32 %v6079, 1.442695
  %v6081 = vpow.pop %v6080
  %v6082 = vadd.f32 %v6081, 1.0
  %v6083 = vrcp.pop %v6082
  %v6084 = vmul.f32 %v6082, %v6083
  %v6085 = vsub.f32 1.0, %v6084
  %v6086 = vmul.f32 %v6083, %v6085
  %v6087 = vadd.f32 %v6083, %v6086
  %vm6088 = vweird.f32 %v6082
  %vm6089 = vweird.f32 %v6083
  %vm6090 = vmor %vm6088, %vm6089
  %v6091 = vsel %vm6090, %v6083, %v6087
  %v6092 = vand.u32 2147483647, %v6082
  %vm6093 = vcmp.eq.f32.partialorder %v6092, 8.507059e+37
  %v6094 = vand.u32 %v6082, 2147483648
  %v6095 = vor.u32 1.1754944e-38, %v6094
  %v6096 = vsel %vm6093, %v6095, %v6091
  %v6097 = vmul.f32 1.0, %v6096
  %v6098 = vmul.f32 %v6077, %v5653
  %v6099 = vmul.f32 %v6058, %v6078
  %v6100 = vadd.f32 %v6098, %v6099
  %v6101 = vtanh.pop %v6100
  %v6102 = vmul.f32 %v6097, %v6101
  %v6103 = vld [vmem:[%s1 + $0x20] sm:$0xff]
  %6104 = vmatpush.msra.mxu0 %v293
  %6105 = vmatpush.msra.mxu0 %v289
  %6106 = vmatpush.msra.mxu0 %v285
  %6107 = vmatpush.msra.mxu0 %v281
  %6108 = vmatpush.msra.mxu0 %v277
  %6109 = vmatpush.msra.mxu0 %v273
  %6110 = vmatpush.msra.mxu0 %v269
  %6111 = vmatpush.msra.mxu0 %v265
  %6112 = vmatpush.msra.mxu0 %v261
  %6113 = vmatpush.msra.mxu0 %v257
  %6114 = vmatpush.msra.mxu0 %v253
  %6115 = vmatpush.msra.mxu0 %v249
  %6116 = vmatpush.msra.mxu0 %v245
  %6117 = vmatpush.msra.mxu0 %v241
  %6118 = vmatpush.msra.mxu0 %v237
  %6119 = vmatpush.msra.mxu0 %v233
  %6120 = vmatmul.f32.gmra.mxu0 %v6103
  %v6121 = vpop.f32.mrf.mxu0
  %v6122 = vadd.f32 %v659, %v6121
  %6123 = vdwg.mxu0
  %6124 = vmatpush.msra.mxu0 %v357
  %6125 = vmatpush.msra.mxu0 %v353
  %6126 = vmatpush.msra.mxu0 %v349
  %6127 = vmatpush.msra.mxu0 %v345
  %6128 = vmatpush.msra.mxu0 %v341
  %6129 = vmatpush.msra.mxu0 %v337
  %6130 = vmatpush.msra.mxu0 %v333
  %6131 = vmatpush.msra.mxu0 %v329
  %6132 = vmatpush.msra.mxu0 %v325
  %6133 = vmatpush.msra.mxu0 %v321
  %6134 = vmatpush.msra.mxu0 %v317
  %6135 = vmatpush.msra.mxu0 %v313
  %6136 = vmatpush.msra.mxu0 %v309
  %6137 = vmatpush.msra.mxu0 %v305
  %6138 = vmatpush.msra.mxu0 %v301
  %6139 = vmatpush.msra.mxu0 %v297
  %6140 = vmatmul.f32.gmra.mxu0 %v6102
  %v6141 = vpop.f32.mrf.mxu0
  %v6142 = vadd.f32 %v6122, %v6141
  %6143 = vdwg.mxu0
  %6144 = vmatpush.msra.mxu0 %v421
  %6145 = vmatpush.msra.mxu0 %v417
  %6146 = vmatpush.msra.mxu0 %v413
  %6147 = vmatpush.msra.mxu0 %v409
  %6148 = vmatpush.msra.mxu0 %v405
  %6149 = vmatpush.msra.mxu0 %v401
  %6150 = vmatpush.msra.mxu0 %v397
  %6151 = vmatpush.msra.mxu0 %v393
  %6152 = vmatpush.msra.mxu0 %v389
  %6153 = vmatpush.msra.mxu0 %v385
  %6154 = vmatpush.msra.mxu0 %v381
  %6155 = vmatpush.msra.mxu0 %v377
  %6156 = vmatpush.msra.mxu0 %v373
  %6157 = vmatpush.msra.mxu0 %v369
  %6158 = vmatpush.msra.mxu0 %v365
  %6159 = vmatpush.msra.mxu0 %v361
  %6160 = vmatmul.f32.gmra.mxu0 %v5959
  %v6161 = vpop.f32.mrf.mxu0
  %v6162 = vadd.f32 %v6142, %v6161
  %6163 = vdwg.mxu0
  %6164 = vmatpush.msra.mxu0 %v294
  %6165 = vmatpush.msra.mxu0 %v290
  %6166 = vmatpush.msra.mxu0 %v286
  %6167 = vmatpush.msra.mxu0 %v282
  %6168 = vmatpush.msra.mxu0 %v278
  %6169 = vmatpush.msra.mxu0 %v274
  %6170 = vmatpush.msra.mxu0 %v270
  %6171 = vmatpush.msra.mxu0 %v266
  %6172 = vmatpush.msra.mxu0 %v262
  %6173 = vmatpush.msra.mxu0 %v258
  %6174 = vmatpush.msra.mxu0 %v254
  %6175 = vmatpush.msra.mxu0 %v250
  %6176 = vmatpush.msra.mxu0 %v246
  %6177 = vmatpush.msra.mxu0 %v242
  %6178 = vmatpush.msra.mxu0 %v238
  %6179 = vmatpush.msra.mxu0 %v234
  %6180 = vmatmul.f32.gmra.mxu0 %v6103
  %v6181 = vpop.f32.mrf.mxu0
  %v6182 = vadd.f32 %v660, %v6181
  %6183 = vdwg.mxu0
  %6184 = vmatpush.msra.mxu0 %v358
  %6185 = vmatpush.msra.mxu0 %v354
  %6186 = vmatpush.msra.mxu0 %v350
  %6187 = vmatpush.msra.mxu0 %v346
  %6188 = vmatpush.msra.mxu0 %v342
  %6189 = vmatpush.msra.mxu0 %v338
  %6190 = vmatpush.msra.mxu0 %v334
  %6191 = vmatpush.msra.mxu0 %v330
  %6192 = vmatpush.msra.mxu0 %v326
  %6193 = vmatpush.msra.mxu0 %v322
  %6194 = vmatpush.msra.mxu0 %v318
  %6195 = vmatpush.msra.mxu0 %v314
  %6196 = vmatpush.msra.mxu0 %v310
  %6197 = vmatpush.msra.mxu0 %v306
  %6198 = vmatpush.msra.mxu0 %v302
  %6199 = vmatpush.msra.mxu0 %v298
  %6200 = vmatmul.f32.gmra.mxu0 %v6102
  %v6201 = vpop.f32.mrf.mxu0
  %v6202 = vadd.f32 %v6182, %v6201
  %6203 = vdwg.mxu0
  %6204 = vmatpush.msra.mxu0 %v422
  %6205 = vmatpush.msra.mxu0 %v418
  %6206 = vmatpush.msra.mxu0 %v414
  %6207 = vmatpush.msra.mxu0 %v410
  %6208 = vmatpush.msra.mxu0 %v406
  %6209 = vmatpush.msra.mxu0 %v402
  %6210 = vmatpush.msra.mxu0 %v398
  %6211 = vmatpush.msra.mxu0 %v394
  %6212 = vmatpush.msra.mxu0 %v390
  %6213 = vmatpush.msra.mxu0 %v386
  %6214 = vmatpush.msra.mxu0 %v382
  %6215 = vmatpush.msra.mxu0 %v378
  %6216 = vmatpush.msra.mxu0 %v374
  %6217 = vmatpush.msra.mxu0 %v370
  %6218 = vmatpush.msra.mxu0 %v366
  %6219 = vmatpush.msra.mxu0 %v362
  %6220 = vmatmul.f32.gmra.mxu0 %v5959
  %v6221 = vpop.f32.mrf.mxu0
  %v6222 = vadd.f32 %v6202, %v6221
  %6223 = vdwg.mxu0
  %6224 = vmatpush.msra.mxu0 %v295
  %6225 = vmatpush.msra.mxu0 %v291
  %6226 = vmatpush.msra.mxu0 %v287
  %6227 = vmatpush.msra.mxu0 %v283
  %6228 = vmatpush.msra.mxu0 %v279
  %6229 = vmatpush.msra.mxu0 %v275
  %6230 = vmatpush.msra.mxu0 %v271
  %6231 = vmatpush.msra.mxu0 %v267
  %6232 = vmatpush.msra.mxu0 %v263
  %6233 = vmatpush.msra.mxu0 %v259
  %6234 = vmatpush.msra.mxu0 %v255
  %6235 = vmatpush.msra.mxu0 %v251
  %6236 = vmatpush.msra.mxu0 %v247
  %6237 = vmatpush.msra.mxu0 %v243
  %6238 = vmatpush.msra.mxu0 %v239
  %6239 = vmatpush.msra.mxu0 %v235
  %6240 = vmatmul.f32.gmra.mxu0 %v6103
  %v6241 = vpop.f32.mrf.mxu0
  %v6242 = vadd.f32 %v661, %v6241
  %6243 = vdwg.mxu0
  %6244 = vmatpush.msra.mxu0 %v359
  %6245 = vmatpush.msra.mxu0 %v355
  %6246 = vmatpush.msra.mxu0 %v351
  %6247 = vmatpush.msra.mxu0 %v347
  %6248 = vmatpush.msra.mxu0 %v343
  %6249 = vmatpush.msra.mxu0 %v339
  %6250 = vmatpush.msra.mxu0 %v335
  %6251 = vmatpush.msra.mxu0 %v331
  %6252 = vmatpush.msra.mxu0 %v327
  %6253 = vmatpush.msra.mxu0 %v323
  %6254 = vmatpush.msra.mxu0 %v319
  %6255 = vmatpush.msra.mxu0 %v315
  %6256 = vmatpush.msra.mxu0 %v311
  %6257 = vmatpush.msra.mxu0 %v307
  %6258 = vmatpush.msra.mxu0 %v303
  %6259 = vmatpush.msra.mxu0 %v299
  %6260 = vmatmul.f32.gmra.mxu0 %v6102
  %v6261 = vpop.f32.mrf.mxu0
  %v6262 = vadd.f32 %v6242, %v6261
  %6263 = vdwg.mxu0
  %6264 = vmatpush.msra.mxu0 %v423
  %6265 = vmatpush.msra.mxu0 %v419
  %6266 = vmatpush.msra.mxu0 %v415
  %6267 = vmatpush.msra.mxu0 %v411
  %6268 = vmatpush.msra.mxu0 %v407
  %6269 = vmatpush.msra.mxu0 %v403
  %6270 = vmatpush.msra.mxu0 %v399
  %6271 = vmatpush.msra.mxu0 %v395
  %6272 = vmatpush.msra.mxu0 %v391
  %6273 = vmatpush.msra.mxu0 %v387
  %6274 = vmatpush.msra.mxu0 %v383
  %6275 = vmatpush.msra.mxu0 %v379
  %6276 = vmatpush.msra.mxu0 %v375
  %6277 = vmatpush.msra.mxu0 %v371
  %6278 = vmatpush.msra.mxu0 %v367
  %6279 = vmatpush.msra.mxu0 %v363
  %6280 = vmatmul.f32.gmra.mxu0 %v5959
  %v6281 = vpop.f32.mrf.mxu0
  %v6282 = vadd.f32 %v6262, %v6281
  %6283 = vdwg.mxu0
  %6284 = vmatpush.msra.mxu0 %v296
  %6285 = vmatpush.msra.mxu0 %v292
  %6286 = vmatpush.msra.mxu0 %v288
  %6287 = vmatpush.msra.mxu0 %v284
  %6288 = vmatpush.msra.mxu0 %v280
  %6289 = vmatpush.msra.mxu0 %v276
  %6290 = vmatpush.msra.mxu0 %v272
  %6291 = vmatpush.msra.mxu0 %v268
  %6292 = vmatpush.msra.mxu0 %v264
  %6293 = vmatpush.msra.mxu0 %v260
  %6294 = vmatpush.msra.mxu0 %v256
  %6295 = vmatpush.msra.mxu0 %v252
  %6296 = vmatpush.msra.mxu0 %v248
  %6297 = vmatpush.msra.mxu0 %v244
  %6298 = vmatpush.msra.mxu0 %v240
  %6299 = vmatpush.msra.mxu0 %v236
  %6300 = vmatmul.f32.gmra.mxu0 %v6103
  %v6301 = vpop.f32.mrf.mxu0
  %v6302 = vadd.f32 %v662, %v6301
  %6303 = vdwg.mxu0
  %6304 = vmatpush.msra.mxu0 %v360
  %6305 = vmatpush.msra.mxu0 %v356
  %6306 = vmatpush.msra.mxu0 %v352
  %6307 = vmatpush.msra.mxu0 %v348
  %6308 = vmatpush.msra.mxu0 %v344
  %6309 = vmatpush.msra.mxu0 %v340
  %6310 = vmatpush.msra.mxu0 %v336
  %6311 = vmatpush.msra.mxu0 %v332
  %6312 = vmatpush.msra.mxu0 %v328
  %6313 = vmatpush.msra.mxu0 %v324
  %6314 = vmatpush.msra.mxu0 %v320
  %6315 = vmatpush.msra.mxu0 %v316
  %6316 = vmatpush.msra.mxu0 %v312
  %6317 = vmatpush.msra.mxu0 %v308
  %6318 = vmatpush.msra.mxu0 %v304
  %6319 = vmatpush.msra.mxu0 %v300
  %6320 = vmatmul.f32.gmra.mxu0 %v6102
  %v6321 = vpop.f32.mrf.mxu0
  %v6322 = vadd.f32 %v6302, %v6321
  %6323 = vdwg.mxu0
  %6324 = vmatpush.msra.mxu0 %v424
  %6325 = vmatpush.msra.mxu0 %v420
  %6326 = vmatpush.msra.mxu0 %v416
  %6327 = vmatpush.msra.mxu0 %v412
  %6328 = vmatpush.msra.mxu0 %v408
  %6329 = vmatpush.msra.mxu0 %v404
  %6330 = vmatpush.msra.mxu0 %v400
  %6331 = vmatpush.msra.mxu0 %v396
  %6332 = vmatpush.msra.mxu0 %v392
  %6333 = vmatpush.msra.mxu0 %v388
  %6334 = vmatpush.msra.mxu0 %v384
  %6335 = vmatpush.msra.mxu0 %v380
  %6336 = vmatpush.msra.mxu0 %v376
  %6337 = vmatpush.msra.mxu0 %v372
  %6338 = vmatpush.msra.mxu0 %v368
  %6339 = vmatpush.msra.mxu0 %v364
  %6340 = vmatmul.f32.gmra.mxu0 %v5959
  %v6341 = vpop.f32.mrf.mxu0
  %v6342 = vadd.f32 %v6322, %v6341
  %6343 = vdwg.mxu0
  %v6344 = vxor.u32 %v6162, 2147483648
  %v6345 = vmul.f32 %v6344, 1.442695
  %v6346 = vpow.pop %v6345
  %v6347 = vadd.f32 %v6346, 1.0
  %v6348 = vrcp.pop %v6347
  %v6349 = vmul.f32 %v6347, %v6348
  %v6350 = vsub.f32 1.0, %v6349
  %v6351 = vmul.f32 %v6348, %v6350
  %v6352 = vadd.f32 %v6348, %v6351
  %vm6353 = vweird.f32 %v6347
  %vm6354 = vweird.f32 %v6348
  %vm6355 = vmor %vm6353, %vm6354
  %v6356 = vsel %vm6355, %v6348, %v6352
  %v6357 = vand.u32 2147483647, %v6347
  %vm6358 = vcmp.eq.f32.partialorder %v6357, 8.507059e+37
  %v6359 = vand.u32 %v6347, 2147483648
  %v6360 = vor.u32 1.1754944e-38, %v6359
  %v6361 = vsel %vm6358, %v6360, %v6356
  %v6362 = vmul.f32 1.0, %v6361
  %v6363 = vxor.u32 %v6222, 2147483648
  %v6364 = vmul.f32 %v6363, 1.442695
  %v6365 = vpow.pop %v6364
  %v6366 = vadd.f32 %v6365, 1.0
  %v6367 = vrcp.pop %v6366
  %v6368 = vmul.f32 %v6366, %v6367
  %v6369 = vsub.f32 1.0, %v6368
  %v6370 = vmul.f32 %v6367, %v6369
  %v6371 = vadd.f32 %v6367, %v6370
  %vm6372 = vweird.f32 %v6366
  %vm6373 = vweird.f32 %v6367
  %vm6374 = vmor %vm6372, %vm6373
  %v6375 = vsel %vm6374, %v6367, %v6371
  %v6376 = vand.u32 2147483647, %v6366
  %vm6377 = vcmp.eq.f32.partialorder %v6376, 8.507059e+37
  %v6378 = vand.u32 %v6366, 2147483648
  %v6379 = vor.u32 1.1754944e-38, %v6378
  %v6380 = vsel %vm6377, %v6379, %v6375
  %v6381 = vmul.f32 1.0, %v6380
  %v6382 = vtanh.pop %v6282
  %v6383 = vxor.u32 %v6342, 2147483648
  %v6384 = vmul.f32 %v6383, 1.442695
  %v6385 = vpow.pop %v6384
  %v6386 = vadd.f32 %v6385, 1.0
  %v6387 = vrcp.pop %v6386
  %v6388 = vmul.f32 %v6386, %v6387
  %v6389 = vsub.f32 1.0, %v6388
  %v6390 = vmul.f32 %v6387, %v6389
  %v6391 = vadd.f32 %v6387, %v6390
  %vm6392 = vweird.f32 %v6386
  %vm6393 = vweird.f32 %v6387
  %vm6394 = vmor %vm6392, %vm6393
  %v6395 = vsel %vm6394, %v6387, %v6391
  %v6396 = vand.u32 2147483647, %v6386
  %vm6397 = vcmp.eq.f32.partialorder %v6396, 8.507059e+37
  %v6398 = vand.u32 %v6386, 2147483648
  %v6399 = vor.u32 1.1754944e-38, %v6398
  %v6400 = vsel %vm6397, %v6399, %v6395
  %v6401 = vmul.f32 1.0, %v6400
  %v6402 = vmul.f32 %v6381, %v5957
  %v6403 = vmul.f32 %v6362, %v6382
  %v6404 = vadd.f32 %v6402, %v6403
  %v6405 = vtanh.pop %v6404
  %v6406 = vmul.f32 %v6401, %v6405
  %v6407 = vld [vmem:[%s8] sm:$0xff]
  %v6408 = vld [vmem:[%s8 + $0x8] sm:$0xff]
  %v6409 = vld [vmem:[%s8 + $0x10] sm:$0xff]
  %v6410 = vld [vmem:[%s8 + $0x18] sm:$0xff]
  %v6411 = vld [vmem:[%s8 + $0x20] sm:$0xff]
  %v6412 = vld [vmem:[%s8 + $0x28] sm:$0xff]
  %v6413 = vld [vmem:[%s8 + $0x30] sm:$0xff]
  %v6414 = vld [vmem:[%s8 + $0x38] sm:$0xff]
  %v6415 = vld [vmem:[%s8 + $0x40] sm:$0xff]
  %v6416 = vld [vmem:[%s8 + $0x48] sm:$0xff]
  %v6417 = vld [vmem:[%s8 + $0x50] sm:$0xff]
  %v6418 = vld [vmem:[%s8 + $0x58] sm:$0xff]
  %v6419 = vld [vmem:[%s8 + $0x60] sm:$0xff]
  %v6420 = vld [vmem:[%s8 + $0x68] sm:$0xff]
  %v6421 = vld [vmem:[%s8 + $0x70] sm:$0xff]
  %v6422 = vld [vmem:[%s8 + $0x78] sm:$0xff]
  %v6423 = vld [vmem:[%s9] sm:$0x1]
  %v6425 = vperm.slane %v6423, 0
  %6427 = vmatpush.msra.mxu0 %v6422
  %6428 = vmatpush.msra.mxu0 %v6421
  %6429 = vmatpush.msra.mxu0 %v6420
  %6430 = vmatpush.msra.mxu0 %v6419
  %6431 = vmatpush.msra.mxu0 %v6418
  %6432 = vmatpush.msra.mxu0 %v6417
  %6433 = vmatpush.msra.mxu0 %v6416
  %6434 = vmatpush.msra.mxu0 %v6415
  %6435 = vmatpush.msra.mxu0 %v6414
  %6436 = vmatpush.msra.mxu0 %v6413
  %6437 = vmatpush.msra.mxu0 %v6412
  %6438 = vmatpush.msra.mxu0 %v6411
  %6439 = vmatpush.msra.mxu0 %v6410
  %6440 = vmatpush.msra.mxu0 %v6409
  %6441 = vmatpush.msra.mxu0 %v6408
  %6442 = vmatpush.msra.mxu0 %v6407
  %6443 = vmatmul.f32.gmra.mxu0 %v4618
  %v6444 = vpop.f32.mrf.mxu0
  %v6445 = vadd.f32 %v6425, %v6444
  %6446 = vmatmul.f32.gmra.mxu0 %v5065
  %v6447 = vpop.f32.mrf.mxu0
  %v6448 = vadd.f32 %v6425, %v6447
  %6449 = vmatmul.f32.gmra.mxu0 %v5512
  %v6450 = vpop.f32.mrf.mxu0
  %v6451 = vadd.f32 %v6425, %v6450
  %6452 = vmatmul.f32.gmra.mxu0 %v5959
  %v6453 = vpop.f32.mrf.mxu0
  %v6454 = vadd.f32 %v6425, %v6453
  %6455 = vmatmul.f32.gmra.mxu0 %v6406
  %v6456 = vpop.f32.mrf.mxu0
  %v6457 = vadd.f32 %v6425, %v6456
  %6458 = vdwg.mxu0
  %v6459 = vlaneseq
  %v6460 = vand.u32 %v6459, 127
  %vm6461 = vcmp.lt.s32.totalorder %v6460, 48
  %v6462 = vsel %vm6461, %v6445, -1e+30
  %v6463 = vsel %vm6461, %v6448, -1e+30
  %v6464 = vsel %vm6461, %v6451, -1e+30
  %v6465 = vsel %vm6461, %v6454, -1e+30
  %v6466 = vsel %vm6461, %v6457, -1e+30
  %6467 = vmax.xlane.f32.xlu0 %v6462
  %v6468 = vpop.xlane.xlu0 %6467
  %6469 = vmax.xlane.f32.xlu0 %v6463
  %v6470 = vpop.xlane.xlu0 %6469
  %6471 = vmax.xlane.f32.xlu0 %v6464
  %v6472 = vpop.xlane.xlu0 %6471
  %6473 = vmax.xlane.f32.xlu0 %v6465
  %v6474 = vpop.xlane.xlu0 %6473
  %6475 = vmax.xlane.f32.xlu0 %v6466
  %v6476 = vpop.xlane.xlu0 %6475
  %v6477 = vsub.f32 %v6462, %v6468
  %v6478 = vsub.f32 %v6463, %v6470
  %v6479 = vsub.f32 %v6464, %v6472
  %v6480 = vsub.f32 %v6465, %v6474
  %v6481 = vsub.f32 %v6466, %v6476
  %v6482 = vmul.f32 %v6477, 1.442695
  %v6483 = vpow.pop %v6482
  %v6484 = vmul.f32 %v6478, 1.442695
  %v6485 = vpow.pop %v6484
  %v6486 = vmul.f32 %v6479, 1.442695
  %v6487 = vpow.pop %v6486
  %v6488 = vmul.f32 %v6480, 1.442695
  %v6489 = vpow.pop %v6488
  %v6490 = vmul.f32 %v6481, 1.442695
  %v6491 = vpow.pop %v6490
  %6492 = vadd.xlane.f32.xlu0 %v6483
  %v6493 = vpop.xlane.xlu0 %6492
  %6494 = vadd.xlane.f32.xlu0 %v6485
  %v6495 = vpop.xlane.xlu0 %6494
  %6496 = vadd.xlane.f32.xlu0 %v6487
  %v6497 = vpop.xlane.xlu0 %6496
  %6498 = vadd.xlane.f32.xlu0 %v6489
  %v6499 = vpop.xlane.xlu0 %6498
  %6500 = vadd.xlane.f32.xlu0 %v6491
  %v6501 = vpop.xlane.xlu0 %6500
  %v6502 = vlog2.pop %v6493
  %v6503 = vmul.f32 %v6502, 0.6931472
  %v6504 = vlog2.pop %v6495
  %v6505 = vmul.f32 %v6504, 0.6931472
  %v6506 = vlog2.pop %v6497
  %v6507 = vmul.f32 %v6506, 0.6931472
  %v6508 = vlog2.pop %v6499
  %v6509 = vmul.f32 %v6508, 0.6931472
  %v6510 = vlog2.pop %v6501
  %v6511 = vmul.f32 %v6510, 0.6931472
  %v6512 = vadd.f32 %v6468, %v6503
  %v6513 = vadd.f32 %v6470, %v6505
  %v6514 = vadd.f32 %v6472, %v6507
  %v6515 = vadd.f32 %v6474, %v6509
  %v6516 = vadd.f32 %v6476, %v6511
  %v6517 = vsub.f32 %v6462, %v6512
  %v6518 = vsub.f32 %v6463, %v6513
  %v6519 = vsub.f32 %v6464, %v6514
  %v6520 = vsub.f32 %v6465, %v6515
  %v6521 = vsub.f32 %v6466, %v6516
  %6522 = vst [vmem:[%s10] sm:$0xff] %v6517
  %6523 = vst [vmem:[%s10 + $0x8] sm:$0xff] %v6518
  %6524 = vst [vmem:[%s10 + $0x10] sm:$0xff] %v6519
  %6525 = vst [vmem:[%s10 + $0x18] sm:$0xff] %v6520
  %6526 = vst [vmem:[%s10 + $0x20] sm:$0xff] %v6521
  // Predicated region
  $region42: #{s2vt_forward.1} parent=0 // pred_check
    _
  $region43: #{s2vt_forward.1} parent=0 // pred_check_branch
    %6528 = sbr.rel (0) target = $region45
  $region44: #{s2vt_forward.1} parent=0 // pred_region
    _
  $region45: #{s2vt_forward.1} parent=0 // pred_fallthru
    _
  // Predicated region
  $region46: #{s2vt_forward.1} parent=0 // pred_check
    _
  $region47: #{s2vt_forward.1} parent=0 // pred_check_branch
    %6530 = sbr.rel (0) target = $region49
  $region48: #{s2vt_forward.1} parent=0 // pred_region
    _
  $region49: #{s2vt_forward.1} parent=0 // pred_fallthru
    _

</llo_original>
